<compile_context>
chip_gen: v6e
topology: v6e:2x2x1
jax: 0.10.0
libtpu: 0.0.40
codegen_flags: <defaults>
</compile_context>

<pallas_src>
import math

import numpy as np

import jax
import jax.numpy as jnp
from jax.experimental import pallas as pl
from jax.experimental.pallas import tpu as pltpu

# ---------------------------------------------------------------------------
# Static super-net configuration (mirrors Transformer_super_V3)
# ---------------------------------------------------------------------------
NUM_OF_LOCAL_OPERATION = 5             # MixedOpLocal: [Zero, conv k=3, 5, 7, 11]
NUM_OF_OPERATION = 3                   # MixedOp:      [FFN, Zero, SelfAttention]
LOCAL_KERNEL_SIZES = (0, 3, 5, 7, 11)  # index 0 == Zero
LN_EPS = 1e-5                          # torch nn.LayerNorm default
NEG_INF = -1e30


# ---------------------------------------------------------------------------
# In-kernel building blocks (operate on (S, D) f32 slabs of one batch element)
# ---------------------------------------------------------------------------
def _layer_norm(x, gb):
    """x: (rows, D); gb: (2, D) = [gamma; beta]."""
    gamma = gb[0:1, :]
    beta = gb[1:2, :]
    mu = jnp.mean(x, axis=-1, keepdims=True)
    xc = x - mu
    var = jnp.mean(xc * xc, axis=-1, keepdims=True)
    return xc * jax.lax.rsqrt(var + LN_EPS) * gamma + beta


def _ffn(x, w, b):
    # TODO(synk): FFN class body is not in the provided source; assumed
    # Linear(D->d_ffn) -> ReLU -> Linear(d_ffn->D), d_ffn == dim_model
    # (Decoder_Block forces d_ffn = dim_model), dropout == 0.
    D = x.shape[-1]
    h = jnp.dot(x, w[:, :D], preferred_element_type=jnp.float32) + b[:, :D]
    h = jnp.maximum(h, 0.0)
    return jnp.dot(h, w[:, D:], preferred_element_type=jnp.float32) + b[:, D:]


def _mha(xq, xkv, w, b, *, heads, causal_add):
    # TODO(synk): SelfAttention class body is not in the provided source;
    # assumed standard multi-head attention (causal for the self case,
    # unmasked for the cross case), scale 1/sqrt(head_dim), dropout == 0.
    D = xq.shape[-1]
    dh = D // heads
    scale = 1.0 / math.sqrt(dh)
    if causal_add is not None:
        # self-attention: single fused QKV matmul, scale folded into q once
        qkv = jnp.dot(xq, w[:, :3 * D], preferred_element_type=jnp.float32) + b[:, :3 * D]
        q = qkv[:, :D] * scale
        k = qkv[:, D:2 * D]
        v = qkv[:, 2 * D:3 * D]
    else:
        # cross-attention: fused KV matmul on the encoder stream
        q = (jnp.dot(xq, w[:, :D], preferred_element_type=jnp.float32) + b[:, :D]) * scale
        kv = jnp.dot(xkv, w[:, D:3 * D], preferred_element_type=jnp.float32) + b[:, D:3 * D]
        k = kv[:, :D]
        v = kv[:, D:]
    ctxs = []
    for hh in range(heads):                      # static unroll over heads
        qh = q[:, hh * dh:(hh + 1) * dh]
        kh = k[:, hh * dh:(hh + 1) * dh]
        vh = v[:, hh * dh:(hh + 1) * dh]
        s = jnp.dot(qh, kh.T, preferred_element_type=jnp.float32)
        if causal_add is not None:
            s = s + causal_add                   # hoisted additive causal mask
        m = jnp.max(s, axis=-1, keepdims=True)
        p = jnp.exp(s - m)
        l = jnp.sum(p, axis=-1, keepdims=True)
        ctx_h = jnp.dot(p, vh, preferred_element_type=jnp.float32)
        # deferred normalization: one EUP reciprocal + (S, dh) scale per head
        ctxs.append(ctx_h * pl.reciprocal(l, approx=True))
    # head concat + output projection as ONE (S, D) x (D, D) matmul
    ctx = jnp.concatenate(ctxs, axis=-1)
    return jnp.dot(ctx, w[:, 3 * D:], preferred_element_type=jnp.float32) + b[:, 3 * D:]


def _causal_conv(x, wp, bias, k):
    # TODO(synk): MaskConV1d class body is not in the provided source; assumed
    # a causal (left-padded) Conv1d over the sequence axis, no activation.
    # Single matmul: taps stacked along the contraction axis (K = k*D).
    S, D = x.shape
    xpad = jnp.concatenate([jnp.zeros((k - 1, D), jnp.float32), x], axis=0)  # (S+k-1, D)
    slab = jnp.concatenate([xpad[j:j + S] for j in range(k)], axis=-1)       # (S, k*D)
    return jnp.dot(slab, wp, preferred_element_type=jnp.float32) + bias


# ---------------------------------------------------------------------------
# Kernel factory: whole decoder forward for one batch element per grid step
# ---------------------------------------------------------------------------
def _make_decoder_kernel(plan, *, S, D, heads, L):
    def kernel(*refs):
        out_ref = refs[-1]
        x_ref, ln_ref, xw_ref, xb_ref = refs[0], refs[1], refs[2], refs[3]

        # one-time causal additive mask, reused by every self-attention site
        qi = jax.lax.broadcasted_iota(jnp.int32, (S, S), 0)
        ki = jax.lax.broadcasted_iota(jnp.int32, (S, S), 1)
        causal_add = jnp.where(qi >= ki, 0.0, NEG_INF).astype(jnp.float32)

        x = x_ref[...]                                            # (S, D)
        for l, e in enumerate(plan):
            c0, c1, c2 = e['coding']
            # --- Decoder_Block.forward -----------------------------------
            h = _layer_norm(x, ln_ref[4 * l + 0])                 # layer_norm1
            skip = h
            if c0 == 0:                                           # atten_1: FFN
                h = _ffn(h, refs[e['slot0'][0]][...], refs[e['slot0'][1]][...]) + skip
            elif c0 == 2:                                         # atten_1: SelfAttention
                h = _mha(h, h, refs[e['slot0'][0]][...], refs[e['slot0'][1]][...],
                         heads=heads, causal_add=causal_add) + skip
            else:                                                 # atten_1: Zero
                h = skip
            if c2 == 0:                                           # Local: Zero
                out1 = _layer_norm(skip, ln_ref[4 * l + 3])       # layer_norm_local
            else:                                                 # Local: MaskConV1d
                conv = _causal_conv(skip, refs[e['conv'][0]][...],
                                    refs[e['conv'][1]][...], e['k'])
                out1 = _layer_norm(conv + skip, ln_ref[4 * l + 3])
            h = _layer_norm(h, ln_ref[4 * l + 1])                 # layer_norm2
            skip = h
            enc = refs[e['enc']][...]                             # (Se, D)
            h = _mha(h, enc, xw_ref[l], xb_ref[l],
                     heads=heads, causal_add=None) + skip         # atten_2 (cross)
            h = _layer_norm(h, ln_ref[4 * l + 2])                 # layer_norm3
            skip = h
            z = h + out1
            if c1 == 0:                                           # ffn_de: FFN
                h = _ffn(z, refs[e['slot1'][0]][...], refs[e['slot1'][1]][...]) + skip
            elif c1 == 2:                                         # ffn_de: SelfAttention
                h = _mha(z, z, refs[e['slot1'][0]][...], refs[e['slot1'][1]][...],
                         heads=heads, causal_add=causal_add) + skip
            else:                                                 # ffn_de: Zero
                h = skip
            x = h
        out_ref[...] = _layer_norm(x, ln_ref[4 * L])              # layer_norm_dec_end
    return kernel


# ---------------------------------------------------------------------------
# Wrapper: packs params, builds operands + static plan, calls pallas_call
# ---------------------------------------------------------------------------
def transformer_decoder_forward(x, encoder_out, params, nas_coding, nas_link, *, heads):
    nas_coding = np.asarray(nas_coding).reshape(-1)
    nas_link = np.asarray(nas_link)
    layers = params['layers']
    L = len(layers)
    B, S, D = x.shape
    assert D % heads == 0

    coding = [tuple(int(c) for c in nas_coding[3 * l:3 * l + 3]) for l in range(L)]
    local_ks = [LOCAL_KERNEL_SIZES[c[2]] for c in coding]

    # fixed packed operands (few, lane-dense where possible)
    ln_all = jnp.concatenate([lp['ln'] for lp in layers]
                             + [params['ln_final'][None]], axis=0)     # (4L+1, 2, D)
    cross_w = jnp.stack([lp['cross_w'] for lp in layers])              # (L, D, 4D)
    cross_b = jnp.stack([lp['cross_b'] for lp in layers])              # (L, 1, 4D)

    operands = []
    in_specs = []

    def add(arr, spec):
        operands.append(arr)
        in_specs.append(spec)
        return len(operands) - 1

    def const_spec(arr):
        nd = arr.ndim
        return pl.BlockSpec(arr.shape, lambda b, _nd=nd: (0,) * _nd)

    add(x.astype(jnp.float32), pl.BlockSpec((None, S, D), lambda b: (b, 0, 0)))
    add(ln_all, const_spec(ln_all))
    add(cross_w, const_spec(cross_w))
    add(cross_b, const_spec(cross_b))

    plan = []
    for l, lp in enumerate(layers):
        c0, c1, c2 = coding[l]
        sel = [i for i in range(nas_link.shape[1]) if nas_link[l, i] == 1]
        assert sel, "each decoder layer must receive at least one encoder output"
        # extract_from_encoder_out: concat selected encoder outputs along seq
        enc_cat = jnp.concatenate([encoder_out[i] for i in sel], axis=1).astype(jnp.float32)
        Se = enc_cat.shape[1]
        entry = {'coding': (c0, c1, c2), 'k': local_ks[l],
                 'enc': add(enc_cat, pl.BlockSpec((None, Se, D), lambda b: (b, 0, 0)))}
        for name, c in (('slot0', c0), ('slot1', c1)):
            if c == 1:                       # Zero op -> no parameters needed
                entry[name] = None
            else:
                w, bvec = lp[name]
                entry[name] = (add(w, const_spec(w)), add(bvec, const_spec(bvec)))
        if c2 == 0:
            entry['conv'] = None
        else:                                # pack conv taps at their real k
            k, wt, bt = lp['local']
            wp = wt.reshape(k * D, D)        # (k*D, D): tap j occupies rows j*D:(j+1)*D
            entry['conv'] = (add(wp, const_spec(wp)), add(bt, const_spec(bt)))
        plan.append(entry)

    kernel = _make_decoder_kernel(plan, S=S, D=D, heads=heads, L=L)

    # grid over the independent batch dimension; weights use constant block
    # indices so they stay VMEM-resident across grid steps.  For real sizes
    # add a row tile (>= 512) and budget VMEM against v7x's 64 MiB
    # (double-buffered), setting vmem_limit_bytes explicitly.
    out = pl.pallas_call(
        kernel,
        grid=(B,),
        out_shape=jax.ShapeDtypeStruct((B, S, D), jnp.float32),
        in_specs=in_specs,
        out_specs=pl.BlockSpec((None, S, D), lambda b: (b, 0, 0)),
        compiler_params=pltpu.CompilerParams(dimension_semantics=("parallel",)),
    )(*operands)
    return out


# ---------------------------------------------------------------------------
# Parameter construction (packed layouts shared by kernel and reference)
# ---------------------------------------------------------------------------
def init_transformer_decoder_params(key, *, num_de, dim, nas_coding):
    D = dim
    keys = iter(jax.random.split(key, 256))

    def nxt():
        return next(keys)

    def linear_t(d_in, d_out):
        bound = 1.0 / math.sqrt(d_in)
        w = jax.random.uniform(nxt(), (d_in, d_out), jnp.float32, -bound, bound)
        b = jax.random.uniform(nxt(), (1, d_out), jnp.float32, -bound, bound)
        return w, b

    def attn_params():
        ws, bs = zip(*[linear_t(D, D) for _ in range(4)])        # q, k, v, o
        return jnp.concatenate(ws, axis=1), jnp.concatenate(bs, axis=1)

    def ffn_params():
        w1, b1 = linear_t(D, D)      # d_ffn == dim_model in this module
        w2, b2 = linear_t(D, D)
        return jnp.concatenate([w1, w2], axis=1), jnp.concatenate([b1, b2], axis=1)

    def ln_params():
        g = 1.0 + 0.1 * jax.random.normal(nxt(), (1, D), jnp.float32)
        b = 0.1 * jax.random.normal(nxt(), (1, D), jnp.float32)
        return jnp.concatenate([g, b], axis=0)                   # (2, D)

    def conv_params(k):
        bound = 1.0 / math.sqrt(D * k)
        w = jax.random.uniform(nxt(), (k, D, D), jnp.float32, -bound, bound)  # (tap, in, out)
        b = jax.random.uniform(nxt(), (1, D), jnp.float32, -bound, bound)
        return w, b

    nas_coding = np.asarray(nas_coding).reshape(-1)
    layers = []
    for l in range(num_de):
        c0, c1, c2 = (int(v) for v in nas_coding[3 * l:3 * l + 3])
        lp = {'ln': jnp.stack([ln_params() for _ in range(4)])}  # ln1, ln2, ln3, ln_local
        lp['cross_w'], lp['cross_b'] = attn_params()
        lp['slot0'] = None if c0 == 1 else (ffn_params() if c0 == 0 else attn_params())
        lp['slot1'] = None if c1 == 1 else (ffn_params() if c1 == 0 else attn_params())
        if c2 == 0:
            lp['local'] = None
        else:
            k = LOCAL_KERNEL_SIZES[c2]
            lp['local'] = (k,) + conv_params(k)
        layers.append(lp)
    return {'layers': layers, 'ln_final': ln_params()}


# ---------------------------------------------------------------------------
# Pure-JAX reference (same assumed op semantics, standard XLA ops)
# ---------------------------------------------------------------------------
def transformer_decoder_reference(x, encoder_out, params, nas_coding, nas_link, *, heads):
    nas_coding = np.asarray(nas_coding).reshape(-1)
    nas_link = np.asarray(nas_link)
    D = x.shape[-1]
    dh = D // heads

    def ln(t, gb):
        mu = t.mean(-1, keepdims=True)
        var = ((t - mu) ** 2).mean(-1, keepdims=True)
        return (t - mu) / jnp.sqrt(var + LN_EPS) * gb[0] + gb[1]

    def mha(xq, xkv, w, b, causal):
        Bq, Sq, _ = xq.shape
        Skv = xkv.shape[1]
        q = (xq @ w[:, :D] + b[0, :D]).reshape(Bq, Sq, heads, dh)
        k = (xkv @ w[:, D:2 * D] + b[0, D:2 * D]).reshape(Bq, Skv, heads, dh)
        v = (xkv @ w[:, 2 * D:3 * D] + b[0, 2 * D:3 * D]).reshape(Bq, Skv, heads, dh)
        s = jnp.einsum('bqhd,bkhd->bhqk', q, k) / math.sqrt(dh)
        if causal:
            mask = jnp.tril(jnp.ones((Sq, Skv), bool))
            s = jnp.where(mask[None, None], s, NEG_INF)
        p = jax.nn.softmax(s, axis=-1)
        o = jnp.einsum('bhqk,bkhd->bqhd', p, v).reshape(Bq, Sq, D)
        return o @ w[:, 3 * D:] + b[0, 3 * D:]

    def ffn(t, w, b):
        h = jax.nn.relu(t @ w[:, :D] + b[0, :D])
        return h @ w[:, D:] + b[0, D:]

    def conv(t, w_taps, bias, k):
        _, S, _ = t.shape
        xpad = jnp.pad(t, ((0, 0), (k - 1, 0), (0, 0)))
        acc = sum(xpad[:, j:j + S, :] @ w_taps[j] for j in range(k))
        return acc + bias[0]

    out = x
    for l, lp in enumerate(params['layers']):
        c0, c1, c2 = (int(c) for c in nas_coding[3 * l:3 * l + 3])
        sel = [i for i in range(nas_link.shape[1]) if nas_link[l, i] == 1]
        enc_cat = jnp.concatenate([encoder_out[i] for i in sel], axis=1)
        h = ln(out, lp['ln'][0])
        skip = h
        if c0 == 0:
            h = ffn(h, *lp['slot0']) + skip
        elif c0 == 2:
            h = mha(h, h, *lp['slot0'], causal=True) + skip
        else:
            h = skip
        if c2 == 0:
            out1 = ln(skip, lp['ln'][3])
        else:
            k, wt, bt = lp['local']
            out1 = ln(conv(skip, wt, bt, k) + skip, lp['ln'][3])
        h = ln(h, lp['ln'][1])
        skip = h
        h = mha(h, enc_cat, lp['cross_w'], lp['cross_b'], causal=False) + skip
        h = ln(h, lp['ln'][2])
        skip = h
        z = h + out1
        if c1 == 0:
            h = ffn(z, *lp['slot1']) + skip
        elif c1 == 2:
            h = mha(z, z, *lp['slot1'], causal=True) + skip
        else:
            h = skip
        out = h
    return ln(out, params['ln_final'])


# ---------------------------------------------------------------------------
if __name__ == "__main__":
    EMBED_DIMS = 32       # dim_model
    ENC_HEADS = 4         # heads (head_dim = 8)
    MAX_SEQ = 16          # decoder sequence length
    NUM_DE = 2            # decoder blocks
    NUM_EN = 4            # encoder outputs available for linking
    S_ENC = 16            # per-encoder-layer output sequence length
    B = 2

    # deterministic NAS choices (the PyTorch forward accepts explicit arrays)
    NAS_coding = np.array([2, 0, 4,    # layer0: atten_1=SelfAttn, ffn_de=FFN, Local=conv k=11
                           0, 2, 1])   # layer1: atten_1=FFN, ffn_de=SelfAttn, Local=conv k=3
    NAS_link = np.array([[1, 0, 1, 1],
                         [0, 1, 0, 1]])
    # TODO(synk): the module's default behaviour samples NAS_coding / NAS_link with
    # host-side np.random; that host randomness is supplied explicitly here.

    key = jax.random.PRNGKey(0)
    k_par, k_x, k_enc = jax.random.split(key, 3)
    params = init_transformer_decoder_params(k_par, num_de=NUM_DE, dim=EMBED_DIMS,
                                             nas_coding=NAS_coding)
    x = jax.random.normal(k_x, (B, MAX_SEQ, EMBED_DIMS), jnp.float32)
    enc_keys = jax.random.split(k_enc, NUM_EN)
    encoder_out = [jax.random.normal(enc_keys[i], (B, S_ENC, EMBED_DIMS), jnp.float32)
                   for i in range(NUM_EN)]

    out = transformer_decoder_forward(x, encoder_out, params, NAS_coding, NAS_link,
                                      heads=ENC_HEADS)
    out = jax.block_until_ready(out)

    ref = transformer_decoder_reference(x, encoder_out, params, NAS_coding, NAS_link,
                                        heads=ENC_HEADS)
    assert out.shape == (B, MAX_SEQ, EMBED_DIMS)
    err = float(jnp.max(jnp.abs(out - ref)))
    # tolerance allows the EUP approximate reciprocal in the softmax denominator
    assert err < 5e-3, f"max abs err {err}"

    print("KERNEL_OK")
</pallas_src>

<mosaic_0001>
module attributes {stable_mosaic.version = 11 : i64} {
  func.func @kernel(%arg0: i32, %arg1: memref<1x16x32xf32, #tpu.memory_space<vmem>>, %arg2: memref<9x2x32xf32, #tpu.memory_space<vmem>>, %arg3: memref<2x32x128xf32, #tpu.memory_space<vmem>>, %arg4: memref<2x1x128xf32, #tpu.memory_space<vmem>>, %arg5: memref<1x48x32xf32, #tpu.memory_space<vmem>>, %arg6: memref<32x128xf32, #tpu.memory_space<vmem>>, %arg7: memref<1x128xf32, #tpu.memory_space<vmem>>, %arg8: memref<32x64xf32, #tpu.memory_space<vmem>>, %arg9: memref<1x64xf32, #tpu.memory_space<vmem>>, %arg10: memref<352x32xf32, #tpu.memory_space<vmem>>, %arg11: memref<1x32xf32, #tpu.memory_space<vmem>>, %arg12: memref<1x32x32xf32, #tpu.memory_space<vmem>>, %arg13: memref<32x64xf32, #tpu.memory_space<vmem>>, %arg14: memref<1x64xf32, #tpu.memory_space<vmem>>, %arg15: memref<32x128xf32, #tpu.memory_space<vmem>>, %arg16: memref<1x128xf32, #tpu.memory_space<vmem>>, %arg17: memref<96x32xf32, #tpu.memory_space<vmem>>, %arg18: memref<1x32xf32, #tpu.memory_space<vmem>>, %arg19: memref<1x16x32xf32, #tpu.memory_space<vmem>>) attributes {dimension_semantics = [#tpu.dimension_semantics<parallel>], iteration_bounds = array<i64: 2>, scalar_prefetch = 0 : i64, scratch_operands = 0 : i64, tpu.core_type = #tpu.core_type<tc>, window_params = [{transform_indices = @transform_0, window_bounds = array<i64: 1, 16, 32>}, {pipeline_mode = #tpu.pipeline_mode<synchronous>, transform_indices = @transform_1, window_bounds = array<i64: 9, 2, 32>}, {pipeline_mode = #tpu.pipeline_mode<synchronous>, transform_indices = @transform_2, window_bounds = array<i64: 2, 32, 128>}, {pipeline_mode = #tpu.pipeline_mode<synchronous>, transform_indices = @transform_3, window_bounds = array<i64: 2, 1, 128>}, {transform_indices = @transform_4, window_bounds = array<i64: 1, 48, 32>}, {pipeline_mode = #tpu.pipeline_mode<synchronous>, transform_indices = @transform_5, window_bounds = array<i64: 32, 128>}, {pipeline_mode = #tpu.pipeline_mode<synchronous>, transform_indices = @transform_6, window_bounds = array<i64: 1, 128>}, {pipeline_mode = #tpu.pipeline_mode<synchronous>, transform_indices = @transform_7, window_bounds = array<i64: 32, 64>}, {pipeline_mode = #tpu.pipeline_mode<synchronous>, transform_indices = @transform_8, window_bounds = array<i64: 1, 64>}, {pipeline_mode = #tpu.pipeline_mode<synchronous>, transform_indices = @transform_9, window_bounds = array<i64: 352, 32>}, {pipeline_mode = #tpu.pipeline_mode<synchronous>, transform_indices = @transform_10, window_bounds = array<i64: 1, 32>}, {transform_indices = @transform_11, window_bounds = array<i64: 1, 32, 32>}, {pipeline_mode = #tpu.pipeline_mode<synchronous>, transform_indices = @transform_12, window_bounds = array<i64: 32, 64>}, {pipeline_mode = #tpu.pipeline_mode<synchronous>, transform_indices = @transform_13, window_bounds = array<i64: 1, 64>}, {pipeline_mode = #tpu.pipeline_mode<synchronous>, transform_indices = @transform_14, window_bounds = array<i64: 32, 128>}, {pipeline_mode = #tpu.pipeline_mode<synchronous>, transform_indices = @transform_15, window_bounds = array<i64: 1, 128>}, {pipeline_mode = #tpu.pipeline_mode<synchronous>, transform_indices = @transform_16, window_bounds = array<i64: 96, 32>}, {pipeline_mode = #tpu.pipeline_mode<synchronous>, transform_indices = @transform_17, window_bounds = array<i64: 1, 32>}, {transform_indices = @transform_18, window_bounds = array<i64: 1, 16, 32>}]} {
    %0 = tpu.iota {dimensions = array<i32: 0>} : vector<16x16xi32>
    %1 = tpu.iota {dimensions = array<i32: 1>} : vector<16x16xi32>
    %2 = arith.cmpi sge, %0, %1 : vector<16x16xi32>
    %cst = arith.constant 0.000000e+00 : f32
    %cst_0 = arith.constant -1.000000e+30 : f32
    %3 = vector.broadcast %cst : f32 to vector<16x16xf32>
    %4 = vector.broadcast %cst_0 : f32 to vector<16x16xf32>
    %5 = arith.select %2, %3, %4 : vector<16x16xi1>, vector<16x16xf32>
    %c0 = arith.constant 0 : index
    %c0_1 = arith.constant 0 : index
    %c0_2 = arith.constant 0 : index
    %6 = vector.load %arg1[%c0, %c0_1, %c0_2] : memref<1x16x32xf32, #tpu.memory_space<vmem>>, vector<1x16x32xf32>
    %7 = vector.shape_cast %6 : vector<1x16x32xf32> to vector<16x32xf32>
    %c0_3 = arith.constant 0 : index
    %c0_4 = arith.constant 0 : index
    %c0_5 = arith.constant 0 : index
    %8 = vector.load %arg2[%c0_3, %c0_4, %c0_5] : memref<9x2x32xf32, #tpu.memory_space<vmem>>, vector<1x2x32xf32>
    %9 = vector.shape_cast %8 : vector<1x2x32xf32> to vector<2x32xf32>
    %10 = vector.extract_strided_slice %9 {offsets = [0, 0], sizes = [1, 32], strides = [1, 1]} : vector<2x32xf32> to vector<1x32xf32>
    %11 = vector.extract_strided_slice %9 {offsets = [1, 0], sizes = [1, 32], strides = [1, 1]} : vector<2x32xf32> to vector<1x32xf32>
    %cst_6 = arith.constant dense<0.000000e+00> : vector<16xf32>
    %12 = vector.multi_reduction <add>, %7, %cst_6 [1] : vector<16x32xf32> to vector<16xf32>
    %13 = vector.shape_cast %12 : vector<16xf32> to vector<16x1xf32>
    %cst_7 = arith.constant 3.200000e+01 : f32
    %14 = vector.broadcast %cst_7 : f32 to vector<16x1xf32>
    %15 = arith.divf %13, %14 : vector<16x1xf32>
    %16 = vector.broadcast %15 : vector<16x1xf32> to vector<16x32xf32>
    %17 = arith.subf %7, %16 : vector<16x32xf32>
    %18 = arith.mulf %17, %17 : vector<16x32xf32>
    %cst_8 = arith.constant dense<0.000000e+00> : vector<16xf32>
    %19 = vector.multi_reduction <add>, %18, %cst_8 [1] : vector<16x32xf32> to vector<16xf32>
    %20 = vector.shape_cast %19 : vector<16xf32> to vector<16x1xf32>
    %cst_9 = arith.constant 3.200000e+01 : f32
    %21 = vector.broadcast %cst_9 : f32 to vector<16x1xf32>
    %22 = arith.divf %20, %21 : vector<16x1xf32>
    %cst_10 = arith.constant 9.99999974E-6 : f32
    %23 = vector.broadcast %cst_10 : f32 to vector<16x1xf32>
    %24 = arith.addf %22, %23 : vector<16x1xf32>
    %25 = math.rsqrt %24 : vector<16x1xf32>
    %26 = vector.broadcast %25 : vector<16x1xf32> to vector<16x32xf32>
    %27 = arith.mulf %17, %26 : vector<16x32xf32>
    %28 = vector.broadcast %10 : vector<1x32xf32> to vector<16x32xf32>
    %29 = arith.mulf %27, %28 : vector<16x32xf32>
    %30 = vector.broadcast %11 : vector<1x32xf32> to vector<16x32xf32>
    %31 = arith.addf %29, %30 : vector<16x32xf32>
    %c0_11 = arith.constant 0 : index
    %c0_12 = arith.constant 0 : index
    %32 = vector.load %arg6[%c0_11, %c0_12] : memref<32x128xf32, #tpu.memory_space<vmem>>, vector<32x128xf32>
    %c0_13 = arith.constant 0 : index
    %c0_14 = arith.constant 0 : index
    %33 = vector.load %arg7[%c0_13, %c0_14] : memref<1x128xf32, #tpu.memory_space<vmem>>, vector<1x128xf32>
    %34 = vector.extract_strided_slice %32 {offsets = [0, 0], sizes = [32, 96], strides = [1, 1]} : vector<32x128xf32> to vector<32x96xf32>
    %cst_15 = arith.constant dense<0.000000e+00> : vector<16x96xf32>
    %35 = tpu.matmul %31, %34, %cst_15 {dimension_numbers = #tpu.dot_dimension_numbers<[1], [0], [0], [1], [0, 0, 1, 1], [], []>} : vector<16x32xf32>, vector<32x96xf32>, vector<16x96xf32> -> vector<16x96xf32>
    %36 = vector.extract_strided_slice %33 {offsets = [0, 0], sizes = [1, 96], strides = [1, 1]} : vector<1x128xf32> to vector<1x96xf32>
    %37 = vector.broadcast %36 : vector<1x96xf32> to vector<16x96xf32>
    %38 = arith.addf %35, %37 : vector<16x96xf32>
    %39 = vector.extract_strided_slice %38 {offsets = [0, 0], sizes = [16, 32], strides = [1, 1]} : vector<16x96xf32> to vector<16x32xf32>
    %cst_16 = arith.constant 0.353553385 : f32
    %40 = vector.broadcast %cst_16 : f32 to vector<16x32xf32>
    %41 = arith.mulf %39, %40 : vector<16x32xf32>
    %42 = vector.extract_strided_slice %38 {offsets = [0, 32], sizes = [16, 32], strides = [1, 1]} : vector<16x96xf32> to vector<16x32xf32>
    %43 = vector.extract_strided_slice %38 {offsets = [0, 64], sizes = [16, 32], strides = [1, 1]} : vector<16x96xf32> to vector<16x32xf32>
    %44 = vector.extract_strided_slice %41 {offsets = [0, 0], sizes = [16, 8], strides = [1, 1]} : vector<16x32xf32> to vector<16x8xf32>
    %45 = vector.extract_strided_slice %42 {offsets = [0, 0], sizes = [16, 8], strides = [1, 1]} : vector<16x32xf32> to vector<16x8xf32>
    %46 = vector.extract_strided_slice %43 {offsets = [0, 0], sizes = [16, 8], strides = [1, 1]} : vector<16x32xf32> to vector<16x8xf32>
    %47 = tpu.transpose %45, [1, 0] : vector<16x8xf32> -> vector<8x16xf32>
    %cst_17 = arith.constant dense<0.000000e+00> : vector<16x16xf32>
    %48 = tpu.matmul %44, %47, %cst_17 {dimension_numbers = #tpu.dot_dimension_numbers<[1], [0], [0], [1], [0, 0, 1, 1], [], []>} : vector<16x8xf32>, vector<8x16xf32>, vector<16x16xf32> -> vector<16x16xf32>
    %49 = arith.addf %48, %5 : vector<16x16xf32>
    %cst_18 = arith.constant dense<0xFF800000> : vector<16xf32>
    %50 = vector.multi_reduction <maximumf>, %49, %cst_18 [1] : vector<16x16xf32> to vector<16xf32>
    %51 = vector.shape_cast %50 : vector<16xf32> to vector<16x1xf32>
    %52 = vector.broadcast %51 : vector<16x1xf32> to vector<16x16xf32>
    %53 = arith.subf %49, %52 : vector<16x16xf32>
    %54 = math.exp %53 : vector<16x16xf32>
    %cst_19 = arith.constant dense<0.000000e+00> : vector<16xf32>
    %55 = vector.multi_reduction <add>, %54, %cst_19 [1] : vector<16x16xf32> to vector<16xf32>
    %56 = vector.shape_cast %55 : vector<16xf32> to vector<16x1xf32>
    %cst_20 = arith.constant dense<0.000000e+00> : vector<16x8xf32>
    %57 = tpu.matmul %54, %46, %cst_20 {dimension_numbers = #tpu.dot_dimension_numbers<[1], [0], [0], [1], [0, 0, 1, 1], [], []>} : vector<16x16xf32>, vector<16x8xf32>, vector<16x8xf32> -> vector<16x8xf32>
    %58 = tpu.reciprocal %56 {approx = true} : vector<16x1xf32> -> vector<16x1xf32>
    %59 = vector.broadcast %58 : vector<16x1xf32> to vector<16x8xf32>
    %60 = arith.mulf %57, %59 : vector<16x8xf32>
    %61 = vector.extract_strided_slice %41 {offsets = [0, 8], sizes = [16, 8], strides = [1, 1]} : vector<16x32xf32> to vector<16x8xf32>
    %62 = vector.extract_strided_slice %42 {offsets = [0, 8], sizes = [16, 8], strides = [1, 1]} : vector<16x32xf32> to vector<16x8xf32>
    %63 = vector.extract_strided_slice %43 {offsets = [0, 8], sizes = [16, 8], strides = [1, 1]} : vector<16x32xf32> to vector<16x8xf32>
    %64 = tpu.transpose %62, [1, 0] : vector<16x8xf32> -> vector<8x16xf32>
    %cst_21 = arith.constant dense<0.000000e+00> : vector<16x16xf32>
    %65 = tpu.matmul %61, %64, %cst_21 {dimension_numbers = #tpu.dot_dimension_numbers<[1], [0], [0], [1], [0, 0, 1, 1], [], []>} : vector<16x8xf32>, vector<8x16xf32>, vector<16x16xf32> -> vector<16x16xf32>
    %66 = arith.addf %65, %5 : vector<16x16xf32>
    %cst_22 = arith.constant dense<0xFF800000> : vector<16xf32>
    %67 = vector.multi_reduction <maximumf>, %66, %cst_22 [1] : vector<16x16xf32> to vector<16xf32>
    %68 = vector.shape_cast %67 : vector<16xf32> to vector<16x1xf32>
    %69 = vector.broadcast %68 : vector<16x1xf32> to vector<16x16xf32>
    %70 = arith.subf %66, %69 : vector<16x16xf32>
    %71 = math.exp %70 : vector<16x16xf32>
    %cst_23 = arith.constant dense<0.000000e+00> : vector<16xf32>
    %72 = vector.multi_reduction <add>, %71, %cst_23 [1] : vector<16x16xf32> to vector<16xf32>
    %73 = vector.shape_cast %72 : vector<16xf32> to vector<16x1xf32>
    %cst_24 = arith.constant dense<0.000000e+00> : vector<16x8xf32>
    %74 = tpu.matmul %71, %63, %cst_24 {dimension_numbers = #tpu.dot_dimension_numbers<[1], [0], [0], [1], [0, 0, 1, 1], [], []>} : vector<16x16xf32>, vector<16x8xf32>, vector<16x8xf32> -> vector<16x8xf32>
    %75 = tpu.reciprocal %73 {approx = true} : vector<16x1xf32> -> vector<16x1xf32>
    %76 = vector.broadcast %75 : vector<16x1xf32> to vector<16x8xf32>
    %77 = arith.mulf %74, %76 : vector<16x8xf32>
    %78 = vector.extract_strided_slice %41 {offsets = [0, 16], sizes = [16, 8], strides = [1, 1]} : vector<16x32xf32> to vector<16x8xf32>
    %79 = vector.extract_strided_slice %42 {offsets = [0, 16], sizes = [16, 8], strides = [1, 1]} : vector<16x32xf32> to vector<16x8xf32>
    %80 = vector.extract_strided_slice %43 {offsets = [0, 16], sizes = [16, 8], strides = [1, 1]} : vector<16x32xf32> to vector<16x8xf32>
    %81 = tpu.transpose %79, [1, 0] : vector<16x8xf32> -> vector<8x16xf32>
    %cst_25 = arith.constant dense<0.000000e+00> : vector<16x16xf32>
    %82 = tpu.matmul %78, %81, %cst_25 {dimension_numbers = #tpu.dot_dimension_numbers<[1], [0], [0], [1], [0, 0, 1, 1], [], []>} : vector<16x8xf32>, vector<8x16xf32>, vector<16x16xf32> -> vector<16x16xf32>
    %83 = arith.addf %82, %5 : vector<16x16xf32>
    %cst_26 = arith.constant dense<0xFF800000> : vector<16xf32>
    %84 = vector.multi_reduction <maximumf>, %83, %cst_26 [1] : vector<16x16xf32> to vector<16xf32>
    %85 = vector.shape_cast %84 : vector<16xf32> to vector<16x1xf32>
    %86 = vector.broadcast %85 : vector<16x1xf32> to vector<16x16xf32>
    %87 = arith.subf %83, %86 : vector<16x16xf32>
    %88 = math.exp %87 : vector<16x16xf32>
    %cst_27 = arith.constant dense<0.000000e+00> : vector<16xf32>
    %89 = vector.multi_reduction <add>, %88, %cst_27 [1] : vector<16x16xf32> to vector<16xf32>
    %90 = vector.shape_cast %89 : vector<16xf32> to vector<16x1xf32>
    %cst_28 = arith.constant dense<0.000000e+00> : vector<16x8xf32>
    %91 = tpu.matmul %88, %80, %cst_28 {dimension_numbers = #tpu.dot_dimension_numbers<[1], [0], [0], [1], [0, 0, 1, 1], [], []>} : vector<16x16xf32>, vector<16x8xf32>, vector<16x8xf32> -> vector<16x8xf32>
    %92 = tpu.reciprocal %90 {approx = true} : vector<16x1xf32> -> vector<16x1xf32>
    %93 = vector.broadcast %92 : vector<16x1xf32> to vector<16x8xf32>
    %94 = arith.mulf %91, %93 : vector<16x8xf32>
    %95 = vector.extract_strided_slice %41 {offsets = [0, 24], sizes = [16, 8], strides = [1, 1]} : vector<16x32xf32> to vector<16x8xf32>
    %96 = vector.extract_strided_slice %42 {offsets = [0, 24], sizes = [16, 8], strides = [1, 1]} : vector<16x32xf32> to vector<16x8xf32>
    %97 = vector.extract_strided_slice %43 {offsets = [0, 24], sizes = [16, 8], strides = [1, 1]} : vector<16x32xf32> to vector<16x8xf32>
    %98 = tpu.transpose %96, [1, 0] : vector<16x8xf32> -> vector<8x16xf32>
    %cst_29 = arith.constant dense<0.000000e+00> : vector<16x16xf32>
    %99 = tpu.matmul %95, %98, %cst_29 {dimension_numbers = #tpu.dot_dimension_numbers<[1], [0], [0], [1], [0, 0, 1, 1], [], []>} : vector<16x8xf32>, vector<8x16xf32>, vector<16x16xf32> -> vector<16x16xf32>
    %100 = arith.addf %99, %5 : vector<16x16xf32>
    %cst_30 = arith.constant dense<0xFF800000> : vector<16xf32>
    %101 = vector.multi_reduction <maximumf>, %100, %cst_30 [1] : vector<16x16xf32> to vector<16xf32>
    %102 = vector.shape_cast %101 : vector<16xf32> to vector<16x1xf32>
    %103 = vector.broadcast %102 : vector<16x1xf32> to vector<16x16xf32>
    %104 = arith.subf %100, %103 : vector<16x16xf32>
    %105 = math.exp %104 : vector<16x16xf32>
    %cst_31 = arith.constant dense<0.000000e+00> : vector<16xf32>
    %106 = vector.multi_reduction <add>, %105, %cst_31 [1] : vector<16x16xf32> to vector<16xf32>
    %107 = vector.shape_cast %106 : vector<16xf32> to vector<16x1xf32>
    %cst_32 = arith.constant dense<0.000000e+00> : vector<16x8xf32>
    %108 = tpu.matmul %105, %97, %cst_32 {dimension_numbers = #tpu.dot_dimension_numbers<[1], [0], [0], [1], [0, 0, 1, 1], [], []>} : vector<16x16xf32>, vector<16x8xf32>, vector<16x8xf32> -> vector<16x8xf32>
    %109 = tpu.reciprocal %107 {approx = true} : vector<16x1xf32> -> vector<16x1xf32>
    %110 = vector.broadcast %109 : vector<16x1xf32> to vector<16x8xf32>
    %111 = arith.mulf %108, %110 : vector<16x8xf32>
    %112 = tpu.concatenate %60, %77, %94, %111 in 1 : vector<16x8xf32>, vector<16x8xf32>, vector<16x8xf32>, vector<16x8xf32> -> vector<16x32xf32>
    %113 = vector.extract_strided_slice %32 {offsets = [0, 96], sizes = [32, 32], strides = [1, 1]} : vector<32x128xf32> to vector<32x32xf32>
    %cst_33 = arith.constant dense<0.000000e+00> : vector<16x32xf32>
    %114 = tpu.matmul %112, %113, %cst_33 {dimension_numbers = #tpu.dot_dimension_numbers<[1], [0], [0], [1], [0, 0, 1, 1], [], []>} : vector<16x32xf32>, vector<32x32xf32>, vector<16x32xf32> -> vector<16x32xf32>
    %115 = vector.extract_strided_slice %33 {offsets = [0, 96], sizes = [1, 32], strides = [1, 1]} : vector<1x128xf32> to vector<1x32xf32>
    %116 = vector.broadcast %115 : vector<1x32xf32> to vector<16x32xf32>
    %117 = arith.addf %114, %116 : vector<16x32xf32>
    %118 = arith.addf %117, %31 : vector<16x32xf32>
    %c0_34 = arith.constant 0 : index
    %c0_35 = arith.constant 0 : index
    %119 = vector.load %arg10[%c0_34, %c0_35] : memref<352x32xf32, #tpu.memory_space<vmem>>, vector<352x32xf32>
    %c0_36 = arith.constant 0 : index
    %c0_37 = arith.constant 0 : index
    %120 = vector.load %arg11[%c0_36, %c0_37] : memref<1x32xf32, #tpu.memory_space<vmem>>, vector<1x32xf32>
    %cst_38 = arith.constant 0.000000e+00 : f32
    %121 = vector.broadcast %cst_38 : f32 to vector<10x32xf32>
    %122 = tpu.concatenate %121, %31 in 0 : vector<10x32xf32>, vector<16x32xf32> -> vector<26x32xf32>
    %123 = vector.extract_strided_slice %122 {offsets = [0, 0], sizes = [16, 32], strides = [1, 1]} : vector<26x32xf32> to vector<16x32xf32>
    %124 = vector.extract_strided_slice %122 {offsets = [1, 0], sizes = [16, 32], strides = [1, 1]} : vector<26x32xf32> to vector<16x32xf32>
    %125 = vector.extract_strided_slice %122 {offsets = [2, 0], sizes = [16, 32], strides = [1, 1]} : vector<26x32xf32> to vector<16x32xf32>
    %126 = vector.extract_strided_slice %122 {offsets = [3, 0], sizes = [16, 32], strides = [1, 1]} : vector<26x32xf32> to vector<16x32xf32>
    %127 = vector.extract_strided_slice %122 {offsets = [4, 0], sizes = [16, 32], strides = [1, 1]} : vector<26x32xf32> to vector<16x32xf32>
    %128 = vector.extract_strided_slice %122 {offsets = [5, 0], sizes = [16, 32], strides = [1, 1]} : vector<26x32xf32> to vector<16x32xf32>
    %129 = vector.extract_strided_slice %122 {offsets = [6, 0], sizes = [16, 32], strides = [1, 1]} : vector<26x32xf32> to vector<16x32xf32>
    %130 = vector.extract_strided_slice %122 {offsets = [7, 0], sizes = [16, 32], strides = [1, 1]} : vector<26x32xf32> to vector<16x32xf32>
    %131 = vector.extract_strided_slice %122 {offsets = [8, 0], sizes = [16, 32], strides = [1, 1]} : vector<26x32xf32> to vector<16x32xf32>
    %132 = vector.extract_strided_slice %122 {offsets = [9, 0], sizes = [16, 32], strides = [1, 1]} : vector<26x32xf32> to vector<16x32xf32>
    %133 = vector.extract_strided_slice %122 {offsets = [10, 0], sizes = [16, 32], strides = [1, 1]} : vector<26x32xf32> to vector<16x32xf32>
    %134 = tpu.concatenate %123, %124, %125, %126, %127, %128, %129, %130, %131, %132, %133 in 1 : vector<16x32xf32>, vector<16x32xf32>, vector<16x32xf32>, vector<16x32xf32>, vector<16x32xf32>, vector<16x32xf32>, vector<16x32xf32>, vector<16x32xf32>, vector<16x32xf32>, vector<16x32xf32>, vector<16x32xf32> -> vector<16x352xf32>
    %cst_39 = arith.constant dense<0.000000e+00> : vector<16x32xf32>
    %135 = tpu.matmul %134, %119, %cst_39 {dimension_numbers = #tpu.dot_dimension_numbers<[1], [0], [0], [1], [0, 0, 1, 1], [], []>} : vector<16x352xf32>, vector<352x32xf32>, vector<16x32xf32> -> vector<16x32xf32>
    %136 = vector.broadcast %120 : vector<1x32xf32> to vector<16x32xf32>
    %137 = arith.addf %135, %136 : vector<16x32xf32>
    %138 = arith.addf %137, %31 : vector<16x32xf32>
    %c3 = arith.constant 3 : index
    %c0_40 = arith.constant 0 : index
    %c0_41 = arith.constant 0 : index
    %139 = vector.load %arg2[%c3, %c0_40, %c0_41] : memref<9x2x32xf32, #tpu.memory_space<vmem>>, vector<1x2x32xf32>
    %140 = vector.shape_cast %139 : vector<1x2x32xf32> to vector<2x32xf32>
    %141 = vector.extract_strided_slice %140 {offsets = [0, 0], sizes = [1, 32], strides = [1, 1]} : vector<2x32xf32> to vector<1x32xf32>
    %142 = vector.extract_strided_slice %140 {offsets = [1, 0], sizes = [1, 32], strides = [1, 1]} : vector<2x32xf32> to vector<1x32xf32>
    %cst_42 = arith.constant dense<0.000000e+00> : vector<16xf32>
    %143 = vector.multi_reduction <add>, %138, %cst_42 [1] : vector<16x32xf32> to vector<16xf32>
    %144 = vector.shape_cast %143 : vector<16xf32> to vector<16x1xf32>
    %cst_43 = arith.constant 3.200000e+01 : f32
    %145 = vector.broadcast %cst_43 : f32 to vector<16x1xf32>
    %146 = arith.divf %144, %145 : vector<16x1xf32>
    %147 = vector.broadcast %146 : vector<16x1xf32> to vector<16x32xf32>
    %148 = arith.subf %138, %147 : vector<16x32xf32>
    %149 = arith.mulf %148, %148 : vector<16x32xf32>
    %cst_44 = arith.constant dense<0.000000e+00> : vector<16xf32>
    %150 = vector.multi_reduction <add>, %149, %cst_44 [1] : vector<16x32xf32> to vector<16xf32>
    %151 = vector.shape_cast %150 : vector<16xf32> to vector<16x1xf32>
    %cst_45 = arith.constant 3.200000e+01 : f32
    %152 = vector.broadcast %cst_45 : f32 to vector<16x1xf32>
    %153 = arith.divf %151, %152 : vector<16x1xf32>
    %cst_46 = arith.constant 9.99999974E-6 : f32
    %154 = vector.broadcast %cst_46 : f32 to vector<16x1xf32>
    %155 = arith.addf %153, %154 : vector<16x1xf32>
    %156 = math.rsqrt %155 : vector<16x1xf32>
    %157 = vector.broadcast %156 : vector<16x1xf32> to vector<16x32xf32>
    %158 = arith.mulf %148, %157 : vector<16x32xf32>
    %159 = vector.broadcast %141 : vector<1x32xf32> to vector<16x32xf32>
    %160 = arith.mulf %158, %159 : vector<16x32xf32>
    %161 = vector.broadcast %142 : vector<1x32xf32> to vector<16x32xf32>
    %162 = arith.addf %160, %161 : vector<16x32xf32>
    %c1 = arith.constant 1 : index
    %c0_47 = arith.constant 0 : index
    %c0_48 = arith.constant 0 : index
    %163 = vector.load %arg2[%c1, %c0_47, %c0_48] : memref<9x2x32xf32, #tpu.memory_space<vmem>>, vector<1x2x32xf32>
    %164 = vector.shape_cast %163 : vector<1x2x32xf32> to vector<2x32xf32>
    %165 = vector.extract_strided_slice %164 {offsets = [0, 0], sizes = [1, 32], strides = [1, 1]} : vector<2x32xf32> to vector<1x32xf32>
    %166 = vector.extract_strided_slice %164 {offsets = [1, 0], sizes = [1, 32], strides = [1, 1]} : vector<2x32xf32> to vector<1x32xf32>
    %cst_49 = arith.constant dense<0.000000e+00> : vector<16xf32>
    %167 = vector.multi_reduction <add>, %118, %cst_49 [1] : vector<16x32xf32> to vector<16xf32>
    %168 = vector.shape_cast %167 : vector<16xf32> to vector<16x1xf32>
    %cst_50 = arith.constant 3.200000e+01 : f32
    %169 = vector.broadcast %cst_50 : f32 to vector<16x1xf32>
    %170 = arith.divf %168, %169 : vector<16x1xf32>
    %171 = vector.broadcast %170 : vector<16x1xf32> to vector<16x32xf32>
    %172 = arith.subf %118, %171 : vector<16x32xf32>
    %173 = arith.mulf %172, %172 : vector<16x32xf32>
    %cst_51 = arith.constant dense<0.000000e+00> : vector<16xf32>
    %174 = vector.multi_reduction <add>, %173, %cst_51 [1] : vector<16x32xf32> to vector<16xf32>
    %175 = vector.shape_cast %174 : vector<16xf32> to vector<16x1xf32>
    %cst_52 = arith.constant 3.200000e+01 : f32
    %176 = vector.broadcast %cst_52 : f32 to vector<16x1xf32>
    %177 = arith.divf %175, %176 : vector<16x1xf32>
    %cst_53 = arith.constant 9.99999974E-6 : f32
    %178 = vector.broadcast %cst_53 : f32 to vector<16x1xf32>
    %179 = arith.addf %177, %178 : vector<16x1xf32>
    %180 = math.rsqrt %179 : vector<16x1xf32>
    %181 = vector.broadcast %180 : vector<16x1xf32> to vector<16x32xf32>
    %182 = arith.mulf %172, %181 : vector<16x32xf32>
    %183 = vector.broadcast %165 : vector<1x32xf32> to vector<16x32xf32>
    %184 = arith.mulf %182, %183 : vector<16x32xf32>
    %185 = vector.broadcast %166 : vector<1x32xf32> to vector<16x32xf32>
    %186 = arith.addf %184, %185 : vector<16x32xf32>
    %c0_54 = arith.constant 0 : index
    %c0_55 = arith.constant 0 : index
    %c0_56 = arith.constant 0 : index
    %187 = vector.load %arg5[%c0_54, %c0_55, %c0_56] : memref<1x48x32xf32, #tpu.memory_space<vmem>>, vector<1x48x32xf32>
    %188 = vector.shape_cast %187 : vector<1x48x32xf32> to vector<48x32xf32>
    %c0_57 = arith.constant 0 : index
    %c0_58 = arith.constant 0 : index
    %c0_59 = arith.constant 0 : index
    %189 = vector.load %arg3[%c0_57, %c0_58, %c0_59] : memref<2x32x128xf32, #tpu.memory_space<vmem>>, vector<1x32x128xf32>
    %190 = vector.shape_cast %189 : vector<1x32x128xf32> to vector<32x128xf32>
    %c0_60 = arith.constant 0 : index
    %c0_61 = arith.constant 0 : index
    %c0_62 = arith.constant 0 : index
    %191 = vector.load %arg4[%c0_60, %c0_61, %c0_62] : memref<2x1x128xf32, #tpu.memory_space<vmem>>, vector<1x1x128xf32>
    %192 = vector.shape_cast %191 : vector<1x1x128xf32> to vector<1x128xf32>
    %193 = vector.extract_strided_slice %190 {offsets = [0, 0], sizes = [32, 32], strides = [1, 1]} : vector<32x128xf32> to vector<32x32xf32>
    %cst_63 = arith.constant dense<0.000000e+00> : vector<16x32xf32>
    %194 = tpu.matmul %186, %193, %cst_63 {dimension_numbers = #tpu.dot_dimension_numbers<[1], [0], [0], [1], [0, 0, 1, 1], [], []>} : vector<16x32xf32>, vector<32x32xf32>, vector<16x32xf32> -> vector<16x32xf32>
    %195 = vector.extract_strided_slice %192 {offsets = [0, 0], sizes = [1, 32], strides = [1, 1]} : vector<1x128xf32> to vector<1x32xf32>
    %196 = vector.broadcast %195 : vector<1x32xf32> to vector<16x32xf32>
    %197 = arith.addf %194, %196 : vector<16x32xf32>
    %cst_64 = arith.constant 0.353553385 : f32
    %198 = vector.broadcast %cst_64 : f32 to vector<16x32xf32>
    %199 = arith.mulf %197, %198 : vector<16x32xf32>
    %200 = vector.extract_strided_slice %190 {offsets = [0, 32], sizes = [32, 64], strides = [1, 1]} : vector<32x128xf32> to vector<32x64xf32>
    %cst_65 = arith.constant dense<0.000000e+00> : vector<48x64xf32>
    %201 = tpu.matmul %188, %200, %cst_65 {dimension_numbers = #tpu.dot_dimension_numbers<[1], [0], [0], [1], [0, 0, 1, 1], [], []>} : vector<48x32xf32>, vector<32x64xf32>, vector<48x64xf32> -> vector<48x64xf32>
    %202 = vector.extract_strided_slice %192 {offsets = [0, 32], sizes = [1, 64], strides = [1, 1]} : vector<1x128xf32> to vector<1x64xf32>
    %203 = vector.broadcast %202 : vector<1x64xf32> to vector<48x64xf32>
    %204 = arith.addf %201, %203 : vector<48x64xf32>
    %205 = vector.extract_strided_slice %204 {offsets = [0, 0], sizes = [48, 32], strides = [1, 1]} : vector<48x64xf32> to vector<48x32xf32>
    %206 = vector.extract_strided_slice %204 {offsets = [0, 32], sizes = [48, 32], strides = [1, 1]} : vector<48x64xf32> to vector<48x32xf32>
    %207 = vector.extract_strided_slice %199 {offsets = [0, 0], sizes = [16, 8], strides = [1, 1]} : vector<16x32xf32> to vector<16x8xf32>
    %208 = vector.extract_strided_slice %205 {offsets = [0, 0], sizes = [48, 8], strides = [1, 1]} : vector<48x32xf32> to vector<48x8xf32>
    %209 = vector.extract_strided_slice %206 {offsets = [0, 0], sizes = [48, 8], strides = [1, 1]} : vector<48x32xf32> to vector<48x8xf32>
    %210 = tpu.transpose %208, [1, 0] : vector<48x8xf32> -> vector<8x48xf32>
    %cst_66 = arith.constant dense<0.000000e+00> : vector<16x48xf32>
    %211 = tpu.matmul %207, %210, %cst_66 {dimension_numbers = #tpu.dot_dimension_numbers<[1], [0], [0], [1], [0, 0, 1, 1], [], []>} : vector<16x8xf32>, vector<8x48xf32>, vector<16x48xf32> -> vector<16x48xf32>
    %cst_67 = arith.constant dense<0xFF800000> : vector<16xf32>
    %212 = vector.multi_reduction <maximumf>, %211, %cst_67 [1] : vector<16x48xf32> to vector<16xf32>
    %213 = vector.shape_cast %212 : vector<16xf32> to vector<16x1xf32>
    %214 = vector.broadcast %213 : vector<16x1xf32> to vector<16x48xf32>
    %215 = arith.subf %211, %214 : vector<16x48xf32>
    %216 = math.exp %215 : vector<16x48xf32>
    %cst_68 = arith.constant dense<0.000000e+00> : vector<16xf32>
    %217 = vector.multi_reduction <add>, %216, %cst_68 [1] : vector<16x48xf32> to vector<16xf32>
    %218 = vector.shape_cast %217 : vector<16xf32> to vector<16x1xf32>
    %cst_69 = arith.constant dense<0.000000e+00> : vector<16x8xf32>
    %219 = tpu.matmul %216, %209, %cst_69 {dimension_numbers = #tpu.dot_dimension_numbers<[1], [0], [0], [1], [0, 0, 1, 1], [], []>} : vector<16x48xf32>, vector<48x8xf32>, vector<16x8xf32> -> vector<16x8xf32>
    %220 = tpu.reciprocal %218 {approx = true} : vector<16x1xf32> -> vector<16x1xf32>
    %221 = vector.broadcast %220 : vector<16x1xf32> to vector<16x8xf32>
    %222 = arith.mulf %219, %221 : vector<16x8xf32>
    %223 = vector.extract_strided_slice %199 {offsets = [0, 8], sizes = [16, 8], strides = [1, 1]} : vector<16x32xf32> to vector<16x8xf32>
    %224 = vector.extract_strided_slice %205 {offsets = [0, 8], sizes = [48, 8], strides = [1, 1]} : vector<48x32xf32> to vector<48x8xf32>
    %225 = vector.extract_strided_slice %206 {offsets = [0, 8], sizes = [48, 8], strides = [1, 1]} : vector<48x32xf32> to vector<48x8xf32>
    %226 = tpu.transpose %224, [1, 0] : vector<48x8xf32> -> vector<8x48xf32>
    %cst_70 = arith.constant dense<0.000000e+00> : vector<16x48xf32>
    %227 = tpu.matmul %223, %226, %cst_70 {dimension_numbers = #tpu.dot_dimension_numbers<[1], [0], [0], [1], [0, 0, 1, 1], [], []>} : vector<16x8xf32>, vector<8x48xf32>, vector<16x48xf32> -> vector<16x48xf32>
    %cst_71 = arith.constant dense<0xFF800000> : vector<16xf32>
    %228 = vector.multi_reduction <maximumf>, %227, %cst_71 [1] : vector<16x48xf32> to vector<16xf32>
    %229 = vector.shape_cast %228 : vector<16xf32> to vector<16x1xf32>
    %230 = vector.broadcast %229 : vector<16x1xf32> to vector<16x48xf32>
    %231 = arith.subf %227, %230 : vector<16x48xf32>
    %232 = math.exp %231 : vector<16x48xf32>
    %cst_72 = arith.constant dense<0.000000e+00> : vector<16xf32>
    %233 = vector.multi_reduction <add>, %232, %cst_72 [1] : vector<16x48xf32> to vector<16xf32>
    %234 = vector.shape_cast %233 : vector<16xf32> to vector<16x1xf32>
    %cst_73 = arith.constant dense<0.000000e+00> : vector<16x8xf32>
    %235 = tpu.matmul %232, %225, %cst_73 {dimension_numbers = #tpu.dot_dimension_numbers<[1], [0], [0], [1], [0, 0, 1, 1], [], []>} : vector<16x48xf32>, vector<48x8xf32>, vector<16x8xf32> -> vector<16x8xf32>
    %236 = tpu.reciprocal %234 {approx = true} : vector<16x1xf32> -> vector<16x1xf32>
    %237 = vector.broadcast %236 : vector<16x1xf32> to vector<16x8xf32>
    %238 = arith.mulf %235, %237 : vector<16x8xf32>
    %239 = vector.extract_strided_slice %199 {offsets = [0, 16], sizes = [16, 8], strides = [1, 1]} : vector<16x32xf32> to vector<16x8xf32>
    %240 = vector.extract_strided_slice %205 {offsets = [0, 16], sizes = [48, 8], strides = [1, 1]} : vector<48x32xf32> to vector<48x8xf32>
    %241 = vector.extract_strided_slice %206 {offsets = [0, 16], sizes = [48, 8], strides = [1, 1]} : vector<48x32xf32> to vector<48x8xf32>
    %242 = tpu.transpose %240, [1, 0] : vector<48x8xf32> -> vector<8x48xf32>
    %cst_74 = arith.constant dense<0.000000e+00> : vector<16x48xf32>
    %243 = tpu.matmul %239, %242, %cst_74 {dimension_numbers = #tpu.dot_dimension_numbers<[1], [0], [0], [1], [0, 0, 1, 1], [], []>} : vector<16x8xf32>, vector<8x48xf32>, vector<16x48xf32> -> vector<16x48xf32>
    %cst_75 = arith.constant dense<0xFF800000> : vector<16xf32>
    %244 = vector.multi_reduction <maximumf>, %243, %cst_75 [1] : vector<16x48xf32> to vector<16xf32>
    %245 = vector.shape_cast %244 : vector<16xf32> to vector<16x1xf32>
    %246 = vector.broadcast %245 : vector<16x1xf32> to vector<16x48xf32>
    %247 = arith.subf %243, %246 : vector<16x48xf32>
    %248 = math.exp %247 : vector<16x48xf32>
    %cst_76 = arith.constant dense<0.000000e+00> : vector<16xf32>
    %249 = vector.multi_reduction <add>, %248, %cst_76 [1] : vector<16x48xf32> to vector<16xf32>
    %250 = vector.shape_cast %249 : vector<16xf32> to vector<16x1xf32>
    %cst_77 = arith.constant dense<0.000000e+00> : vector<16x8xf32>
    %251 = tpu.matmul %248, %241, %cst_77 {dimension_numbers = #tpu.dot_dimension_numbers<[1], [0], [0], [1], [0, 0, 1, 1], [], []>} : vector<16x48xf32>, vector<48x8xf32>, vector<16x8xf32> -> vector<16x8xf32>
    %252 = tpu.reciprocal %250 {approx = true} : vector<16x1xf32> -> vector<16x1xf32>
    %253 = vector.broadcast %252 : vector<16x1xf32> to vector<16x8xf32>
    %254 = arith.mulf %251, %253 : vector<16x8xf32>
    %255 = vector.extract_strided_slice %199 {offsets = [0, 24], sizes = [16, 8], strides = [1, 1]} : vector<16x32xf32> to vector<16x8xf32>
    %256 = vector.extract_strided_slice %205 {offsets = [0, 24], sizes = [48, 8], strides = [1, 1]} : vector<48x32xf32> to vector<48x8xf32>
    %257 = vector.extract_strided_slice %206 {offsets = [0, 24], sizes = [48, 8], strides = [1, 1]} : vector<48x32xf32> to vector<48x8xf32>
    %258 = tpu.transpose %256, [1, 0] : vector<48x8xf32> -> vector<8x48xf32>
    %cst_78 = arith.constant dense<0.000000e+00> : vector<16x48xf32>
    %259 = tpu.matmul %255, %258, %cst_78 {dimension_numbers = #tpu.dot_dimension_numbers<[1], [0], [0], [1], [0, 0, 1, 1], [], []>} : vector<16x8xf32>, vector<8x48xf32>, vector<16x48xf32> -> vector<16x48xf32>
    %cst_79 = arith.constant dense<0xFF800000> : vector<16xf32>
    %260 = vector.multi_reduction <maximumf>, %259, %cst_79 [1] : vector<16x48xf32> to vector<16xf32>
    %261 = vector.shape_cast %260 : vector<16xf32> to vector<16x1xf32>
    %262 = vector.broadcast %261 : vector<16x1xf32> to vector<16x48xf32>
    %263 = arith.subf %259, %262 : vector<16x48xf32>
    %264 = math.exp %263 : vector<16x48xf32>
    %cst_80 = arith.constant dense<0.000000e+00> : vector<16xf32>
    %265 = vector.multi_reduction <add>, %264, %cst_80 [1] : vector<16x48xf32> to vector<16xf32>
    %266 = vector.shape_cast %265 : vector<16xf32> to vector<16x1xf32>
    %cst_81 = arith.constant dense<0.000000e+00> : vector<16x8xf32>
    %267 = tpu.matmul %264, %257, %cst_81 {dimension_numbers = #tpu.dot_dimension_numbers<[1], [0], [0], [1], [0, 0, 1, 1], [], []>} : vector<16x48xf32>, vector<48x8xf32>, vector<16x8xf32> -> vector<16x8xf32>
    %268 = tpu.reciprocal %266 {approx = true} : vector<16x1xf32> -> vector<16x1xf32>
    %269 = vector.broadcast %268 : vector<16x1xf32> to vector<16x8xf32>
    %270 = arith.mulf %267, %269 : vector<16x8xf32>
    %271 = tpu.concatenate %222, %238, %254, %270 in 1 : vector<16x8xf32>, vector<16x8xf32>, vector<16x8xf32>, vector<16x8xf32> -> vector<16x32xf32>
    %272 = vector.extract_strided_slice %190 {offsets = [0, 96], sizes = [32, 32], strides = [1, 1]} : vector<32x128xf32> to vector<32x32xf32>
    %cst_82 = arith.constant dense<0.000000e+00> : vector<16x32xf32>
    %273 = tpu.matmul %271, %272, %cst_82 {dimension_numbers = #tpu.dot_dimension_numbers<[1], [0], [0], [1], [0, 0, 1, 1], [], []>} : vector<16x32xf32>, vector<32x32xf32>, vector<16x32xf32> -> vector<16x32xf32>
    %274 = vector.extract_strided_slice %192 {offsets = [0, 96], sizes = [1, 32], strides = [1, 1]} : vector<1x128xf32> to vector<1x32xf32>
    %275 = vector.broadcast %274 : vector<1x32xf32> to vector<16x32xf32>
    %276 = arith.addf %273, %275 : vector<16x32xf32>
    %277 = arith.addf %276, %186 : vector<16x32xf32>
    %c2 = arith.constant 2 : index
    %c0_83 = arith.constant 0 : index
    %c0_84 = arith.constant 0 : index
    %278 = vector.load %arg2[%c2, %c0_83, %c0_84] : memref<9x2x32xf32, #tpu.memory_space<vmem>>, vector<1x2x32xf32>
    %279 = vector.shape_cast %278 : vector<1x2x32xf32> to vector<2x32xf32>
    %280 = vector.extract_strided_slice %279 {offsets = [0, 0], sizes = [1, 32], strides = [1, 1]} : vector<2x32xf32> to vector<1x32xf32>
    %281 = vector.extract_strided_slice %279 {offsets = [1, 0], sizes = [1, 32], strides = [1, 1]} : vector<2x32xf32> to vector<1x32xf32>
    %cst_85 = arith.constant dense<0.000000e+00> : vector<16xf32>
    %282 = vector.multi_reduction <add>, %277, %cst_85 [1] : vector<16x32xf32> to vector<16xf32>
    %283 = vector.shape_cast %282 : vector<16xf32> to vector<16x1xf32>
    %cst_86 = arith.constant 3.200000e+01 : f32
    %284 = vector.broadcast %cst_86 : f32 to vector<16x1xf32>
    %285 = arith.divf %283, %284 : vector<16x1xf32>
    %286 = vector.broadcast %285 : vector<16x1xf32> to vector<16x32xf32>
    %287 = arith.subf %277, %286 : vector<16x32xf32>
    %288 = arith.mulf %287, %287 : vector<16x32xf32>
    %cst_87 = arith.constant dense<0.000000e+00> : vector<16xf32>
    %289 = vector.multi_reduction <add>, %288, %cst_87 [1] : vector<16x32xf32> to vector<16xf32>
    %290 = vector.shape_cast %289 : vector<16xf32> to vector<16x1xf32>
    %cst_88 = arith.constant 3.200000e+01 : f32
    %291 = vector.broadcast %cst_88 : f32 to vector<16x1xf32>
    %292 = arith.divf %290, %291 : vector<16x1xf32>
    %cst_89 = arith.constant 9.99999974E-6 : f32
    %293 = vector.broadcast %cst_89 : f32 to vector<16x1xf32>
    %294 = arith.addf %292, %293 : vector<16x1xf32>
    %295 = math.rsqrt %294 : vector<16x1xf32>
    %296 = vector.broadcast %295 : vector<16x1xf32> to vector<16x32xf32>
    %297 = arith.mulf %287, %296 : vector<16x32xf32>
    %298 = vector.broadcast %280 : vector<1x32xf32> to vector<16x32xf32>
    %299 = arith.mulf %297, %298 : vector<16x32xf32>
    %300 = vector.broadcast %281 : vector<1x32xf32> to vector<16x32xf32>
    %301 = arith.addf %299, %300 : vector<16x32xf32>
    %302 = arith.addf %301, %162 : vector<16x32xf32>
    %c0_90 = arith.constant 0 : index
    %c0_91 = arith.constant 0 : index
    %303 = vector.load %arg8[%c0_90, %c0_91] : memref<32x64xf32, #tpu.memory_space<vmem>>, vector<32x64xf32>
    %c0_92 = arith.constant 0 : index
    %c0_93 = arith.constant 0 : index
    %304 = vector.load %arg9[%c0_92, %c0_93] : memref<1x64xf32, #tpu.memory_space<vmem>>, vector<1x64xf32>
    %305 = vector.extract_strided_slice %303 {offsets = [0, 0], sizes = [32, 32], strides = [1, 1]} : vector<32x64xf32> to vector<32x32xf32>
    %cst_94 = arith.constant dense<0.000000e+00> : vector<16x32xf32>
    %306 = tpu.matmul %302, %305, %cst_94 {dimension_numbers = #tpu.dot_dimension_numbers<[1], [0], [0], [1], [0, 0, 1, 1], [], []>} : vector<16x32xf32>, vector<32x32xf32>, vector<16x32xf32> -> vector<16x32xf32>
    %307 = vector.extract_strided_slice %304 {offsets = [0, 0], sizes = [1, 32], strides = [1, 1]} : vector<1x64xf32> to vector<1x32xf32>
    %308 = vector.broadcast %307 : vector<1x32xf32> to vector<16x32xf32>
    %309 = arith.addf %306, %308 : vector<16x32xf32>
    %cst_95 = arith.constant 0.000000e+00 : f32
    %310 = vector.broadcast %cst_95 : f32 to vector<16x32xf32>
    %311 = arith.maximumf %309, %310 : vector<16x32xf32>
    %312 = vector.extract_strided_slice %303 {offsets = [0, 32], sizes = [32, 32], strides = [1, 1]} : vector<32x64xf32> to vector<32x32xf32>
    %cst_96 = arith.constant dense<0.000000e+00> : vector<16x32xf32>
    %313 = tpu.matmul %311, %312, %cst_96 {dimension_numbers = #tpu.dot_dimension_numbers<[1], [0], [0], [1], [0, 0, 1, 1], [], []>} : vector<16x32xf32>, vector<32x32xf32>, vector<16x32xf32> -> vector<16x32xf32>
    %314 = vector.extract_strided_slice %304 {offsets = [0, 32], sizes = [1, 32], strides = [1, 1]} : vector<1x64xf32> to vector<1x32xf32>
    %315 = vector.broadcast %314 : vector<1x32xf32> to vector<16x32xf32>
    %316 = arith.addf %313, %315 : vector<16x32xf32>
    %317 = arith.addf %316, %301 : vector<16x32xf32>
    %c4 = arith.constant 4 : index
    %c0_97 = arith.constant 0 : index
    %c0_98 = arith.constant 0 : index
    %318 = vector.load %arg2[%c4, %c0_97, %c0_98] : memref<9x2x32xf32, #tpu.memory_space<vmem>>, vector<1x2x32xf32>
    %319 = vector.shape_cast %318 : vector<1x2x32xf32> to vector<2x32xf32>
    %320 = vector.extract_strided_slice %319 {offsets = [0, 0], sizes = [1, 32], strides = [1, 1]} : vector<2x32xf32> to vector<1x32xf32>
    %321 = vector.extract_strided_slice %319 {offsets = [1, 0], sizes = [1, 32], strides = [1, 1]} : vector<2x32xf32> to vector<1x32xf32>
    %cst_99 = arith.constant dense<0.000000e+00> : vector<16xf32>
    %322 = vector.multi_reduction <add>, %317, %cst_99 [1] : vector<16x32xf32> to vector<16xf32>
    %323 = vector.shape_cast %322 : vector<16xf32> to vector<16x1xf32>
    %cst_100 = arith.constant 3.200000e+01 : f32
    %324 = vector.broadcast %cst_100 : f32 to vector<16x1xf32>
    %325 = arith.divf %323, %324 : vector<16x1xf32>
    %326 = vector.broadcast %325 : vector<16x1xf32> to vector<16x32xf32>
    %327 = arith.subf %317, %326 : vector<16x32xf32>
    %328 = arith.mulf %327, %327 : vector<16x32xf32>
    %cst_101 = arith.constant dense<0.000000e+00> : vector<16xf32>
    %329 = vector.multi_reduction <add>, %328, %cst_101 [1] : vector<16x32xf32> to vector<16xf32>
    %330 = vector.shape_cast %329 : vector<16xf32> to vector<16x1xf32>
    %cst_102 = arith.constant 3.200000e+01 : f32
    %331 = vector.broadcast %cst_102 : f32 to vector<16x1xf32>
    %332 = arith.divf %330, %331 : vector<16x1xf32>
    %cst_103 = arith.constant 9.99999974E-6 : f32
    %333 = vector.broadcast %cst_103 : f32 to vector<16x1xf32>
    %334 = arith.addf %332, %333 : vector<16x1xf32>
    %335 = math.rsqrt %334 : vector<16x1xf32>
    %336 = vector.broadcast %335 : vector<16x1xf32> to vector<16x32xf32>
    %337 = arith.mulf %327, %336 : vector<16x32xf32>
    %338 = vector.broadcast %320 : vector<1x32xf32> to vector<16x32xf32>
    %339 = arith.mulf %337, %338 : vector<16x32xf32>
    %340 = vector.broadcast %321 : vector<1x32xf32> to vector<16x32xf32>
    %341 = arith.addf %339, %340 : vector<16x32xf32>
    %c0_104 = arith.constant 0 : index
    %c0_105 = arith.constant 0 : index
    %342 = vector.load %arg13[%c0_104, %c0_105] : memref<32x64xf32, #tpu.memory_space<vmem>>, vector<32x64xf32>
    %c0_106 = arith.constant 0 : index
    %c0_107 = arith.constant 0 : index
    %343 = vector.load %arg14[%c0_106, %c0_107] : memref<1x64xf32, #tpu.memory_space<vmem>>, vector<1x64xf32>
    %344 = vector.extract_strided_slice %342 {offsets = [0, 0], sizes = [32, 32], strides = [1, 1]} : vector<32x64xf32> to vector<32x32xf32>
    %cst_108 = arith.constant dense<0.000000e+00> : vector<16x32xf32>
    %345 = tpu.matmul %341, %344, %cst_108 {dimension_numbers = #tpu.dot_dimension_numbers<[1], [0], [0], [1], [0, 0, 1, 1], [], []>} : vector<16x32xf32>, vector<32x32xf32>, vector<16x32xf32> -> vector<16x32xf32>
    %346 = vector.extract_strided_slice %343 {offsets = [0, 0], sizes = [1, 32], strides = [1, 1]} : vector<1x64xf32> to vector<1x32xf32>
    %347 = vector.broadcast %346 : vector<1x32xf32> to vector<16x32xf32>
    %348 = arith.addf %345, %347 : vector<16x32xf32>
    %cst_109 = arith.constant 0.000000e+00 : f32
    %349 = vector.broadcast %cst_109 : f32 to vector<16x32xf32>
    %350 = arith.maximumf %348, %349 : vector<16x32xf32>
    %351 = vector.extract_strided_slice %342 {offsets = [0, 32], sizes = [32, 32], strides = [1, 1]} : vector<32x64xf32> to vector<32x32xf32>
    %cst_110 = arith.constant dense<0.000000e+00> : vector<16x32xf32>
    %352 = tpu.matmul %350, %351, %cst_110 {dimension_numbers = #tpu.dot_dimension_numbers<[1], [0], [0], [1], [0, 0, 1, 1], [], []>} : vector<16x32xf32>, vector<32x32xf32>, vector<16x32xf32> -> vector<16x32xf32>
    %353 = vector.extract_strided_slice %343 {offsets = [0, 32], sizes = [1, 32], strides = [1, 1]} : vector<1x64xf32> to vector<1x32xf32>
    %354 = vector.broadcast %353 : vector<1x32xf32> to vector<16x32xf32>
    %355 = arith.addf %352, %354 : vector<16x32xf32>
    %356 = arith.addf %355, %341 : vector<16x32xf32>
    %c0_111 = arith.constant 0 : index
    %c0_112 = arith.constant 0 : index
    %357 = vector.load %arg17[%c0_111, %c0_112] : memref<96x32xf32, #tpu.memory_space<vmem>>, vector<96x32xf32>
    %c0_113 = arith.constant 0 : index
    %c0_114 = arith.constant 0 : index
    %358 = vector.load %arg18[%c0_113, %c0_114] : memref<1x32xf32, #tpu.memory_space<vmem>>, vector<1x32xf32>
    %cst_115 = arith.constant 0.000000e+00 : f32
    %359 = vector.broadcast %cst_115 : f32 to vector<2x32xf32>
    %360 = tpu.concatenate %359, %341 in 0 : vector<2x32xf32>, vector<16x32xf32> -> vector<18x32xf32>
    %361 = vector.extract_strided_slice %360 {offsets = [0, 0], sizes = [16, 32], strides = [1, 1]} : vector<18x32xf32> to vector<16x32xf32>
    %362 = vector.extract_strided_slice %360 {offsets = [1, 0], sizes = [16, 32], strides = [1, 1]} : vector<18x32xf32> to vector<16x32xf32>
    %363 = vector.extract_strided_slice %360 {offsets = [2, 0], sizes = [16, 32], strides = [1, 1]} : vector<18x32xf32> to vector<16x32xf32>
    %364 = tpu.concatenate %361, %362, %363 in 1 : vector<16x32xf32>, vector<16x32xf32>, vector<16x32xf32> -> vector<16x96xf32>
    %cst_116 = arith.constant dense<0.000000e+00> : vector<16x32xf32>
    %365 = tpu.matmul %364, %357, %cst_116 {dimension_numbers = #tpu.dot_dimension_numbers<[1], [0], [0], [1], [0, 0, 1, 1], [], []>} : vector<16x96xf32>, vector<96x32xf32>, vector<16x32xf32> -> vector<16x32xf32>
    %366 = vector.broadcast %358 : vector<1x32xf32> to vector<16x32xf32>
    %367 = arith.addf %365, %366 : vector<16x32xf32>
    %368 = arith.addf %367, %341 : vector<16x32xf32>
    %c7 = arith.constant 7 : index
    %c0_117 = arith.constant 0 : index
    %c0_118 = arith.constant 0 : index
    %369 = vector.load %arg2[%c7, %c0_117, %c0_118] : memref<9x2x32xf32, #tpu.memory_space<vmem>>, vector<1x2x32xf32>
    %370 = vector.shape_cast %369 : vector<1x2x32xf32> to vector<2x32xf32>
    %371 = vector.extract_strided_slice %370 {offsets = [0, 0], sizes = [1, 32], strides = [1, 1]} : vector<2x32xf32> to vector<1x32xf32>
    %372 = vector.extract_strided_slice %370 {offsets = [1, 0], sizes = [1, 32], strides = [1, 1]} : vector<2x32xf32> to vector<1x32xf32>
    %cst_119 = arith.constant dense<0.000000e+00> : vector<16xf32>
    %373 = vector.multi_reduction <add>, %368, %cst_119 [1] : vector<16x32xf32> to vector<16xf32>
    %374 = vector.shape_cast %373 : vector<16xf32> to vector<16x1xf32>
    %cst_120 = arith.constant 3.200000e+01 : f32
    %375 = vector.broadcast %cst_120 : f32 to vector<16x1xf32>
    %376 = arith.divf %374, %375 : vector<16x1xf32>
    %377 = vector.broadcast %376 : vector<16x1xf32> to vector<16x32xf32>
    %378 = arith.subf %368, %377 : vector<16x32xf32>
    %379 = arith.mulf %378, %378 : vector<16x32xf32>
    %cst_121 = arith.constant dense<0.000000e+00> : vector<16xf32>
    %380 = vector.multi_reduction <add>, %379, %cst_121 [1] : vector<16x32xf32> to vector<16xf32>
    %381 = vector.shape_cast %380 : vector<16xf32> to vector<16x1xf32>
    %cst_122 = arith.constant 3.200000e+01 : f32
    %382 = vector.broadcast %cst_122 : f32 to vector<16x1xf32>
    %383 = arith.divf %381, %382 : vector<16x1xf32>
    %cst_123 = arith.constant 9.99999974E-6 : f32
    %384 = vector.broadcast %cst_123 : f32 to vector<16x1xf32>
    %385 = arith.addf %383, %384 : vector<16x1xf32>
    %386 = math.rsqrt %385 : vector<16x1xf32>
    %387 = vector.broadcast %386 : vector<16x1xf32> to vector<16x32xf32>
    %388 = arith.mulf %378, %387 : vector<16x32xf32>
    %389 = vector.broadcast %371 : vector<1x32xf32> to vector<16x32xf32>
    %390 = arith.mulf %388, %389 : vector<16x32xf32>
    %391 = vector.broadcast %372 : vector<1x32xf32> to vector<16x32xf32>
    %392 = arith.addf %390, %391 : vector<16x32xf32>
    %c5 = arith.constant 5 : index
    %c0_124 = arith.constant 0 : index
    %c0_125 = arith.constant 0 : index
    %393 = vector.load %arg2[%c5, %c0_124, %c0_125] : memref<9x2x32xf32, #tpu.memory_space<vmem>>, vector<1x2x32xf32>
    %394 = vector.shape_cast %393 : vector<1x2x32xf32> to vector<2x32xf32>
    %395 = vector.extract_strided_slice %394 {offsets = [0, 0], sizes = [1, 32], strides = [1, 1]} : vector<2x32xf32> to vector<1x32xf32>
    %396 = vector.extract_strided_slice %394 {offsets = [1, 0], sizes = [1, 32], strides = [1, 1]} : vector<2x32xf32> to vector<1x32xf32>
    %cst_126 = arith.constant dense<0.000000e+00> : vector<16xf32>
    %397 = vector.multi_reduction <add>, %356, %cst_126 [1] : vector<16x32xf32> to vector<16xf32>
    %398 = vector.shape_cast %397 : vector<16xf32> to vector<16x1xf32>
    %cst_127 = arith.constant 3.200000e+01 : f32
    %399 = vector.broadcast %cst_127 : f32 to vector<16x1xf32>
    %400 = arith.divf %398, %399 : vector<16x1xf32>
    %401 = vector.broadcast %400 : vector<16x1xf32> to vector<16x32xf32>
    %402 = arith.subf %356, %401 : vector<16x32xf32>
    %403 = arith.mulf %402, %402 : vector<16x32xf32>
    %cst_128 = arith.constant dense<0.000000e+00> : vector<16xf32>
    %404 = vector.multi_reduction <add>, %403, %cst_128 [1] : vector<16x32xf32> to vector<16xf32>
    %405 = vector.shape_cast %404 : vector<16xf32> to vector<16x1xf32>
    %cst_129 = arith.constant 3.200000e+01 : f32
    %406 = vector.broadcast %cst_129 : f32 to vector<16x1xf32>
    %407 = arith.divf %405, %406 : vector<16x1xf32>
    %cst_130 = arith.constant 9.99999974E-6 : f32
    %408 = vector.broadcast %cst_130 : f32 to vector<16x1xf32>
    %409 = arith.addf %407, %408 : vector<16x1xf32>
    %410 = math.rsqrt %409 : vector<16x1xf32>
    %411 = vector.broadcast %410 : vector<16x1xf32> to vector<16x32xf32>
    %412 = arith.mulf %402, %411 : vector<16x32xf32>
    %413 = vector.broadcast %395 : vector<1x32xf32> to vector<16x32xf32>
    %414 = arith.mulf %412, %413 : vector<16x32xf32>
    %415 = vector.broadcast %396 : vector<1x32xf32> to vector<16x32xf32>
    %416 = arith.addf %414, %415 : vector<16x32xf32>
    %c0_131 = arith.constant 0 : index
    %c0_132 = arith.constant 0 : index
    %c0_133 = arith.constant 0 : index
    %417 = vector.load %arg12[%c0_131, %c0_132, %c0_133] : memref<1x32x32xf32, #tpu.memory_space<vmem>>, vector<1x32x32xf32>
    %418 = vector.shape_cast %417 : vector<1x32x32xf32> to vector<32x32xf32>
    %c1_134 = arith.constant 1 : index
    %c0_135 = arith.constant 0 : index
    %c0_136 = arith.constant 0 : index
    %419 = vector.load %arg3[%c1_134, %c0_135, %c0_136] : memref<2x32x128xf32, #tpu.memory_space<vmem>>, vector<1x32x128xf32>
    %420 = vector.shape_cast %419 : vector<1x32x128xf32> to vector<32x128xf32>
    %c1_137 = arith.constant 1 : index
    %c0_138 = arith.constant 0 : index
    %c0_139 = arith.constant 0 : index
    %421 = vector.load %arg4[%c1_137, %c0_138, %c0_139] : memref<2x1x128xf32, #tpu.memory_space<vmem>>, vector<1x1x128xf32>
    %422 = vector.shape_cast %421 : vector<1x1x128xf32> to vector<1x128xf32>
    %423 = vector.extract_strided_slice %420 {offsets = [0, 0], sizes = [32, 32], strides = [1, 1]} : vector<32x128xf32> to vector<32x32xf32>
    %cst_140 = arith.constant dense<0.000000e+00> : vector<16x32xf32>
    %424 = tpu.matmul %416, %423, %cst_140 {dimension_numbers = #tpu.dot_dimension_numbers<[1], [0], [0], [1], [0, 0, 1, 1], [], []>} : vector<16x32xf32>, vector<32x32xf32>, vector<16x32xf32> -> vector<16x32xf32>
    %425 = vector.extract_strided_slice %422 {offsets = [0, 0], sizes = [1, 32], strides = [1, 1]} : vector<1x128xf32> to vector<1x32xf32>
    %426 = vector.broadcast %425 : vector<1x32xf32> to vector<16x32xf32>
    %427 = arith.addf %424, %426 : vector<16x32xf32>
    %cst_141 = arith.constant 0.353553385 : f32
    %428 = vector.broadcast %cst_141 : f32 to vector<16x32xf32>
    %429 = arith.mulf %427, %428 : vector<16x32xf32>
    %430 = vector.extract_strided_slice %420 {offsets = [0, 32], sizes = [32, 64], strides = [1, 1]} : vector<32x128xf32> to vector<32x64xf32>
    %cst_142 = arith.constant dense<0.000000e+00> : vector<32x64xf32>
    %431 = tpu.matmul %418, %430, %cst_142 {dimension_numbers = #tpu.dot_dimension_numbers<[1], [0], [0], [1], [0, 0, 1, 1], [], []>} : vector<32x32xf32>, vector<32x64xf32>, vector<32x64xf32> -> vector<32x64xf32>
    %432 = vector.extract_strided_slice %422 {offsets = [0, 32], sizes = [1, 64], strides = [1, 1]} : vector<1x128xf32> to vector<1x64xf32>
    %433 = vector.broadcast %432 : vector<1x64xf32> to vector<32x64xf32>
    %434 = arith.addf %431, %433 : vector<32x64xf32>
    %435 = vector.extract_strided_slice %434 {offsets = [0, 0], sizes = [32, 32], strides = [1, 1]} : vector<32x64xf32> to vector<32x32xf32>
    %436 = vector.extract_strided_slice %434 {offsets = [0, 32], sizes = [32, 32], strides = [1, 1]} : vector<32x64xf32> to vector<32x32xf32>
    %437 = vector.extract_strided_slice %429 {offsets = [0, 0], sizes = [16, 8], strides = [1, 1]} : vector<16x32xf32> to vector<16x8xf32>
    %438 = vector.extract_strided_slice %435 {offsets = [0, 0], sizes = [32, 8], strides = [1, 1]} : vector<32x32xf32> to vector<32x8xf32>
    %439 = vector.extract_strided_slice %436 {offsets = [0, 0], sizes = [32, 8], strides = [1, 1]} : vector<32x32xf32> to vector<32x8xf32>
    %440 = tpu.transpose %438, [1, 0] : vector<32x8xf32> -> vector<8x32xf32>
    %cst_143 = arith.constant dense<0.000000e+00> : vector<16x32xf32>
    %441 = tpu.matmul %437, %440, %cst_143 {dimension_numbers = #tpu.dot_dimension_numbers<[1], [0], [0], [1], [0, 0, 1, 1], [], []>} : vector<16x8xf32>, vector<8x32xf32>, vector<16x32xf32> -> vector<16x32xf32>
    %cst_144 = arith.constant dense<0xFF800000> : vector<16xf32>
    %442 = vector.multi_reduction <maximumf>, %441, %cst_144 [1] : vector<16x32xf32> to vector<16xf32>
    %443 = vector.shape_cast %442 : vector<16xf32> to vector<16x1xf32>
    %444 = vector.broadcast %443 : vector<16x1xf32> to vector<16x32xf32>
    %445 = arith.subf %441, %444 : vector<16x32xf32>
    %446 = math.exp %445 : vector<16x32xf32>
    %cst_145 = arith.constant dense<0.000000e+00> : vector<16xf32>
    %447 = vector.multi_reduction <add>, %446, %cst_145 [1] : vector<16x32xf32> to vector<16xf32>
    %448 = vector.shape_cast %447 : vector<16xf32> to vector<16x1xf32>
    %cst_146 = arith.constant dense<0.000000e+00> : vector<16x8xf32>
    %449 = tpu.matmul %446, %439, %cst_146 {dimension_numbers = #tpu.dot_dimension_numbers<[1], [0], [0], [1], [0, 0, 1, 1], [], []>} : vector<16x32xf32>, vector<32x8xf32>, vector<16x8xf32> -> vector<16x8xf32>
    %450 = tpu.reciprocal %448 {approx = true} : vector<16x1xf32> -> vector<16x1xf32>
    %451 = vector.broadcast %450 : vector<16x1xf32> to vector<16x8xf32>
    %452 = arith.mulf %449, %451 : vector<16x8xf32>
    %453 = vector.extract_strided_slice %429 {offsets = [0, 8], sizes = [16, 8], strides = [1, 1]} : vector<16x32xf32> to vector<16x8xf32>
    %454 = vector.extract_strided_slice %435 {offsets = [0, 8], sizes = [32, 8], strides = [1, 1]} : vector<32x32xf32> to vector<32x8xf32>
    %455 = vector.extract_strided_slice %436 {offsets = [0, 8], sizes = [32, 8], strides = [1, 1]} : vector<32x32xf32> to vector<32x8xf32>
    %456 = tpu.transpose %454, [1, 0] : vector<32x8xf32> -> vector<8x32xf32>
    %cst_147 = arith.constant dense<0.000000e+00> : vector<16x32xf32>
    %457 = tpu.matmul %453, %456, %cst_147 {dimension_numbers = #tpu.dot_dimension_numbers<[1], [0], [0], [1], [0, 0, 1, 1], [], []>} : vector<16x8xf32>, vector<8x32xf32>, vector<16x32xf32> -> vector<16x32xf32>
    %cst_148 = arith.constant dense<0xFF800000> : vector<16xf32>
    %458 = vector.multi_reduction <maximumf>, %457, %cst_148 [1] : vector<16x32xf32> to vector<16xf32>
    %459 = vector.shape_cast %458 : vector<16xf32> to vector<16x1xf32>
    %460 = vector.broadcast %459 : vector<16x1xf32> to vector<16x32xf32>
    %461 = arith.subf %457, %460 : vector<16x32xf32>
    %462 = math.exp %461 : vector<16x32xf32>
    %cst_149 = arith.constant dense<0.000000e+00> : vector<16xf32>
    %463 = vector.multi_reduction <add>, %462, %cst_149 [1] : vector<16x32xf32> to vector<16xf32>
    %464 = vector.shape_cast %463 : vector<16xf32> to vector<16x1xf32>
    %cst_150 = arith.constant dense<0.000000e+00> : vector<16x8xf32>
    %465 = tpu.matmul %462, %455, %cst_150 {dimension_numbers = #tpu.dot_dimension_numbers<[1], [0], [0], [1], [0, 0, 1, 1], [], []>} : vector<16x32xf32>, vector<32x8xf32>, vector<16x8xf32> -> vector<16x8xf32>
    %466 = tpu.reciprocal %464 {approx = true} : vector<16x1xf32> -> vector<16x1xf32>
    %467 = vector.broadcast %466 : vector<16x1xf32> to vector<16x8xf32>
    %468 = arith.mulf %465, %467 : vector<16x8xf32>
    %469 = vector.extract_strided_slice %429 {offsets = [0, 16], sizes = [16, 8], strides = [1, 1]} : vector<16x32xf32> to vector<16x8xf32>
    %470 = vector.extract_strided_slice %435 {offsets = [0, 16], sizes = [32, 8], strides = [1, 1]} : vector<32x32xf32> to vector<32x8xf32>
    %471 = vector.extract_strided_slice %436 {offsets = [0, 16], sizes = [32, 8], strides = [1, 1]} : vector<32x32xf32> to vector<32x8xf32>
    %472 = tpu.transpose %470, [1, 0] : vector<32x8xf32> -> vector<8x32xf32>
    %cst_151 = arith.constant dense<0.000000e+00> : vector<16x32xf32>
    %473 = tpu.matmul %469, %472, %cst_151 {dimension_numbers = #tpu.dot_dimension_numbers<[1], [0], [0], [1], [0, 0, 1, 1], [], []>} : vector<16x8xf32>, vector<8x32xf32>, vector<16x32xf32> -> vector<16x32xf32>
    %cst_152 = arith.constant dense<0xFF800000> : vector<16xf32>
    %474 = vector.multi_reduction <maximumf>, %473, %cst_152 [1] : vector<16x32xf32> to vector<16xf32>
    %475 = vector.shape_cast %474 : vector<16xf32> to vector<16x1xf32>
    %476 = vector.broadcast %475 : vector<16x1xf32> to vector<16x32xf32>
    %477 = arith.subf %473, %476 : vector<16x32xf32>
    %478 = math.exp %477 : vector<16x32xf32>
    %cst_153 = arith.constant dense<0.000000e+00> : vector<16xf32>
    %479 = vector.multi_reduction <add>, %478, %cst_153 [1] : vector<16x32xf32> to vector<16xf32>
    %480 = vector.shape_cast %479 : vector<16xf32> to vector<16x1xf32>
    %cst_154 = arith.constant dense<0.000000e+00> : vector<16x8xf32>
    %481 = tpu.matmul %478, %471, %cst_154 {dimension_numbers = #tpu.dot_dimension_numbers<[1], [0], [0], [1], [0, 0, 1, 1], [], []>} : vector<16x32xf32>, vector<32x8xf32>, vector<16x8xf32> -> vector<16x8xf32>
    %482 = tpu.reciprocal %480 {approx = true} : vector<16x1xf32> -> vector<16x1xf32>
    %483 = vector.broadcast %482 : vector<16x1xf32> to vector<16x8xf32>
    %484 = arith.mulf %481, %483 : vector<16x8xf32>
    %485 = vector.extract_strided_slice %429 {offsets = [0, 24], sizes = [16, 8], strides = [1, 1]} : vector<16x32xf32> to vector<16x8xf32>
    %486 = vector.extract_strided_slice %435 {offsets = [0, 24], sizes = [32, 8], strides = [1, 1]} : vector<32x32xf32> to vector<32x8xf32>
    %487 = vector.extract_strided_slice %436 {offsets = [0, 24], sizes = [32, 8], strides = [1, 1]} : vector<32x32xf32> to vector<32x8xf32>
    %488 = tpu.transpose %486, [1, 0] : vector<32x8xf32> -> vector<8x32xf32>
    %cst_155 = arith.constant dense<0.000000e+00> : vector<16x32xf32>
    %489 = tpu.matmul %485, %488, %cst_155 {dimension_numbers = #tpu.dot_dimension_numbers<[1], [0], [0], [1], [0, 0, 1, 1], [], []>} : vector<16x8xf32>, vector<8x32xf32>, vector<16x32xf32> -> vector<16x32xf32>
    %cst_156 = arith.constant dense<0xFF800000> : vector<16xf32>
    %490 = vector.multi_reduction <maximumf>, %489, %cst_156 [1] : vector<16x32xf32> to vector<16xf32>
    %491 = vector.shape_cast %490 : vector<16xf32> to vector<16x1xf32>
    %492 = vector.broadcast %491 : vector<16x1xf32> to vector<16x32xf32>
    %493 = arith.subf %489, %492 : vector<16x32xf32>
    %494 = math.exp %493 : vector<16x32xf32>
    %cst_157 = arith.constant dense<0.000000e+00> : vector<16xf32>
    %495 = vector.multi_reduction <add>, %494, %cst_157 [1] : vector<16x32xf32> to vector<16xf32>
    %496 = vector.shape_cast %495 : vector<16xf32> to vector<16x1xf32>
    %cst_158 = arith.constant dense<0.000000e+00> : vector<16x8xf32>
    %497 = tpu.matmul %494, %487, %cst_158 {dimension_numbers = #tpu.dot_dimension_numbers<[1], [0], [0], [1], [0, 0, 1, 1], [], []>} : vector<16x32xf32>, vector<32x8xf32>, vector<16x8xf32> -> vector<16x8xf32>
    %498 = tpu.reciprocal %496 {approx = true} : vector<16x1xf32> -> vector<16x1xf32>
    %499 = vector.broadcast %498 : vector<16x1xf32> to vector<16x8xf32>
    %500 = arith.mulf %497, %499 : vector<16x8xf32>
    %501 = tpu.concatenate %452, %468, %484, %500 in 1 : vector<16x8xf32>, vector<16x8xf32>, vector<16x8xf32>, vector<16x8xf32> -> vector<16x32xf32>
    %502 = vector.extract_strided_slice %420 {offsets = [0, 96], sizes = [32, 32], strides = [1, 1]} : vector<32x128xf32> to vector<32x32xf32>
    %cst_159 = arith.constant dense<0.000000e+00> : vector<16x32xf32>
    %503 = tpu.matmul %501, %502, %cst_159 {dimension_numbers = #tpu.dot_dimension_numbers<[1], [0], [0], [1], [0, 0, 1, 1], [], []>} : vector<16x32xf32>, vector<32x32xf32>, vector<16x32xf32> -> vector<16x32xf32>
    %504 = vector.extract_strided_slice %422 {offsets = [0, 96], sizes = [1, 32], strides = [1, 1]} : vector<1x128xf32> to vector<1x32xf32>
    %505 = vector.broadcast %504 : vector<1x32xf32> to vector<16x32xf32>
    %506 = arith.addf %503, %505 : vector<16x32xf32>
    %507 = arith.addf %506, %416 : vector<16x32xf32>
    %c6 = arith.constant 6 : index
    %c0_160 = arith.constant 0 : index
    %c0_161 = arith.constant 0 : index
    %508 = vector.load %arg2[%c6, %c0_160, %c0_161] : memref<9x2x32xf32, #tpu.memory_space<vmem>>, vector<1x2x32xf32>
    %509 = vector.shape_cast %508 : vector<1x2x32xf32> to vector<2x32xf32>
    %510 = vector.extract_strided_slice %509 {offsets = [0, 0], sizes = [1, 32], strides = [1, 1]} : vector<2x32xf32> to vector<1x32xf32>
    %511 = vector.extract_strided_slice %509 {offsets = [1, 0], sizes = [1, 32], strides = [1, 1]} : vector<2x32xf32> to vector<1x32xf32>
    %cst_162 = arith.constant dense<0.000000e+00> : vector<16xf32>
    %512 = vector.multi_reduction <add>, %507, %cst_162 [1] : vector<16x32xf32> to vector<16xf32>
    %513 = vector.shape_cast %512 : vector<16xf32> to vector<16x1xf32>
    %cst_163 = arith.constant 3.200000e+01 : f32
    %514 = vector.broadcast %cst_163 : f32 to vector<16x1xf32>
    %515 = arith.divf %513, %514 : vector<16x1xf32>
    %516 = vector.broadcast %515 : vector<16x1xf32> to vector<16x32xf32>
    %517 = arith.subf %507, %516 : vector<16x32xf32>
    %518 = arith.mulf %517, %517 : vector<16x32xf32>
    %cst_164 = arith.constant dense<0.000000e+00> : vector<16xf32>
    %519 = vector.multi_reduction <add>, %518, %cst_164 [1] : vector<16x32xf32> to vector<16xf32>
    %520 = vector.shape_cast %519 : vector<16xf32> to vector<16x1xf32>
    %cst_165 = arith.constant 3.200000e+01 : f32
    %521 = vector.broadcast %cst_165 : f32 to vector<16x1xf32>
    %522 = arith.divf %520, %521 : vector<16x1xf32>
    %cst_166 = arith.constant 9.99999974E-6 : f32
    %523 = vector.broadcast %cst_166 : f32 to vector<16x1xf32>
    %524 = arith.addf %522, %523 : vector<16x1xf32>
    %525 = math.rsqrt %524 : vector<16x1xf32>
    %526 = vector.broadcast %525 : vector<16x1xf32> to vector<16x32xf32>
    %527 = arith.mulf %517, %526 : vector<16x32xf32>
    %528 = vector.broadcast %510 : vector<1x32xf32> to vector<16x32xf32>
    %529 = arith.mulf %527, %528 : vector<16x32xf32>
    %530 = vector.broadcast %511 : vector<1x32xf32> to vector<16x32xf32>
    %531 = arith.addf %529, %530 : vector<16x32xf32>
    %532 = arith.addf %531, %392 : vector<16x32xf32>
    %c0_167 = arith.constant 0 : index
    %c0_168 = arith.constant 0 : index
    %533 = vector.load %arg15[%c0_167, %c0_168] : memref<32x128xf32, #tpu.memory_space<vmem>>, vector<32x128xf32>
    %c0_169 = arith.constant 0 : index
    %c0_170 = arith.constant 0 : index
    %534 = vector.load %arg16[%c0_169, %c0_170] : memref<1x128xf32, #tpu.memory_space<vmem>>, vector<1x128xf32>
    %535 = vector.extract_strided_slice %533 {offsets = [0, 0], sizes = [32, 96], strides = [1, 1]} : vector<32x128xf32> to vector<32x96xf32>
    %cst_171 = arith.constant dense<0.000000e+00> : vector<16x96xf32>
    %536 = tpu.matmul %532, %535, %cst_171 {dimension_numbers = #tpu.dot_dimension_numbers<[1], [0], [0], [1], [0, 0, 1, 1], [], []>} : vector<16x32xf32>, vector<32x96xf32>, vector<16x96xf32> -> vector<16x96xf32>
    %537 = vector.extract_strided_slice %534 {offsets = [0, 0], sizes = [1, 96], strides = [1, 1]} : vector<1x128xf32> to vector<1x96xf32>
    %538 = vector.broadcast %537 : vector<1x96xf32> to vector<16x96xf32>
    %539 = arith.addf %536, %538 : vector<16x96xf32>
    %540 = vector.extract_strided_slice %539 {offsets = [0, 0], sizes = [16, 32], strides = [1, 1]} : vector<16x96xf32> to vector<16x32xf32>
    %cst_172 = arith.constant 0.353553385 : f32
    %541 = vector.broadcast %cst_172 : f32 to vector<16x32xf32>
    %542 = arith.mulf %540, %541 : vector<16x32xf32>
    %543 = vector.extract_strided_slice %539 {offsets = [0, 32], sizes = [16, 32], strides = [1, 1]} : vector<16x96xf32> to vector<16x32xf32>
    %544 = vector.extract_strided_slice %539 {offsets = [0, 64], sizes = [16, 32], strides = [1, 1]} : vector<16x96xf32> to vector<16x32xf32>
    %545 = vector.extract_strided_slice %542 {offsets = [0, 0], sizes = [16, 8], strides = [1, 1]} : vector<16x32xf32> to vector<16x8xf32>
    %546 = vector.extract_strided_slice %543 {offsets = [0, 0], sizes = [16, 8], strides = [1, 1]} : vector<16x32xf32> to vector<16x8xf32>
    %547 = vector.extract_strided_slice %544 {offsets = [0, 0], sizes = [16, 8], strides = [1, 1]} : vector<16x32xf32> to vector<16x8xf32>
    %548 = tpu.transpose %546, [1, 0] : vector<16x8xf32> -> vector<8x16xf32>
    %cst_173 = arith.constant dense<0.000000e+00> : vector<16x16xf32>
    %549 = tpu.matmul %545, %548, %cst_173 {dimension_numbers = #tpu.dot_dimension_numbers<[1], [0], [0], [1], [0, 0, 1, 1], [], []>} : vector<16x8xf32>, vector<8x16xf32>, vector<16x16xf32> -> vector<16x16xf32>
    %550 = arith.addf %549, %5 : vector<16x16xf32>
    %cst_174 = arith.constant dense<0xFF800000> : vector<16xf32>
    %551 = vector.multi_reduction <maximumf>, %550, %cst_174 [1] : vector<16x16xf32> to vector<16xf32>
    %552 = vector.shape_cast %551 : vector<16xf32> to vector<16x1xf32>
    %553 = vector.broadcast %552 : vector<16x1xf32> to vector<16x16xf32>
    %554 = arith.subf %550, %553 : vector<16x16xf32>
    %555 = math.exp %554 : vector<16x16xf32>
    %cst_175 = arith.constant dense<0.000000e+00> : vector<16xf32>
    %556 = vector.multi_reduction <add>, %555, %cst_175 [1] : vector<16x16xf32> to vector<16xf32>
    %557 = vector.shape_cast %556 : vector<16xf32> to vector<16x1xf32>
    %cst_176 = arith.constant dense<0.000000e+00> : vector<16x8xf32>
    %558 = tpu.matmul %555, %547, %cst_176 {dimension_numbers = #tpu.dot_dimension_numbers<[1], [0], [0], [1], [0, 0, 1, 1], [], []>} : vector<16x16xf32>, vector<16x8xf32>, vector<16x8xf32> -> vector<16x8xf32>
    %559 = tpu.reciprocal %557 {approx = true} : vector<16x1xf32> -> vector<16x1xf32>
    %560 = vector.broadcast %559 : vector<16x1xf32> to vector<16x8xf32>
    %561 = arith.mulf %558, %560 : vector<16x8xf32>
    %562 = vector.extract_strided_slice %542 {offsets = [0, 8], sizes = [16, 8], strides = [1, 1]} : vector<16x32xf32> to vector<16x8xf32>
    %563 = vector.extract_strided_slice %543 {offsets = [0, 8], sizes = [16, 8], strides = [1, 1]} : vector<16x32xf32> to vector<16x8xf32>
    %564 = vector.extract_strided_slice %544 {offsets = [0, 8], sizes = [16, 8], strides = [1, 1]} : vector<16x32xf32> to vector<16x8xf32>
    %565 = tpu.transpose %563, [1, 0] : vector<16x8xf32> -> vector<8x16xf32>
    %cst_177 = arith.constant dense<0.000000e+00> : vector<16x16xf32>
    %566 = tpu.matmul %562, %565, %cst_177 {dimension_numbers = #tpu.dot_dimension_numbers<[1], [0], [0], [1], [0, 0, 1, 1], [], []>} : vector<16x8xf32>, vector<8x16xf32>, vector<16x16xf32> -> vector<16x16xf32>
    %567 = arith.addf %566, %5 : vector<16x16xf32>
    %cst_178 = arith.constant dense<0xFF800000> : vector<16xf32>
    %568 = vector.multi_reduction <maximumf>, %567, %cst_178 [1] : vector<16x16xf32> to vector<16xf32>
    %569 = vector.shape_cast %568 : vector<16xf32> to vector<16x1xf32>
    %570 = vector.broadcast %569 : vector<16x1xf32> to vector<16x16xf32>
    %571 = arith.subf %567, %570 : vector<16x16xf32>
    %572 = math.exp %571 : vector<16x16xf32>
    %cst_179 = arith.constant dense<0.000000e+00> : vector<16xf32>
    %573 = vector.multi_reduction <add>, %572, %cst_179 [1] : vector<16x16xf32> to vector<16xf32>
    %574 = vector.shape_cast %573 : vector<16xf32> to vector<16x1xf32>
    %cst_180 = arith.constant dense<0.000000e+00> : vector<16x8xf32>
    %575 = tpu.matmul %572, %564, %cst_180 {dimension_numbers = #tpu.dot_dimension_numbers<[1], [0], [0], [1], [0, 0, 1, 1], [], []>} : vector<16x16xf32>, vector<16x8xf32>, vector<16x8xf32> -> vector<16x8xf32>
    %576 = tpu.reciprocal %574 {approx = true} : vector<16x1xf32> -> vector<16x1xf32>
    %577 = vector.broadcast %576 : vector<16x1xf32> to vector<16x8xf32>
    %578 = arith.mulf %575, %577 : vector<16x8xf32>
    %579 = vector.extract_strided_slice %542 {offsets = [0, 16], sizes = [16, 8], strides = [1, 1]} : vector<16x32xf32> to vector<16x8xf32>
    %580 = vector.extract_strided_slice %543 {offsets = [0, 16], sizes = [16, 8], strides = [1, 1]} : vector<16x32xf32> to vector<16x8xf32>
    %581 = vector.extract_strided_slice %544 {offsets = [0, 16], sizes = [16, 8], strides = [1, 1]} : vector<16x32xf32> to vector<16x8xf32>
    %582 = tpu.transpose %580, [1, 0] : vector<16x8xf32> -> vector<8x16xf32>
    %cst_181 = arith.constant dense<0.000000e+00> : vector<16x16xf32>
    %583 = tpu.matmul %579, %582, %cst_181 {dimension_numbers = #tpu.dot_dimension_numbers<[1], [0], [0], [1], [0, 0, 1, 1], [], []>} : vector<16x8xf32>, vector<8x16xf32>, vector<16x16xf32> -> vector<16x16xf32>
    %584 = arith.addf %583, %5 : vector<16x16xf32>
    %cst_182 = arith.constant dense<0xFF800000> : vector<16xf32>
    %585 = vector.multi_reduction <maximumf>, %584, %cst_182 [1] : vector<16x16xf32> to vector<16xf32>
    %586 = vector.shape_cast %585 : vector<16xf32> to vector<16x1xf32>
    %587 = vector.broadcast %586 : vector<16x1xf32> to vector<16x16xf32>
    %588 = arith.subf %584, %587 : vector<16x16xf32>
    %589 = math.exp %588 : vector<16x16xf32>
    %cst_183 = arith.constant dense<0.000000e+00> : vector<16xf32>
    %590 = vector.multi_reduction <add>, %589, %cst_183 [1] : vector<16x16xf32> to vector<16xf32>
    %591 = vector.shape_cast %590 : vector<16xf32> to vector<16x1xf32>
    %cst_184 = arith.constant dense<0.000000e+00> : vector<16x8xf32>
    %592 = tpu.matmul %589, %581, %cst_184 {dimension_numbers = #tpu.dot_dimension_numbers<[1], [0], [0], [1], [0, 0, 1, 1], [], []>} : vector<16x16xf32>, vector<16x8xf32>, vector<16x8xf32> -> vector<16x8xf32>
    %593 = tpu.reciprocal %591 {approx = true} : vector<16x1xf32> -> vector<16x1xf32>
    %594 = vector.broadcast %593 : vector<16x1xf32> to vector<16x8xf32>
    %595 = arith.mulf %592, %594 : vector<16x8xf32>
    %596 = vector.extract_strided_slice %542 {offsets = [0, 24], sizes = [16, 8], strides = [1, 1]} : vector<16x32xf32> to vector<16x8xf32>
    %597 = vector.extract_strided_slice %543 {offsets = [0, 24], sizes = [16, 8], strides = [1, 1]} : vector<16x32xf32> to vector<16x8xf32>
    %598 = vector.extract_strided_slice %544 {offsets = [0, 24], sizes = [16, 8], strides = [1, 1]} : vector<16x32xf32> to vector<16x8xf32>
    %599 = tpu.transpose %597, [1, 0] : vector<16x8xf32> -> vector<8x16xf32>
    %cst_185 = arith.constant dense<0.000000e+00> : vector<16x16xf32>
    %600 = tpu.matmul %596, %599, %cst_185 {dimension_numbers = #tpu.dot_dimension_numbers<[1], [0], [0], [1], [0, 0, 1, 1], [], []>} : vector<16x8xf32>, vector<8x16xf32>, vector<16x16xf32> -> vector<16x16xf32>
    %601 = arith.addf %600, %5 : vector<16x16xf32>
    %cst_186 = arith.constant dense<0xFF800000> : vector<16xf32>
    %602 = vector.multi_reduction <maximumf>, %601, %cst_186 [1] : vector<16x16xf32> to vector<16xf32>
    %603 = vector.shape_cast %602 : vector<16xf32> to vector<16x1xf32>
    %604 = vector.broadcast %603 : vector<16x1xf32> to vector<16x16xf32>
    %605 = arith.subf %601, %604 : vector<16x16xf32>
    %606 = math.exp %605 : vector<16x16xf32>
    %cst_187 = arith.constant dense<0.000000e+00> : vector<16xf32>
    %607 = vector.multi_reduction <add>, %606, %cst_187 [1] : vector<16x16xf32> to vector<16xf32>
    %608 = vector.shape_cast %607 : vector<16xf32> to vector<16x1xf32>
    %cst_188 = arith.constant dense<0.000000e+00> : vector<16x8xf32>
    %609 = tpu.matmul %606, %598, %cst_188 {dimension_numbers = #tpu.dot_dimension_numbers<[1], [0], [0], [1], [0, 0, 1, 1], [], []>} : vector<16x16xf32>, vector<16x8xf32>, vector<16x8xf32> -> vector<16x8xf32>
    %610 = tpu.reciprocal %608 {approx = true} : vector<16x1xf32> -> vector<16x1xf32>
    %611 = vector.broadcast %610 : vector<16x1xf32> to vector<16x8xf32>
    %612 = arith.mulf %609, %611 : vector<16x8xf32>
    %613 = tpu.concatenate %561, %578, %595, %612 in 1 : vector<16x8xf32>, vector<16x8xf32>, vector<16x8xf32>, vector<16x8xf32> -> vector<16x32xf32>
    %614 = vector.extract_strided_slice %533 {offsets = [0, 96], sizes = [32, 32], strides = [1, 1]} : vector<32x128xf32> to vector<32x32xf32>
    %cst_189 = arith.constant dense<0.000000e+00> : vector<16x32xf32>
    %615 = tpu.matmul %613, %614, %cst_189 {dimension_numbers = #tpu.dot_dimension_numbers<[1], [0], [0], [1], [0, 0, 1, 1], [], []>} : vector<16x32xf32>, vector<32x32xf32>, vector<16x32xf32> -> vector<16x32xf32>
    %616 = vector.extract_strided_slice %534 {offsets = [0, 96], sizes = [1, 32], strides = [1, 1]} : vector<1x128xf32> to vector<1x32xf32>
    %617 = vector.broadcast %616 : vector<1x32xf32> to vector<16x32xf32>
    %618 = arith.addf %615, %617 : vector<16x32xf32>
    %619 = arith.addf %618, %531 : vector<16x32xf32>
    %c8 = arith.constant 8 : index
    %c0_190 = arith.constant 0 : index
    %c0_191 = arith.constant 0 : index
    %620 = vector.load %arg2[%c8, %c0_190, %c0_191] : memref<9x2x32xf32, #tpu.memory_space<vmem>>, vector<1x2x32xf32>
    %621 = vector.shape_cast %620 : vector<1x2x32xf32> to vector<2x32xf32>
    %622 = vector.extract_strided_slice %621 {offsets = [0, 0], sizes = [1, 32], strides = [1, 1]} : vector<2x32xf32> to vector<1x32xf32>
    %623 = vector.extract_strided_slice %621 {offsets = [1, 0], sizes = [1, 32], strides = [1, 1]} : vector<2x32xf32> to vector<1x32xf32>
    %cst_192 = arith.constant dense<0.000000e+00> : vector<16xf32>
    %624 = vector.multi_reduction <add>, %619, %cst_192 [1] : vector<16x32xf32> to vector<16xf32>
    %625 = vector.shape_cast %624 : vector<16xf32> to vector<16x1xf32>
    %cst_193 = arith.constant 3.200000e+01 : f32
    %626 = vector.broadcast %cst_193 : f32 to vector<16x1xf32>
    %627 = arith.divf %625, %626 : vector<16x1xf32>
    %628 = vector.broadcast %627 : vector<16x1xf32> to vector<16x32xf32>
    %629 = arith.subf %619, %628 : vector<16x32xf32>
    %630 = arith.mulf %629, %629 : vector<16x32xf32>
    %cst_194 = arith.constant dense<0.000000e+00> : vector<16xf32>
    %631 = vector.multi_reduction <add>, %630, %cst_194 [1] : vector<16x32xf32> to vector<16xf32>
    %632 = vector.shape_cast %631 : vector<16xf32> to vector<16x1xf32>
    %cst_195 = arith.constant 3.200000e+01 : f32
    %633 = vector.broadcast %cst_195 : f32 to vector<16x1xf32>
    %634 = arith.divf %632, %633 : vector<16x1xf32>
    %cst_196 = arith.constant 9.99999974E-6 : f32
    %635 = vector.broadcast %cst_196 : f32 to vector<16x1xf32>
    %636 = arith.addf %634, %635 : vector<16x1xf32>
    %637 = math.rsqrt %636 : vector<16x1xf32>
    %638 = vector.broadcast %637 : vector<16x1xf32> to vector<16x32xf32>
    %639 = arith.mulf %629, %638 : vector<16x32xf32>
    %640 = vector.broadcast %622 : vector<1x32xf32> to vector<16x32xf32>
    %641 = arith.mulf %639, %640 : vector<16x32xf32>
    %642 = vector.broadcast %623 : vector<1x32xf32> to vector<16x32xf32>
    %643 = arith.addf %641, %642 : vector<16x32xf32>
    %c0_197 = arith.constant 0 : index
    %c0_198 = arith.constant 0 : index
    %c0_199 = arith.constant 0 : index
    %644 = vector.load %arg19[%c0_197, %c0_198, %c0_199] : memref<1x16x32xf32, #tpu.memory_space<vmem>>, vector<1x16x32xf32>
    %645 = vector.shape_cast %644 : vector<1x16x32xf32> to vector<16x32xf32>
    %646 = vector.shape_cast %643 : vector<16x32xf32> to vector<1x16x32xf32>
    tpu.vector_store %arg19[%c0_197, %c0_198, %c0_199], %646 {strides = array<i32>} : memref<1x16x32xf32, #tpu.memory_space<vmem>>, vector<1x16x32xf32>,
    return
  }
  func.func @transform_0(%arg0: i32) -> (i32, i32, i32) {
    %c0_i32 = arith.constant 0 : i32
    %c0_i32_0 = arith.constant 0 : i32
    %c0_i32_1 = arith.constant 0 : i32
    return %arg0, %c0_i32, %c0_i32_0 : i32, i32, i32
  }
  func.func @transform_1(%arg0: i32) -> (i32, i32, i32) {
    %c0_i32 = arith.constant 0 : i32
    %c0_i32_0 = arith.constant 0 : i32
    %c0_i32_1 = arith.constant 0 : i32
    %c0_i32_2 = arith.constant 0 : i32
    return %c0_i32, %c0_i32_0, %c0_i32_1 : i32, i32, i32
  }
  func.func @transform_2(%arg0: i32) -> (i32, i32, i32) {
    %c0_i32 = arith.constant 0 : i32
    %c0_i32_0 = arith.constant 0 : i32
    %c0_i32_1 = arith.constant 0 : i32
    %c0_i32_2 = arith.constant 0 : i32
    return %c0_i32, %c0_i32_0, %c0_i32_1 : i32, i32, i32
  }
  func.func @transform_3(%arg0: i32) -> (i32, i32, i32) {
    %c0_i32 = arith.constant 0 : i32
    %c0_i32_0 = arith.constant 0 : i32
    %c0_i32_1 = arith.constant 0 : i32
    %c0_i32_2 = arith.constant 0 : i32
    return %c0_i32, %c0_i32_0, %c0_i32_1 : i32, i32, i32
  }
  func.func @transform_4(%arg0: i32) -> (i32, i32, i32) {
    %c0_i32 = arith.constant 0 : i32
    %c0_i32_0 = arith.constant 0 : i32
    %c0_i32_1 = arith.constant 0 : i32
    return %arg0, %c0_i32, %c0_i32_0 : i32, i32, i32
  }
  func.func @transform_5(%arg0: i32) -> (i32, i32) {
    %c0_i32 = arith.constant 0 : i32
    %c0_i32_0 = arith.constant 0 : i32
    %c0_i32_1 = arith.constant 0 : i32
    return %c0_i32, %c0_i32_0 : i32, i32
  }
  func.func @transform_6(%arg0: i32) -> (i32, i32) {
    %c0_i32 = arith.constant 0 : i32
    %c0_i32_0 = arith.constant 0 : i32
    %c0_i32_1 = arith.constant 0 : i32
    return %c0_i32, %c0_i32_0 : i32, i32
  }
  func.func @transform_7(%arg0: i32) -> (i32, i32) {
    %c0_i32 = arith.constant 0 : i32
    %c0_i32_0 = arith.constant 0 : i32
    %c0_i32_1 = arith.constant 0 : i32
    return %c0_i32, %c0_i32_0 : i32, i32
  }
  func.func @transform_8(%arg0: i32) -> (i32, i32) {
    %c0_i32 = arith.constant 0 : i32
    %c0_i32_0 = arith.constant 0 : i32
    %c0_i32_1 = arith.constant 0 : i32
    return %c0_i32, %c0_i32_0 : i32, i32
  }
  func.func @transform_9(%arg0: i32) -> (i32, i32) {
    %c0_i32 = arith.constant 0 : i32
    %c0_i32_0 = arith.constant 0 : i32
    %c0_i32_1 = arith.constant 0 : i32
    return %c0_i32, %c0_i32_0 : i32, i32
  }
  func.func @transform_10(%arg0: i32) -> (i32, i32) {
    %c0_i32 = arith.constant 0 : i32
    %c0_i32_0 = arith.constant 0 : i32
    %c0_i32_1 = arith.constant 0 : i32
    return %c0_i32, %c0_i32_0 : i32, i32
  }
  func.func @transform_11(%arg0: i32) -> (i32, i32, i32) {
    %c0_i32 = arith.constant 0 : i32
    %c0_i32_0 = arith.constant 0 : i32
    %c0_i32_1 = arith.constant 0 : i32
    return %arg0, %c0_i32, %c0_i32_0 : i32, i32, i32
  }
  func.func @transform_12(%arg0: i32) -> (i32, i32) {
    %c0_i32 = arith.constant 0 : i32
    %c0_i32_0 = arith.constant 0 : i32
    %c0_i32_1 = arith.constant 0 : i32
    return %c0_i32, %c0_i32_0 : i32, i32
  }
  func.func @transform_13(%arg0: i32) -> (i32, i32) {
    %c0_i32 = arith.constant 0 : i32
    %c0_i32_0 = arith.constant 0 : i32
    %c0_i32_1 = arith.constant 0 : i32
    return %c0_i32, %c0_i32_0 : i32, i32
  }
  func.func @transform_14(%arg0: i32) -> (i32, i32) {
    %c0_i32 = arith.constant 0 : i32
    %c0_i32_0 = arith.constant 0 : i32
    %c0_i32_1 = arith.constant 0 : i32
    return %c0_i32, %c0_i32_0 : i32, i32
  }
  func.func @transform_15(%arg0: i32) -> (i32, i32) {
    %c0_i32 = arith.constant 0 : i32
    %c0_i32_0 = arith.constant 0 : i32
    %c0_i32_1 = arith.constant 0 : i32
    return %c0_i32, %c0_i32_0 : i32, i32
  }
  func.func @transform_16(%arg0: i32) -> (i32, i32) {
    %c0_i32 = arith.constant 0 : i32
    %c0_i32_0 = arith.constant 0 : i32
    %c0_i32_1 = arith.constant 0 : i32
    return %c0_i32, %c0_i32_0 : i32, i32
  }
  func.func @transform_17(%arg0: i32) -> (i32, i32) {
    %c0_i32 = arith.constant 0 : i32
    %c0_i32_0 = arith.constant 0 : i32
    %c0_i32_1 = arith.constant 0 : i32
    return %c0_i32, %c0_i32_0 : i32, i32
  }
  func.func @transform_18(%arg0: i32) -> (i32, i32, i32) {
    %c0_i32 = arith.constant 0 : i32
    %c0_i32_0 = arith.constant 0 : i32
    %c0_i32_1 = arith.constant 0 : i32
    return %arg0, %c0_i32, %c0_i32_0 : i32, i32, i32
  }
}

</mosaic_0001>

<llo_original>
// kernel: tpu_custom_call.1
$region0: #{tpu_custom_call.1}
  #allocation0 [shape = 'u32[]', space=smem, size = 0x4, offset = 0x4, fixed_abs, tag = 'smem constant byte address 0x4 - core index']
  #allocation1 [shape = 'u32[144,128]{1,0:T(1,128)}', space=vmem, size = 0x12000, scoped, tag = 'internal scratch']
  %s0 = inlined_call_operand.vmem [shape: f32[2,16,32], index: 0, kind: input, shape index: {}]
  %s1 = inlined_call_operand.vmem [shape: f32[9,2,32], index: 1, kind: input, shape index: {}]
  %s2 = inlined_call_operand.vmem [shape: f32[2,32,128], index: 2, kind: input, shape index: {}]
  %s3 = inlined_call_operand.vmem [shape: f32[2,1,128], index: 3, kind: input, shape index: {}]
  %s4 = inlined_call_operand.vmem [shape: f32[2,48,32], index: 4, kind: input, shape index: {}]
  %s5 = inlined_call_operand.vmem [shape: f32[32,128], index: 5, kind: input, shape index: {}]
  %s6 = inlined_call_operand.vmem [shape: f32[1,128], index: 6, kind: input, shape index: {}]
  %s7 = inlined_call_operand.vmem [shape: f32[32,64], index: 7, kind: input, shape index: {}]
  %s8 = inlined_call_operand.vmem [shape: f32[1,64], index: 8, kind: input, shape index: {}]
  %s9 = inlined_call_operand.vmem [shape: f32[352,32], index: 9, kind: input, shape index: {}]
  %s10 = inlined_call_operand.vmem [shape: f32[1,32], index: 10, kind: input, shape index: {}]
  %s11 = inlined_call_operand.vmem [shape: f32[2,32,32], index: 11, kind: input, shape index: {}]
  %s12 = inlined_call_operand.vmem [shape: f32[32,64], index: 12, kind: input, shape index: {}]
  %s13 = inlined_call_operand.vmem [shape: f32[1,64], index: 13, kind: input, shape index: {}]
  %s14 = inlined_call_operand.vmem [shape: f32[32,128], index: 14, kind: input, shape index: {}]
  %s15 = inlined_call_operand.vmem [shape: f32[1,128], index: 15, kind: input, shape index: {}]
  %s16 = inlined_call_operand.vmem [shape: f32[96,32], index: 16, kind: input, shape index: {}]
  %s17 = inlined_call_operand.vmem [shape: f32[1,32], index: 17, kind: input, shape index: {}]
  %s18 = inlined_call_operand.hbm [shape: f32[2,16,32], index: 18, kind: output, shape index: {}]
  %s19 = sld [smem:[#allocation0]]
  $region105: #{tpu_custom_call.1} parent=0
    _
  %s21 = ssub.s32 1, %s19
  %s22 = scalar_select 0, %s21, %s19
  $region1: #{tpu_custom_call.1} parent=0
    #allocation2 [shape = 'u8[16384]{0}', space=vmem, size = 0x4000, scoped, tag = 'output window, operand 0']
    #allocation3 [shape = 's32[2]{0}', space=sflag, size = 0x8, scoped, tag = 'scoped memory for tpu_custom_call.1']
    %23 = vsyncpa [#allocation3], 0
    %s24 = scalar_lea.sflag [#allocation3], 1
    %25 = vsyncpa %s24, 0
    loop: start=0, step=1, limit=4
    $region2: #{tpu_custom_call.1} parent=1 // loop_pre_header
      _
    $region3: #{tpu_custom_call.1} parent=1 // loop_header
      %s27 = sphi 0, %s31
      %p28 = scmp.ge.s32.totalorder %s27, 4
      %s37 = sphi 0, %s39
      %s40 = sphi 0, %s37
      %s41 = sphi 0, %s40
      %s57 = sphi 0, %s41
      %s61 = sphi 0, %s61
      %s63 = sphi 0, %s61
      %s64 = sphi 0, %s63
      %s78 = sphi 0, %s64
      %s82 = sphi 0, %s82
      %s84 = sphi 0, %s82
      %s85 = sphi 0, %s84
      %s99 = sphi 0, %s85
      %s103 = sphi 0, %s103
      %s105 = sphi 0, %s103
      %s106 = sphi 0, %s105
      %s120 = sphi 0, %s106
      %s126 = sphi 0, %s128
      %s129 = sphi 0, %s126
      %s130 = sphi 0, %s129
      %s146 = sphi 0, %s130
      %s150 = sphi 0, %s150
      %s152 = sphi 0, %s150
      %s153 = sphi 0, %s152
      %s167 = sphi 0, %s153
      %s171 = sphi 0, %s171
      %s173 = sphi 0, %s171
      %s174 = sphi 0, %s173
      %s188 = sphi 0, %s174
      %s192 = sphi 0, %s192
      %s194 = sphi 0, %s192
      %s195 = sphi 0, %s194
      %s209 = sphi 0, %s195
      %s213 = sphi 0, %s213
      %s215 = sphi 0, %s213
      %s216 = sphi 0, %s215
      %s230 = sphi 0, %s216
      %s234 = sphi 0, %s234
      %s236 = sphi 0, %s234
      %s237 = sphi 0, %s236
      %s251 = sphi 0, %s237
      %s255 = sphi 0, %s255
      %s257 = sphi 0, %s255
      %s258 = sphi 0, %s257
      %s272 = sphi 0, %s258
      %s278 = sphi 0, %s280
      %s281 = sphi 0, %s278
      %s282 = sphi 0, %s281
      %s298 = sphi 0, %s282
      %s302 = sphi 0, %s302
      %s304 = sphi 0, %s302
      %s305 = sphi 0, %s304
      %s319 = sphi 0, %s305
      %s323 = sphi 0, %s323
      %s325 = sphi 0, %s323
      %s326 = sphi 0, %s325
      %s340 = sphi 0, %s326
      %s344 = sphi 0, %s344
      %s346 = sphi 0, %s344
      %s347 = sphi 0, %s346
      %s361 = sphi 0, %s347
      %s365 = sphi 0, %s365
      %s367 = sphi 0, %s365
      %s368 = sphi 0, %s367
      %s382 = sphi 0, %s368
      %s386 = sphi 0, %s386
      %s388 = sphi 0, %s386
      %s389 = sphi 0, %s388
      %s403 = sphi 0, %s389
      %s407 = sphi 0, %s407
      %s409 = sphi 0, %s407
      %s410 = sphi 0, %s409
      %s424 = sphi 0, %s410
      %s430 = sphi 0, %s432
      %s433 = sphi 0, %s430
      %s434 = sphi 0, %s433
      %s450 = sphi 0, %s434
    $region4: #{tpu_custom_call.1} parent=1 // loop_header_branch
      %30 = sbr.rel (%p28) target = $region8
    $region5: #{tpu_custom_call.1} parent=1 // loop_body
      %s32 = ssub.s32 %s27, 1
      %s33 = ssub.s32 %s27, 2
      %s34 = sadd.s32 %s27, 1
      %s35 = ssub.s32 %s27, %s34
      %p36 = scmp.eq.s32.totalorder %s35, 0
      %s38 = sadd.s32 %s37, 1
      %s39 = scalar_select %p36, %s37, %s38
      %p42 = pneg %p36
      %p43 = scmp.eq.s32.totalorder %s27, 1
      %p44 = por %p42, %p43
      %p45 = scmp.ne.s32.totalorder %s37, %s40
      %p46 = scmp.eq.s32.totalorder %s27, 0
      %p47 = por %p45, %p46
      %p48 = scmp.ne.s32.totalorder %s37, %s40
      %p49 = scmp.eq.s32.totalorder %s32, 1
      %p50 = por %p48, %p49
      %p51 = scmp.ne.s32.totalorder %s40, %s41
      %p52 = scmp.eq.s32.totalorder %s32, 0
      %p53 = por %p51, %p52
      %p54 = scmp.ne.s32.totalorder %s40, %s41
      %p55 = scmp.eq.s32.totalorder %s33, 1
      %p56 = por %p54, %p55
      %p58 = scmp.ne.s32.totalorder %s41, %s57
      %p59 = scmp.eq.s32.totalorder %s33, 0
      %p60 = por %p58, %p59
      %s62 = sadd.s32 %s61, 1
      %p65 = scmp.eq.s32.totalorder %s27, 1
      %p66 = scmp.ne.s32.totalorder %s61, %s63
      %p67 = scmp.eq.s32.totalorder %s27, 0
      %p68 = por %p66, %p67
      %p69 = scmp.ne.s32.totalorder %s61, %s63
      %p70 = scmp.eq.s32.totalorder %s32, 1
      %p71 = por %p69, %p70
      %p72 = scmp.ne.s32.totalorder %s63, %s64
      %p73 = scmp.eq.s32.totalorder %s32, 0
      %p74 = por %p72, %p73
      %p75 = scmp.ne.s32.totalorder %s63, %s64
      %p76 = scmp.eq.s32.totalorder %s33, 1
      %p77 = por %p75, %p76
      %p79 = scmp.ne.s32.totalorder %s64, %s78
      %p80 = scmp.eq.s32.totalorder %s33, 0
      %p81 = por %p79, %p80
      %s83 = sadd.s32 %s82, 1
      %p86 = scmp.eq.s32.totalorder %s27, 1
      %p87 = scmp.ne.s32.totalorder %s82, %s84
      %p88 = scmp.eq.s32.totalorder %s27, 0
      %p89 = por %p87, %p88
      %p90 = scmp.ne.s32.totalorder %s82, %s84
      %p91 = scmp.eq.s32.totalorder %s32, 1
      %p92 = por %p90, %p91
      %p93 = scmp.ne.s32.totalorder %s84, %s85
      %p94 = scmp.eq.s32.totalorder %s32, 0
      %p95 = por %p93, %p94
      %p96 = scmp.ne.s32.totalorder %s84, %s85
      %p97 = scmp.eq.s32.totalorder %s33, 1
      %p98 = por %p96, %p97
      %p100 = scmp.ne.s32.totalorder %s85, %s99
      %p101 = scmp.eq.s32.totalorder %s33, 0
      %p102 = por %p100, %p101
      %s104 = sadd.s32 %s103, 1
      %p107 = scmp.eq.s32.totalorder %s27, 1
      %p108 = scmp.ne.s32.totalorder %s103, %s105
      %p109 = scmp.eq.s32.totalorder %s27, 0
      %p110 = por %p108, %p109
      %p111 = scmp.ne.s32.totalorder %s103, %s105
      %p112 = scmp.eq.s32.totalorder %s32, 1
      %p113 = por %p111, %p112
      %p114 = scmp.ne.s32.totalorder %s105, %s106
      %p115 = scmp.eq.s32.totalorder %s32, 0
      %p116 = por %p114, %p115
      %p117 = scmp.ne.s32.totalorder %s105, %s106
      %p118 = scmp.eq.s32.totalorder %s33, 1
      %p119 = por %p117, %p118
      %p121 = scmp.ne.s32.totalorder %s106, %s120
      %p122 = scmp.eq.s32.totalorder %s33, 0
      %p123 = por %p121, %p122
      %s124 = ssub.s32 %s27, %s34
      %p125 = scmp.eq.s32.totalorder %s124, 0
      %s127 = sadd.s32 %s126, 1
      %s128 = scalar_select %p125, %s126, %s127
      %p131 = pneg %p125
      %p132 = scmp.eq.s32.totalorder %s27, 1
      %p133 = por %p131, %p132
      %p134 = scmp.ne.s32.totalorder %s126, %s129
      %p135 = scmp.eq.s32.totalorder %s27, 0
      %p136 = por %p134, %p135
      %p137 = scmp.ne.s32.totalorder %s126, %s129
      %p138 = scmp.eq.s32.totalorder %s32, 1
      %p139 = por %p137, %p138
      %p140 = scmp.ne.s32.totalorder %s129, %s130
      %p141 = scmp.eq.s32.totalorder %s32, 0
      %p142 = por %p140, %p141
      %p143 = scmp.ne.s32.totalorder %s129, %s130
      %p144 = scmp.eq.s32.totalorder %s33, 1
      %p145 = por %p143, %p144
      %p147 = scmp.ne.s32.totalorder %s130, %s146
      %p148 = scmp.eq.s32.totalorder %s33, 0
      %p149 = por %p147, %p148
      %s151 = sadd.s32 %s150, 1
      %p154 = scmp.eq.s32.totalorder %s27, 1
      %p155 = scmp.ne.s32.totalorder %s150, %s152
      %p156 = scmp.eq.s32.totalorder %s27, 0
      %p157 = por %p155, %p156
      %p158 = scmp.ne.s32.totalorder %s150, %s152
      %p159 = scmp.eq.s32.totalorder %s32, 1
      %p160 = por %p158, %p159
      %p161 = scmp.ne.s32.totalorder %s152, %s153
      %p162 = scmp.eq.s32.totalorder %s32, 0
      %p163 = por %p161, %p162
      %p164 = scmp.ne.s32.totalorder %s152, %s153
      %p165 = scmp.eq.s32.totalorder %s33, 1
      %p166 = por %p164, %p165
      %p168 = scmp.ne.s32.totalorder %s153, %s167
      %p169 = scmp.eq.s32.totalorder %s33, 0
      %p170 = por %p168, %p169
      %s172 = sadd.s32 %s171, 1
      %p175 = scmp.eq.s32.totalorder %s27, 1
      %p176 = scmp.ne.s32.totalorder %s171, %s173
      %p177 = scmp.eq.s32.totalorder %s27, 0
      %p178 = por %p176, %p177
      %p179 = scmp.ne.s32.totalorder %s171, %s173
      %p180 = scmp.eq.s32.totalorder %s32, 1
      %p181 = por %p179, %p180
      %p182 = scmp.ne.s32.totalorder %s173, %s174
      %p183 = scmp.eq.s32.totalorder %s32, 0
      %p184 = por %p182, %p183
      %p185 = scmp.ne.s32.totalorder %s173, %s174
      %p186 = scmp.eq.s32.totalorder %s33, 1
      %p187 = por %p185, %p186
      %p189 = scmp.ne.s32.totalorder %s174, %s188
      %p190 = scmp.eq.s32.totalorder %s33, 0
      %p191 = por %p189, %p190
      %s193 = sadd.s32 %s192, 1
      %p196 = scmp.eq.s32.totalorder %s27, 1
      %p197 = scmp.ne.s32.totalorder %s192, %s194
      %p198 = scmp.eq.s32.totalorder %s27, 0
      %p199 = por %p197, %p198
      %p200 = scmp.ne.s32.totalorder %s192, %s194
      %p201 = scmp.eq.s32.totalorder %s32, 1
      %p202 = por %p200, %p201
      %p203 = scmp.ne.s32.totalorder %s194, %s195
      %p204 = scmp.eq.s32.totalorder %s32, 0
      %p205 = por %p203, %p204
      %p206 = scmp.ne.s32.totalorder %s194, %s195
      %p207 = scmp.eq.s32.totalorder %s33, 1
      %p208 = por %p206, %p207
      %p210 = scmp.ne.s32.totalorder %s195, %s209
      %p211 = scmp.eq.s32.totalorder %s33, 0
      %p212 = por %p210, %p211
      %s214 = sadd.s32 %s213, 1
      %p217 = scmp.eq.s32.totalorder %s27, 1
      %p218 = scmp.ne.s32.totalorder %s213, %s215
      %p219 = scmp.eq.s32.totalorder %s27, 0
      %p220 = por %p218, %p219
      %p221 = scmp.ne.s32.totalorder %s213, %s215
      %p222 = scmp.eq.s32.totalorder %s32, 1
      %p223 = por %p221, %p222
      %p224 = scmp.ne.s32.totalorder %s215, %s216
      %p225 = scmp.eq.s32.totalorder %s32, 0
      %p226 = por %p224, %p225
      %p227 = scmp.ne.s32.totalorder %s215, %s216
      %p228 = scmp.eq.s32.totalorder %s33, 1
      %p229 = por %p227, %p228
      %p231 = scmp.ne.s32.totalorder %s216, %s230
      %p232 = scmp.eq.s32.totalorder %s33, 0
      %p233 = por %p231, %p232
      %s235 = sadd.s32 %s234, 1
      %p238 = scmp.eq.s32.totalorder %s27, 1
      %p239 = scmp.ne.s32.totalorder %s234, %s236
      %p240 = scmp.eq.s32.totalorder %s27, 0
      %p241 = por %p239, %p240
      %p242 = scmp.ne.s32.totalorder %s234, %s236
      %p243 = scmp.eq.s32.totalorder %s32, 1
      %p244 = por %p242, %p243
      %p245 = scmp.ne.s32.totalorder %s236, %s237
      %p246 = scmp.eq.s32.totalorder %s32, 0
      %p247 = por %p245, %p246
      %p248 = scmp.ne.s32.totalorder %s236, %s237
      %p249 = scmp.eq.s32.totalorder %s33, 1
      %p250 = por %p248, %p249
      %p252 = scmp.ne.s32.totalorder %s237, %s251
      %p253 = scmp.eq.s32.totalorder %s33, 0
      %p254 = por %p252, %p253
      %s256 = sadd.s32 %s255, 1
      %p259 = scmp.eq.s32.totalorder %s27, 1
      %p260 = scmp.ne.s32.totalorder %s255, %s257
      %p261 = scmp.eq.s32.totalorder %s27, 0
      %p262 = por %p260, %p261
      %p263 = scmp.ne.s32.totalorder %s255, %s257
      %p264 = scmp.eq.s32.totalorder %s32, 1
      %p265 = por %p263, %p264
      %p266 = scmp.ne.s32.totalorder %s257, %s258
      %p267 = scmp.eq.s32.totalorder %s32, 0
      %p268 = por %p266, %p267
      %p269 = scmp.ne.s32.totalorder %s257, %s258
      %p270 = scmp.eq.s32.totalorder %s33, 1
      %p271 = por %p269, %p270
      %p273 = scmp.ne.s32.totalorder %s258, %s272
      %p274 = scmp.eq.s32.totalorder %s33, 0
      %p275 = por %p273, %p274
      %s276 = ssub.s32 %s27, %s34
      %p277 = scmp.eq.s32.totalorder %s276, 0
      %s279 = sadd.s32 %s278, 1
      %s280 = scalar_select %p277, %s278, %s279
      %p283 = pneg %p277
      %p284 = scmp.eq.s32.totalorder %s27, 1
      %p285 = por %p283, %p284
      %p286 = scmp.ne.s32.totalorder %s278, %s281
      %p287 = scmp.eq.s32.totalorder %s27, 0
      %p288 = por %p286, %p287
      %p289 = scmp.ne.s32.totalorder %s278, %s281
      %p290 = scmp.eq.s32.totalorder %s32, 1
      %p291 = por %p289, %p290
      %p292 = scmp.ne.s32.totalorder %s281, %s282
      %p293 = scmp.eq.s32.totalorder %s32, 0
      %p294 = por %p292, %p293
      %p295 = scmp.ne.s32.totalorder %s281, %s282
      %p296 = scmp.eq.s32.totalorder %s33, 1
      %p297 = por %p295, %p296
      %p299 = scmp.ne.s32.totalorder %s282, %s298
      %p300 = scmp.eq.s32.totalorder %s33, 0
      %p301 = por %p299, %p300
      %s303 = sadd.s32 %s302, 1
      %p306 = scmp.eq.s32.totalorder %s27, 1
      %p307 = scmp.ne.s32.totalorder %s302, %s304
      %p308 = scmp.eq.s32.totalorder %s27, 0
      %p309 = por %p307, %p308
      %p310 = scmp.ne.s32.totalorder %s302, %s304
      %p311 = scmp.eq.s32.totalorder %s32, 1
      %p312 = por %p310, %p311
      %p313 = scmp.ne.s32.totalorder %s304, %s305
      %p314 = scmp.eq.s32.totalorder %s32, 0
      %p315 = por %p313, %p314
      %p316 = scmp.ne.s32.totalorder %s304, %s305
      %p317 = scmp.eq.s32.totalorder %s33, 1
      %p318 = por %p316, %p317
      %p320 = scmp.ne.s32.totalorder %s305, %s319
      %p321 = scmp.eq.s32.totalorder %s33, 0
      %p322 = por %p320, %p321
      %s324 = sadd.s32 %s323, 1
      %p327 = scmp.eq.s32.totalorder %s27, 1
      %p328 = scmp.ne.s32.totalorder %s323, %s325
      %p329 = scmp.eq.s32.totalorder %s27, 0
      %p330 = por %p328, %p329
      %p331 = scmp.ne.s32.totalorder %s323, %s325
      %p332 = scmp.eq.s32.totalorder %s32, 1
      %p333 = por %p331, %p332
      %p334 = scmp.ne.s32.totalorder %s325, %s326
      %p335 = scmp.eq.s32.totalorder %s32, 0
      %p336 = por %p334, %p335
      %p337 = scmp.ne.s32.totalorder %s325, %s326
      %p338 = scmp.eq.s32.totalorder %s33, 1
      %p339 = por %p337, %p338
      %p341 = scmp.ne.s32.totalorder %s326, %s340
      %p342 = scmp.eq.s32.totalorder %s33, 0
      %p343 = por %p341, %p342
      %s345 = sadd.s32 %s344, 1
      %p348 = scmp.eq.s32.totalorder %s27, 1
      %p349 = scmp.ne.s32.totalorder %s344, %s346
      %p350 = scmp.eq.s32.totalorder %s27, 0
      %p351 = por %p349, %p350
      %p352 = scmp.ne.s32.totalorder %s344, %s346
      %p353 = scmp.eq.s32.totalorder %s32, 1
      %p354 = por %p352, %p353
      %p355 = scmp.ne.s32.totalorder %s346, %s347
      %p356 = scmp.eq.s32.totalorder %s32, 0
      %p357 = por %p355, %p356
      %p358 = scmp.ne.s32.totalorder %s346, %s347
      %p359 = scmp.eq.s32.totalorder %s33, 1
      %p360 = por %p358, %p359
      %p362 = scmp.ne.s32.totalorder %s347, %s361
      %p363 = scmp.eq.s32.totalorder %s33, 0
      %p364 = por %p362, %p363
      %s366 = sadd.s32 %s365, 1
      %p369 = scmp.eq.s32.totalorder %s27, 1
      %p370 = scmp.ne.s32.totalorder %s365, %s367
      %p371 = scmp.eq.s32.totalorder %s27, 0
      %p372 = por %p370, %p371
      %p373 = scmp.ne.s32.totalorder %s365, %s367
      %p374 = scmp.eq.s32.totalorder %s32, 1
      %p375 = por %p373, %p374
      %p376 = scmp.ne.s32.totalorder %s367, %s368
      %p377 = scmp.eq.s32.totalorder %s32, 0
      %p378 = por %p376, %p377
      %p379 = scmp.ne.s32.totalorder %s367, %s368
      %p380 = scmp.eq.s32.totalorder %s33, 1
      %p381 = por %p379, %p380
      %p383 = scmp.ne.s32.totalorder %s368, %s382
      %p384 = scmp.eq.s32.totalorder %s33, 0
      %p385 = por %p383, %p384
      %s387 = sadd.s32 %s386, 1
      %p390 = scmp.eq.s32.totalorder %s27, 1
      %p391 = scmp.ne.s32.totalorder %s386, %s388
      %p392 = scmp.eq.s32.totalorder %s27, 0
      %p393 = por %p391, %p392
      %p394 = scmp.ne.s32.totalorder %s386, %s388
      %p395 = scmp.eq.s32.totalorder %s32, 1
      %p396 = por %p394, %p395
      %p397 = scmp.ne.s32.totalorder %s388, %s389
      %p398 = scmp.eq.s32.totalorder %s32, 0
      %p399 = por %p397, %p398
      %p400 = scmp.ne.s32.totalorder %s388, %s389
      %p401 = scmp.eq.s32.totalorder %s33, 1
      %p402 = por %p400, %p401
      %p404 = scmp.ne.s32.totalorder %s389, %s403
      %p405 = scmp.eq.s32.totalorder %s33, 0
      %p406 = por %p404, %p405
      %s408 = sadd.s32 %s407, 1
      %p411 = scmp.eq.s32.totalorder %s27, 1
      %p412 = scmp.ne.s32.totalorder %s407, %s409
      %p413 = scmp.eq.s32.totalorder %s27, 0
      %p414 = por %p412, %p413
      %p415 = scmp.ne.s32.totalorder %s407, %s409
      %p416 = scmp.eq.s32.totalorder %s32, 1
      %p417 = por %p415, %p416
      %p418 = scmp.ne.s32.totalorder %s409, %s410
      %p419 = scmp.eq.s32.totalorder %s32, 0
      %p420 = por %p418, %p419
      %p421 = scmp.ne.s32.totalorder %s409, %s410
      %p422 = scmp.eq.s32.totalorder %s33, 1
      %p423 = por %p421, %p422
      %p425 = scmp.ne.s32.totalorder %s410, %s424
      %p426 = scmp.eq.s32.totalorder %s33, 0
      %p427 = por %p425, %p426
      %s428 = ssub.s32 %s27, %s34
      %p429 = scmp.eq.s32.totalorder %s428, 0
      %s431 = sadd.s32 %s430, 1
      %s432 = scalar_select %p429, %s430, %s431
      %p435 = pneg %p429
      %p436 = scmp.eq.s32.totalorder %s27, 1
      %p437 = por %p435, %p436
      %p438 = scmp.ne.s32.totalorder %s430, %s433
      %p439 = scmp.eq.s32.totalorder %s27, 0
      %p440 = por %p438, %p439
      %p441 = scmp.ne.s32.totalorder %s430, %s433
      %p442 = scmp.eq.s32.totalorder %s32, 1
      %p443 = por %p441, %p442
      %p444 = scmp.ne.s32.totalorder %s433, %s434
      %p445 = scmp.eq.s32.totalorder %s32, 0
      %p446 = por %p444, %p445
      %p447 = scmp.ne.s32.totalorder %s433, %s434
      %p448 = scmp.eq.s32.totalorder %s33, 1
      %p449 = por %p447, %p448
      %p451 = scmp.ne.s32.totalorder %s434, %s450
      %p452 = scmp.eq.s32.totalorder %s33, 0
      %p453 = por %p451, %p452
      %p454 = scmp.le.s32.totalorder 1, %s27
      %p455 = scmp.lt.s32.totalorder %s27, 3
      %p456 = pnand %p454, %p455
      %p457 = pneg %p456
      // Predicated region
      $region9: #{tpu_custom_call.1} parent=5 // pred_check
        _
      $region10: #{tpu_custom_call.1} parent=5 // pred_check_branch
        %459 = sbr.rel (%p456) target = $region12
      $region11: #{tpu_custom_call.1} parent=5 // pred_region
        %s460 = ssub.s32 %s27, 1
        // Predicated region
        $region13: #{tpu_custom_call.1} parent=11 // pred_check
          %p461 = pneg %p74
        $region14: #{tpu_custom_call.1} parent=11 // pred_check_branch
          %463 = sbr.rel (%p461) target = $region16
        $region15: #{tpu_custom_call.1} parent=11 // pred_region
          _
        $region16: #{tpu_custom_call.1} parent=11 // pred_fallthru
          _
        // Predicated region
        $region17: #{tpu_custom_call.1} parent=11 // pred_check
          %p464 = pneg %p95
        $region18: #{tpu_custom_call.1} parent=11 // pred_check_branch
          %466 = sbr.rel (%p464) target = $region20
        $region19: #{tpu_custom_call.1} parent=11 // pred_region
          _
        $region20: #{tpu_custom_call.1} parent=11 // pred_fallthru
          _
        // Predicated region
        $region21: #{tpu_custom_call.1} parent=11 // pred_check
          %p467 = pneg %p116
        $region22: #{tpu_custom_call.1} parent=11 // pred_check_branch
          %469 = sbr.rel (%p467) target = $region24
        $region23: #{tpu_custom_call.1} parent=11 // pred_region
          _
        $region24: #{tpu_custom_call.1} parent=11 // pred_fallthru
          _
        // Predicated region
        $region25: #{tpu_custom_call.1} parent=11 // pred_check
          %p470 = pneg %p163
        $region26: #{tpu_custom_call.1} parent=11 // pred_check_branch
          %472 = sbr.rel (%p470) target = $region28
        $region27: #{tpu_custom_call.1} parent=11 // pred_region
          _
        $region28: #{tpu_custom_call.1} parent=11 // pred_fallthru
          _
        // Predicated region
        $region29: #{tpu_custom_call.1} parent=11 // pred_check
          %p473 = pneg %p184
        $region30: #{tpu_custom_call.1} parent=11 // pred_check_branch
          %475 = sbr.rel (%p473) target = $region32
        $region31: #{tpu_custom_call.1} parent=11 // pred_region
          _
        $region32: #{tpu_custom_call.1} parent=11 // pred_fallthru
          _
        // Predicated region
        $region33: #{tpu_custom_call.1} parent=11 // pred_check
          %p476 = pneg %p205
        $region34: #{tpu_custom_call.1} parent=11 // pred_check_branch
          %478 = sbr.rel (%p476) target = $region36
        $region35: #{tpu_custom_call.1} parent=11 // pred_region
          _
        $region36: #{tpu_custom_call.1} parent=11 // pred_fallthru
          _
        // Predicated region
        $region37: #{tpu_custom_call.1} parent=11 // pred_check
          %p479 = pneg %p226
        $region38: #{tpu_custom_call.1} parent=11 // pred_check_branch
          %481 = sbr.rel (%p479) target = $region40
        $region39: #{tpu_custom_call.1} parent=11 // pred_region
          _
        $region40: #{tpu_custom_call.1} parent=11 // pred_fallthru
          _
        // Predicated region
        $region41: #{tpu_custom_call.1} parent=11 // pred_check
          %p482 = pneg %p247
        $region42: #{tpu_custom_call.1} parent=11 // pred_check_branch
          %484 = sbr.rel (%p482) target = $region44
        $region43: #{tpu_custom_call.1} parent=11 // pred_region
          _
        $region44: #{tpu_custom_call.1} parent=11 // pred_fallthru
          _
        // Predicated region
        $region45: #{tpu_custom_call.1} parent=11 // pred_check
          %p485 = pneg %p268
        $region46: #{tpu_custom_call.1} parent=11 // pred_check_branch
          %487 = sbr.rel (%p485) target = $region48
        $region47: #{tpu_custom_call.1} parent=11 // pred_region
          _
        $region48: #{tpu_custom_call.1} parent=11 // pred_fallthru
          _
        // Predicated region
        $region49: #{tpu_custom_call.1} parent=11 // pred_check
          %p488 = pneg %p315
        $region50: #{tpu_custom_call.1} parent=11 // pred_check_branch
          %490 = sbr.rel (%p488) target = $region52
        $region51: #{tpu_custom_call.1} parent=11 // pred_region
          _
        $region52: #{tpu_custom_call.1} parent=11 // pred_fallthru
          _
        // Predicated region
        $region53: #{tpu_custom_call.1} parent=11 // pred_check
          %p491 = pneg %p336
        $region54: #{tpu_custom_call.1} parent=11 // pred_check_branch
          %493 = sbr.rel (%p491) target = $region56
        $region55: #{tpu_custom_call.1} parent=11 // pred_region
          _
        $region56: #{tpu_custom_call.1} parent=11 // pred_fallthru
          _
        // Predicated region
        $region57: #{tpu_custom_call.1} parent=11 // pred_check
          %p494 = pneg %p357
        $region58: #{tpu_custom_call.1} parent=11 // pred_check_branch
          %496 = sbr.rel (%p494) target = $region60
        $region59: #{tpu_custom_call.1} parent=11 // pred_region
          _
        $region60: #{tpu_custom_call.1} parent=11 // pred_fallthru
          _
        // Predicated region
        $region61: #{tpu_custom_call.1} parent=11 // pred_check
          %p497 = pneg %p378
        $region62: #{tpu_custom_call.1} parent=11 // pred_check_branch
          %499 = sbr.rel (%p497) target = $region64
        $region63: #{tpu_custom_call.1} parent=11 // pred_region
          _
        $region64: #{tpu_custom_call.1} parent=11 // pred_fallthru
          _
        // Predicated region
        $region65: #{tpu_custom_call.1} parent=11 // pred_check
          %p500 = pneg %p399
        $region66: #{tpu_custom_call.1} parent=11 // pred_check_branch
          %502 = sbr.rel (%p500) target = $region68
        $region67: #{tpu_custom_call.1} parent=11 // pred_region
          _
        $region68: #{tpu_custom_call.1} parent=11 // pred_fallthru
          _
        // Predicated region
        $region69: #{tpu_custom_call.1} parent=11 // pred_check
          %p503 = pneg %p420
        $region70: #{tpu_custom_call.1} parent=11 // pred_check_branch
          %505 = sbr.rel (%p503) target = $region72
        $region71: #{tpu_custom_call.1} parent=11 // pred_region
          _
        $region72: #{tpu_custom_call.1} parent=11 // pred_fallthru
          _
      $region12: #{tpu_custom_call.1} parent=5 // pred_fallthru
        _
      %p506 = scmp.lt.s32.totalorder %s27, 2
      // Predicated region
      $region73: #{tpu_custom_call.1} parent=5 // pred_check
        %p507 = pneg %p506
      $region74: #{tpu_custom_call.1} parent=5 // pred_check_branch
        %509 = sbr.rel (%p507) target = $region76
      $region75: #{tpu_custom_call.1} parent=5 // pred_region
        // Predicated region
        $region77: #{tpu_custom_call.1} parent=75 // pred_check
          %p510 = pneg %p47
        $region78: #{tpu_custom_call.1} parent=75 // pred_check_branch
          %512 = sbr.rel (%p510) target = $region80
        $region79: #{tpu_custom_call.1} parent=75 // pred_region
          %p513 = scmp.lt.s32.totalorder %s27, 1
          %s514 = scalar_select %p513, %s27, 1
          %s515 = smul.addr %s514, 2
          %s516 = smul.addr %s515, 8
          %s517 = scalar_lea.vmem %s0, %s516
        $region80: #{tpu_custom_call.1} parent=75 // pred_fallthru
          _
        // Predicated region
        $region81: #{tpu_custom_call.1} parent=75 // pred_check
          %p518 = pneg %p136
        $region82: #{tpu_custom_call.1} parent=75 // pred_check_branch
          %520 = sbr.rel (%p518) target = $region84
        $region83: #{tpu_custom_call.1} parent=75 // pred_region
          %p521 = scmp.lt.s32.totalorder %s27, 1
          %s522 = scalar_select %p521, %s27, 1
          %s523 = smul.addr %s522, 6
          %s524 = smul.addr %s523, 8
          %s525 = scalar_lea.vmem %s4, %s524
        $region84: #{tpu_custom_call.1} parent=75 // pred_fallthru
          _
        // Predicated region
        $region85: #{tpu_custom_call.1} parent=75 // pred_check
          %p526 = pneg %p288
        $region86: #{tpu_custom_call.1} parent=75 // pred_check_branch
          %528 = sbr.rel (%p526) target = $region88
        $region87: #{tpu_custom_call.1} parent=75 // pred_region
          %p529 = scmp.lt.s32.totalorder %s27, 1
          %s530 = scalar_select %p529, %s27, 1
          %s531 = smul.addr %s530, 4
          %s532 = smul.addr %s531, 8
          %s533 = scalar_lea.vmem %s11, %s532
        $region88: #{tpu_custom_call.1} parent=75 // pred_fallthru
          _
      $region76: #{tpu_custom_call.1} parent=5 // pred_fallthru
        _
      %p534 = scmp.le.s32.totalorder 1, %s27
      %p535 = scmp.lt.s32.totalorder %s27, 3
      %p536 = pnand %p534, %p535
      %p537 = pneg %p536
      // Predicated region
      $region89: #{tpu_custom_call.1} parent=5 // pred_check
        _
      $region90: #{tpu_custom_call.1} parent=5 // pred_check_branch
        %539 = sbr.rel (%p536) target = $region92
      $region91: #{tpu_custom_call.1} parent=5 // pred_region
        %s540 = ssub.s32 %s27, 1
        %p541 = scmp.lt.s32.totalorder %s32, 1
        %s542 = scalar_select %p541, %s32, 1
        %s543 = smul.addr %s542, 2
        %s544 = smul.addr %s543, 8
        %s545 = scalar_lea.vmem %s0, %s544
        %p546 = pneg %p53
        %p547 = pneg %p50
        %p548 = pneg %p74
        %p549 = pneg %p71
        %p550 = pneg %p95
        %p551 = pneg %p92
        %p552 = pneg %p116
        %p553 = pneg %p113
        %p554 = scmp.lt.s32.totalorder %s32, 1
        %s555 = scalar_select %p554, %s32, 1
        %s556 = smul.addr %s555, 6
        %s557 = smul.addr %s556, 8
        %s558 = scalar_lea.vmem %s4, %s557
        %p559 = pneg %p142
        %p560 = pneg %p139
        %p561 = pneg %p163
        %p562 = pneg %p160
        %p563 = pneg %p184
        %p564 = pneg %p181
        %p565 = pneg %p205
        %p566 = pneg %p202
        %p567 = pneg %p226
        %p568 = pneg %p223
        %p569 = pneg %p247
        %p570 = pneg %p244
        %p571 = pneg %p268
        %p572 = pneg %p265
        %p573 = scmp.lt.s32.totalorder %s32, 1
        %s574 = scalar_select %p573, %s32, 1
        %s575 = smul.addr %s574, 4
        %s576 = smul.addr %s575, 8
        %s577 = scalar_lea.vmem %s11, %s576
        %p578 = pneg %p294
        %p579 = pneg %p291
        %p580 = pneg %p315
        %p581 = pneg %p312
        %p582 = pneg %p336
        %p583 = pneg %p333
        %p584 = pneg %p357
        %p585 = pneg %p354
        %p586 = pneg %p378
        %p587 = pneg %p375
        %p588 = pneg %p399
        %p589 = pneg %p396
        %p590 = pneg %p420
        %p591 = pneg %p417
        %p592 = pneg %p446
        %p593 = pneg %p443
        %s594 = sand.u32 %s433, 1
        %s595 = scalar_lea.sflag [#allocation3], %s594
        %s596 = sand.u32 %s433, 1
        %s597 = smul.addr %s596, 16
        %s598 = scalar_lea.vmem [#allocation2], %s597
        %p599 = scmp.lt.s32.totalorder %s32, 1
        %s600 = scalar_select %p599, %s32, 1
        %s601 = smul.addr %s600, 2
        %s602 = smul.addr %s601, 8
        %s603 = scalar_lea.vmem %s0, %s602
        %p604 = scmp.lt.s32.totalorder %s32, 1
        %s605 = scalar_select %p604, %s32, 1
        %s606 = smul.addr %s605, 6
        %s607 = smul.addr %s606, 8
        %s608 = scalar_lea.vmem %s4, %s607
        %p609 = scmp.lt.s32.totalorder %s32, 1
        %s610 = scalar_select %p609, %s32, 1
        %s611 = smul.addr %s610, 4
        %s612 = smul.addr %s611, 8
        %s613 = scalar_lea.vmem %s11, %s612
        %v614 = vlaneseq
        %v615 = vshrl.u32 %v614, 7
        %v616 = vadd.s32 %v615, 8
        %v617 = vlaneseq
        %v618 = vand.u32 %v617, 127
        %vm619 = vcmp.ge.s32.totalorder %v615, %v618
        %vm620 = vcmp.ge.s32.totalorder %v616, %v618
        %v621 = vsel %vm619, 0.0, -1e+30
        %v622 = vsel %vm620, 0.0, -1e+30
        %v623 = vld [vmem:[%s603] sm:$0xff]
        %v624 = vld [vmem:[%s603 + $0x8] sm:$0xff]
        %v625 = vld [vmem:[%s1] sm:$0x3]
        %vm626 = vcmask 261120
        %v627 = vsel %vm626, %v623, 0.0
        %628 = vadd.xlane.f32.xlu0 %v627
        %v629 = vpop.xlane.xlu0 %628
        %v630 = vsel %vm626, %v624, 0.0
        %631 = vadd.xlane.f32.xlu0 %v630
        %v632 = vpop.xlane.xlu0 %631
        %v633 = vrcp.pop 32.0
        %v634 = vmul.f32 %v629, %v633
        %v635 = vmul.f32 %v632, %v633
        %v636 = vsub.f32 %v623, %v634
        %v637 = vsub.f32 %v624, %v635
        %v638 = vmul.f32 %v636, %v636
        %v639 = vmul.f32 %v637, %v637
        %v640 = vsel %vm626, %v638, 0.0
        %641 = vadd.xlane.f32.xlu0 %v640
        %v642 = vpop.xlane.xlu0 %641
        %v643 = vsel %vm626, %v639, 0.0
        %644 = vadd.xlane.f32.xlu0 %v643
        %v645 = vpop.xlane.xlu0 %644
        %v646 = vmul.f32 %v642, %v633
        %v647 = vmul.f32 %v645, %v633
        %v648 = vadd.f32 %v646, 1e-05
        %v649 = vadd.f32 %v647, 1e-05
        %v650 = vrsqrt.pop %v648
        %v651 = vrsqrt.pop %v649
        %v652 = vmul.f32 %v636, %v650
        %v653 = vmul.f32 %v637, %v651
        %v654 = vlaneseq
        %v655 = vshrl.u32 %v654, 7
        %v656 = vsub.s32 0, %v655
        %v657 = vrot.slane %v625, %v656
        %v658 = vmul.f32 %v652, %v657
        %v659 = vmul.f32 %v653, %v657
        %v660 = vlaneseq
        %v661 = vshrl.u32 %v660, 7
        %v662 = vsub.s32 1, %v661
        %v663 = vrot.slane %v625, %v662
        %v664 = vadd.f32 %v658, %v663
        %v665 = vadd.f32 %v659, %v663
        %v666 = vld [vmem:[%s5] sm:$0xff]
        %v667 = vld [vmem:[%s5 + $0x8] sm:$0xff]
        %v668 = vld [vmem:[%s5 + $0x10] sm:$0xff]
        %v669 = vld [vmem:[%s5 + $0x18] sm:$0xff]
        %v670 = vld [vmem:[%s6] sm:$0x1]
        %v672 = vlaneseq
        %v673 = vshrl.u32 %v672, 7
        %v674 = vsub.s32 0, %v673
        %v675 = vrot.slane %v670, %v674
        %v678 = vsel %vm626, %v664, 0
        %v681 = vsel %vm626, %v665, 0
        %683 = vmatprep.subr.mxu0 0.0
        %684 = vmatpush1.msra.mxu0 0.0
        %685 = vmatprep.subr.mxu0 0.0
        %686 = vmatpush1.msra.mxu0 0.0
        %687 = vmatprep.subr.mxu0 0.0
        %688 = vmatpush1.msra.mxu0 0.0
        %689 = vmatprep.subr.mxu0 0.0
        %690 = vmatpush1.msra.mxu0 0.0
        %691 = vmatprep.subr.mxu0 0.0
        %692 = vmatpush1.msra.mxu0 0.0
        %693 = vmatprep.subr.mxu0 0.0
        %694 = vmatpush1.msra.mxu0 0.0
        %695 = vmatprep.subr.mxu0 0.0
        %696 = vmatpush1.msra.mxu0 0.0
        %697 = vmatprep.subr.mxu0 0.0
        %698 = vmatpush1.msra.mxu0 0.0
        %699 = vmatprep.subr.mxu0 0.0
        %700 = vmatpush1.msra.mxu0 0.0
        %701 = vmatprep.subr.mxu0 0.0
        %702 = vmatpush1.msra.mxu0 0.0
        %703 = vmatprep.subr.mxu0 0.0
        %704 = vmatpush1.msra.mxu0 0.0
        %705 = vmatprep.subr.mxu0 0.0
        %706 = vmatpush1.msra.mxu0 0.0
        %707 = vmatprep.subr.mxu0 0.0
        %708 = vmatpush1.msra.mxu0 %v669
        %709 = vmatprep.subr.mxu0 0.0
        %710 = vmatpush1.msra.mxu0 %v668
        %711 = vmatprep.subr.mxu0 0.0
        %712 = vmatpush1.msra.mxu0 %v667
        %713 = vmatprep.subr.mxu0 0.0
        %714 = vmatpush1.msra.mxu0 %v666
        %715 = vmatprep.subr.mxu0 0.0
        %716 = vmatpush2.msra.mxu0 0.0
        %717 = vmatprep.subr.mxu0 0.0
        %718 = vmatpush2.msra.mxu0 0.0
        %719 = vmatprep.subr.mxu0 0.0
        %720 = vmatpush2.msra.mxu0 0.0
        %721 = vmatprep.subr.mxu0 0.0
        %722 = vmatpush2.msra.mxu0 0.0
        %723 = vmatprep.subr.mxu0 0.0
        %724 = vmatpush2.msra.mxu0 0.0
        %725 = vmatprep.subr.mxu0 0.0
        %726 = vmatpush2.msra.mxu0 0.0
        %727 = vmatprep.subr.mxu0 0.0
        %728 = vmatpush2.msra.mxu0 0.0
        %729 = vmatprep.subr.mxu0 0.0
        %730 = vmatpush2.msra.mxu0 0.0
        %731 = vmatprep.subr.mxu0 0.0
        %732 = vmatpush2.msra.mxu0 0.0
        %733 = vmatprep.subr.mxu0 0.0
        %734 = vmatpush2.msra.mxu0 0.0
        %735 = vmatprep.subr.mxu0 0.0
        %736 = vmatpush2.msra.mxu0 0.0
        %737 = vmatprep.subr.mxu0 0.0
        %738 = vmatpush2.msra.mxu0 0.0
        %739 = vmatprep.subr.mxu0 0.0
        %740 = vmatpush2.msra.mxu0 0.0
        %741 = vmatprep.subr.mxu0 0.0
        %742 = vmatpush2.msra.mxu0 0.0
        %743 = vmatprep.subr.mxu0 0.0
        %744 = vmatpush2.msra.mxu0 0.0
        %745 = vmatprep.subr.mxu0 0.0
        %746 = vmatpush2.msra.mxu0 0.0
        %747 = vmatprep.mubr.f32.mxu0 0.0
        %748 = vmatmul.mubr.f32.gmra.mxu0 %v678
        %v749 = vpop.f32.mrf.mxu0
        %v750 = vadd.f32 %v675, %v749
        %v751 = vpop.f32.mrf.mxu0
        %752 = vmatprep.mubr.f32.mxu0 0.0
        %753 = vmatmul.mubr.f32.gmra.mxu0 %v681
        %v754 = vpop.f32.mrf.mxu0
        %v755 = vadd.f32 %v675, %v754
        %v756 = vpop.f32.mrf.mxu0
        %757 = vdwg.mxu0
        %v758 = vmul.f32 %v750, 0.35355338
        %v759 = vmul.f32 %v755, 0.35355338
        %762 = vrot.lane.b32.xlu0 %v750, 96
        %v763 = vpop.permute.xlu0 %762
        %764 = vrot.lane.b32.xlu0 %v755, 96
        %v765 = vpop.permute.xlu0 %764
        %vm766 = vcmask 64512
        %v768 = vsel %vm766, %v758, 0
        %v771 = vsel %vm766, %v759, 0
        %v773 = vsel %vm766, %v763, 0
        %v775 = vsel %vm766, %v765, 0
        %777 = vmatprep.subr.mxu0 0.0
        %778 = vmatpush1.xpose.msra.mxu0 0.0
        %779 = vmatprep.subr.mxu0 0.0
        %780 = vmatpush1.xpose.msra.mxu0 0.0
        %781 = vmatprep.subr.mxu0 0.0
        %782 = vmatpush1.xpose.msra.mxu0 0.0
        %783 = vmatprep.subr.mxu0 0.0
        %784 = vmatpush1.xpose.msra.mxu0 0.0
        %785 = vmatprep.subr.mxu0 0.0
        %786 = vmatpush1.xpose.msra.mxu0 0.0
        %787 = vmatprep.subr.mxu0 0.0
        %788 = vmatpush1.xpose.msra.mxu0 0.0
        %789 = vmatprep.subr.mxu0 0.0
        %790 = vmatpush1.xpose.msra.mxu0 0.0
        %791 = vmatprep.subr.mxu0 0.0
        %792 = vmatpush1.xpose.msra.mxu0 0.0
        %793 = vmatprep.subr.mxu0 0.0
        %794 = vmatpush1.xpose.msra.mxu0 0.0
        %795 = vmatprep.subr.mxu0 0.0
        %796 = vmatpush1.xpose.msra.mxu0 0.0
        %797 = vmatprep.subr.mxu0 0.0
        %798 = vmatpush1.xpose.msra.mxu0 0.0
        %799 = vmatprep.subr.mxu0 0.0
        %800 = vmatpush1.xpose.msra.mxu0 0.0
        %801 = vmatprep.subr.mxu0 0.0
        %802 = vmatpush1.xpose.msra.mxu0 0.0
        %803 = vmatprep.subr.mxu0 0.0
        %804 = vmatpush1.xpose.msra.mxu0 0.0
        %805 = vmatprep.subr.mxu0 0.0
        %806 = vmatpush1.xpose.msra.mxu0 %v775
        %807 = vmatprep.subr.mxu0 0.0
        %808 = vmatpush1.xpose.msra.mxu0 %v773
        %809 = vmatprep.subr.mxu0 0.0
        %810 = vmatpush2.xpose.msra.mxu0 0.0
        %811 = vmatprep.subr.mxu0 0.0
        %812 = vmatpush2.xpose.msra.mxu0 0.0
        %813 = vmatprep.subr.mxu0 0.0
        %814 = vmatpush2.xpose.msra.mxu0 0.0
        %815 = vmatprep.subr.mxu0 0.0
        %816 = vmatpush2.xpose.msra.mxu0 0.0
        %817 = vmatprep.subr.mxu0 0.0
        %818 = vmatpush2.xpose.msra.mxu0 0.0
        %819 = vmatprep.subr.mxu0 0.0
        %820 = vmatpush2.xpose.msra.mxu0 0.0
        %821 = vmatprep.subr.mxu0 0.0
        %822 = vmatpush2.xpose.msra.mxu0 0.0
        %823 = vmatprep.subr.mxu0 0.0
        %824 = vmatpush2.xpose.msra.mxu0 0.0
        %825 = vmatprep.subr.mxu0 0.0
        %826 = vmatpush2.xpose.msra.mxu0 0.0
        %827 = vmatprep.subr.mxu0 0.0
        %828 = vmatpush2.xpose.msra.mxu0 0.0
        %829 = vmatprep.subr.mxu0 0.0
        %830 = vmatpush2.xpose.msra.mxu0 0.0
        %831 = vmatprep.subr.mxu0 0.0
        %832 = vmatpush2.xpose.msra.mxu0 0.0
        %833 = vmatprep.subr.mxu0 0.0
        %834 = vmatpush2.xpose.msra.mxu0 0.0
        %835 = vmatprep.subr.mxu0 0.0
        %836 = vmatpush2.xpose.msra.mxu0 0.0
        %837 = vmatprep.subr.mxu0 0.0
        %838 = vmatpush2.xpose.msra.mxu0 0.0
        %839 = vmatprep.subr.mxu0 0.0
        %840 = vmatpush2.xpose.msra.mxu0 0.0
        %841 = vmatprep.mubr.f32.mxu0 0.0
        %842 = vmatmul.mubr.f32.gmra.mxu0 %v768
        %v843 = vpop.f32.mrf.mxu0
        %v844 = vadd.f32 %v621, %v843
        %v845 = vpop.f32.mrf.mxu0
        %846 = vmatprep.mubr.f32.mxu0 0.0
        %847 = vmatmul.mubr.f32.gmra.mxu0 %v771
        %v848 = vpop.f32.mrf.mxu0
        %v849 = vadd.f32 %v622, %v848
        %v850 = vpop.f32.mrf.mxu0
        %851 = vdwg.mxu0
        %vm852 = vcmask 130048
        %v853 = vsel %vm852, %v844, -inf
        %854 = vmax.xlane.f32.xlu0 %v853
        %v855 = vpop.xlane.xlu0 %854
        %v856 = vsel %vm852, %v849, -inf
        %857 = vmax.xlane.f32.xlu0 %v856
        %v858 = vpop.xlane.xlu0 %857
        %v859 = vsub.f32 %v844, %v855
        %v860 = vsub.f32 %v849, %v858
        %v861 = vmul.f32 %v859, 1.442695
        %v862 = vpow.pop %v861
        %v863 = vmul.f32 %v860, 1.442695
        %v864 = vpow.pop %v863
        %v865 = vsel %vm852, %v862, 0.0
        %866 = vadd.xlane.f32.xlu0 %v865
        %v867 = vpop.xlane.xlu0 %866
        %v868 = vsel %vm852, %v864, 0.0
        %869 = vadd.xlane.f32.xlu0 %v868
        %v870 = vpop.xlane.xlu0 %869
        %871 = vrot.lane.b32.xlu0 %v750, 64
        %v872 = vpop.permute.xlu0 %871
        %873 = vrot.lane.b32.xlu0 %v755, 64
        %v874 = vpop.permute.xlu0 %873
        %v878 = vsel %vm852, %v862, 0
        %v881 = vsel %vm852, %v864, 0
        %883 = vmatprep.subr.mxu0 0.0
        %884 = vmatpush1.msra.mxu0 0.0
        %885 = vmatprep.subr.mxu0 0.0
        %886 = vmatpush1.msra.mxu0 0.0
        %887 = vmatprep.subr.mxu0 0.0
        %888 = vmatpush1.msra.mxu0 0.0
        %889 = vmatprep.subr.mxu0 0.0
        %890 = vmatpush1.msra.mxu0 0.0
        %891 = vmatprep.subr.mxu0 0.0
        %892 = vmatpush1.msra.mxu0 0.0
        %893 = vmatprep.subr.mxu0 0.0
        %894 = vmatpush1.msra.mxu0 0.0
        %895 = vmatprep.subr.mxu0 0.0
        %896 = vmatpush1.msra.mxu0 0.0
        %897 = vmatprep.subr.mxu0 0.0
        %898 = vmatpush1.msra.mxu0 0.0
        %899 = vmatprep.subr.mxu0 0.0
        %900 = vmatpush1.msra.mxu0 0.0
        %901 = vmatprep.subr.mxu0 0.0
        %902 = vmatpush1.msra.mxu0 0.0
        %903 = vmatprep.subr.mxu0 0.0
        %904 = vmatpush1.msra.mxu0 0.0
        %905 = vmatprep.subr.mxu0 0.0
        %906 = vmatpush1.msra.mxu0 0.0
        %907 = vmatprep.subr.mxu0 0.0
        %908 = vmatpush1.msra.mxu0 0.0
        %909 = vmatprep.subr.mxu0 0.0
        %910 = vmatpush1.msra.mxu0 0.0
        %911 = vmatprep.subr.mxu0 0.0
        %912 = vmatpush1.msra.mxu0 %v874
        %913 = vmatprep.subr.mxu0 0.0
        %914 = vmatpush1.msra.mxu0 %v872
        %915 = vmatprep.subr.mxu0 0.0
        %916 = vmatpush2.msra.mxu0 0.0
        %917 = vmatprep.subr.mxu0 0.0
        %918 = vmatpush2.msra.mxu0 0.0
        %919 = vmatprep.subr.mxu0 0.0
        %920 = vmatpush2.msra.mxu0 0.0
        %921 = vmatprep.subr.mxu0 0.0
        %922 = vmatpush2.msra.mxu0 0.0
        %923 = vmatprep.subr.mxu0 0.0
        %924 = vmatpush2.msra.mxu0 0.0
        %925 = vmatprep.subr.mxu0 0.0
        %926 = vmatpush2.msra.mxu0 0.0
        %927 = vmatprep.subr.mxu0 0.0
        %928 = vmatpush2.msra.mxu0 0.0
        %929 = vmatprep.subr.mxu0 0.0
        %930 = vmatpush2.msra.mxu0 0.0
        %931 = vmatprep.subr.mxu0 0.0
        %932 = vmatpush2.msra.mxu0 0.0
        %933 = vmatprep.subr.mxu0 0.0
        %934 = vmatpush2.msra.mxu0 0.0
        %935 = vmatprep.subr.mxu0 0.0
        %936 = vmatpush2.msra.mxu0 0.0
        %937 = vmatprep.subr.mxu0 0.0
        %938 = vmatpush2.msra.mxu0 0.0
        %939 = vmatprep.subr.mxu0 0.0
        %940 = vmatpush2.msra.mxu0 0.0
        %941 = vmatprep.subr.mxu0 0.0
        %942 = vmatpush2.msra.mxu0 0.0
        %943 = vmatprep.subr.mxu0 0.0
        %944 = vmatpush2.msra.mxu0 0.0
        %945 = vmatprep.subr.mxu0 0.0
        %946 = vmatpush2.msra.mxu0 0.0
        %947 = vmatprep.mubr.f32.mxu0 0.0
        %948 = vmatmul.mubr.f32.gmra.mxu0 %v878
        %v949 = vpop.f32.mrf.mxu0
        %v950 = vadd.f32 0.0, %v949
        %v951 = vpop.f32.mrf.mxu0
        %952 = vmatprep.mubr.f32.mxu0 0.0
        %953 = vmatmul.mubr.f32.gmra.mxu0 %v881
        %v954 = vpop.f32.mrf.mxu0
        %v955 = vadd.f32 0.0, %v954
        %v956 = vpop.f32.mrf.mxu0
        %957 = vdwg.mxu0
        %v958 = vrcp.pop %v867
        %v959 = vrcp.pop %v870
        %v960 = vmul.f32 %v950, %v958
        %v961 = vmul.f32 %v955, %v959
        %962 = vrot.lane.b32.xlu0 %v758, 120
        %v963 = vpop.permute.xlu0 %962
        %964 = vrot.lane.b32.xlu0 %v759, 120
        %v965 = vpop.permute.xlu0 %964
        %966 = vrot.lane.b32.xlu0 %v750, 88
        %v967 = vpop.permute.xlu0 %966
        %968 = vrot.lane.b32.xlu0 %v755, 88
        %v969 = vpop.permute.xlu0 %968
        %v970 = vsel %vm766, %v963, 0
        %v972 = vsel %vm766, %v965, 0
        %v974 = vsel %vm766, %v967, 0
        %v976 = vsel %vm766, %v969, 0
        %978 = vmatprep.subr.mxu0 0.0
        %979 = vmatpush1.xpose.msra.mxu0 0.0
        %980 = vmatprep.subr.mxu0 0.0
        %981 = vmatpush1.xpose.msra.mxu0 0.0
        %982 = vmatprep.subr.mxu0 0.0
        %983 = vmatpush1.xpose.msra.mxu0 0.0
        %984 = vmatprep.subr.mxu0 0.0
        %985 = vmatpush1.xpose.msra.mxu0 0.0
        %986 = vmatprep.subr.mxu0 0.0
        %987 = vmatpush1.xpose.msra.mxu0 0.0
        %988 = vmatprep.subr.mxu0 0.0
        %989 = vmatpush1.xpose.msra.mxu0 0.0
        %990 = vmatprep.subr.mxu0 0.0
        %991 = vmatpush1.xpose.msra.mxu0 0.0
        %992 = vmatprep.subr.mxu0 0.0
        %993 = vmatpush1.xpose.msra.mxu0 0.0
        %994 = vmatprep.subr.mxu0 0.0
        %995 = vmatpush1.xpose.msra.mxu0 0.0
        %996 = vmatprep.subr.mxu0 0.0
        %997 = vmatpush1.xpose.msra.mxu0 0.0
        %998 = vmatprep.subr.mxu0 0.0
        %999 = vmatpush1.xpose.msra.mxu0 0.0
        %1000 = vmatprep.subr.mxu0 0.0
        %1001 = vmatpush1.xpose.msra.mxu0 0.0
        %1002 = vmatprep.subr.mxu0 0.0
        %1003 = vmatpush1.xpose.msra.mxu0 0.0
        %1004 = vmatprep.subr.mxu0 0.0
        %1005 = vmatpush1.xpose.msra.mxu0 0.0
        %1006 = vmatprep.subr.mxu0 0.0
        %1007 = vmatpush1.xpose.msra.mxu0 %v976
        %1008 = vmatprep.subr.mxu0 0.0
        %1009 = vmatpush1.xpose.msra.mxu0 %v974
        %1010 = vmatprep.subr.mxu0 0.0
        %1011 = vmatpush2.xpose.msra.mxu0 0.0
        %1012 = vmatprep.subr.mxu0 0.0
        %1013 = vmatpush2.xpose.msra.mxu0 0.0
        %1014 = vmatprep.subr.mxu0 0.0
        %1015 = vmatpush2.xpose.msra.mxu0 0.0
        %1016 = vmatprep.subr.mxu0 0.0
        %1017 = vmatpush2.xpose.msra.mxu0 0.0
        %1018 = vmatprep.subr.mxu0 0.0
        %1019 = vmatpush2.xpose.msra.mxu0 0.0
        %1020 = vmatprep.subr.mxu0 0.0
        %1021 = vmatpush2.xpose.msra.mxu0 0.0
        %1022 = vmatprep.subr.mxu0 0.0
        %1023 = vmatpush2.xpose.msra.mxu0 0.0
        %1024 = vmatprep.subr.mxu0 0.0
        %1025 = vmatpush2.xpose.msra.mxu0 0.0
        %1026 = vmatprep.subr.mxu0 0.0
        %1027 = vmatpush2.xpose.msra.mxu0 0.0
        %1028 = vmatprep.subr.mxu0 0.0
        %1029 = vmatpush2.xpose.msra.mxu0 0.0
        %1030 = vmatprep.subr.mxu0 0.0
        %1031 = vmatpush2.xpose.msra.mxu0 0.0
        %1032 = vmatprep.subr.mxu0 0.0
        %1033 = vmatpush2.xpose.msra.mxu0 0.0
        %1034 = vmatprep.subr.mxu0 0.0
        %1035 = vmatpush2.xpose.msra.mxu0 0.0
        %1036 = vmatprep.subr.mxu0 0.0
        %1037 = vmatpush2.xpose.msra.mxu0 0.0
        %1038 = vmatprep.subr.mxu0 0.0
        %1039 = vmatpush2.xpose.msra.mxu0 0.0
        %1040 = vmatprep.subr.mxu0 0.0
        %1041 = vmatpush2.xpose.msra.mxu0 0.0
        %1042 = vmatprep.mubr.f32.mxu0 0.0
        %1043 = vmatmul.mubr.f32.gmra.mxu0 %v970
        %v1044 = vpop.f32.mrf.mxu0
        %v1045 = vadd.f32 %v621, %v1044
        %v1046 = vpop.f32.mrf.mxu0
        %1047 = vmatprep.mubr.f32.mxu0 0.0
        %1048 = vmatmul.mubr.f32.gmra.mxu0 %v972
        %v1049 = vpop.f32.mrf.mxu0
        %v1050 = vadd.f32 %v622, %v1049
        %v1051 = vpop.f32.mrf.mxu0
        %1052 = vdwg.mxu0
        %v1053 = vsel %vm852, %v1045, -inf
        %1054 = vmax.xlane.f32.xlu0 %v1053
        %v1055 = vpop.xlane.xlu0 %1054
        %v1056 = vsel %vm852, %v1050, -inf
        %1057 = vmax.xlane.f32.xlu0 %v1056
        %v1058 = vpop.xlane.xlu0 %1057
        %v1059 = vsub.f32 %v1045, %v1055
        %v1060 = vsub.f32 %v1050, %v1058
        %v1061 = vmul.f32 %v1059, 1.442695
        %v1062 = vpow.pop %v1061
        %v1063 = vmul.f32 %v1060, 1.442695
        %v1064 = vpow.pop %v1063
        %v1065 = vsel %vm852, %v1062, 0.0
        %1066 = vadd.xlane.f32.xlu0 %v1065
        %v1067 = vpop.xlane.xlu0 %1066
        %v1068 = vsel %vm852, %v1064, 0.0
        %1069 = vadd.xlane.f32.xlu0 %v1068
        %v1070 = vpop.xlane.xlu0 %1069
        %1071 = vrot.lane.b32.xlu0 %v750, 56
        %v1072 = vpop.permute.xlu0 %1071
        %1073 = vrot.lane.b32.xlu0 %v755, 56
        %v1074 = vpop.permute.xlu0 %1073
        %v1078 = vsel %vm852, %v1062, 0
        %v1081 = vsel %vm852, %v1064, 0
        %1083 = vmatprep.subr.mxu0 0.0
        %1084 = vmatpush1.msra.mxu0 0.0
        %1085 = vmatprep.subr.mxu0 0.0
        %1086 = vmatpush1.msra.mxu0 0.0
        %1087 = vmatprep.subr.mxu0 0.0
        %1088 = vmatpush1.msra.mxu0 0.0
        %1089 = vmatprep.subr.mxu0 0.0
        %1090 = vmatpush1.msra.mxu0 0.0
        %1091 = vmatprep.subr.mxu0 0.0
        %1092 = vmatpush1.msra.mxu0 0.0
        %1093 = vmatprep.subr.mxu0 0.0
        %1094 = vmatpush1.msra.mxu0 0.0
        %1095 = vmatprep.subr.mxu0 0.0
        %1096 = vmatpush1.msra.mxu0 0.0
        %1097 = vmatprep.subr.mxu0 0.0
        %1098 = vmatpush1.msra.mxu0 0.0
        %1099 = vmatprep.subr.mxu0 0.0
        %1100 = vmatpush1.msra.mxu0 0.0
        %1101 = vmatprep.subr.mxu0 0.0
        %1102 = vmatpush1.msra.mxu0 0.0
        %1103 = vmatprep.subr.mxu0 0.0
        %1104 = vmatpush1.msra.mxu0 0.0
        %1105 = vmatprep.subr.mxu0 0.0
        %1106 = vmatpush1.msra.mxu0 0.0
        %1107 = vmatprep.subr.mxu0 0.0
        %1108 = vmatpush1.msra.mxu0 0.0
        %1109 = vmatprep.subr.mxu0 0.0
        %1110 = vmatpush1.msra.mxu0 0.0
        %1111 = vmatprep.subr.mxu0 0.0
        %1112 = vmatpush1.msra.mxu0 %v1074
        %1113 = vmatprep.subr.mxu0 0.0
        %1114 = vmatpush1.msra.mxu0 %v1072
        %1115 = vmatprep.subr.mxu0 0.0
        %1116 = vmatpush2.msra.mxu0 0.0
        %1117 = vmatprep.subr.mxu0 0.0
        %1118 = vmatpush2.msra.mxu0 0.0
        %1119 = vmatprep.subr.mxu0 0.0
        %1120 = vmatpush2.msra.mxu0 0.0
        %1121 = vmatprep.subr.mxu0 0.0
        %1122 = vmatpush2.msra.mxu0 0.0
        %1123 = vmatprep.subr.mxu0 0.0
        %1124 = vmatpush2.msra.mxu0 0.0
        %1125 = vmatprep.subr.mxu0 0.0
        %1126 = vmatpush2.msra.mxu0 0.0
        %1127 = vmatprep.subr.mxu0 0.0
        %1128 = vmatpush2.msra.mxu0 0.0
        %1129 = vmatprep.subr.mxu0 0.0
        %1130 = vmatpush2.msra.mxu0 0.0
        %1131 = vmatprep.subr.mxu0 0.0
        %1132 = vmatpush2.msra.mxu0 0.0
        %1133 = vmatprep.subr.mxu0 0.0
        %1134 = vmatpush2.msra.mxu0 0.0
        %1135 = vmatprep.subr.mxu0 0.0
        %1136 = vmatpush2.msra.mxu0 0.0
        %1137 = vmatprep.subr.mxu0 0.0
        %1138 = vmatpush2.msra.mxu0 0.0
        %1139 = vmatprep.subr.mxu0 0.0
        %1140 = vmatpush2.msra.mxu0 0.0
        %1141 = vmatprep.subr.mxu0 0.0
        %1142 = vmatpush2.msra.mxu0 0.0
        %1143 = vmatprep.subr.mxu0 0.0
        %1144 = vmatpush2.msra.mxu0 0.0
        %1145 = vmatprep.subr.mxu0 0.0
        %1146 = vmatpush2.msra.mxu0 0.0
        %1147 = vmatprep.mubr.f32.mxu0 0.0
        %1148 = vmatmul.mubr.f32.gmra.mxu0 %v1078
        %v1149 = vpop.f32.mrf.mxu0
        %v1150 = vadd.f32 0.0, %v1149
        %v1151 = vpop.f32.mrf.mxu0
        %1152 = vmatprep.mubr.f32.mxu0 0.0
        %1153 = vmatmul.mubr.f32.gmra.mxu0 %v1081
        %v1154 = vpop.f32.mrf.mxu0
        %v1155 = vadd.f32 0.0, %v1154
        %v1156 = vpop.f32.mrf.mxu0
        %1157 = vdwg.mxu0
        %v1158 = vrcp.pop %v1067
        %v1159 = vrcp.pop %v1070
        %v1160 = vmul.f32 %v1150, %v1158
        %v1161 = vmul.f32 %v1155, %v1159
        %1162 = vrot.lane.b32.xlu0 %v758, 112
        %v1163 = vpop.permute.xlu0 %1162
        %1164 = vrot.lane.b32.xlu0 %v759, 112
        %v1165 = vpop.permute.xlu0 %1164
        %1166 = vrot.lane.b32.xlu0 %v750, 80
        %v1167 = vpop.permute.xlu0 %1166
        %1168 = vrot.lane.b32.xlu0 %v755, 80
        %v1169 = vpop.permute.xlu0 %1168
        %v1170 = vsel %vm766, %v1163, 0
        %v1172 = vsel %vm766, %v1165, 0
        %v1174 = vsel %vm766, %v1167, 0
        %v1176 = vsel %vm766, %v1169, 0
        %1178 = vmatprep.subr.mxu0 0.0
        %1179 = vmatpush1.xpose.msra.mxu0 0.0
        %1180 = vmatprep.subr.mxu0 0.0
        %1181 = vmatpush1.xpose.msra.mxu0 0.0
        %1182 = vmatprep.subr.mxu0 0.0
        %1183 = vmatpush1.xpose.msra.mxu0 0.0
        %1184 = vmatprep.subr.mxu0 0.0
        %1185 = vmatpush1.xpose.msra.mxu0 0.0
        %1186 = vmatprep.subr.mxu0 0.0
        %1187 = vmatpush1.xpose.msra.mxu0 0.0
        %1188 = vmatprep.subr.mxu0 0.0
        %1189 = vmatpush1.xpose.msra.mxu0 0.0
        %1190 = vmatprep.subr.mxu0 0.0
        %1191 = vmatpush1.xpose.msra.mxu0 0.0
        %1192 = vmatprep.subr.mxu0 0.0
        %1193 = vmatpush1.xpose.msra.mxu0 0.0
        %1194 = vmatprep.subr.mxu0 0.0
        %1195 = vmatpush1.xpose.msra.mxu0 0.0
        %1196 = vmatprep.subr.mxu0 0.0
        %1197 = vmatpush1.xpose.msra.mxu0 0.0
        %1198 = vmatprep.subr.mxu0 0.0
        %1199 = vmatpush1.xpose.msra.mxu0 0.0
        %1200 = vmatprep.subr.mxu0 0.0
        %1201 = vmatpush1.xpose.msra.mxu0 0.0
        %1202 = vmatprep.subr.mxu0 0.0
        %1203 = vmatpush1.xpose.msra.mxu0 0.0
        %1204 = vmatprep.subr.mxu0 0.0
        %1205 = vmatpush1.xpose.msra.mxu0 0.0
        %1206 = vmatprep.subr.mxu0 0.0
        %1207 = vmatpush1.xpose.msra.mxu0 %v1176
        %1208 = vmatprep.subr.mxu0 0.0
        %1209 = vmatpush1.xpose.msra.mxu0 %v1174
        %1210 = vmatprep.subr.mxu0 0.0
        %1211 = vmatpush2.xpose.msra.mxu0 0.0
        %1212 = vmatprep.subr.mxu0 0.0
        %1213 = vmatpush2.xpose.msra.mxu0 0.0
        %1214 = vmatprep.subr.mxu0 0.0
        %1215 = vmatpush2.xpose.msra.mxu0 0.0
        %1216 = vmatprep.subr.mxu0 0.0
        %1217 = vmatpush2.xpose.msra.mxu0 0.0
        %1218 = vmatprep.subr.mxu0 0.0
        %1219 = vmatpush2.xpose.msra.mxu0 0.0
        %1220 = vmatprep.subr.mxu0 0.0
        %1221 = vmatpush2.xpose.msra.mxu0 0.0
        %1222 = vmatprep.subr.mxu0 0.0
        %1223 = vmatpush2.xpose.msra.mxu0 0.0
        %1224 = vmatprep.subr.mxu0 0.0
        %1225 = vmatpush2.xpose.msra.mxu0 0.0
        %1226 = vmatprep.subr.mxu0 0.0
        %1227 = vmatpush2.xpose.msra.mxu0 0.0
        %1228 = vmatprep.subr.mxu0 0.0
        %1229 = vmatpush2.xpose.msra.mxu0 0.0
        %1230 = vmatprep.subr.mxu0 0.0
        %1231 = vmatpush2.xpose.msra.mxu0 0.0
        %1232 = vmatprep.subr.mxu0 0.0
        %1233 = vmatpush2.xpose.msra.mxu0 0.0
        %1234 = vmatprep.subr.mxu0 0.0
        %1235 = vmatpush2.xpose.msra.mxu0 0.0
        %1236 = vmatprep.subr.mxu0 0.0
        %1237 = vmatpush2.xpose.msra.mxu0 0.0
        %1238 = vmatprep.subr.mxu0 0.0
        %1239 = vmatpush2.xpose.msra.mxu0 0.0
        %1240 = vmatprep.subr.mxu0 0.0
        %1241 = vmatpush2.xpose.msra.mxu0 0.0
        %1242 = vmatprep.mubr.f32.mxu0 0.0
        %1243 = vmatmul.mubr.f32.gmra.mxu0 %v1170
        %v1244 = vpop.f32.mrf.mxu0
        %v1245 = vadd.f32 %v621, %v1244
        %v1246 = vpop.f32.mrf.mxu0
        %1247 = vmatprep.mubr.f32.mxu0 0.0
        %1248 = vmatmul.mubr.f32.gmra.mxu0 %v1172
        %v1249 = vpop.f32.mrf.mxu0
        %v1250 = vadd.f32 %v622, %v1249
        %v1251 = vpop.f32.mrf.mxu0
        %1252 = vdwg.mxu0
        %v1253 = vsel %vm852, %v1245, -inf
        %1254 = vmax.xlane.f32.xlu0 %v1253
        %v1255 = vpop.xlane.xlu0 %1254
        %v1256 = vsel %vm852, %v1250, -inf
        %1257 = vmax.xlane.f32.xlu0 %v1256
        %v1258 = vpop.xlane.xlu0 %1257
        %v1259 = vsub.f32 %v1245, %v1255
        %v1260 = vsub.f32 %v1250, %v1258
        %v1261 = vmul.f32 %v1259, 1.442695
        %v1262 = vpow.pop %v1261
        %v1263 = vmul.f32 %v1260, 1.442695
        %v1264 = vpow.pop %v1263
        %v1265 = vsel %vm852, %v1262, 0.0
        %1266 = vadd.xlane.f32.xlu0 %v1265
        %v1267 = vpop.xlane.xlu0 %1266
        %v1268 = vsel %vm852, %v1264, 0.0
        %1269 = vadd.xlane.f32.xlu0 %v1268
        %v1270 = vpop.xlane.xlu0 %1269
        %1271 = vrot.lane.b32.xlu0 %v750, 48
        %v1272 = vpop.permute.xlu0 %1271
        %1273 = vrot.lane.b32.xlu0 %v755, 48
        %v1274 = vpop.permute.xlu0 %1273
        %v1278 = vsel %vm852, %v1262, 0
        %v1281 = vsel %vm852, %v1264, 0
        %1283 = vmatprep.subr.mxu0 0.0
        %1284 = vmatpush1.msra.mxu0 0.0
        %1285 = vmatprep.subr.mxu0 0.0
        %1286 = vmatpush1.msra.mxu0 0.0
        %1287 = vmatprep.subr.mxu0 0.0
        %1288 = vmatpush1.msra.mxu0 0.0
        %1289 = vmatprep.subr.mxu0 0.0
        %1290 = vmatpush1.msra.mxu0 0.0
        %1291 = vmatprep.subr.mxu0 0.0
        %1292 = vmatpush1.msra.mxu0 0.0
        %1293 = vmatprep.subr.mxu0 0.0
        %1294 = vmatpush1.msra.mxu0 0.0
        %1295 = vmatprep.subr.mxu0 0.0
        %1296 = vmatpush1.msra.mxu0 0.0
        %1297 = vmatprep.subr.mxu0 0.0
        %1298 = vmatpush1.msra.mxu0 0.0
        %1299 = vmatprep.subr.mxu0 0.0
        %1300 = vmatpush1.msra.mxu0 0.0
        %1301 = vmatprep.subr.mxu0 0.0
        %1302 = vmatpush1.msra.mxu0 0.0
        %1303 = vmatprep.subr.mxu0 0.0
        %1304 = vmatpush1.msra.mxu0 0.0
        %1305 = vmatprep.subr.mxu0 0.0
        %1306 = vmatpush1.msra.mxu0 0.0
        %1307 = vmatprep.subr.mxu0 0.0
        %1308 = vmatpush1.msra.mxu0 0.0
        %1309 = vmatprep.subr.mxu0 0.0
        %1310 = vmatpush1.msra.mxu0 0.0
        %1311 = vmatprep.subr.mxu0 0.0
        %1312 = vmatpush1.msra.mxu0 %v1274
        %1313 = vmatprep.subr.mxu0 0.0
        %1314 = vmatpush1.msra.mxu0 %v1272
        %1315 = vmatprep.subr.mxu0 0.0
        %1316 = vmatpush2.msra.mxu0 0.0
        %1317 = vmatprep.subr.mxu0 0.0
        %1318 = vmatpush2.msra.mxu0 0.0
        %1319 = vmatprep.subr.mxu0 0.0
        %1320 = vmatpush2.msra.mxu0 0.0
        %1321 = vmatprep.subr.mxu0 0.0
        %1322 = vmatpush2.msra.mxu0 0.0
        %1323 = vmatprep.subr.mxu0 0.0
        %1324 = vmatpush2.msra.mxu0 0.0
        %1325 = vmatprep.subr.mxu0 0.0
        %1326 = vmatpush2.msra.mxu0 0.0
        %1327 = vmatprep.subr.mxu0 0.0
        %1328 = vmatpush2.msra.mxu0 0.0
        %1329 = vmatprep.subr.mxu0 0.0
        %1330 = vmatpush2.msra.mxu0 0.0
        %1331 = vmatprep.subr.mxu0 0.0
        %1332 = vmatpush2.msra.mxu0 0.0
        %1333 = vmatprep.subr.mxu0 0.0
        %1334 = vmatpush2.msra.mxu0 0.0
        %1335 = vmatprep.subr.mxu0 0.0
        %1336 = vmatpush2.msra.mxu0 0.0
        %1337 = vmatprep.subr.mxu0 0.0
        %1338 = vmatpush2.msra.mxu0 0.0
        %1339 = vmatprep.subr.mxu0 0.0
        %1340 = vmatpush2.msra.mxu0 0.0
        %1341 = vmatprep.subr.mxu0 0.0
        %1342 = vmatpush2.msra.mxu0 0.0
        %1343 = vmatprep.subr.mxu0 0.0
        %1344 = vmatpush2.msra.mxu0 0.0
        %1345 = vmatprep.subr.mxu0 0.0
        %1346 = vmatpush2.msra.mxu0 0.0
        %1347 = vmatprep.mubr.f32.mxu0 0.0
        %1348 = vmatmul.mubr.f32.gmra.mxu0 %v1278
        %v1349 = vpop.f32.mrf.mxu0
        %v1350 = vadd.f32 0.0, %v1349
        %v1351 = vpop.f32.mrf.mxu0
        %1352 = vmatprep.mubr.f32.mxu0 0.0
        %1353 = vmatmul.mubr.f32.gmra.mxu0 %v1281
        %v1354 = vpop.f32.mrf.mxu0
        %v1355 = vadd.f32 0.0, %v1354
        %v1356 = vpop.f32.mrf.mxu0
        %1357 = vdwg.mxu0
        %v1358 = vrcp.pop %v1267
        %v1359 = vrcp.pop %v1270
        %v1360 = vmul.f32 %v1350, %v1358
        %v1361 = vmul.f32 %v1355, %v1359
        %1362 = vrot.lane.b32.xlu0 %v758, 104
        %v1363 = vpop.permute.xlu0 %1362
        %1364 = vrot.lane.b32.xlu0 %v759, 104
        %v1365 = vpop.permute.xlu0 %1364
        %1366 = vrot.lane.b32.xlu0 %v750, 72
        %v1367 = vpop.permute.xlu0 %1366
        %1368 = vrot.lane.b32.xlu0 %v755, 72
        %v1369 = vpop.permute.xlu0 %1368
        %v1370 = vsel %vm766, %v1363, 0
        %v1372 = vsel %vm766, %v1365, 0
        %v1374 = vsel %vm766, %v1367, 0
        %v1376 = vsel %vm766, %v1369, 0
        %1378 = vmatprep.subr.mxu0 0.0
        %1379 = vmatpush1.xpose.msra.mxu0 0.0
        %1380 = vmatprep.subr.mxu0 0.0
        %1381 = vmatpush1.xpose.msra.mxu0 0.0
        %1382 = vmatprep.subr.mxu0 0.0
        %1383 = vmatpush1.xpose.msra.mxu0 0.0
        %1384 = vmatprep.subr.mxu0 0.0
        %1385 = vmatpush1.xpose.msra.mxu0 0.0
        %1386 = vmatprep.subr.mxu0 0.0
        %1387 = vmatpush1.xpose.msra.mxu0 0.0
        %1388 = vmatprep.subr.mxu0 0.0
        %1389 = vmatpush1.xpose.msra.mxu0 0.0
        %1390 = vmatprep.subr.mxu0 0.0
        %1391 = vmatpush1.xpose.msra.mxu0 0.0
        %1392 = vmatprep.subr.mxu0 0.0
        %1393 = vmatpush1.xpose.msra.mxu0 0.0
        %1394 = vmatprep.subr.mxu0 0.0
        %1395 = vmatpush1.xpose.msra.mxu0 0.0
        %1396 = vmatprep.subr.mxu0 0.0
        %1397 = vmatpush1.xpose.msra.mxu0 0.0
        %1398 = vmatprep.subr.mxu0 0.0
        %1399 = vmatpush1.xpose.msra.mxu0 0.0
        %1400 = vmatprep.subr.mxu0 0.0
        %1401 = vmatpush1.xpose.msra.mxu0 0.0
        %1402 = vmatprep.subr.mxu0 0.0
        %1403 = vmatpush1.xpose.msra.mxu0 0.0
        %1404 = vmatprep.subr.mxu0 0.0
        %1405 = vmatpush1.xpose.msra.mxu0 0.0
        %1406 = vmatprep.subr.mxu0 0.0
        %1407 = vmatpush1.xpose.msra.mxu0 %v1376
        %1408 = vmatprep.subr.mxu0 0.0
        %1409 = vmatpush1.xpose.msra.mxu0 %v1374
        %1410 = vmatprep.subr.mxu0 0.0
        %1411 = vmatpush2.xpose.msra.mxu0 0.0
        %1412 = vmatprep.subr.mxu0 0.0
        %1413 = vmatpush2.xpose.msra.mxu0 0.0
        %1414 = vmatprep.subr.mxu0 0.0
        %1415 = vmatpush2.xpose.msra.mxu0 0.0
        %1416 = vmatprep.subr.mxu0 0.0
        %1417 = vmatpush2.xpose.msra.mxu0 0.0
        %1418 = vmatprep.subr.mxu0 0.0
        %1419 = vmatpush2.xpose.msra.mxu0 0.0
        %1420 = vmatprep.subr.mxu0 0.0
        %1421 = vmatpush2.xpose.msra.mxu0 0.0
        %1422 = vmatprep.subr.mxu0 0.0
        %1423 = vmatpush2.xpose.msra.mxu0 0.0
        %1424 = vmatprep.subr.mxu0 0.0
        %1425 = vmatpush2.xpose.msra.mxu0 0.0
        %1426 = vmatprep.subr.mxu0 0.0
        %1427 = vmatpush2.xpose.msra.mxu0 0.0
        %1428 = vmatprep.subr.mxu0 0.0
        %1429 = vmatpush2.xpose.msra.mxu0 0.0
        %1430 = vmatprep.subr.mxu0 0.0
        %1431 = vmatpush2.xpose.msra.mxu0 0.0
        %1432 = vmatprep.subr.mxu0 0.0
        %1433 = vmatpush2.xpose.msra.mxu0 0.0
        %1434 = vmatprep.subr.mxu0 0.0
        %1435 = vmatpush2.xpose.msra.mxu0 0.0
        %1436 = vmatprep.subr.mxu0 0.0
        %1437 = vmatpush2.xpose.msra.mxu0 0.0
        %1438 = vmatprep.subr.mxu0 0.0
        %1439 = vmatpush2.xpose.msra.mxu0 0.0
        %1440 = vmatprep.subr.mxu0 0.0
        %1441 = vmatpush2.xpose.msra.mxu0 0.0
        %1442 = vmatprep.mubr.f32.mxu0 0.0
        %1443 = vmatmul.mubr.f32.gmra.mxu0 %v1370
        %v1444 = vpop.f32.mrf.mxu0
        %v1445 = vadd.f32 %v621, %v1444
        %v1446 = vpop.f32.mrf.mxu0
        %1447 = vmatprep.mubr.f32.mxu0 0.0
        %1448 = vmatmul.mubr.f32.gmra.mxu0 %v1372
        %v1449 = vpop.f32.mrf.mxu0
        %v1450 = vadd.f32 %v622, %v1449
        %v1451 = vpop.f32.mrf.mxu0
        %1452 = vdwg.mxu0
        %v1453 = vsel %vm852, %v1445, -inf
        %1454 = vmax.xlane.f32.xlu0 %v1453
        %v1455 = vpop.xlane.xlu0 %1454
        %v1456 = vsel %vm852, %v1450, -inf
        %1457 = vmax.xlane.f32.xlu0 %v1456
        %v1458 = vpop.xlane.xlu0 %1457
        %v1459 = vsub.f32 %v1445, %v1455
        %v1460 = vsub.f32 %v1450, %v1458
        %v1461 = vmul.f32 %v1459, 1.442695
        %v1462 = vpow.pop %v1461
        %v1463 = vmul.f32 %v1460, 1.442695
        %v1464 = vpow.pop %v1463
        %v1465 = vsel %vm852, %v1462, 0.0
        %1466 = vadd.xlane.f32.xlu0 %v1465
        %v1467 = vpop.xlane.xlu0 %1466
        %v1468 = vsel %vm852, %v1464, 0.0
        %1469 = vadd.xlane.f32.xlu0 %v1468
        %v1470 = vpop.xlane.xlu0 %1469
        %1471 = vrot.lane.b32.xlu0 %v750, 40
        %v1472 = vpop.permute.xlu0 %1471
        %1473 = vrot.lane.b32.xlu0 %v755, 40
        %v1474 = vpop.permute.xlu0 %1473
        %v1478 = vsel %vm852, %v1462, 0
        %v1481 = vsel %vm852, %v1464, 0
        %1483 = vmatprep.subr.mxu0 0.0
        %1484 = vmatpush1.msra.mxu0 0.0
        %1485 = vmatprep.subr.mxu0 0.0
        %1486 = vmatpush1.msra.mxu0 0.0
        %1487 = vmatprep.subr.mxu0 0.0
        %1488 = vmatpush1.msra.mxu0 0.0
        %1489 = vmatprep.subr.mxu0 0.0
        %1490 = vmatpush1.msra.mxu0 0.0
        %1491 = vmatprep.subr.mxu0 0.0
        %1492 = vmatpush1.msra.mxu0 0.0
        %1493 = vmatprep.subr.mxu0 0.0
        %1494 = vmatpush1.msra.mxu0 0.0
        %1495 = vmatprep.subr.mxu0 0.0
        %1496 = vmatpush1.msra.mxu0 0.0
        %1497 = vmatprep.subr.mxu0 0.0
        %1498 = vmatpush1.msra.mxu0 0.0
        %1499 = vmatprep.subr.mxu0 0.0
        %1500 = vmatpush1.msra.mxu0 0.0
        %1501 = vmatprep.subr.mxu0 0.0
        %1502 = vmatpush1.msra.mxu0 0.0
        %1503 = vmatprep.subr.mxu0 0.0
        %1504 = vmatpush1.msra.mxu0 0.0
        %1505 = vmatprep.subr.mxu0 0.0
        %1506 = vmatpush1.msra.mxu0 0.0
        %1507 = vmatprep.subr.mxu0 0.0
        %1508 = vmatpush1.msra.mxu0 0.0
        %1509 = vmatprep.subr.mxu0 0.0
        %1510 = vmatpush1.msra.mxu0 0.0
        %1511 = vmatprep.subr.mxu0 0.0
        %1512 = vmatpush1.msra.mxu0 %v1474
        %1513 = vmatprep.subr.mxu0 0.0
        %1514 = vmatpush1.msra.mxu0 %v1472
        %1515 = vmatprep.subr.mxu0 0.0
        %1516 = vmatpush2.msra.mxu0 0.0
        %1517 = vmatprep.subr.mxu0 0.0
        %1518 = vmatpush2.msra.mxu0 0.0
        %1519 = vmatprep.subr.mxu0 0.0
        %1520 = vmatpush2.msra.mxu0 0.0
        %1521 = vmatprep.subr.mxu0 0.0
        %1522 = vmatpush2.msra.mxu0 0.0
        %1523 = vmatprep.subr.mxu0 0.0
        %1524 = vmatpush2.msra.mxu0 0.0
        %1525 = vmatprep.subr.mxu0 0.0
        %1526 = vmatpush2.msra.mxu0 0.0
        %1527 = vmatprep.subr.mxu0 0.0
        %1528 = vmatpush2.msra.mxu0 0.0
        %1529 = vmatprep.subr.mxu0 0.0
        %1530 = vmatpush2.msra.mxu0 0.0
        %1531 = vmatprep.subr.mxu0 0.0
        %1532 = vmatpush2.msra.mxu0 0.0
        %1533 = vmatprep.subr.mxu0 0.0
        %1534 = vmatpush2.msra.mxu0 0.0
        %1535 = vmatprep.subr.mxu0 0.0
        %1536 = vmatpush2.msra.mxu0 0.0
        %1537 = vmatprep.subr.mxu0 0.0
        %1538 = vmatpush2.msra.mxu0 0.0
        %1539 = vmatprep.subr.mxu0 0.0
        %1540 = vmatpush2.msra.mxu0 0.0
        %1541 = vmatprep.subr.mxu0 0.0
        %1542 = vmatpush2.msra.mxu0 0.0
        %1543 = vmatprep.subr.mxu0 0.0
        %1544 = vmatpush2.msra.mxu0 0.0
        %1545 = vmatprep.subr.mxu0 0.0
        %1546 = vmatpush2.msra.mxu0 0.0
        %1547 = vmatprep.mubr.f32.mxu0 0.0
        %1548 = vmatmul.mubr.f32.gmra.mxu0 %v1478
        %v1549 = vpop.f32.mrf.mxu0
        %v1550 = vadd.f32 0.0, %v1549
        %v1551 = vpop.f32.mrf.mxu0
        %1552 = vmatprep.mubr.f32.mxu0 0.0
        %1553 = vmatmul.mubr.f32.gmra.mxu0 %v1481
        %v1554 = vpop.f32.mrf.mxu0
        %v1555 = vadd.f32 0.0, %v1554
        %v1556 = vpop.f32.mrf.mxu0
        %1557 = vdwg.mxu0
        %v1558 = vrcp.pop %v1467
        %v1559 = vrcp.pop %v1470
        %v1560 = vmul.f32 %v1550, %v1558
        %v1561 = vmul.f32 %v1555, %v1559
        %1564 = vrot.lane.b32.xlu0 %v1160, 8
        %v1565 = vpop.permute.xlu0 %1564
        %1566 = vrot.lane.b32.xlu0 %v1161, 8
        %v1567 = vpop.permute.xlu0 %1566
        %1572 = vrot.lane.b32.xlu0 %v1360, 16
        %v1573 = vpop.permute.xlu0 %1572
        %1574 = vrot.lane.b32.xlu0 %v1361, 16
        %v1575 = vpop.permute.xlu0 %1574
        %1580 = vrot.lane.b32.xlu0 %v1560, 24
        %v1581 = vpop.permute.xlu0 %1580
        %1582 = vrot.lane.b32.xlu0 %v1561, 24
        %v1583 = vpop.permute.xlu0 %1582
        %v1586 = vsel %vm766, %v960, %v1565
        %v1587 = vsel %vm766, %v961, %v1567
        %v1588 = vsel %vm852, %v1586, %v1573
        %v1589 = vsel %vm852, %v1587, %v1575
        %vm1590 = vcmask 195584
        %v1591 = vsel %vm1590, %v1588, %v1581
        %v1592 = vsel %vm1590, %v1589, %v1583
        %1597 = vrot.lane.b32.xlu0 %v666, 32
        %v1598 = vpop.permute.xlu0 %1597
        %1599 = vrot.lane.b32.xlu0 %v667, 32
        %v1600 = vpop.permute.xlu0 %1599
        %1601 = vrot.lane.b32.xlu0 %v668, 32
        %v1602 = vpop.permute.xlu0 %1601
        %1603 = vrot.lane.b32.xlu0 %v669, 32
        %v1604 = vpop.permute.xlu0 %1603
        %1609 = vrot.lane.b32.xlu0 %v675, 32
        %v1610 = vpop.permute.xlu0 %1609
        %v1613 = vsel %vm626, %v1591, 0
        %v1616 = vsel %vm626, %v1592, 0
        %1618 = vmatprep.subr.mxu0 0.0
        %1619 = vmatpush1.msra.mxu0 0.0
        %1620 = vmatprep.subr.mxu0 0.0
        %1621 = vmatpush1.msra.mxu0 0.0
        %1622 = vmatprep.subr.mxu0 0.0
        %1623 = vmatpush1.msra.mxu0 0.0
        %1624 = vmatprep.subr.mxu0 0.0
        %1625 = vmatpush1.msra.mxu0 0.0
        %1626 = vmatprep.subr.mxu0 0.0
        %1627 = vmatpush1.msra.mxu0 0.0
        %1628 = vmatprep.subr.mxu0 0.0
        %1629 = vmatpush1.msra.mxu0 0.0
        %1630 = vmatprep.subr.mxu0 0.0
        %1631 = vmatpush1.msra.mxu0 0.0
        %1632 = vmatprep.subr.mxu0 0.0
        %1633 = vmatpush1.msra.mxu0 0.0
        %1634 = vmatprep.subr.mxu0 0.0
        %1635 = vmatpush1.msra.mxu0 0.0
        %1636 = vmatprep.subr.mxu0 0.0
        %1637 = vmatpush1.msra.mxu0 0.0
        %1638 = vmatprep.subr.mxu0 0.0
        %1639 = vmatpush1.msra.mxu0 0.0
        %1640 = vmatprep.subr.mxu0 0.0
        %1641 = vmatpush1.msra.mxu0 0.0
        %1642 = vmatprep.subr.mxu0 0.0
        %1643 = vmatpush1.msra.mxu0 %v1604
        %1644 = vmatprep.subr.mxu0 0.0
        %1645 = vmatpush1.msra.mxu0 %v1602
        %1646 = vmatprep.subr.mxu0 0.0
        %1647 = vmatpush1.msra.mxu0 %v1600
        %1648 = vmatprep.subr.mxu0 0.0
        %1649 = vmatpush1.msra.mxu0 %v1598
        %1650 = vmatprep.subr.mxu0 0.0
        %1651 = vmatpush2.msra.mxu0 0.0
        %1652 = vmatprep.subr.mxu0 0.0
        %1653 = vmatpush2.msra.mxu0 0.0
        %1654 = vmatprep.subr.mxu0 0.0
        %1655 = vmatpush2.msra.mxu0 0.0
        %1656 = vmatprep.subr.mxu0 0.0
        %1657 = vmatpush2.msra.mxu0 0.0
        %1658 = vmatprep.subr.mxu0 0.0
        %1659 = vmatpush2.msra.mxu0 0.0
        %1660 = vmatprep.subr.mxu0 0.0
        %1661 = vmatpush2.msra.mxu0 0.0
        %1662 = vmatprep.subr.mxu0 0.0
        %1663 = vmatpush2.msra.mxu0 0.0
        %1664 = vmatprep.subr.mxu0 0.0
        %1665 = vmatpush2.msra.mxu0 0.0
        %1666 = vmatprep.subr.mxu0 0.0
        %1667 = vmatpush2.msra.mxu0 0.0
        %1668 = vmatprep.subr.mxu0 0.0
        %1669 = vmatpush2.msra.mxu0 0.0
        %1670 = vmatprep.subr.mxu0 0.0
        %1671 = vmatpush2.msra.mxu0 0.0
        %1672 = vmatprep.subr.mxu0 0.0
        %1673 = vmatpush2.msra.mxu0 0.0
        %1674 = vmatprep.subr.mxu0 0.0
        %1675 = vmatpush2.msra.mxu0 0.0
        %1676 = vmatprep.subr.mxu0 0.0
        %1677 = vmatpush2.msra.mxu0 0.0
        %1678 = vmatprep.subr.mxu0 0.0
        %1679 = vmatpush2.msra.mxu0 0.0
        %1680 = vmatprep.subr.mxu0 0.0
        %1681 = vmatpush2.msra.mxu0 0.0
        %1682 = vmatprep.mubr.f32.mxu0 0.0
        %1683 = vmatmul.mubr.f32.gmra.mxu0 %v1613
        %v1684 = vpop.f32.mrf.mxu0
        %v1685 = vadd.f32 %v1610, %v1684
        %v1686 = vpop.f32.mrf.mxu0
        %1687 = vmatprep.mubr.f32.mxu0 0.0
        %1688 = vmatmul.mubr.f32.gmra.mxu0 %v1616
        %v1689 = vpop.f32.mrf.mxu0
        %v1690 = vadd.f32 %v1610, %v1689
        %v1691 = vpop.f32.mrf.mxu0
        %1692 = vdwg.mxu0
        %v1693 = vadd.f32 %v1685, %v664
        %v1694 = vadd.f32 %v1690, %v665
        %v1695 = vld [vmem:[%s9] sm:$0xff]
        %v1696 = vld [vmem:[%s9 + $0x8] sm:$0xff]
        %v1697 = vld [vmem:[%s9 + $0x10] sm:$0xff]
        %v1698 = vld [vmem:[%s9 + $0x18] sm:$0xff]
        %v1699 = vld [vmem:[%s9 + $0x20] sm:$0xff]
        %v1700 = vld [vmem:[%s9 + $0x28] sm:$0xff]
        %v1701 = vld [vmem:[%s9 + $0x30] sm:$0xff]
        %v1702 = vld [vmem:[%s9 + $0x38] sm:$0xff]
        %v1703 = vld [vmem:[%s9 + $0x40] sm:$0xff]
        %v1704 = vld [vmem:[%s9 + $0x48] sm:$0xff]
        %v1705 = vld [vmem:[%s9 + $0x50] sm:$0xff]
        %v1706 = vld [vmem:[%s9 + $0x58] sm:$0xff]
        %v1707 = vld [vmem:[%s9 + $0x60] sm:$0xff]
        %v1708 = vld [vmem:[%s9 + $0x68] sm:$0xff]
        %v1709 = vld [vmem:[%s9 + $0x70] sm:$0xff]
        %v1710 = vld [vmem:[%s9 + $0x78] sm:$0xff]
        %v1711 = vld [vmem:[%s9 + $0x80] sm:$0xff]
        %v1712 = vld [vmem:[%s9 + $0x88] sm:$0xff]
        %v1713 = vld [vmem:[%s9 + $0x90] sm:$0xff]
        %v1714 = vld [vmem:[%s9 + $0x98] sm:$0xff]
        %v1715 = vld [vmem:[%s9 + $0xa0] sm:$0xff]
        %v1716 = vld [vmem:[%s9 + $0xa8] sm:$0xff]
        %v1717 = vld [vmem:[%s9 + $0xb0] sm:$0xff]
        %v1718 = vld [vmem:[%s9 + $0xb8] sm:$0xff]
        %v1719 = vld [vmem:[%s9 + $0xc0] sm:$0xff]
        %v1720 = vld [vmem:[%s9 + $0xc8] sm:$0xff]
        %v1721 = vld [vmem:[%s9 + $0xd0] sm:$0xff]
        %v1722 = vld [vmem:[%s9 + $0xd8] sm:$0xff]
        %v1723 = vld [vmem:[%s9 + $0xe0] sm:$0xff]
        %v1724 = vld [vmem:[%s9 + $0xe8] sm:$0xff]
        %v1725 = vld [vmem:[%s9 + $0xf0] sm:$0xff]
        %v1726 = vld [vmem:[%s9 + $0xf8] sm:$0xff]
        %v1727 = vld [vmem:[%s9 + $0x100] sm:$0xff]
        %v1728 = vld [vmem:[%s9 + $0x108] sm:$0xff]
        %v1729 = vld [vmem:[%s9 + $0x110] sm:$0xff]
        %v1730 = vld [vmem:[%s9 + $0x118] sm:$0xff]
        %v1731 = vld [vmem:[%s9 + $0x120] sm:$0xff]
        %v1732 = vld [vmem:[%s9 + $0x128] sm:$0xff]
        %v1733 = vld [vmem:[%s9 + $0x130] sm:$0xff]
        %v1734 = vld [vmem:[%s9 + $0x138] sm:$0xff]
        %v1735 = vld [vmem:[%s9 + $0x140] sm:$0xff]
        %v1736 = vld [vmem:[%s9 + $0x148] sm:$0xff]
        %v1737 = vld [vmem:[%s9 + $0x150] sm:$0xff]
        %v1738 = vld [vmem:[%s9 + $0x158] sm:$0xff]
        %v1739 = vld [vmem:[%s10] sm:$0x1]
        %vm1740 = vcmask 1041408
        %v1741 = vrot.slane %v664, 6
        %v1742 = vrot.slane %v665, 6
        %v1743 = vsel %vm1740, %v1741, %v1742
        %v1746 = vsel %vm1740, 0.0, %v1741
        %vm1749 = vcmask 1046528
        %v1750 = vrot.slane 0.0, 1
        %v1751 = vrot.slane %v1746, 1
        %v1752 = vsel %vm1749, %v1750, %v1751
        %v1753 = vrot.slane %v1743, 1
        %v1754 = vsel %vm1749, %v1751, %v1753
        %1755 = vrot.lane.b32.xlu0 %v1752, 32
        %v1756 = vpop.permute.xlu0 %1755
        %1757 = vrot.lane.b32.xlu0 %v1754, 32
        %v1758 = vpop.permute.xlu0 %1757
        %vm1761 = vcmask 1045504
        %v1762 = vrot.slane 0.0, 2
        %v1763 = vrot.slane %v1746, 2
        %v1764 = vsel %vm1761, %v1762, %v1763
        %v1765 = vrot.slane %v1743, 2
        %v1766 = vsel %vm1761, %v1763, %v1765
        %1767 = vrot.lane.b32.xlu0 %v1764, 64
        %v1768 = vpop.permute.xlu0 %1767
        %1769 = vrot.lane.b32.xlu0 %v1766, 64
        %v1770 = vpop.permute.xlu0 %1769
        %vm1773 = vcmask 1044480
        %v1774 = vrot.slane 0.0, 3
        %v1775 = vrot.slane %v1746, 3
        %v1776 = vsel %vm1773, %v1774, %v1775
        %v1777 = vrot.slane %v1743, 3
        %v1778 = vsel %vm1773, %v1775, %v1777
        %1779 = vrot.lane.b32.xlu0 %v1776, 96
        %v1780 = vpop.permute.xlu0 %1779
        %1781 = vrot.lane.b32.xlu0 %v1778, 96
        %v1782 = vpop.permute.xlu0 %1781
        %vm1785 = vcmask 1043456
        %v1786 = vrot.slane 0.0, 4
        %v1787 = vrot.slane %v1746, 4
        %v1788 = vsel %vm1785, %v1786, %v1787
        %v1789 = vrot.slane %v1743, 4
        %v1790 = vsel %vm1785, %v1787, %v1789
        %vm1793 = vcmask 1042432
        %v1794 = vrot.slane 0.0, 5
        %v1795 = vrot.slane %v1746, 5
        %v1796 = vsel %vm1793, %v1794, %v1795
        %v1797 = vrot.slane %v1743, 5
        %v1798 = vsel %vm1793, %v1795, %v1797
        %1799 = vrot.lane.b32.xlu0 %v1796, 32
        %v1800 = vpop.permute.xlu0 %1799
        %1801 = vrot.lane.b32.xlu0 %v1798, 32
        %v1802 = vpop.permute.xlu0 %1801
        %v1805 = vrot.slane 0.0, 6
        %v1806 = vrot.slane %v1746, 6
        %v1807 = vsel %vm1740, %v1805, %v1806
        %v1808 = vrot.slane %v1743, 6
        %v1809 = vsel %vm1740, %v1806, %v1808
        %1810 = vrot.lane.b32.xlu0 %v1807, 64
        %v1811 = vpop.permute.xlu0 %1810
        %1812 = vrot.lane.b32.xlu0 %v1809, 64
        %v1813 = vpop.permute.xlu0 %1812
        %vm1816 = vcmask 1040384
        %v1817 = vrot.slane 0.0, 7
        %v1818 = vrot.slane %v1746, 7
        %v1819 = vsel %vm1816, %v1817, %v1818
        %v1820 = vrot.slane %v1743, 7
        %v1821 = vsel %vm1816, %v1818, %v1820
        %1822 = vrot.lane.b32.xlu0 %v1819, 96
        %v1823 = vpop.permute.xlu0 %1822
        %1824 = vrot.lane.b32.xlu0 %v1821, 96
        %v1825 = vpop.permute.xlu0 %1824
        %v1828 = vrot.slane %v1742, 1
        %v1829 = vsel %vm1749, %v1753, %v1828
        %1830 = vrot.lane.b32.xlu0 %v1829, 32
        %v1831 = vpop.permute.xlu0 %1830
        %v1833 = vrot.slane %v1742, 2
        %v1834 = vsel %vm1761, %v1765, %v1833
        %1835 = vrot.lane.b32.xlu0 %v1834, 64
        %v1836 = vpop.permute.xlu0 %1835
        %v1838 = vsel %vm626, 0.0, %v1756
        %v1839 = vsel %vm626, %v1746, %v1758
        %vm1840 = vcmask 523264
        %v1841 = vsel %vm1840, %v1838, %v1768
        %v1842 = vsel %vm1840, %v1839, %v1770
        %vm1843 = vcmask 785408
        %v1844 = vsel %vm1843, %v1841, %v1780
        %v1845 = vsel %vm1843, %v1842, %v1782
        %v1846 = vsel %vm626, %v1788, %v1800
        %v1847 = vsel %vm626, %v1790, %v1802
        %v1848 = vsel %vm1840, %v1846, %v1811
        %v1849 = vsel %vm1840, %v1847, %v1813
        %v1850 = vsel %vm1843, %v1848, %v1823
        %v1851 = vsel %vm1843, %v1849, %v1825
        %v1852 = vsel %vm626, %v1743, %v1831
        %v1853 = vsel %vm1840, %v1852, %v1836
        %v1855 = vlaneseq
        %v1856 = vshrl.u32 %v1855, 7
        %v1857 = vsub.s32 0, %v1856
        %v1858 = vrot.slane %v1739, %v1857
        %v1861 = vsel %vm1843, %v1842, 0
        %v1864 = vsel %vm1843, %v1853, 0
        %1866 = vmatprep.subr.mxu0 0.0
        %1867 = vmatpush1.msra.mxu0 %v1710
        %1868 = vmatprep.subr.mxu0 0.0
        %1869 = vmatpush1.msra.mxu0 %v1709
        %1870 = vmatprep.subr.mxu0 0.0
        %1871 = vmatpush1.msra.mxu0 %v1708
        %1872 = vmatprep.subr.mxu0 0.0
        %1873 = vmatpush1.msra.mxu0 %v1707
        %1874 = vmatprep.subr.mxu0 0.0
        %1875 = vmatpush1.msra.mxu0 %v1706
        %1876 = vmatprep.subr.mxu0 0.0
        %1877 = vmatpush1.msra.mxu0 %v1705
        %1878 = vmatprep.subr.mxu0 0.0
        %1879 = vmatpush1.msra.mxu0 %v1704
        %1880 = vmatprep.subr.mxu0 0.0
        %1881 = vmatpush1.msra.mxu0 %v1703
        %1882 = vmatprep.subr.mxu0 0.0
        %1883 = vmatpush1.msra.mxu0 %v1702
        %1884 = vmatprep.subr.mxu0 0.0
        %1885 = vmatpush1.msra.mxu0 %v1701
        %1886 = vmatprep.subr.mxu0 0.0
        %1887 = vmatpush1.msra.mxu0 %v1700
        %1888 = vmatprep.subr.mxu0 0.0
        %1889 = vmatpush1.msra.mxu0 %v1699
        %1890 = vmatprep.subr.mxu0 0.0
        %1891 = vmatpush1.msra.mxu0 %v1698
        %1892 = vmatprep.subr.mxu0 0.0
        %1893 = vmatpush1.msra.mxu0 %v1697
        %1894 = vmatprep.subr.mxu0 0.0
        %1895 = vmatpush1.msra.mxu0 %v1696
        %1896 = vmatprep.subr.mxu0 0.0
        %1897 = vmatpush1.msra.mxu0 %v1695
        %1898 = vmatprep.subr.mxu0 0.0
        %1899 = vmatpush2.msra.mxu0 %v1726
        %1900 = vmatprep.subr.mxu0 0.0
        %1901 = vmatpush2.msra.mxu0 %v1725
        %1902 = vmatprep.subr.mxu0 0.0
        %1903 = vmatpush2.msra.mxu0 %v1724
        %1904 = vmatprep.subr.mxu0 0.0
        %1905 = vmatpush2.msra.mxu0 %v1723
        %1906 = vmatprep.subr.mxu0 0.0
        %1907 = vmatpush2.msra.mxu0 %v1722
        %1908 = vmatprep.subr.mxu0 0.0
        %1909 = vmatpush2.msra.mxu0 %v1721
        %1910 = vmatprep.subr.mxu0 0.0
        %1911 = vmatpush2.msra.mxu0 %v1720
        %1912 = vmatprep.subr.mxu0 0.0
        %1913 = vmatpush2.msra.mxu0 %v1719
        %1914 = vmatprep.subr.mxu0 0.0
        %1915 = vmatpush2.msra.mxu0 %v1718
        %1916 = vmatprep.subr.mxu0 0.0
        %1917 = vmatpush2.msra.mxu0 %v1717
        %1918 = vmatprep.subr.mxu0 0.0
        %1919 = vmatpush2.msra.mxu0 %v1716
        %1920 = vmatprep.subr.mxu0 0.0
        %1921 = vmatpush2.msra.mxu0 %v1715
        %1922 = vmatprep.subr.mxu0 0.0
        %1923 = vmatpush2.msra.mxu0 %v1714
        %1924 = vmatprep.subr.mxu0 0.0
        %1925 = vmatpush2.msra.mxu0 %v1713
        %1926 = vmatprep.subr.mxu0 0.0
        %1927 = vmatpush2.msra.mxu0 %v1712
        %1928 = vmatprep.subr.mxu0 0.0
        %1929 = vmatpush2.msra.mxu0 %v1711
        %1930 = vmatprep.mubr.f32.mxu0 %v1850
        %1931 = vmatmul.mubr.f32.gmra.mxu0 %v1844
        %v1932 = vpop.f32.mrf.mxu0
        %v1933 = vadd.f32 %v1858, %v1932
        %v1934 = vpop.f32.mrf.mxu0
        %1935 = vmatprep.mubr.f32.mxu0 %v1851
        %1936 = vmatmul.mubr.f32.gmra.mxu0 %v1845
        %v1937 = vpop.f32.mrf.mxu0
        %v1938 = vadd.f32 %v1858, %v1937
        %v1939 = vpop.f32.mrf.mxu0
        %1940 = vdwg.mxu0
        %1941 = vmatprep.subr.mxu0 0.0
        %1942 = vmatpush1.msra.mxu0 0.0
        %1943 = vmatprep.subr.mxu0 0.0
        %1944 = vmatpush1.msra.mxu0 0.0
        %1945 = vmatprep.subr.mxu0 0.0
        %1946 = vmatpush1.msra.mxu0 0.0
        %1947 = vmatprep.subr.mxu0 0.0
        %1948 = vmatpush1.msra.mxu0 0.0
        %1949 = vmatprep.subr.mxu0 0.0
        %1950 = vmatpush1.msra.mxu0 %v1738
        %1951 = vmatprep.subr.mxu0 0.0
        %1952 = vmatpush1.msra.mxu0 %v1737
        %1953 = vmatprep.subr.mxu0 0.0
        %1954 = vmatpush1.msra.mxu0 %v1736
        %1955 = vmatprep.subr.mxu0 0.0
        %1956 = vmatpush1.msra.mxu0 %v1735
        %1957 = vmatprep.subr.mxu0 0.0
        %1958 = vmatpush1.msra.mxu0 %v1734
        %1959 = vmatprep.subr.mxu0 0.0
        %1960 = vmatpush1.msra.mxu0 %v1733
        %1961 = vmatprep.subr.mxu0 0.0
        %1962 = vmatpush1.msra.mxu0 %v1732
        %1963 = vmatprep.subr.mxu0 0.0
        %1964 = vmatpush1.msra.mxu0 %v1731
        %1965 = vmatprep.subr.mxu0 0.0
        %1966 = vmatpush1.msra.mxu0 %v1730
        %1967 = vmatprep.subr.mxu0 0.0
        %1968 = vmatpush1.msra.mxu0 %v1729
        %1969 = vmatprep.subr.mxu0 0.0
        %1970 = vmatpush1.msra.mxu0 %v1728
        %1971 = vmatprep.subr.mxu0 0.0
        %1972 = vmatpush1.msra.mxu0 %v1727
        %1973 = vmatprep.subr.mxu0 0.0
        %1974 = vmatpush2.msra.mxu0 0.0
        %1975 = vmatprep.subr.mxu0 0.0
        %1976 = vmatpush2.msra.mxu0 0.0
        %1977 = vmatprep.subr.mxu0 0.0
        %1978 = vmatpush2.msra.mxu0 0.0
        %1979 = vmatprep.subr.mxu0 0.0
        %1980 = vmatpush2.msra.mxu0 0.0
        %1981 = vmatprep.subr.mxu0 0.0
        %1982 = vmatpush2.msra.mxu0 0.0
        %1983 = vmatprep.subr.mxu0 0.0
        %1984 = vmatpush2.msra.mxu0 0.0
        %1985 = vmatprep.subr.mxu0 0.0
        %1986 = vmatpush2.msra.mxu0 0.0
        %1987 = vmatprep.subr.mxu0 0.0
        %1988 = vmatpush2.msra.mxu0 0.0
        %1989 = vmatprep.subr.mxu0 0.0
        %1990 = vmatpush2.msra.mxu0 0.0
        %1991 = vmatprep.subr.mxu0 0.0
        %1992 = vmatpush2.msra.mxu0 0.0
        %1993 = vmatprep.subr.mxu0 0.0
        %1994 = vmatpush2.msra.mxu0 0.0
        %1995 = vmatprep.subr.mxu0 0.0
        %1996 = vmatpush2.msra.mxu0 0.0
        %1997 = vmatprep.subr.mxu0 0.0
        %1998 = vmatpush2.msra.mxu0 0.0
        %1999 = vmatprep.subr.mxu0 0.0
        %2000 = vmatpush2.msra.mxu0 0.0
        %2001 = vmatprep.subr.mxu0 0.0
        %2002 = vmatpush2.msra.mxu0 0.0
        %2003 = vmatprep.subr.mxu0 0.0
        %2004 = vmatpush2.msra.mxu0 0.0
        %2005 = vmatprep.mubr.f32.mxu0 0.0
        %2006 = vmatmul.mubr.f32.gmra.mxu0 %v1861
        %v2007 = vpop.f32.mrf.mxu0
        %v2008 = vadd.f32 %v1933, %v2007
        %v2009 = vpop.f32.mrf.mxu0
        %2010 = vmatprep.mubr.f32.mxu0 0.0
        %2011 = vmatmul.mubr.f32.gmra.mxu0 %v1864
        %v2012 = vpop.f32.mrf.mxu0
        %v2013 = vadd.f32 %v1938, %v2012
        %v2014 = vpop.f32.mrf.mxu0
        %2015 = vdwg.mxu0
        %v2016 = vadd.f32 %v2008, %v664
        %v2017 = vadd.f32 %v2013, %v665
        %s2018 = scalar_lea.vmem %s1, 6
        %v2019 = vld [vmem:[%s2018] sm:$0x3]
        %v2020 = vsel %vm626, %v2016, 0.0
        %2021 = vadd.xlane.f32.xlu0 %v2020
        %v2022 = vpop.xlane.xlu0 %2021
        %v2023 = vsel %vm626, %v2017, 0.0
        %2024 = vadd.xlane.f32.xlu0 %v2023
        %v2025 = vpop.xlane.xlu0 %2024
        %v2026 = vmul.f32 %v2022, %v633
        %v2027 = vmul.f32 %v2025, %v633
        %v2028 = vsub.f32 %v2016, %v2026
        %v2029 = vsub.f32 %v2017, %v2027
        %v2030 = vmul.f32 %v2028, %v2028
        %v2031 = vmul.f32 %v2029, %v2029
        %v2032 = vsel %vm626, %v2030, 0.0
        %2033 = vadd.xlane.f32.xlu0 %v2032
        %v2034 = vpop.xlane.xlu0 %2033
        %v2035 = vsel %vm626, %v2031, 0.0
        %2036 = vadd.xlane.f32.xlu0 %v2035
        %v2037 = vpop.xlane.xlu0 %2036
        %v2038 = vmul.f32 %v2034, %v633
        %v2039 = vmul.f32 %v2037, %v633
        %v2040 = vadd.f32 %v2038, 1e-05
        %v2041 = vadd.f32 %v2039, 1e-05
        %v2042 = vrsqrt.pop %v2040
        %v2043 = vrsqrt.pop %v2041
        %v2044 = vmul.f32 %v2028, %v2042
        %v2045 = vmul.f32 %v2029, %v2043
        %v2046 = vlaneseq
        %v2047 = vshrl.u32 %v2046, 7
        %v2048 = vsub.s32 0, %v2047
        %v2049 = vrot.slane %v2019, %v2048
        %v2050 = vmul.f32 %v2044, %v2049
        %v2051 = vmul.f32 %v2045, %v2049
        %v2052 = vlaneseq
        %v2053 = vshrl.u32 %v2052, 7
        %v2054 = vsub.s32 1, %v2053
        %v2055 = vrot.slane %v2019, %v2054
        %v2056 = vadd.f32 %v2050, %v2055
        %v2057 = vadd.f32 %v2051, %v2055
        %s2058 = scalar_lea.vmem %s1, 2
        %v2059 = vld [vmem:[%s2058] sm:$0x3]
        %v2060 = vsel %vm626, %v1693, 0.0
        %2061 = vadd.xlane.f32.xlu0 %v2060
        %v2062 = vpop.xlane.xlu0 %2061
        %v2063 = vsel %vm626, %v1694, 0.0
        %2064 = vadd.xlane.f32.xlu0 %v2063
        %v2065 = vpop.xlane.xlu0 %2064
        %v2066 = vmul.f32 %v2062, %v633
        %v2067 = vmul.f32 %v2065, %v633
        %v2068 = vsub.f32 %v1693, %v2066
        %v2069 = vsub.f32 %v1694, %v2067
        %v2070 = vmul.f32 %v2068, %v2068
        %v2071 = vmul.f32 %v2069, %v2069
        %v2072 = vsel %vm626, %v2070, 0.0
        %2073 = vadd.xlane.f32.xlu0 %v2072
        %v2074 = vpop.xlane.xlu0 %2073
        %v2075 = vsel %vm626, %v2071, 0.0
        %2076 = vadd.xlane.f32.xlu0 %v2075
        %v2077 = vpop.xlane.xlu0 %2076
        %v2078 = vmul.f32 %v2074, %v633
        %v2079 = vmul.f32 %v2077, %v633
        %v2080 = vadd.f32 %v2078, 1e-05
        %v2081 = vadd.f32 %v2079, 1e-05
        %v2082 = vrsqrt.pop %v2080
        %v2083 = vrsqrt.pop %v2081
        %v2084 = vmul.f32 %v2068, %v2082
        %v2085 = vmul.f32 %v2069, %v2083
        %v2086 = vlaneseq
        %v2087 = vshrl.u32 %v2086, 7
        %v2088 = vsub.s32 0, %v2087
        %v2089 = vrot.slane %v2059, %v2088
        %v2090 = vmul.f32 %v2084, %v2089
        %v2091 = vmul.f32 %v2085, %v2089
        %v2092 = vlaneseq
        %v2093 = vshrl.u32 %v2092, 7
        %v2094 = vsub.s32 1, %v2093
        %v2095 = vrot.slane %v2059, %v2094
        %v2096 = vadd.f32 %v2090, %v2095
        %v2097 = vadd.f32 %v2091, %v2095
        %v2098 = vld [vmem:[%s608] sm:$0xff]
        %v2099 = vld [vmem:[%s608 + $0x8] sm:$0xff]
        %v2100 = vld [vmem:[%s608 + $0x10] sm:$0xff]
        %v2101 = vld [vmem:[%s608 + $0x18] sm:$0xff]
        %v2102 = vld [vmem:[%s608 + $0x20] sm:$0xff]
        %v2103 = vld [vmem:[%s608 + $0x28] sm:$0xff]
        %v2104 = vld [vmem:[%s2] sm:$0xff]
        %v2105 = vld [vmem:[%s2 + $0x8] sm:$0xff]
        %v2106 = vld [vmem:[%s2 + $0x10] sm:$0xff]
        %v2107 = vld [vmem:[%s2 + $0x18] sm:$0xff]
        %v2108 = vld [vmem:[%s3] sm:$0x1]
        %v2110 = vlaneseq
        %v2111 = vshrl.u32 %v2110, 7
        %v2112 = vsub.s32 0, %v2111
        %v2113 = vrot.slane %v2108, %v2112
        %v2116 = vsel %vm626, %v2096, 0
        %v2119 = vsel %vm626, %v2097, 0
        %2121 = vmatprep.subr.mxu0 0.0
        %2122 = vmatpush1.msra.mxu0 0.0
        %2123 = vmatprep.subr.mxu0 0.0
        %2124 = vmatpush1.msra.mxu0 0.0
        %2125 = vmatprep.subr.mxu0 0.0
        %2126 = vmatpush1.msra.mxu0 0.0
        %2127 = vmatprep.subr.mxu0 0.0
        %2128 = vmatpush1.msra.mxu0 0.0
        %2129 = vmatprep.subr.mxu0 0.0
        %2130 = vmatpush1.msra.mxu0 0.0
        %2131 = vmatprep.subr.mxu0 0.0
        %2132 = vmatpush1.msra.mxu0 0.0
        %2133 = vmatprep.subr.mxu0 0.0
        %2134 = vmatpush1.msra.mxu0 0.0
        %2135 = vmatprep.subr.mxu0 0.0
        %2136 = vmatpush1.msra.mxu0 0.0
        %2137 = vmatprep.subr.mxu0 0.0
        %2138 = vmatpush1.msra.mxu0 0.0
        %2139 = vmatprep.subr.mxu0 0.0
        %2140 = vmatpush1.msra.mxu0 0.0
        %2141 = vmatprep.subr.mxu0 0.0
        %2142 = vmatpush1.msra.mxu0 0.0
        %2143 = vmatprep.subr.mxu0 0.0
        %2144 = vmatpush1.msra.mxu0 0.0
        %2145 = vmatprep.subr.mxu0 0.0
        %2146 = vmatpush1.msra.mxu0 %v2107
        %2147 = vmatprep.subr.mxu0 0.0
        %2148 = vmatpush1.msra.mxu0 %v2106
        %2149 = vmatprep.subr.mxu0 0.0
        %2150 = vmatpush1.msra.mxu0 %v2105
        %2151 = vmatprep.subr.mxu0 0.0
        %2152 = vmatpush1.msra.mxu0 %v2104
        %2153 = vmatprep.subr.mxu0 0.0
        %2154 = vmatpush2.msra.mxu0 0.0
        %2155 = vmatprep.subr.mxu0 0.0
        %2156 = vmatpush2.msra.mxu0 0.0
        %2157 = vmatprep.subr.mxu0 0.0
        %2158 = vmatpush2.msra.mxu0 0.0
        %2159 = vmatprep.subr.mxu0 0.0
        %2160 = vmatpush2.msra.mxu0 0.0
        %2161 = vmatprep.subr.mxu0 0.0
        %2162 = vmatpush2.msra.mxu0 0.0
        %2163 = vmatprep.subr.mxu0 0.0
        %2164 = vmatpush2.msra.mxu0 0.0
        %2165 = vmatprep.subr.mxu0 0.0
        %2166 = vmatpush2.msra.mxu0 0.0
        %2167 = vmatprep.subr.mxu0 0.0
        %2168 = vmatpush2.msra.mxu0 0.0
        %2169 = vmatprep.subr.mxu0 0.0
        %2170 = vmatpush2.msra.mxu0 0.0
        %2171 = vmatprep.subr.mxu0 0.0
        %2172 = vmatpush2.msra.mxu0 0.0
        %2173 = vmatprep.subr.mxu0 0.0
        %2174 = vmatpush2.msra.mxu0 0.0
        %2175 = vmatprep.subr.mxu0 0.0
        %2176 = vmatpush2.msra.mxu0 0.0
        %2177 = vmatprep.subr.mxu0 0.0
        %2178 = vmatpush2.msra.mxu0 0.0
        %2179 = vmatprep.subr.mxu0 0.0
        %2180 = vmatpush2.msra.mxu0 0.0
        %2181 = vmatprep.subr.mxu0 0.0
        %2182 = vmatpush2.msra.mxu0 0.0
        %2183 = vmatprep.subr.mxu0 0.0
        %2184 = vmatpush2.msra.mxu0 0.0
        %2185 = vmatprep.mubr.f32.mxu0 0.0
        %2186 = vmatmul.mubr.f32.gmra.mxu0 %v2116
        %v2187 = vpop.f32.mrf.mxu0
        %v2188 = vadd.f32 %v2113, %v2187
        %v2189 = vpop.f32.mrf.mxu0
        %2190 = vmatprep.mubr.f32.mxu0 0.0
        %2191 = vmatmul.mubr.f32.gmra.mxu0 %v2119
        %v2192 = vpop.f32.mrf.mxu0
        %v2193 = vadd.f32 %v2113, %v2192
        %v2194 = vpop.f32.mrf.mxu0
        %2195 = vdwg.mxu0
        %v2196 = vmul.f32 %v2188, 0.35355338
        %v2197 = vmul.f32 %v2193, 0.35355338
        %2202 = vrot.lane.b32.xlu0 %v2104, 96
        %v2203 = vpop.permute.xlu0 %2202
        %2204 = vrot.lane.b32.xlu0 %v2105, 96
        %v2205 = vpop.permute.xlu0 %2204
        %2206 = vrot.lane.b32.xlu0 %v2106, 96
        %v2207 = vpop.permute.xlu0 %2206
        %2208 = vrot.lane.b32.xlu0 %v2107, 96
        %v2209 = vpop.permute.xlu0 %2208
        %2214 = vrot.lane.b32.xlu0 %v2113, 96
        %v2215 = vpop.permute.xlu0 %2214
        %v2218 = vsel %vm626, %v2098, 0
        %v2221 = vsel %vm626, %v2099, 0
        %v2224 = vsel %vm626, %v2100, 0
        %v2227 = vsel %vm626, %v2101, 0
        %v2230 = vsel %vm626, %v2102, 0
        %v2233 = vsel %vm626, %v2103, 0
        %2235 = vmatprep.subr.mxu0 0.0
        %2236 = vmatpush1.msra.mxu0 0.0
        %2237 = vmatprep.subr.mxu0 0.0
        %2238 = vmatpush1.msra.mxu0 0.0
        %2239 = vmatprep.subr.mxu0 0.0
        %2240 = vmatpush1.msra.mxu0 0.0
        %2241 = vmatprep.subr.mxu0 0.0
        %2242 = vmatpush1.msra.mxu0 0.0
        %2243 = vmatprep.subr.mxu0 0.0
        %2244 = vmatpush1.msra.mxu0 0.0
        %2245 = vmatprep.subr.mxu0 0.0
        %2246 = vmatpush1.msra.mxu0 0.0
        %2247 = vmatprep.subr.mxu0 0.0
        %2248 = vmatpush1.msra.mxu0 0.0
        %2249 = vmatprep.subr.mxu0 0.0
        %2250 = vmatpush1.msra.mxu0 0.0
        %2251 = vmatprep.subr.mxu0 0.0
        %2252 = vmatpush1.msra.mxu0 0.0
        %2253 = vmatprep.subr.mxu0 0.0
        %2254 = vmatpush1.msra.mxu0 0.0
        %2255 = vmatprep.subr.mxu0 0.0
        %2256 = vmatpush1.msra.mxu0 0.0
        %2257 = vmatprep.subr.mxu0 0.0
        %2258 = vmatpush1.msra.mxu0 0.0
        %2259 = vmatprep.subr.mxu0 0.0
        %2260 = vmatpush1.msra.mxu0 %v2209
        %2261 = vmatprep.subr.mxu0 0.0
        %2262 = vmatpush1.msra.mxu0 %v2207
        %2263 = vmatprep.subr.mxu0 0.0
        %2264 = vmatpush1.msra.mxu0 %v2205
        %2265 = vmatprep.subr.mxu0 0.0
        %2266 = vmatpush1.msra.mxu0 %v2203
        %2267 = vmatprep.subr.mxu0 0.0
        %2268 = vmatpush2.msra.mxu0 0.0
        %2269 = vmatprep.subr.mxu0 0.0
        %2270 = vmatpush2.msra.mxu0 0.0
        %2271 = vmatprep.subr.mxu0 0.0
        %2272 = vmatpush2.msra.mxu0 0.0
        %2273 = vmatprep.subr.mxu0 0.0
        %2274 = vmatpush2.msra.mxu0 0.0
        %2275 = vmatprep.subr.mxu0 0.0
        %2276 = vmatpush2.msra.mxu0 0.0
        %2277 = vmatprep.subr.mxu0 0.0
        %2278 = vmatpush2.msra.mxu0 0.0
        %2279 = vmatprep.subr.mxu0 0.0
        %2280 = vmatpush2.msra.mxu0 0.0
        %2281 = vmatprep.subr.mxu0 0.0
        %2282 = vmatpush2.msra.mxu0 0.0
        %2283 = vmatprep.subr.mxu0 0.0
        %2284 = vmatpush2.msra.mxu0 0.0
        %2285 = vmatprep.subr.mxu0 0.0
        %2286 = vmatpush2.msra.mxu0 0.0
        %2287 = vmatprep.subr.mxu0 0.0
        %2288 = vmatpush2.msra.mxu0 0.0
        %2289 = vmatprep.subr.mxu0 0.0
        %2290 = vmatpush2.msra.mxu0 0.0
        %2291 = vmatprep.subr.mxu0 0.0
        %2292 = vmatpush2.msra.mxu0 0.0
        %2293 = vmatprep.subr.mxu0 0.0
        %2294 = vmatpush2.msra.mxu0 0.0
        %2295 = vmatprep.subr.mxu0 0.0
        %2296 = vmatpush2.msra.mxu0 0.0
        %2297 = vmatprep.subr.mxu0 0.0
        %2298 = vmatpush2.msra.mxu0 0.0
        %2299 = vmatprep.mubr.f32.mxu0 0.0
        %2300 = vmatmul.mubr.f32.gmra.mxu0 %v2218
        %v2301 = vpop.f32.mrf.mxu0
        %v2302 = vadd.f32 %v2215, %v2301
        %v2303 = vpop.f32.mrf.mxu0
        %2304 = vmatprep.mubr.f32.mxu0 0.0
        %2305 = vmatmul.mubr.f32.gmra.mxu0 %v2221
        %v2306 = vpop.f32.mrf.mxu0
        %v2307 = vadd.f32 %v2215, %v2306
        %v2308 = vpop.f32.mrf.mxu0
        %2309 = vmatprep.mubr.f32.mxu0 0.0
        %2310 = vmatmul.mubr.f32.gmra.mxu0 %v2224
        %v2311 = vpop.f32.mrf.mxu0
        %v2312 = vadd.f32 %v2215, %v2311
        %v2313 = vpop.f32.mrf.mxu0
        %2314 = vmatprep.mubr.f32.mxu0 0.0
        %2315 = vmatmul.mubr.f32.gmra.mxu0 %v2227
        %v2316 = vpop.f32.mrf.mxu0
        %v2317 = vadd.f32 %v2215, %v2316
        %v2318 = vpop.f32.mrf.mxu0
        %2319 = vmatprep.mubr.f32.mxu0 0.0
        %2320 = vmatmul.mubr.f32.gmra.mxu0 %v2230
        %v2321 = vpop.f32.mrf.mxu0
        %v2322 = vadd.f32 %v2215, %v2321
        %v2323 = vpop.f32.mrf.mxu0
        %2324 = vmatprep.mubr.f32.mxu0 0.0
        %2325 = vmatmul.mubr.f32.gmra.mxu0 %v2233
        %v2326 = vpop.f32.mrf.mxu0
        %v2327 = vadd.f32 %v2215, %v2326
        %v2328 = vpop.f32.mrf.mxu0
        %2329 = vdwg.mxu0
        %v2331 = vsel %vm766, %v2196, 0
        %v2334 = vsel %vm766, %v2197, 0
        %v2337 = vsel %vm766, %v2302, 0
        %v2340 = vsel %vm766, %v2307, 0
        %v2343 = vsel %vm766, %v2312, 0
        %v2346 = vsel %vm766, %v2317, 0
        %v2349 = vsel %vm766, %v2322, 0
        %v2352 = vsel %vm766, %v2327, 0
        %2354 = vmatprep.subr.mxu0 0.0
        %2355 = vmatpush1.xpose.msra.mxu0 0.0
        %2356 = vmatprep.subr.mxu0 0.0
        %2357 = vmatpush1.xpose.msra.mxu0 0.0
        %2358 = vmatprep.subr.mxu0 0.0
        %2359 = vmatpush1.xpose.msra.mxu0 0.0
        %2360 = vmatprep.subr.mxu0 0.0
        %2361 = vmatpush1.xpose.msra.mxu0 0.0
        %2362 = vmatprep.subr.mxu0 0.0
        %2363 = vmatpush1.xpose.msra.mxu0 0.0
        %2364 = vmatprep.subr.mxu0 0.0
        %2365 = vmatpush1.xpose.msra.mxu0 0.0
        %2366 = vmatprep.subr.mxu0 0.0
        %2367 = vmatpush1.xpose.msra.mxu0 0.0
        %2368 = vmatprep.subr.mxu0 0.0
        %2369 = vmatpush1.xpose.msra.mxu0 0.0
        %2370 = vmatprep.subr.mxu0 0.0
        %2371 = vmatpush1.xpose.msra.mxu0 0.0
        %2372 = vmatprep.subr.mxu0 0.0
        %2373 = vmatpush1.xpose.msra.mxu0 0.0
        %2374 = vmatprep.subr.mxu0 0.0
        %2375 = vmatpush1.xpose.msra.mxu0 %v2352
        %2376 = vmatprep.subr.mxu0 0.0
        %2377 = vmatpush1.xpose.msra.mxu0 %v2349
        %2378 = vmatprep.subr.mxu0 0.0
        %2379 = vmatpush1.xpose.msra.mxu0 %v2346
        %2380 = vmatprep.subr.mxu0 0.0
        %2381 = vmatpush1.xpose.msra.mxu0 %v2343
        %2382 = vmatprep.subr.mxu0 0.0
        %2383 = vmatpush1.xpose.msra.mxu0 %v2340
        %2384 = vmatprep.subr.mxu0 0.0
        %2385 = vmatpush1.xpose.msra.mxu0 %v2337
        %2386 = vmatprep.subr.mxu0 0.0
        %2387 = vmatpush2.xpose.msra.mxu0 0.0
        %2388 = vmatprep.subr.mxu0 0.0
        %2389 = vmatpush2.xpose.msra.mxu0 0.0
        %2390 = vmatprep.subr.mxu0 0.0
        %2391 = vmatpush2.xpose.msra.mxu0 0.0
        %2392 = vmatprep.subr.mxu0 0.0
        %2393 = vmatpush2.xpose.msra.mxu0 0.0
        %2394 = vmatprep.subr.mxu0 0.0
        %2395 = vmatpush2.xpose.msra.mxu0 0.0
        %2396 = vmatprep.subr.mxu0 0.0
        %2397 = vmatpush2.xpose.msra.mxu0 0.0
        %2398 = vmatprep.subr.mxu0 0.0
        %2399 = vmatpush2.xpose.msra.mxu0 0.0
        %2400 = vmatprep.subr.mxu0 0.0
        %2401 = vmatpush2.xpose.msra.mxu0 0.0
        %2402 = vmatprep.subr.mxu0 0.0
        %2403 = vmatpush2.xpose.msra.mxu0 0.0
        %2404 = vmatprep.subr.mxu0 0.0
        %2405 = vmatpush2.xpose.msra.mxu0 0.0
        %2406 = vmatprep.subr.mxu0 0.0
        %2407 = vmatpush2.xpose.msra.mxu0 0.0
        %2408 = vmatprep.subr.mxu0 0.0
        %2409 = vmatpush2.xpose.msra.mxu0 0.0
        %2410 = vmatprep.subr.mxu0 0.0
        %2411 = vmatpush2.xpose.msra.mxu0 0.0
        %2412 = vmatprep.subr.mxu0 0.0
        %2413 = vmatpush2.xpose.msra.mxu0 0.0
        %2414 = vmatprep.subr.mxu0 0.0
        %2415 = vmatpush2.xpose.msra.mxu0 0.0
        %2416 = vmatprep.subr.mxu0 0.0
        %2417 = vmatpush2.xpose.msra.mxu0 0.0
        %2418 = vmatprep.mubr.f32.mxu0 0.0
        %2419 = vmatmul.mubr.f32.gmra.mxu0 %v2331
        %v2420 = vpop.f32.mrf.mxu0
        %v2421 = vadd.f32 0.0, %v2420
        %v2422 = vpop.f32.mrf.mxu0
        %2423 = vmatprep.mubr.f32.mxu0 0.0
        %2424 = vmatmul.mubr.f32.gmra.mxu0 %v2334
        %v2425 = vpop.f32.mrf.mxu0
        %v2426 = vadd.f32 0.0, %v2425
        %v2427 = vpop.f32.mrf.mxu0
        %2428 = vdwg.mxu0
        %vm2429 = vcmask 392192
        %v2430 = vsel %vm2429, %v2421, -inf
        %2431 = vmax.xlane.f32.xlu0 %v2430
        %v2432 = vpop.xlane.xlu0 %2431
        %v2433 = vsel %vm2429, %v2426, -inf
        %2434 = vmax.xlane.f32.xlu0 %v2433
        %v2435 = vpop.xlane.xlu0 %2434
        %v2436 = vsub.f32 %v2421, %v2432
        %v2437 = vsub.f32 %v2426, %v2435
        %v2438 = vmul.f32 %v2436, 1.442695
        %v2439 = vpow.pop %v2438
        %v2440 = vmul.f32 %v2437, 1.442695
        %v2441 = vpow.pop %v2440
        %v2442 = vsel %vm2429, %v2439, 0.0
        %2443 = vadd.xlane.f32.xlu0 %v2442
        %v2444 = vpop.xlane.xlu0 %2443
        %v2445 = vsel %vm2429, %v2441, 0.0
        %2446 = vadd.xlane.f32.xlu0 %v2445
        %v2447 = vpop.xlane.xlu0 %2446
        %2448 = vrot.lane.b32.xlu0 %v2302, 96
        %v2449 = vpop.permute.xlu0 %2448
        %2450 = vrot.lane.b32.xlu0 %v2307, 96
        %v2451 = vpop.permute.xlu0 %2450
        %2452 = vrot.lane.b32.xlu0 %v2312, 96
        %v2453 = vpop.permute.xlu0 %2452
        %2454 = vrot.lane.b32.xlu0 %v2317, 96
        %v2455 = vpop.permute.xlu0 %2454
        %2456 = vrot.lane.b32.xlu0 %v2322, 96
        %v2457 = vpop.permute.xlu0 %2456
        %2458 = vrot.lane.b32.xlu0 %v2327, 96
        %v2459 = vpop.permute.xlu0 %2458
        %v2467 = vsel %vm2429, %v2439, 0
        %v2470 = vsel %vm2429, %v2441, 0
        %2472 = vmatprep.subr.mxu0 0.0
        %2473 = vmatpush1.msra.mxu0 0.0
        %2474 = vmatprep.subr.mxu0 0.0
        %2475 = vmatpush1.msra.mxu0 0.0
        %2476 = vmatprep.subr.mxu0 0.0
        %2477 = vmatpush1.msra.mxu0 0.0
        %2478 = vmatprep.subr.mxu0 0.0
        %2479 = vmatpush1.msra.mxu0 0.0
        %2480 = vmatprep.subr.mxu0 0.0
        %2481 = vmatpush1.msra.mxu0 0.0
        %2482 = vmatprep.subr.mxu0 0.0
        %2483 = vmatpush1.msra.mxu0 0.0
        %2484 = vmatprep.subr.mxu0 0.0
        %2485 = vmatpush1.msra.mxu0 0.0
        %2486 = vmatprep.subr.mxu0 0.0
        %2487 = vmatpush1.msra.mxu0 0.0
        %2488 = vmatprep.subr.mxu0 0.0
        %2489 = vmatpush1.msra.mxu0 0.0
        %2490 = vmatprep.subr.mxu0 0.0
        %2491 = vmatpush1.msra.mxu0 0.0
        %2492 = vmatprep.subr.mxu0 0.0
        %2493 = vmatpush1.msra.mxu0 %v2459
        %2494 = vmatprep.subr.mxu0 0.0
        %2495 = vmatpush1.msra.mxu0 %v2457
        %2496 = vmatprep.subr.mxu0 0.0
        %2497 = vmatpush1.msra.mxu0 %v2455
        %2498 = vmatprep.subr.mxu0 0.0
        %2499 = vmatpush1.msra.mxu0 %v2453
        %2500 = vmatprep.subr.mxu0 0.0
        %2501 = vmatpush1.msra.mxu0 %v2451
        %2502 = vmatprep.subr.mxu0 0.0
        %2503 = vmatpush1.msra.mxu0 %v2449
        %2504 = vmatprep.subr.mxu0 0.0
        %2505 = vmatpush2.msra.mxu0 0.0
        %2506 = vmatprep.subr.mxu0 0.0
        %2507 = vmatpush2.msra.mxu0 0.0
        %2508 = vmatprep.subr.mxu0 0.0
        %2509 = vmatpush2.msra.mxu0 0.0
        %2510 = vmatprep.subr.mxu0 0.0
        %2511 = vmatpush2.msra.mxu0 0.0
        %2512 = vmatprep.subr.mxu0 0.0
        %2513 = vmatpush2.msra.mxu0 0.0
        %2514 = vmatprep.subr.mxu0 0.0
        %2515 = vmatpush2.msra.mxu0 0.0
        %2516 = vmatprep.subr.mxu0 0.0
        %2517 = vmatpush2.msra.mxu0 0.0
        %2518 = vmatprep.subr.mxu0 0.0
        %2519 = vmatpush2.msra.mxu0 0.0
        %2520 = vmatprep.subr.mxu0 0.0
        %2521 = vmatpush2.msra.mxu0 0.0
        %2522 = vmatprep.subr.mxu0 0.0
        %2523 = vmatpush2.msra.mxu0 0.0
        %2524 = vmatprep.subr.mxu0 0.0
        %2525 = vmatpush2.msra.mxu0 0.0
        %2526 = vmatprep.subr.mxu0 0.0
        %2527 = vmatpush2.msra.mxu0 0.0
        %2528 = vmatprep.subr.mxu0 0.0
        %2529 = vmatpush2.msra.mxu0 0.0
        %2530 = vmatprep.subr.mxu0 0.0
        %2531 = vmatpush2.msra.mxu0 0.0
        %2532 = vmatprep.subr.mxu0 0.0
        %2533 = vmatpush2.msra.mxu0 0.0
        %2534 = vmatprep.subr.mxu0 0.0
        %2535 = vmatpush2.msra.mxu0 0.0
        %2536 = vmatprep.mubr.f32.mxu0 0.0
        %2537 = vmatmul.mubr.f32.gmra.mxu0 %v2467
        %v2538 = vpop.f32.mrf.mxu0
        %v2539 = vadd.f32 0.0, %v2538
        %v2540 = vpop.f32.mrf.mxu0
        %2541 = vmatprep.mubr.f32.mxu0 0.0
        %2542 = vmatmul.mubr.f32.gmra.mxu0 %v2470
        %v2543 = vpop.f32.mrf.mxu0
        %v2544 = vadd.f32 0.0, %v2543
        %v2545 = vpop.f32.mrf.mxu0
        %2546 = vdwg.mxu0
        %v2547 = vrcp.pop %v2444
        %v2548 = vrcp.pop %v2447
        %v2549 = vmul.f32 %v2539, %v2547
        %v2550 = vmul.f32 %v2544, %v2548
        %2551 = vrot.lane.b32.xlu0 %v2196, 120
        %v2552 = vpop.permute.xlu0 %2551
        %2553 = vrot.lane.b32.xlu0 %v2197, 120
        %v2554 = vpop.permute.xlu0 %2553
        %2555 = vrot.lane.b32.xlu0 %v2302, 120
        %v2556 = vpop.permute.xlu0 %2555
        %2557 = vrot.lane.b32.xlu0 %v2307, 120
        %v2558 = vpop.permute.xlu0 %2557
        %2559 = vrot.lane.b32.xlu0 %v2312, 120
        %v2560 = vpop.permute.xlu0 %2559
        %2561 = vrot.lane.b32.xlu0 %v2317, 120
        %v2562 = vpop.permute.xlu0 %2561
        %2563 = vrot.lane.b32.xlu0 %v2322, 120
        %v2564 = vpop.permute.xlu0 %2563
        %2565 = vrot.lane.b32.xlu0 %v2327, 120
        %v2566 = vpop.permute.xlu0 %2565
        %v2567 = vsel %vm766, %v2552, 0
        %v2569 = vsel %vm766, %v2554, 0
        %v2571 = vsel %vm766, %v2556, 0
        %v2573 = vsel %vm766, %v2558, 0
        %v2575 = vsel %vm766, %v2560, 0
        %v2577 = vsel %vm766, %v2562, 0
        %v2579 = vsel %vm766, %v2564, 0
        %v2581 = vsel %vm766, %v2566, 0
        %2583 = vmatprep.subr.mxu0 0.0
        %2584 = vmatpush1.xpose.msra.mxu0 0.0
        %2585 = vmatprep.subr.mxu0 0.0
        %2586 = vmatpush1.xpose.msra.mxu0 0.0
        %2587 = vmatprep.subr.mxu0 0.0
        %2588 = vmatpush1.xpose.msra.mxu0 0.0
        %2589 = vmatprep.subr.mxu0 0.0
        %2590 = vmatpush1.xpose.msra.mxu0 0.0
        %2591 = vmatprep.subr.mxu0 0.0
        %2592 = vmatpush1.xpose.msra.mxu0 0.0
        %2593 = vmatprep.subr.mxu0 0.0
        %2594 = vmatpush1.xpose.msra.mxu0 0.0
        %2595 = vmatprep.subr.mxu0 0.0
        %2596 = vmatpush1.xpose.msra.mxu0 0.0
        %2597 = vmatprep.subr.mxu0 0.0
        %2598 = vmatpush1.xpose.msra.mxu0 0.0
        %2599 = vmatprep.subr.mxu0 0.0
        %2600 = vmatpush1.xpose.msra.mxu0 0.0
        %2601 = vmatprep.subr.mxu0 0.0
        %2602 = vmatpush1.xpose.msra.mxu0 0.0
        %2603 = vmatprep.subr.mxu0 0.0
        %2604 = vmatpush1.xpose.msra.mxu0 %v2581
        %2605 = vmatprep.subr.mxu0 0.0
        %2606 = vmatpush1.xpose.msra.mxu0 %v2579
        %2607 = vmatprep.subr.mxu0 0.0
        %2608 = vmatpush1.xpose.msra.mxu0 %v2577
        %2609 = vmatprep.subr.mxu0 0.0
        %2610 = vmatpush1.xpose.msra.mxu0 %v2575
        %2611 = vmatprep.subr.mxu0 0.0
        %2612 = vmatpush1.xpose.msra.mxu0 %v2573
        %2613 = vmatprep.subr.mxu0 0.0
        %2614 = vmatpush1.xpose.msra.mxu0 %v2571
        %2615 = vmatprep.subr.mxu0 0.0
        %2616 = vmatpush2.xpose.msra.mxu0 0.0
        %2617 = vmatprep.subr.mxu0 0.0
        %2618 = vmatpush2.xpose.msra.mxu0 0.0
        %2619 = vmatprep.subr.mxu0 0.0
        %2620 = vmatpush2.xpose.msra.mxu0 0.0
        %2621 = vmatprep.subr.mxu0 0.0
        %2622 = vmatpush2.xpose.msra.mxu0 0.0
        %2623 = vmatprep.subr.mxu0 0.0
        %2624 = vmatpush2.xpose.msra.mxu0 0.0
        %2625 = vmatprep.subr.mxu0 0.0
        %2626 = vmatpush2.xpose.msra.mxu0 0.0
        %2627 = vmatprep.subr.mxu0 0.0
        %2628 = vmatpush2.xpose.msra.mxu0 0.0
        %2629 = vmatprep.subr.mxu0 0.0
        %2630 = vmatpush2.xpose.msra.mxu0 0.0
        %2631 = vmatprep.subr.mxu0 0.0
        %2632 = vmatpush2.xpose.msra.mxu0 0.0
        %2633 = vmatprep.subr.mxu0 0.0
        %2634 = vmatpush2.xpose.msra.mxu0 0.0
        %2635 = vmatprep.subr.mxu0 0.0
        %2636 = vmatpush2.xpose.msra.mxu0 0.0
        %2637 = vmatprep.subr.mxu0 0.0
        %2638 = vmatpush2.xpose.msra.mxu0 0.0
        %2639 = vmatprep.subr.mxu0 0.0
        %2640 = vmatpush2.xpose.msra.mxu0 0.0
        %2641 = vmatprep.subr.mxu0 0.0
        %2642 = vmatpush2.xpose.msra.mxu0 0.0
        %2643 = vmatprep.subr.mxu0 0.0
        %2644 = vmatpush2.xpose.msra.mxu0 0.0
        %2645 = vmatprep.subr.mxu0 0.0
        %2646 = vmatpush2.xpose.msra.mxu0 0.0
        %2647 = vmatprep.mubr.f32.mxu0 0.0
        %2648 = vmatmul.mubr.f32.gmra.mxu0 %v2567
        %v2649 = vpop.f32.mrf.mxu0
        %v2650 = vadd.f32 0.0, %v2649
        %v2651 = vpop.f32.mrf.mxu0
        %2652 = vmatprep.mubr.f32.mxu0 0.0
        %2653 = vmatmul.mubr.f32.gmra.mxu0 %v2569
        %v2654 = vpop.f32.mrf.mxu0
        %v2655 = vadd.f32 0.0, %v2654
        %v2656 = vpop.f32.mrf.mxu0
        %2657 = vdwg.mxu0
        %v2658 = vsel %vm2429, %v2650, -inf
        %2659 = vmax.xlane.f32.xlu0 %v2658
        %v2660 = vpop.xlane.xlu0 %2659
        %v2661 = vsel %vm2429, %v2655, -inf
        %2662 = vmax.xlane.f32.xlu0 %v2661
        %v2663 = vpop.xlane.xlu0 %2662
        %v2664 = vsub.f32 %v2650, %v2660
        %v2665 = vsub.f32 %v2655, %v2663
        %v2666 = vmul.f32 %v2664, 1.442695
        %v2667 = vpow.pop %v2666
        %v2668 = vmul.f32 %v2665, 1.442695
        %v2669 = vpow.pop %v2668
        %v2670 = vsel %vm2429, %v2667, 0.0
        %2671 = vadd.xlane.f32.xlu0 %v2670
        %v2672 = vpop.xlane.xlu0 %2671
        %v2673 = vsel %vm2429, %v2669, 0.0
        %2674 = vadd.xlane.f32.xlu0 %v2673
        %v2675 = vpop.xlane.xlu0 %2674
        %2676 = vrot.lane.b32.xlu0 %v2302, 88
        %v2677 = vpop.permute.xlu0 %2676
        %2678 = vrot.lane.b32.xlu0 %v2307, 88
        %v2679 = vpop.permute.xlu0 %2678
        %2680 = vrot.lane.b32.xlu0 %v2312, 88
        %v2681 = vpop.permute.xlu0 %2680
        %2682 = vrot.lane.b32.xlu0 %v2317, 88
        %v2683 = vpop.permute.xlu0 %2682
        %2684 = vrot.lane.b32.xlu0 %v2322, 88
        %v2685 = vpop.permute.xlu0 %2684
        %2686 = vrot.lane.b32.xlu0 %v2327, 88
        %v2687 = vpop.permute.xlu0 %2686
        %v2695 = vsel %vm2429, %v2667, 0
        %v2698 = vsel %vm2429, %v2669, 0
        %2700 = vmatprep.subr.mxu0 0.0
        %2701 = vmatpush1.msra.mxu0 0.0
        %2702 = vmatprep.subr.mxu0 0.0
        %2703 = vmatpush1.msra.mxu0 0.0
        %2704 = vmatprep.subr.mxu0 0.0
        %2705 = vmatpush1.msra.mxu0 0.0
        %2706 = vmatprep.subr.mxu0 0.0
        %2707 = vmatpush1.msra.mxu0 0.0
        %2708 = vmatprep.subr.mxu0 0.0
        %2709 = vmatpush1.msra.mxu0 0.0
        %2710 = vmatprep.subr.mxu0 0.0
        %2711 = vmatpush1.msra.mxu0 0.0
        %2712 = vmatprep.subr.mxu0 0.0
        %2713 = vmatpush1.msra.mxu0 0.0
        %2714 = vmatprep.subr.mxu0 0.0
        %2715 = vmatpush1.msra.mxu0 0.0
        %2716 = vmatprep.subr.mxu0 0.0
        %2717 = vmatpush1.msra.mxu0 0.0
        %2718 = vmatprep.subr.mxu0 0.0
        %2719 = vmatpush1.msra.mxu0 0.0
        %2720 = vmatprep.subr.mxu0 0.0
        %2721 = vmatpush1.msra.mxu0 %v2687
        %2722 = vmatprep.subr.mxu0 0.0
        %2723 = vmatpush1.msra.mxu0 %v2685
        %2724 = vmatprep.subr.mxu0 0.0
        %2725 = vmatpush1.msra.mxu0 %v2683
        %2726 = vmatprep.subr.mxu0 0.0
        %2727 = vmatpush1.msra.mxu0 %v2681
        %2728 = vmatprep.subr.mxu0 0.0
        %2729 = vmatpush1.msra.mxu0 %v2679
        %2730 = vmatprep.subr.mxu0 0.0
        %2731 = vmatpush1.msra.mxu0 %v2677
        %2732 = vmatprep.subr.mxu0 0.0
        %2733 = vmatpush2.msra.mxu0 0.0
        %2734 = vmatprep.subr.mxu0 0.0
        %2735 = vmatpush2.msra.mxu0 0.0
        %2736 = vmatprep.subr.mxu0 0.0
        %2737 = vmatpush2.msra.mxu0 0.0
        %2738 = vmatprep.subr.mxu0 0.0
        %2739 = vmatpush2.msra.mxu0 0.0
        %2740 = vmatprep.subr.mxu0 0.0
        %2741 = vmatpush2.msra.mxu0 0.0
        %2742 = vmatprep.subr.mxu0 0.0
        %2743 = vmatpush2.msra.mxu0 0.0
        %2744 = vmatprep.subr.mxu0 0.0
        %2745 = vmatpush2.msra.mxu0 0.0
        %2746 = vmatprep.subr.mxu0 0.0
        %2747 = vmatpush2.msra.mxu0 0.0
        %2748 = vmatprep.subr.mxu0 0.0
        %2749 = vmatpush2.msra.mxu0 0.0
        %2750 = vmatprep.subr.mxu0 0.0
        %2751 = vmatpush2.msra.mxu0 0.0
        %2752 = vmatprep.subr.mxu0 0.0
        %2753 = vmatpush2.msra.mxu0 0.0
        %2754 = vmatprep.subr.mxu0 0.0
        %2755 = vmatpush2.msra.mxu0 0.0
        %2756 = vmatprep.subr.mxu0 0.0
        %2757 = vmatpush2.msra.mxu0 0.0
        %2758 = vmatprep.subr.mxu0 0.0
        %2759 = vmatpush2.msra.mxu0 0.0
        %2760 = vmatprep.subr.mxu0 0.0
        %2761 = vmatpush2.msra.mxu0 0.0
        %2762 = vmatprep.subr.mxu0 0.0
        %2763 = vmatpush2.msra.mxu0 0.0
        %2764 = vmatprep.mubr.f32.mxu0 0.0
        %2765 = vmatmul.mubr.f32.gmra.mxu0 %v2695
        %v2766 = vpop.f32.mrf.mxu0
        %v2767 = vadd.f32 0.0, %v2766
        %v2768 = vpop.f32.mrf.mxu0
        %2769 = vmatprep.mubr.f32.mxu0 0.0
        %2770 = vmatmul.mubr.f32.gmra.mxu0 %v2698
        %v2771 = vpop.f32.mrf.mxu0
        %v2772 = vadd.f32 0.0, %v2771
        %v2773 = vpop.f32.mrf.mxu0
        %2774 = vdwg.mxu0
        %v2775 = vrcp.pop %v2672
        %v2776 = vrcp.pop %v2675
        %v2777 = vmul.f32 %v2767, %v2775
        %v2778 = vmul.f32 %v2772, %v2776
        %2779 = vrot.lane.b32.xlu0 %v2196, 112
        %v2780 = vpop.permute.xlu0 %2779
        %2781 = vrot.lane.b32.xlu0 %v2197, 112
        %v2782 = vpop.permute.xlu0 %2781
        %2783 = vrot.lane.b32.xlu0 %v2302, 112
        %v2784 = vpop.permute.xlu0 %2783
        %2785 = vrot.lane.b32.xlu0 %v2307, 112
        %v2786 = vpop.permute.xlu0 %2785
        %2787 = vrot.lane.b32.xlu0 %v2312, 112
        %v2788 = vpop.permute.xlu0 %2787
        %2789 = vrot.lane.b32.xlu0 %v2317, 112
        %v2790 = vpop.permute.xlu0 %2789
        %2791 = vrot.lane.b32.xlu0 %v2322, 112
        %v2792 = vpop.permute.xlu0 %2791
        %2793 = vrot.lane.b32.xlu0 %v2327, 112
        %v2794 = vpop.permute.xlu0 %2793
        %v2795 = vsel %vm766, %v2780, 0
        %v2797 = vsel %vm766, %v2782, 0
        %v2799 = vsel %vm766, %v2784, 0
        %v2801 = vsel %vm766, %v2786, 0
        %v2803 = vsel %vm766, %v2788, 0
        %v2805 = vsel %vm766, %v2790, 0
        %v2807 = vsel %vm766, %v2792, 0
        %v2809 = vsel %vm766, %v2794, 0
        %2811 = vmatprep.subr.mxu0 0.0
        %2812 = vmatpush1.xpose.msra.mxu0 0.0
        %2813 = vmatprep.subr.mxu0 0.0
        %2814 = vmatpush1.xpose.msra.mxu0 0.0
        %2815 = vmatprep.subr.mxu0 0.0
        %2816 = vmatpush1.xpose.msra.mxu0 0.0
        %2817 = vmatprep.subr.mxu0 0.0
        %2818 = vmatpush1.xpose.msra.mxu0 0.0
        %2819 = vmatprep.subr.mxu0 0.0
        %2820 = vmatpush1.xpose.msra.mxu0 0.0
        %2821 = vmatprep.subr.mxu0 0.0
        %2822 = vmatpush1.xpose.msra.mxu0 0.0
        %2823 = vmatprep.subr.mxu0 0.0
        %2824 = vmatpush1.xpose.msra.mxu0 0.0
        %2825 = vmatprep.subr.mxu0 0.0
        %2826 = vmatpush1.xpose.msra.mxu0 0.0
        %2827 = vmatprep.subr.mxu0 0.0
        %2828 = vmatpush1.xpose.msra.mxu0 0.0
        %2829 = vmatprep.subr.mxu0 0.0
        %2830 = vmatpush1.xpose.msra.mxu0 0.0
        %2831 = vmatprep.subr.mxu0 0.0
        %2832 = vmatpush1.xpose.msra.mxu0 %v2809
        %2833 = vmatprep.subr.mxu0 0.0
        %2834 = vmatpush1.xpose.msra.mxu0 %v2807
        %2835 = vmatprep.subr.mxu0 0.0
        %2836 = vmatpush1.xpose.msra.mxu0 %v2805
        %2837 = vmatprep.subr.mxu0 0.0
        %2838 = vmatpush1.xpose.msra.mxu0 %v2803
        %2839 = vmatprep.subr.mxu0 0.0
        %2840 = vmatpush1.xpose.msra.mxu0 %v2801
        %2841 = vmatprep.subr.mxu0 0.0
        %2842 = vmatpush1.xpose.msra.mxu0 %v2799
        %2843 = vmatprep.subr.mxu0 0.0
        %2844 = vmatpush2.xpose.msra.mxu0 0.0
        %2845 = vmatprep.subr.mxu0 0.0
        %2846 = vmatpush2.xpose.msra.mxu0 0.0
        %2847 = vmatprep.subr.mxu0 0.0
        %2848 = vmatpush2.xpose.msra.mxu0 0.0
        %2849 = vmatprep.subr.mxu0 0.0
        %2850 = vmatpush2.xpose.msra.mxu0 0.0
        %2851 = vmatprep.subr.mxu0 0.0
        %2852 = vmatpush2.xpose.msra.mxu0 0.0
        %2853 = vmatprep.subr.mxu0 0.0
        %2854 = vmatpush2.xpose.msra.mxu0 0.0
        %2855 = vmatprep.subr.mxu0 0.0
        %2856 = vmatpush2.xpose.msra.mxu0 0.0
        %2857 = vmatprep.subr.mxu0 0.0
        %2858 = vmatpush2.xpose.msra.mxu0 0.0
        %2859 = vmatprep.subr.mxu0 0.0
        %2860 = vmatpush2.xpose.msra.mxu0 0.0
        %2861 = vmatprep.subr.mxu0 0.0
        %2862 = vmatpush2.xpose.msra.mxu0 0.0
        %2863 = vmatprep.subr.mxu0 0.0
        %2864 = vmatpush2.xpose.msra.mxu0 0.0
        %2865 = vmatprep.subr.mxu0 0.0
        %2866 = vmatpush2.xpose.msra.mxu0 0.0
        %2867 = vmatprep.subr.mxu0 0.0
        %2868 = vmatpush2.xpose.msra.mxu0 0.0
        %2869 = vmatprep.subr.mxu0 0.0
        %2870 = vmatpush2.xpose.msra.mxu0 0.0
        %2871 = vmatprep.subr.mxu0 0.0
        %2872 = vmatpush2.xpose.msra.mxu0 0.0
        %2873 = vmatprep.subr.mxu0 0.0
        %2874 = vmatpush2.xpose.msra.mxu0 0.0
        %2875 = vmatprep.mubr.f32.mxu0 0.0
        %2876 = vmatmul.mubr.f32.gmra.mxu0 %v2795
        %v2877 = vpop.f32.mrf.mxu0
        %v2878 = vadd.f32 0.0, %v2877
        %v2879 = vpop.f32.mrf.mxu0
        %2880 = vmatprep.mubr.f32.mxu0 0.0
        %2881 = vmatmul.mubr.f32.gmra.mxu0 %v2797
        %v2882 = vpop.f32.mrf.mxu0
        %v2883 = vadd.f32 0.0, %v2882
        %v2884 = vpop.f32.mrf.mxu0
        %2885 = vdwg.mxu0
        %v2886 = vsel %vm2429, %v2878, -inf
        %2887 = vmax.xlane.f32.xlu0 %v2886
        %v2888 = vpop.xlane.xlu0 %2887
        %v2889 = vsel %vm2429, %v2883, -inf
        %2890 = vmax.xlane.f32.xlu0 %v2889
        %v2891 = vpop.xlane.xlu0 %2890
        %v2892 = vsub.f32 %v2878, %v2888
        %v2893 = vsub.f32 %v2883, %v2891
        %v2894 = vmul.f32 %v2892, 1.442695
        %v2895 = vpow.pop %v2894
        %v2896 = vmul.f32 %v2893, 1.442695
        %v2897 = vpow.pop %v2896
        %v2898 = vsel %vm2429, %v2895, 0.0
        %2899 = vadd.xlane.f32.xlu0 %v2898
        %v2900 = vpop.xlane.xlu0 %2899
        %v2901 = vsel %vm2429, %v2897, 0.0
        %2902 = vadd.xlane.f32.xlu0 %v2901
        %v2903 = vpop.xlane.xlu0 %2902
        %2904 = vrot.lane.b32.xlu0 %v2302, 80
        %v2905 = vpop.permute.xlu0 %2904
        %2906 = vrot.lane.b32.xlu0 %v2307, 80
        %v2907 = vpop.permute.xlu0 %2906
        %2908 = vrot.lane.b32.xlu0 %v2312, 80
        %v2909 = vpop.permute.xlu0 %2908
        %2910 = vrot.lane.b32.xlu0 %v2317, 80
        %v2911 = vpop.permute.xlu0 %2910
        %2912 = vrot.lane.b32.xlu0 %v2322, 80
        %v2913 = vpop.permute.xlu0 %2912
        %2914 = vrot.lane.b32.xlu0 %v2327, 80
        %v2915 = vpop.permute.xlu0 %2914
        %v2923 = vsel %vm2429, %v2895, 0
        %v2926 = vsel %vm2429, %v2897, 0
        %2928 = vmatprep.subr.mxu0 0.0
        %2929 = vmatpush1.msra.mxu0 0.0
        %2930 = vmatprep.subr.mxu0 0.0
        %2931 = vmatpush1.msra.mxu0 0.0
        %2932 = vmatprep.subr.mxu0 0.0
        %2933 = vmatpush1.msra.mxu0 0.0
        %2934 = vmatprep.subr.mxu0 0.0
        %2935 = vmatpush1.msra.mxu0 0.0
        %2936 = vmatprep.subr.mxu0 0.0
        %2937 = vmatpush1.msra.mxu0 0.0
        %2938 = vmatprep.subr.mxu0 0.0
        %2939 = vmatpush1.msra.mxu0 0.0
        %2940 = vmatprep.subr.mxu0 0.0
        %2941 = vmatpush1.msra.mxu0 0.0
        %2942 = vmatprep.subr.mxu0 0.0
        %2943 = vmatpush1.msra.mxu0 0.0
        %2944 = vmatprep.subr.mxu0 0.0
        %2945 = vmatpush1.msra.mxu0 0.0
        %2946 = vmatprep.subr.mxu0 0.0
        %2947 = vmatpush1.msra.mxu0 0.0
        %2948 = vmatprep.subr.mxu0 0.0
        %2949 = vmatpush1.msra.mxu0 %v2915
        %2950 = vmatprep.subr.mxu0 0.0
        %2951 = vmatpush1.msra.mxu0 %v2913
        %2952 = vmatprep.subr.mxu0 0.0
        %2953 = vmatpush1.msra.mxu0 %v2911
        %2954 = vmatprep.subr.mxu0 0.0
        %2955 = vmatpush1.msra.mxu0 %v2909
        %2956 = vmatprep.subr.mxu0 0.0
        %2957 = vmatpush1.msra.mxu0 %v2907
        %2958 = vmatprep.subr.mxu0 0.0
        %2959 = vmatpush1.msra.mxu0 %v2905
        %2960 = vmatprep.subr.mxu0 0.0
        %2961 = vmatpush2.msra.mxu0 0.0
        %2962 = vmatprep.subr.mxu0 0.0
        %2963 = vmatpush2.msra.mxu0 0.0
        %2964 = vmatprep.subr.mxu0 0.0
        %2965 = vmatpush2.msra.mxu0 0.0
        %2966 = vmatprep.subr.mxu0 0.0
        %2967 = vmatpush2.msra.mxu0 0.0
        %2968 = vmatprep.subr.mxu0 0.0
        %2969 = vmatpush2.msra.mxu0 0.0
        %2970 = vmatprep.subr.mxu0 0.0
        %2971 = vmatpush2.msra.mxu0 0.0
        %2972 = vmatprep.subr.mxu0 0.0
        %2973 = vmatpush2.msra.mxu0 0.0
        %2974 = vmatprep.subr.mxu0 0.0
        %2975 = vmatpush2.msra.mxu0 0.0
        %2976 = vmatprep.subr.mxu0 0.0
        %2977 = vmatpush2.msra.mxu0 0.0
        %2978 = vmatprep.subr.mxu0 0.0
        %2979 = vmatpush2.msra.mxu0 0.0
        %2980 = vmatprep.subr.mxu0 0.0
        %2981 = vmatpush2.msra.mxu0 0.0
        %2982 = vmatprep.subr.mxu0 0.0
        %2983 = vmatpush2.msra.mxu0 0.0
        %2984 = vmatprep.subr.mxu0 0.0
        %2985 = vmatpush2.msra.mxu0 0.0
        %2986 = vmatprep.subr.mxu0 0.0
        %2987 = vmatpush2.msra.mxu0 0.0
        %2988 = vmatprep.subr.mxu0 0.0
        %2989 = vmatpush2.msra.mxu0 0.0
        %2990 = vmatprep.subr.mxu0 0.0
        %2991 = vmatpush2.msra.mxu0 0.0
        %2992 = vmatprep.mubr.f32.mxu0 0.0
        %2993 = vmatmul.mubr.f32.gmra.mxu0 %v2923
        %v2994 = vpop.f32.mrf.mxu0
        %v2995 = vadd.f32 0.0, %v2994
        %v2996 = vpop.f32.mrf.mxu0
        %2997 = vmatprep.mubr.f32.mxu0 0.0
        %2998 = vmatmul.mubr.f32.gmra.mxu0 %v2926
        %v2999 = vpop.f32.mrf.mxu0
        %v3000 = vadd.f32 0.0, %v2999
        %v3001 = vpop.f32.mrf.mxu0
        %3002 = vdwg.mxu0
        %v3003 = vrcp.pop %v2900
        %v3004 = vrcp.pop %v2903
        %v3005 = vmul.f32 %v2995, %v3003
        %v3006 = vmul.f32 %v3000, %v3004
        %3007 = vrot.lane.b32.xlu0 %v2196, 104
        %v3008 = vpop.permute.xlu0 %3007
        %3009 = vrot.lane.b32.xlu0 %v2197, 104
        %v3010 = vpop.permute.xlu0 %3009
        %3011 = vrot.lane.b32.xlu0 %v2302, 104
        %v3012 = vpop.permute.xlu0 %3011
        %3013 = vrot.lane.b32.xlu0 %v2307, 104
        %v3014 = vpop.permute.xlu0 %3013
        %3015 = vrot.lane.b32.xlu0 %v2312, 104
        %v3016 = vpop.permute.xlu0 %3015
        %3017 = vrot.lane.b32.xlu0 %v2317, 104
        %v3018 = vpop.permute.xlu0 %3017
        %3019 = vrot.lane.b32.xlu0 %v2322, 104
        %v3020 = vpop.permute.xlu0 %3019
        %3021 = vrot.lane.b32.xlu0 %v2327, 104
        %v3022 = vpop.permute.xlu0 %3021
        %v3023 = vsel %vm766, %v3008, 0
        %v3025 = vsel %vm766, %v3010, 0
        %v3027 = vsel %vm766, %v3012, 0
        %v3029 = vsel %vm766, %v3014, 0
        %v3031 = vsel %vm766, %v3016, 0
        %v3033 = vsel %vm766, %v3018, 0
        %v3035 = vsel %vm766, %v3020, 0
        %v3037 = vsel %vm766, %v3022, 0
        %3039 = vmatprep.subr.mxu0 0.0
        %3040 = vmatpush1.xpose.msra.mxu0 0.0
        %3041 = vmatprep.subr.mxu0 0.0
        %3042 = vmatpush1.xpose.msra.mxu0 0.0
        %3043 = vmatprep.subr.mxu0 0.0
        %3044 = vmatpush1.xpose.msra.mxu0 0.0
        %3045 = vmatprep.subr.mxu0 0.0
        %3046 = vmatpush1.xpose.msra.mxu0 0.0
        %3047 = vmatprep.subr.mxu0 0.0
        %3048 = vmatpush1.xpose.msra.mxu0 0.0
        %3049 = vmatprep.subr.mxu0 0.0
        %3050 = vmatpush1.xpose.msra.mxu0 0.0
        %3051 = vmatprep.subr.mxu0 0.0
        %3052 = vmatpush1.xpose.msra.mxu0 0.0
        %3053 = vmatprep.subr.mxu0 0.0
        %3054 = vmatpush1.xpose.msra.mxu0 0.0
        %3055 = vmatprep.subr.mxu0 0.0
        %3056 = vmatpush1.xpose.msra.mxu0 0.0
        %3057 = vmatprep.subr.mxu0 0.0
        %3058 = vmatpush1.xpose.msra.mxu0 0.0
        %3059 = vmatprep.subr.mxu0 0.0
        %3060 = vmatpush1.xpose.msra.mxu0 %v3037
        %3061 = vmatprep.subr.mxu0 0.0
        %3062 = vmatpush1.xpose.msra.mxu0 %v3035
        %3063 = vmatprep.subr.mxu0 0.0
        %3064 = vmatpush1.xpose.msra.mxu0 %v3033
        %3065 = vmatprep.subr.mxu0 0.0
        %3066 = vmatpush1.xpose.msra.mxu0 %v3031
        %3067 = vmatprep.subr.mxu0 0.0
        %3068 = vmatpush1.xpose.msra.mxu0 %v3029
        %3069 = vmatprep.subr.mxu0 0.0
        %3070 = vmatpush1.xpose.msra.mxu0 %v3027
        %3071 = vmatprep.subr.mxu0 0.0
        %3072 = vmatpush2.xpose.msra.mxu0 0.0
        %3073 = vmatprep.subr.mxu0 0.0
        %3074 = vmatpush2.xpose.msra.mxu0 0.0
        %3075 = vmatprep.subr.mxu0 0.0
        %3076 = vmatpush2.xpose.msra.mxu0 0.0
        %3077 = vmatprep.subr.mxu0 0.0
        %3078 = vmatpush2.xpose.msra.mxu0 0.0
        %3079 = vmatprep.subr.mxu0 0.0
        %3080 = vmatpush2.xpose.msra.mxu0 0.0
        %3081 = vmatprep.subr.mxu0 0.0
        %3082 = vmatpush2.xpose.msra.mxu0 0.0
        %3083 = vmatprep.subr.mxu0 0.0
        %3084 = vmatpush2.xpose.msra.mxu0 0.0
        %3085 = vmatprep.subr.mxu0 0.0
        %3086 = vmatpush2.xpose.msra.mxu0 0.0
        %3087 = vmatprep.subr.mxu0 0.0
        %3088 = vmatpush2.xpose.msra.mxu0 0.0
        %3089 = vmatprep.subr.mxu0 0.0
        %3090 = vmatpush2.xpose.msra.mxu0 0.0
        %3091 = vmatprep.subr.mxu0 0.0
        %3092 = vmatpush2.xpose.msra.mxu0 0.0
        %3093 = vmatprep.subr.mxu0 0.0
        %3094 = vmatpush2.xpose.msra.mxu0 0.0
        %3095 = vmatprep.subr.mxu0 0.0
        %3096 = vmatpush2.xpose.msra.mxu0 0.0
        %3097 = vmatprep.subr.mxu0 0.0
        %3098 = vmatpush2.xpose.msra.mxu0 0.0
        %3099 = vmatprep.subr.mxu0 0.0
        %3100 = vmatpush2.xpose.msra.mxu0 0.0
        %3101 = vmatprep.subr.mxu0 0.0
        %3102 = vmatpush2.xpose.msra.mxu0 0.0
        %3103 = vmatprep.mubr.f32.mxu0 0.0
        %3104 = vmatmul.mubr.f32.gmra.mxu0 %v3023
        %v3105 = vpop.f32.mrf.mxu0
        %v3106 = vadd.f32 0.0, %v3105
        %v3107 = vpop.f32.mrf.mxu0
        %3108 = vmatprep.mubr.f32.mxu0 0.0
        %3109 = vmatmul.mubr.f32.gmra.mxu0 %v3025
        %v3110 = vpop.f32.mrf.mxu0
        %v3111 = vadd.f32 0.0, %v3110
        %v3112 = vpop.f32.mrf.mxu0
        %3113 = vdwg.mxu0
        %v3114 = vsel %vm2429, %v3106, -inf
        %3115 = vmax.xlane.f32.xlu0 %v3114
        %v3116 = vpop.xlane.xlu0 %3115
        %v3117 = vsel %vm2429, %v3111, -inf
        %3118 = vmax.xlane.f32.xlu0 %v3117
        %v3119 = vpop.xlane.xlu0 %3118
        %v3120 = vsub.f32 %v3106, %v3116
        %v3121 = vsub.f32 %v3111, %v3119
        %v3122 = vmul.f32 %v3120, 1.442695
        %v3123 = vpow.pop %v3122
        %v3124 = vmul.f32 %v3121, 1.442695
        %v3125 = vpow.pop %v3124
        %v3126 = vsel %vm2429, %v3123, 0.0
        %3127 = vadd.xlane.f32.xlu0 %v3126
        %v3128 = vpop.xlane.xlu0 %3127
        %v3129 = vsel %vm2429, %v3125, 0.0
        %3130 = vadd.xlane.f32.xlu0 %v3129
        %v3131 = vpop.xlane.xlu0 %3130
        %3132 = vrot.lane.b32.xlu0 %v2302, 72
        %v3133 = vpop.permute.xlu0 %3132
        %3134 = vrot.lane.b32.xlu0 %v2307, 72
        %v3135 = vpop.permute.xlu0 %3134
        %3136 = vrot.lane.b32.xlu0 %v2312, 72
        %v3137 = vpop.permute.xlu0 %3136
        %3138 = vrot.lane.b32.xlu0 %v2317, 72
        %v3139 = vpop.permute.xlu0 %3138
        %3140 = vrot.lane.b32.xlu0 %v2322, 72
        %v3141 = vpop.permute.xlu0 %3140
        %3142 = vrot.lane.b32.xlu0 %v2327, 72
        %v3143 = vpop.permute.xlu0 %3142
        %v3151 = vsel %vm2429, %v3123, 0
        %v3154 = vsel %vm2429, %v3125, 0
        %3156 = vmatprep.subr.mxu0 0.0
        %3157 = vmatpush1.msra.mxu0 0.0
        %3158 = vmatprep.subr.mxu0 0.0
        %3159 = vmatpush1.msra.mxu0 0.0
        %3160 = vmatprep.subr.mxu0 0.0
        %3161 = vmatpush1.msra.mxu0 0.0
        %3162 = vmatprep.subr.mxu0 0.0
        %3163 = vmatpush1.msra.mxu0 0.0
        %3164 = vmatprep.subr.mxu0 0.0
        %3165 = vmatpush1.msra.mxu0 0.0
        %3166 = vmatprep.subr.mxu0 0.0
        %3167 = vmatpush1.msra.mxu0 0.0
        %3168 = vmatprep.subr.mxu0 0.0
        %3169 = vmatpush1.msra.mxu0 0.0
        %3170 = vmatprep.subr.mxu0 0.0
        %3171 = vmatpush1.msra.mxu0 0.0
        %3172 = vmatprep.subr.mxu0 0.0
        %3173 = vmatpush1.msra.mxu0 0.0
        %3174 = vmatprep.subr.mxu0 0.0
        %3175 = vmatpush1.msra.mxu0 0.0
        %3176 = vmatprep.subr.mxu0 0.0
        %3177 = vmatpush1.msra.mxu0 %v3143
        %3178 = vmatprep.subr.mxu0 0.0
        %3179 = vmatpush1.msra.mxu0 %v3141
        %3180 = vmatprep.subr.mxu0 0.0
        %3181 = vmatpush1.msra.mxu0 %v3139
        %3182 = vmatprep.subr.mxu0 0.0
        %3183 = vmatpush1.msra.mxu0 %v3137
        %3184 = vmatprep.subr.mxu0 0.0
        %3185 = vmatpush1.msra.mxu0 %v3135
        %3186 = vmatprep.subr.mxu0 0.0
        %3187 = vmatpush1.msra.mxu0 %v3133
        %3188 = vmatprep.subr.mxu0 0.0
        %3189 = vmatpush2.msra.mxu0 0.0
        %3190 = vmatprep.subr.mxu0 0.0
        %3191 = vmatpush2.msra.mxu0 0.0
        %3192 = vmatprep.subr.mxu0 0.0
        %3193 = vmatpush2.msra.mxu0 0.0
        %3194 = vmatprep.subr.mxu0 0.0
        %3195 = vmatpush2.msra.mxu0 0.0
        %3196 = vmatprep.subr.mxu0 0.0
        %3197 = vmatpush2.msra.mxu0 0.0
        %3198 = vmatprep.subr.mxu0 0.0
        %3199 = vmatpush2.msra.mxu0 0.0
        %3200 = vmatprep.subr.mxu0 0.0
        %3201 = vmatpush2.msra.mxu0 0.0
        %3202 = vmatprep.subr.mxu0 0.0
        %3203 = vmatpush2.msra.mxu0 0.0
        %3204 = vmatprep.subr.mxu0 0.0
        %3205 = vmatpush2.msra.mxu0 0.0
        %3206 = vmatprep.subr.mxu0 0.0
        %3207 = vmatpush2.msra.mxu0 0.0
        %3208 = vmatprep.subr.mxu0 0.0
        %3209 = vmatpush2.msra.mxu0 0.0
        %3210 = vmatprep.subr.mxu0 0.0
        %3211 = vmatpush2.msra.mxu0 0.0
        %3212 = vmatprep.subr.mxu0 0.0
        %3213 = vmatpush2.msra.mxu0 0.0
        %3214 = vmatprep.subr.mxu0 0.0
        %3215 = vmatpush2.msra.mxu0 0.0
        %3216 = vmatprep.subr.mxu0 0.0
        %3217 = vmatpush2.msra.mxu0 0.0
        %3218 = vmatprep.subr.mxu0 0.0
        %3219 = vmatpush2.msra.mxu0 0.0
        %3220 = vmatprep.mubr.f32.mxu0 0.0
        %3221 = vmatmul.mubr.f32.gmra.mxu0 %v3151
        %v3222 = vpop.f32.mrf.mxu0
        %v3223 = vadd.f32 0.0, %v3222
        %v3224 = vpop.f32.mrf.mxu0
        %3225 = vmatprep.mubr.f32.mxu0 0.0
        %3226 = vmatmul.mubr.f32.gmra.mxu0 %v3154
        %v3227 = vpop.f32.mrf.mxu0
        %v3228 = vadd.f32 0.0, %v3227
        %v3229 = vpop.f32.mrf.mxu0
        %3230 = vdwg.mxu0
        %v3231 = vrcp.pop %v3128
        %v3232 = vrcp.pop %v3131
        %v3233 = vmul.f32 %v3223, %v3231
        %v3234 = vmul.f32 %v3228, %v3232
        %3237 = vrot.lane.b32.xlu0 %v2777, 8
        %v3238 = vpop.permute.xlu0 %3237
        %3239 = vrot.lane.b32.xlu0 %v2778, 8
        %v3240 = vpop.permute.xlu0 %3239
        %3245 = vrot.lane.b32.xlu0 %v3005, 16
        %v3246 = vpop.permute.xlu0 %3245
        %3247 = vrot.lane.b32.xlu0 %v3006, 16
        %v3248 = vpop.permute.xlu0 %3247
        %3253 = vrot.lane.b32.xlu0 %v3233, 24
        %v3254 = vpop.permute.xlu0 %3253
        %3255 = vrot.lane.b32.xlu0 %v3234, 24
        %v3256 = vpop.permute.xlu0 %3255
        %v3259 = vsel %vm766, %v2549, %v3238
        %v3260 = vsel %vm766, %v2550, %v3240
        %v3261 = vsel %vm852, %v3259, %v3246
        %v3262 = vsel %vm852, %v3260, %v3248
        %v3263 = vsel %vm1590, %v3261, %v3254
        %v3264 = vsel %vm1590, %v3262, %v3256
        %3265 = vrot.lane.b32.xlu0 %v2104, 32
        %v3266 = vpop.permute.xlu0 %3265
        %3267 = vrot.lane.b32.xlu0 %v2105, 32
        %v3268 = vpop.permute.xlu0 %3267
        %3269 = vrot.lane.b32.xlu0 %v2106, 32
        %v3270 = vpop.permute.xlu0 %3269
        %3271 = vrot.lane.b32.xlu0 %v2107, 32
        %v3272 = vpop.permute.xlu0 %3271
        %3277 = vrot.lane.b32.xlu0 %v2113, 32
        %v3278 = vpop.permute.xlu0 %3277
        %v3281 = vsel %vm626, %v3263, 0
        %v3284 = vsel %vm626, %v3264, 0
        %3286 = vmatprep.subr.mxu0 0.0
        %3287 = vmatpush1.msra.mxu0 0.0
        %3288 = vmatprep.subr.mxu0 0.0
        %3289 = vmatpush1.msra.mxu0 0.0
        %3290 = vmatprep.subr.mxu0 0.0
        %3291 = vmatpush1.msra.mxu0 0.0
        %3292 = vmatprep.subr.mxu0 0.0
        %3293 = vmatpush1.msra.mxu0 0.0
        %3294 = vmatprep.subr.mxu0 0.0
        %3295 = vmatpush1.msra.mxu0 0.0
        %3296 = vmatprep.subr.mxu0 0.0
        %3297 = vmatpush1.msra.mxu0 0.0
        %3298 = vmatprep.subr.mxu0 0.0
        %3299 = vmatpush1.msra.mxu0 0.0
        %3300 = vmatprep.subr.mxu0 0.0
        %3301 = vmatpush1.msra.mxu0 0.0
        %3302 = vmatprep.subr.mxu0 0.0
        %3303 = vmatpush1.msra.mxu0 0.0
        %3304 = vmatprep.subr.mxu0 0.0
        %3305 = vmatpush1.msra.mxu0 0.0
        %3306 = vmatprep.subr.mxu0 0.0
        %3307 = vmatpush1.msra.mxu0 0.0
        %3308 = vmatprep.subr.mxu0 0.0
        %3309 = vmatpush1.msra.mxu0 0.0
        %3310 = vmatprep.subr.mxu0 0.0
        %3311 = vmatpush1.msra.mxu0 %v3272
        %3312 = vmatprep.subr.mxu0 0.0
        %3313 = vmatpush1.msra.mxu0 %v3270
        %3314 = vmatprep.subr.mxu0 0.0
        %3315 = vmatpush1.msra.mxu0 %v3268
        %3316 = vmatprep.subr.mxu0 0.0
        %3317 = vmatpush1.msra.mxu0 %v3266
        %3318 = vmatprep.subr.mxu0 0.0
        %3319 = vmatpush2.msra.mxu0 0.0
        %3320 = vmatprep.subr.mxu0 0.0
        %3321 = vmatpush2.msra.mxu0 0.0
        %3322 = vmatprep.subr.mxu0 0.0
        %3323 = vmatpush2.msra.mxu0 0.0
        %3324 = vmatprep.subr.mxu0 0.0
        %3325 = vmatpush2.msra.mxu0 0.0
        %3326 = vmatprep.subr.mxu0 0.0
        %3327 = vmatpush2.msra.mxu0 0.0
        %3328 = vmatprep.subr.mxu0 0.0
        %3329 = vmatpush2.msra.mxu0 0.0
        %3330 = vmatprep.subr.mxu0 0.0
        %3331 = vmatpush2.msra.mxu0 0.0
        %3332 = vmatprep.subr.mxu0 0.0
        %3333 = vmatpush2.msra.mxu0 0.0
        %3334 = vmatprep.subr.mxu0 0.0
        %3335 = vmatpush2.msra.mxu0 0.0
        %3336 = vmatprep.subr.mxu0 0.0
        %3337 = vmatpush2.msra.mxu0 0.0
        %3338 = vmatprep.subr.mxu0 0.0
        %3339 = vmatpush2.msra.mxu0 0.0
        %3340 = vmatprep.subr.mxu0 0.0
        %3341 = vmatpush2.msra.mxu0 0.0
        %3342 = vmatprep.subr.mxu0 0.0
        %3343 = vmatpush2.msra.mxu0 0.0
        %3344 = vmatprep.subr.mxu0 0.0
        %3345 = vmatpush2.msra.mxu0 0.0
        %3346 = vmatprep.subr.mxu0 0.0
        %3347 = vmatpush2.msra.mxu0 0.0
        %3348 = vmatprep.subr.mxu0 0.0
        %3349 = vmatpush2.msra.mxu0 0.0
        %3350 = vmatprep.mubr.f32.mxu0 0.0
        %3351 = vmatmul.mubr.f32.gmra.mxu0 %v3281
        %v3352 = vpop.f32.mrf.mxu0
        %v3353 = vadd.f32 %v3278, %v3352
        %v3354 = vpop.f32.mrf.mxu0
        %3355 = vmatprep.mubr.f32.mxu0 0.0
        %3356 = vmatmul.mubr.f32.gmra.mxu0 %v3284
        %v3357 = vpop.f32.mrf.mxu0
        %v3358 = vadd.f32 %v3278, %v3357
        %v3359 = vpop.f32.mrf.mxu0
        %3360 = vdwg.mxu0
        %v3361 = vadd.f32 %v3353, %v2096
        %v3362 = vadd.f32 %v3358, %v2097
        %s3363 = scalar_lea.vmem %s1, 4
        %v3364 = vld [vmem:[%s3363] sm:$0x3]
        %v3365 = vsel %vm626, %v3361, 0.0
        %3366 = vadd.xlane.f32.xlu0 %v3365
        %v3367 = vpop.xlane.xlu0 %3366
        %v3368 = vsel %vm626, %v3362, 0.0
        %3369 = vadd.xlane.f32.xlu0 %v3368
        %v3370 = vpop.xlane.xlu0 %3369
        %v3371 = vmul.f32 %v3367, %v633
        %v3372 = vmul.f32 %v3370, %v633
        %v3373 = vsub.f32 %v3361, %v3371
        %v3374 = vsub.f32 %v3362, %v3372
        %v3375 = vmul.f32 %v3373, %v3373
        %v3376 = vmul.f32 %v3374, %v3374
        %v3377 = vsel %vm626, %v3375, 0.0
        %3378 = vadd.xlane.f32.xlu0 %v3377
        %v3379 = vpop.xlane.xlu0 %3378
        %v3380 = vsel %vm626, %v3376, 0.0
        %3381 = vadd.xlane.f32.xlu0 %v3380
        %v3382 = vpop.xlane.xlu0 %3381
        %v3383 = vmul.f32 %v3379, %v633
        %v3384 = vmul.f32 %v3382, %v633
        %v3385 = vadd.f32 %v3383, 1e-05
        %v3386 = vadd.f32 %v3384, 1e-05
        %v3387 = vrsqrt.pop %v3385
        %v3388 = vrsqrt.pop %v3386
        %v3389 = vmul.f32 %v3373, %v3387
        %v3390 = vmul.f32 %v3374, %v3388
        %v3391 = vlaneseq
        %v3392 = vshrl.u32 %v3391, 7
        %v3393 = vsub.s32 0, %v3392
        %v3394 = vrot.slane %v3364, %v3393
        %v3395 = vmul.f32 %v3389, %v3394
        %v3396 = vmul.f32 %v3390, %v3394
        %v3397 = vlaneseq
        %v3398 = vshrl.u32 %v3397, 7
        %v3399 = vsub.s32 1, %v3398
        %v3400 = vrot.slane %v3364, %v3399
        %v3401 = vadd.f32 %v3395, %v3400
        %v3402 = vadd.f32 %v3396, %v3400
        %v3403 = vadd.f32 %v3401, %v2056
        %v3404 = vadd.f32 %v3402, %v2057
        %v3405 = vld [vmem:[%s7] sm:$0xff]
        %v3406 = vld [vmem:[%s7 + $0x8] sm:$0xff]
        %v3407 = vld [vmem:[%s7 + $0x10] sm:$0xff]
        %v3408 = vld [vmem:[%s7 + $0x18] sm:$0xff]
        %v3409 = vld [vmem:[%s8] sm:$0x1]
        %v3411 = vlaneseq
        %v3412 = vshrl.u32 %v3411, 7
        %v3413 = vsub.s32 0, %v3412
        %v3414 = vrot.slane %v3409, %v3413
        %v3417 = vsel %vm626, %v3403, 0
        %v3420 = vsel %vm626, %v3404, 0
        %3422 = vmatprep.subr.mxu0 0.0
        %3423 = vmatpush1.msra.mxu0 0.0
        %3424 = vmatprep.subr.mxu0 0.0
        %3425 = vmatpush1.msra.mxu0 0.0
        %3426 = vmatprep.subr.mxu0 0.0
        %3427 = vmatpush1.msra.mxu0 0.0
        %3428 = vmatprep.subr.mxu0 0.0
        %3429 = vmatpush1.msra.mxu0 0.0
        %3430 = vmatprep.subr.mxu0 0.0
        %3431 = vmatpush1.msra.mxu0 0.0
        %3432 = vmatprep.subr.mxu0 0.0
        %3433 = vmatpush1.msra.mxu0 0.0
        %3434 = vmatprep.subr.mxu0 0.0
        %3435 = vmatpush1.msra.mxu0 0.0
        %3436 = vmatprep.subr.mxu0 0.0
        %3437 = vmatpush1.msra.mxu0 0.0
        %3438 = vmatprep.subr.mxu0 0.0
        %3439 = vmatpush1.msra.mxu0 0.0
        %3440 = vmatprep.subr.mxu0 0.0
        %3441 = vmatpush1.msra.mxu0 0.0
        %3442 = vmatprep.subr.mxu0 0.0
        %3443 = vmatpush1.msra.mxu0 0.0
        %3444 = vmatprep.subr.mxu0 0.0
        %3445 = vmatpush1.msra.mxu0 0.0
        %3446 = vmatprep.subr.mxu0 0.0
        %3447 = vmatpush1.msra.mxu0 %v3408
        %3448 = vmatprep.subr.mxu0 0.0
        %3449 = vmatpush1.msra.mxu0 %v3407
        %3450 = vmatprep.subr.mxu0 0.0
        %3451 = vmatpush1.msra.mxu0 %v3406
        %3452 = vmatprep.subr.mxu0 0.0
        %3453 = vmatpush1.msra.mxu0 %v3405
        %3454 = vmatprep.subr.mxu0 0.0
        %3455 = vmatpush2.msra.mxu0 0.0
        %3456 = vmatprep.subr.mxu0 0.0
        %3457 = vmatpush2.msra.mxu0 0.0
        %3458 = vmatprep.subr.mxu0 0.0
        %3459 = vmatpush2.msra.mxu0 0.0
        %3460 = vmatprep.subr.mxu0 0.0
        %3461 = vmatpush2.msra.mxu0 0.0
        %3462 = vmatprep.subr.mxu0 0.0
        %3463 = vmatpush2.msra.mxu0 0.0
        %3464 = vmatprep.subr.mxu0 0.0
        %3465 = vmatpush2.msra.mxu0 0.0
        %3466 = vmatprep.subr.mxu0 0.0
        %3467 = vmatpush2.msra.mxu0 0.0
        %3468 = vmatprep.subr.mxu0 0.0
        %3469 = vmatpush2.msra.mxu0 0.0
        %3470 = vmatprep.subr.mxu0 0.0
        %3471 = vmatpush2.msra.mxu0 0.0
        %3472 = vmatprep.subr.mxu0 0.0
        %3473 = vmatpush2.msra.mxu0 0.0
        %3474 = vmatprep.subr.mxu0 0.0
        %3475 = vmatpush2.msra.mxu0 0.0
        %3476 = vmatprep.subr.mxu0 0.0
        %3477 = vmatpush2.msra.mxu0 0.0
        %3478 = vmatprep.subr.mxu0 0.0
        %3479 = vmatpush2.msra.mxu0 0.0
        %3480 = vmatprep.subr.mxu0 0.0
        %3481 = vmatpush2.msra.mxu0 0.0
        %3482 = vmatprep.subr.mxu0 0.0
        %3483 = vmatpush2.msra.mxu0 0.0
        %3484 = vmatprep.subr.mxu0 0.0
        %3485 = vmatpush2.msra.mxu0 0.0
        %3486 = vmatprep.mubr.f32.mxu0 0.0
        %3487 = vmatmul.mubr.f32.gmra.mxu0 %v3417
        %v3488 = vpop.f32.mrf.mxu0
        %v3489 = vadd.f32 %v3414, %v3488
        %v3490 = vpop.f32.mrf.mxu0
        %3491 = vmatprep.mubr.f32.mxu0 0.0
        %3492 = vmatmul.mubr.f32.gmra.mxu0 %v3420
        %v3493 = vpop.f32.mrf.mxu0
        %v3494 = vadd.f32 %v3414, %v3493
        %v3495 = vpop.f32.mrf.mxu0
        %3496 = vdwg.mxu0
        %v3497 = vmax.f32 %v3489, 0.0
        %v3498 = vmax.f32 %v3494, 0.0
        %3503 = vrot.lane.b32.xlu0 %v3405, 96
        %v3504 = vpop.permute.xlu0 %3503
        %3505 = vrot.lane.b32.xlu0 %v3406, 96
        %v3506 = vpop.permute.xlu0 %3505
        %3507 = vrot.lane.b32.xlu0 %v3407, 96
        %v3508 = vpop.permute.xlu0 %3507
        %3509 = vrot.lane.b32.xlu0 %v3408, 96
        %v3510 = vpop.permute.xlu0 %3509
        %3515 = vrot.lane.b32.xlu0 %v3414, 96
        %v3516 = vpop.permute.xlu0 %3515
        %v3519 = vsel %vm626, %v3497, 0
        %v3522 = vsel %vm626, %v3498, 0
        %3524 = vmatprep.subr.mxu0 0.0
        %3525 = vmatpush1.msra.mxu0 0.0
        %3526 = vmatprep.subr.mxu0 0.0
        %3527 = vmatpush1.msra.mxu0 0.0
        %3528 = vmatprep.subr.mxu0 0.0
        %3529 = vmatpush1.msra.mxu0 0.0
        %3530 = vmatprep.subr.mxu0 0.0
        %3531 = vmatpush1.msra.mxu0 0.0
        %3532 = vmatprep.subr.mxu0 0.0
        %3533 = vmatpush1.msra.mxu0 0.0
        %3534 = vmatprep.subr.mxu0 0.0
        %3535 = vmatpush1.msra.mxu0 0.0
        %3536 = vmatprep.subr.mxu0 0.0
        %3537 = vmatpush1.msra.mxu0 0.0
        %3538 = vmatprep.subr.mxu0 0.0
        %3539 = vmatpush1.msra.mxu0 0.0
        %3540 = vmatprep.subr.mxu0 0.0
        %3541 = vmatpush1.msra.mxu0 0.0
        %3542 = vmatprep.subr.mxu0 0.0
        %3543 = vmatpush1.msra.mxu0 0.0
        %3544 = vmatprep.subr.mxu0 0.0
        %3545 = vmatpush1.msra.mxu0 0.0
        %3546 = vmatprep.subr.mxu0 0.0
        %3547 = vmatpush1.msra.mxu0 0.0
        %3548 = vmatprep.subr.mxu0 0.0
        %3549 = vmatpush1.msra.mxu0 %v3510
        %3550 = vmatprep.subr.mxu0 0.0
        %3551 = vmatpush1.msra.mxu0 %v3508
        %3552 = vmatprep.subr.mxu0 0.0
        %3553 = vmatpush1.msra.mxu0 %v3506
        %3554 = vmatprep.subr.mxu0 0.0
        %3555 = vmatpush1.msra.mxu0 %v3504
        %3556 = vmatprep.subr.mxu0 0.0
        %3557 = vmatpush2.msra.mxu0 0.0
        %3558 = vmatprep.subr.mxu0 0.0
        %3559 = vmatpush2.msra.mxu0 0.0
        %3560 = vmatprep.subr.mxu0 0.0
        %3561 = vmatpush2.msra.mxu0 0.0
        %3562 = vmatprep.subr.mxu0 0.0
        %3563 = vmatpush2.msra.mxu0 0.0
        %3564 = vmatprep.subr.mxu0 0.0
        %3565 = vmatpush2.msra.mxu0 0.0
        %3566 = vmatprep.subr.mxu0 0.0
        %3567 = vmatpush2.msra.mxu0 0.0
        %3568 = vmatprep.subr.mxu0 0.0
        %3569 = vmatpush2.msra.mxu0 0.0
        %3570 = vmatprep.subr.mxu0 0.0
        %3571 = vmatpush2.msra.mxu0 0.0
        %3572 = vmatprep.subr.mxu0 0.0
        %3573 = vmatpush2.msra.mxu0 0.0
        %3574 = vmatprep.subr.mxu0 0.0
        %3575 = vmatpush2.msra.mxu0 0.0
        %3576 = vmatprep.subr.mxu0 0.0
        %3577 = vmatpush2.msra.mxu0 0.0
        %3578 = vmatprep.subr.mxu0 0.0
        %3579 = vmatpush2.msra.mxu0 0.0
        %3580 = vmatprep.subr.mxu0 0.0
        %3581 = vmatpush2.msra.mxu0 0.0
        %3582 = vmatprep.subr.mxu0 0.0
        %3583 = vmatpush2.msra.mxu0 0.0
        %3584 = vmatprep.subr.mxu0 0.0
        %3585 = vmatpush2.msra.mxu0 0.0
        %3586 = vmatprep.subr.mxu0 0.0
        %3587 = vmatpush2.msra.mxu0 0.0
        %3588 = vmatprep.mubr.f32.mxu0 0.0
        %3589 = vmatmul.mubr.f32.gmra.mxu0 %v3519
        %v3590 = vpop.f32.mrf.mxu0
        %v3591 = vadd.f32 %v3516, %v3590
        %v3592 = vpop.f32.mrf.mxu0
        %3593 = vmatprep.mubr.f32.mxu0 0.0
        %3594 = vmatmul.mubr.f32.gmra.mxu0 %v3522
        %v3595 = vpop.f32.mrf.mxu0
        %v3596 = vadd.f32 %v3516, %v3595
        %v3597 = vpop.f32.mrf.mxu0
        %3598 = vdwg.mxu0
        %v3599 = vadd.f32 %v3591, %v3401
        %v3600 = vadd.f32 %v3596, %v3402
        %s3601 = scalar_lea.vmem %s1, 8
        %v3602 = vld [vmem:[%s3601] sm:$0x3]
        %v3603 = vsel %vm626, %v3599, 0.0
        %3604 = vadd.xlane.f32.xlu0 %v3603
        %v3605 = vpop.xlane.xlu0 %3604
        %v3606 = vsel %vm626, %v3600, 0.0
        %3607 = vadd.xlane.f32.xlu0 %v3606
        %v3608 = vpop.xlane.xlu0 %3607
        %v3609 = vmul.f32 %v3605, %v633
        %v3610 = vmul.f32 %v3608, %v633
        %v3611 = vsub.f32 %v3599, %v3609
        %v3612 = vsub.f32 %v3600, %v3610
        %v3613 = vmul.f32 %v3611, %v3611
        %v3614 = vmul.f32 %v3612, %v3612
        %v3615 = vsel %vm626, %v3613, 0.0
        %3616 = vadd.xlane.f32.xlu0 %v3615
        %v3617 = vpop.xlane.xlu0 %3616
        %v3618 = vsel %vm626, %v3614, 0.0
        %3619 = vadd.xlane.f32.xlu0 %v3618
        %v3620 = vpop.xlane.xlu0 %3619
        %v3621 = vmul.f32 %v3617, %v633
        %v3622 = vmul.f32 %v3620, %v633
        %v3623 = vadd.f32 %v3621, 1e-05
        %v3624 = vadd.f32 %v3622, 1e-05
        %v3625 = vrsqrt.pop %v3623
        %v3626 = vrsqrt.pop %v3624
        %v3627 = vmul.f32 %v3611, %v3625
        %v3628 = vmul.f32 %v3612, %v3626
        %v3629 = vlaneseq
        %v3630 = vshrl.u32 %v3629, 7
        %v3631 = vsub.s32 0, %v3630
        %v3632 = vrot.slane %v3602, %v3631
        %v3633 = vmul.f32 %v3627, %v3632
        %v3634 = vmul.f32 %v3628, %v3632
        %v3635 = vlaneseq
        %v3636 = vshrl.u32 %v3635, 7
        %v3637 = vsub.s32 1, %v3636
        %v3638 = vrot.slane %v3602, %v3637
        %v3639 = vadd.f32 %v3633, %v3638
        %v3640 = vadd.f32 %v3634, %v3638
        %v3641 = vld [vmem:[%s12] sm:$0xff]
        %v3642 = vld [vmem:[%s12 + $0x8] sm:$0xff]
        %v3643 = vld [vmem:[%s12 + $0x10] sm:$0xff]
        %v3644 = vld [vmem:[%s12 + $0x18] sm:$0xff]
        %v3645 = vld [vmem:[%s13] sm:$0x1]
        %v3647 = vlaneseq
        %v3648 = vshrl.u32 %v3647, 7
        %v3649 = vsub.s32 0, %v3648
        %v3650 = vrot.slane %v3645, %v3649
        %v3653 = vsel %vm626, %v3639, 0
        %v3656 = vsel %vm626, %v3640, 0
        %3658 = vmatprep.subr.mxu0 0.0
        %3659 = vmatpush1.msra.mxu0 0.0
        %3660 = vmatprep.subr.mxu0 0.0
        %3661 = vmatpush1.msra.mxu0 0.0
        %3662 = vmatprep.subr.mxu0 0.0
        %3663 = vmatpush1.msra.mxu0 0.0
        %3664 = vmatprep.subr.mxu0 0.0
        %3665 = vmatpush1.msra.mxu0 0.0
        %3666 = vmatprep.subr.mxu0 0.0
        %3667 = vmatpush1.msra.mxu0 0.0
        %3668 = vmatprep.subr.mxu0 0.0
        %3669 = vmatpush1.msra.mxu0 0.0
        %3670 = vmatprep.subr.mxu0 0.0
        %3671 = vmatpush1.msra.mxu0 0.0
        %3672 = vmatprep.subr.mxu0 0.0
        %3673 = vmatpush1.msra.mxu0 0.0
        %3674 = vmatprep.subr.mxu0 0.0
        %3675 = vmatpush1.msra.mxu0 0.0
        %3676 = vmatprep.subr.mxu0 0.0
        %3677 = vmatpush1.msra.mxu0 0.0
        %3678 = vmatprep.subr.mxu0 0.0
        %3679 = vmatpush1.msra.mxu0 0.0
        %3680 = vmatprep.subr.mxu0 0.0
        %3681 = vmatpush1.msra.mxu0 0.0
        %3682 = vmatprep.subr.mxu0 0.0
        %3683 = vmatpush1.msra.mxu0 %v3644
        %3684 = vmatprep.subr.mxu0 0.0
        %3685 = vmatpush1.msra.mxu0 %v3643
        %3686 = vmatprep.subr.mxu0 0.0
        %3687 = vmatpush1.msra.mxu0 %v3642
        %3688 = vmatprep.subr.mxu0 0.0
        %3689 = vmatpush1.msra.mxu0 %v3641
        %3690 = vmatprep.subr.mxu0 0.0
        %3691 = vmatpush2.msra.mxu0 0.0
        %3692 = vmatprep.subr.mxu0 0.0
        %3693 = vmatpush2.msra.mxu0 0.0
        %3694 = vmatprep.subr.mxu0 0.0
        %3695 = vmatpush2.msra.mxu0 0.0
        %3696 = vmatprep.subr.mxu0 0.0
        %3697 = vmatpush2.msra.mxu0 0.0
        %3698 = vmatprep.subr.mxu0 0.0
        %3699 = vmatpush2.msra.mxu0 0.0
        %3700 = vmatprep.subr.mxu0 0.0
        %3701 = vmatpush2.msra.mxu0 0.0
        %3702 = vmatprep.subr.mxu0 0.0
        %3703 = vmatpush2.msra.mxu0 0.0
        %3704 = vmatprep.subr.mxu0 0.0
        %3705 = vmatpush2.msra.mxu0 0.0
        %3706 = vmatprep.subr.mxu0 0.0
        %3707 = vmatpush2.msra.mxu0 0.0
        %3708 = vmatprep.subr.mxu0 0.0
        %3709 = vmatpush2.msra.mxu0 0.0
        %3710 = vmatprep.subr.mxu0 0.0
        %3711 = vmatpush2.msra.mxu0 0.0
        %3712 = vmatprep.subr.mxu0 0.0
        %3713 = vmatpush2.msra.mxu0 0.0
        %3714 = vmatprep.subr.mxu0 0.0
        %3715 = vmatpush2.msra.mxu0 0.0
        %3716 = vmatprep.subr.mxu0 0.0
        %3717 = vmatpush2.msra.mxu0 0.0
        %3718 = vmatprep.subr.mxu0 0.0
        %3719 = vmatpush2.msra.mxu0 0.0
        %3720 = vmatprep.subr.mxu0 0.0
        %3721 = vmatpush2.msra.mxu0 0.0
        %3722 = vmatprep.mubr.f32.mxu0 0.0
        %3723 = vmatmul.mubr.f32.gmra.mxu0 %v3653
        %v3724 = vpop.f32.mrf.mxu0
        %v3725 = vadd.f32 %v3650, %v3724
        %v3726 = vpop.f32.mrf.mxu0
        %3727 = vmatprep.mubr.f32.mxu0 0.0
        %3728 = vmatmul.mubr.f32.gmra.mxu0 %v3656
        %v3729 = vpop.f32.mrf.mxu0
        %v3730 = vadd.f32 %v3650, %v3729
        %v3731 = vpop.f32.mrf.mxu0
        %3732 = vdwg.mxu0
        %v3733 = vmax.f32 %v3725, 0.0
        %v3734 = vmax.f32 %v3730, 0.0
        %3739 = vrot.lane.b32.xlu0 %v3641, 96
        %v3740 = vpop.permute.xlu0 %3739
        %3741 = vrot.lane.b32.xlu0 %v3642, 96
        %v3742 = vpop.permute.xlu0 %3741
        %3743 = vrot.lane.b32.xlu0 %v3643, 96
        %v3744 = vpop.permute.xlu0 %3743
        %3745 = vrot.lane.b32.xlu0 %v3644, 96
        %v3746 = vpop.permute.xlu0 %3745
        %3751 = vrot.lane.b32.xlu0 %v3650, 96
        %v3752 = vpop.permute.xlu0 %3751
        %v3755 = vsel %vm626, %v3733, 0
        %v3758 = vsel %vm626, %v3734, 0
        %3760 = vmatprep.subr.mxu0 0.0
        %3761 = vmatpush1.msra.mxu0 0.0
        %3762 = vmatprep.subr.mxu0 0.0
        %3763 = vmatpush1.msra.mxu0 0.0
        %3764 = vmatprep.subr.mxu0 0.0
        %3765 = vmatpush1.msra.mxu0 0.0
        %3766 = vmatprep.subr.mxu0 0.0
        %3767 = vmatpush1.msra.mxu0 0.0
        %3768 = vmatprep.subr.mxu0 0.0
        %3769 = vmatpush1.msra.mxu0 0.0
        %3770 = vmatprep.subr.mxu0 0.0
        %3771 = vmatpush1.msra.mxu0 0.0
        %3772 = vmatprep.subr.mxu0 0.0
        %3773 = vmatpush1.msra.mxu0 0.0
        %3774 = vmatprep.subr.mxu0 0.0
        %3775 = vmatpush1.msra.mxu0 0.0
        %3776 = vmatprep.subr.mxu0 0.0
        %3777 = vmatpush1.msra.mxu0 0.0
        %3778 = vmatprep.subr.mxu0 0.0
        %3779 = vmatpush1.msra.mxu0 0.0
        %3780 = vmatprep.subr.mxu0 0.0
        %3781 = vmatpush1.msra.mxu0 0.0
        %3782 = vmatprep.subr.mxu0 0.0
        %3783 = vmatpush1.msra.mxu0 0.0
        %3784 = vmatprep.subr.mxu0 0.0
        %3785 = vmatpush1.msra.mxu0 %v3746
        %3786 = vmatprep.subr.mxu0 0.0
        %3787 = vmatpush1.msra.mxu0 %v3744
        %3788 = vmatprep.subr.mxu0 0.0
        %3789 = vmatpush1.msra.mxu0 %v3742
        %3790 = vmatprep.subr.mxu0 0.0
        %3791 = vmatpush1.msra.mxu0 %v3740
        %3792 = vmatprep.subr.mxu0 0.0
        %3793 = vmatpush2.msra.mxu0 0.0
        %3794 = vmatprep.subr.mxu0 0.0
        %3795 = vmatpush2.msra.mxu0 0.0
        %3796 = vmatprep.subr.mxu0 0.0
        %3797 = vmatpush2.msra.mxu0 0.0
        %3798 = vmatprep.subr.mxu0 0.0
        %3799 = vmatpush2.msra.mxu0 0.0
        %3800 = vmatprep.subr.mxu0 0.0
        %3801 = vmatpush2.msra.mxu0 0.0
        %3802 = vmatprep.subr.mxu0 0.0
        %3803 = vmatpush2.msra.mxu0 0.0
        %3804 = vmatprep.subr.mxu0 0.0
        %3805 = vmatpush2.msra.mxu0 0.0
        %3806 = vmatprep.subr.mxu0 0.0
        %3807 = vmatpush2.msra.mxu0 0.0
        %3808 = vmatprep.subr.mxu0 0.0
        %3809 = vmatpush2.msra.mxu0 0.0
        %3810 = vmatprep.subr.mxu0 0.0
        %3811 = vmatpush2.msra.mxu0 0.0
        %3812 = vmatprep.subr.mxu0 0.0
        %3813 = vmatpush2.msra.mxu0 0.0
        %3814 = vmatprep.subr.mxu0 0.0
        %3815 = vmatpush2.msra.mxu0 0.0
        %3816 = vmatprep.subr.mxu0 0.0
        %3817 = vmatpush2.msra.mxu0 0.0
        %3818 = vmatprep.subr.mxu0 0.0
        %3819 = vmatpush2.msra.mxu0 0.0
        %3820 = vmatprep.subr.mxu0 0.0
        %3821 = vmatpush2.msra.mxu0 0.0
        %3822 = vmatprep.subr.mxu0 0.0
        %3823 = vmatpush2.msra.mxu0 0.0
        %3824 = vmatprep.mubr.f32.mxu0 0.0
        %3825 = vmatmul.mubr.f32.gmra.mxu0 %v3755
        %v3826 = vpop.f32.mrf.mxu0
        %v3827 = vadd.f32 %v3752, %v3826
        %v3828 = vpop.f32.mrf.mxu0
        %3829 = vmatprep.mubr.f32.mxu0 0.0
        %3830 = vmatmul.mubr.f32.gmra.mxu0 %v3758
        %v3831 = vpop.f32.mrf.mxu0
        %v3832 = vadd.f32 %v3752, %v3831
        %v3833 = vpop.f32.mrf.mxu0
        %3834 = vdwg.mxu0
        %v3835 = vadd.f32 %v3827, %v3639
        %v3836 = vadd.f32 %v3832, %v3640
        %v3837 = vld [vmem:[%s16] sm:$0xff]
        %v3838 = vld [vmem:[%s16 + $0x8] sm:$0xff]
        %v3839 = vld [vmem:[%s16 + $0x10] sm:$0xff]
        %v3840 = vld [vmem:[%s16 + $0x18] sm:$0xff]
        %v3841 = vld [vmem:[%s16 + $0x20] sm:$0xff]
        %v3842 = vld [vmem:[%s16 + $0x28] sm:$0xff]
        %v3843 = vld [vmem:[%s16 + $0x30] sm:$0xff]
        %v3844 = vld [vmem:[%s16 + $0x38] sm:$0xff]
        %v3845 = vld [vmem:[%s16 + $0x40] sm:$0xff]
        %v3846 = vld [vmem:[%s16 + $0x48] sm:$0xff]
        %v3847 = vld [vmem:[%s16 + $0x50] sm:$0xff]
        %v3848 = vld [vmem:[%s16 + $0x58] sm:$0xff]
        %v3849 = vld [vmem:[%s17] sm:$0x1]
        %v3850 = vrot.slane %v3639, 6
        %v3851 = vrot.slane %v3640, 6
        %v3852 = vsel %vm1740, %v3850, %v3851
        %v3855 = vsel %vm1740, 0.0, %v3850
        %v3857 = vrot.slane %v3855, 1
        %v3858 = vrot.slane %v3852, 1
        %v3859 = vsel %vm1749, %v3857, %v3858
        %v3860 = vrot.slane %v3851, 1
        %v3861 = vsel %vm1749, %v3858, %v3860
        %3862 = vrot.lane.b32.xlu0 %v3859, 32
        %v3863 = vpop.permute.xlu0 %3862
        %3864 = vrot.lane.b32.xlu0 %v3861, 32
        %v3865 = vpop.permute.xlu0 %3864
        %v3868 = vrot.slane %v3855, 2
        %v3869 = vrot.slane %v3852, 2
        %v3870 = vsel %vm1761, %v3868, %v3869
        %v3871 = vrot.slane %v3851, 2
        %v3872 = vsel %vm1761, %v3869, %v3871
        %3873 = vrot.lane.b32.xlu0 %v3870, 64
        %v3874 = vpop.permute.xlu0 %3873
        %3875 = vrot.lane.b32.xlu0 %v3872, 64
        %v3876 = vpop.permute.xlu0 %3875
        %v3879 = vsel %vm626, %v3855, %v3863
        %v3880 = vsel %vm626, %v3852, %v3865
        %v3881 = vsel %vm1840, %v3879, %v3874
        %v3882 = vsel %vm1840, %v3880, %v3876
        %v3884 = vlaneseq
        %v3885 = vshrl.u32 %v3884, 7
        %v3886 = vsub.s32 0, %v3885
        %v3887 = vrot.slane %v3849, %v3886
        %v3890 = vsel %vm1843, %v3881, 0
        %v3893 = vsel %vm1843, %v3882, 0
        %3895 = vmatprep.subr.mxu0 0.0
        %3896 = vmatpush1.msra.mxu0 0.0
        %3897 = vmatprep.subr.mxu0 0.0
        %3898 = vmatpush1.msra.mxu0 0.0
        %3899 = vmatprep.subr.mxu0 0.0
        %3900 = vmatpush1.msra.mxu0 0.0
        %3901 = vmatprep.subr.mxu0 0.0
        %3902 = vmatpush1.msra.mxu0 0.0
        %3903 = vmatprep.subr.mxu0 0.0
        %3904 = vmatpush1.msra.mxu0 %v3848
        %3905 = vmatprep.subr.mxu0 0.0
        %3906 = vmatpush1.msra.mxu0 %v3847
        %3907 = vmatprep.subr.mxu0 0.0
        %3908 = vmatpush1.msra.mxu0 %v3846
        %3909 = vmatprep.subr.mxu0 0.0
        %3910 = vmatpush1.msra.mxu0 %v3845
        %3911 = vmatprep.subr.mxu0 0.0
        %3912 = vmatpush1.msra.mxu0 %v3844
        %3913 = vmatprep.subr.mxu0 0.0
        %3914 = vmatpush1.msra.mxu0 %v3843
        %3915 = vmatprep.subr.mxu0 0.0
        %3916 = vmatpush1.msra.mxu0 %v3842
        %3917 = vmatprep.subr.mxu0 0.0
        %3918 = vmatpush1.msra.mxu0 %v3841
        %3919 = vmatprep.subr.mxu0 0.0
        %3920 = vmatpush1.msra.mxu0 %v3840
        %3921 = vmatprep.subr.mxu0 0.0
        %3922 = vmatpush1.msra.mxu0 %v3839
        %3923 = vmatprep.subr.mxu0 0.0
        %3924 = vmatpush1.msra.mxu0 %v3838
        %3925 = vmatprep.subr.mxu0 0.0
        %3926 = vmatpush1.msra.mxu0 %v3837
        %3927 = vmatprep.subr.mxu0 0.0
        %3928 = vmatpush2.msra.mxu0 0.0
        %3929 = vmatprep.subr.mxu0 0.0
        %3930 = vmatpush2.msra.mxu0 0.0
        %3931 = vmatprep.subr.mxu0 0.0
        %3932 = vmatpush2.msra.mxu0 0.0
        %3933 = vmatprep.subr.mxu0 0.0
        %3934 = vmatpush2.msra.mxu0 0.0
        %3935 = vmatprep.subr.mxu0 0.0
        %3936 = vmatpush2.msra.mxu0 0.0
        %3937 = vmatprep.subr.mxu0 0.0
        %3938 = vmatpush2.msra.mxu0 0.0
        %3939 = vmatprep.subr.mxu0 0.0
        %3940 = vmatpush2.msra.mxu0 0.0
        %3941 = vmatprep.subr.mxu0 0.0
        %3942 = vmatpush2.msra.mxu0 0.0
        %3943 = vmatprep.subr.mxu0 0.0
        %3944 = vmatpush2.msra.mxu0 0.0
        %3945 = vmatprep.subr.mxu0 0.0
        %3946 = vmatpush2.msra.mxu0 0.0
        %3947 = vmatprep.subr.mxu0 0.0
        %3948 = vmatpush2.msra.mxu0 0.0
        %3949 = vmatprep.subr.mxu0 0.0
        %3950 = vmatpush2.msra.mxu0 0.0
        %3951 = vmatprep.subr.mxu0 0.0
        %3952 = vmatpush2.msra.mxu0 0.0
        %3953 = vmatprep.subr.mxu0 0.0
        %3954 = vmatpush2.msra.mxu0 0.0
        %3955 = vmatprep.subr.mxu0 0.0
        %3956 = vmatpush2.msra.mxu0 0.0
        %3957 = vmatprep.subr.mxu0 0.0
        %3958 = vmatpush2.msra.mxu0 0.0
        %3959 = vmatprep.mubr.f32.mxu0 0.0
        %3960 = vmatmul.mubr.f32.gmra.mxu0 %v3890
        %v3961 = vpop.f32.mrf.mxu0
        %v3962 = vadd.f32 %v3887, %v3961
        %v3963 = vpop.f32.mrf.mxu0
        %3964 = vmatprep.mubr.f32.mxu0 0.0
        %3965 = vmatmul.mubr.f32.gmra.mxu0 %v3893
        %v3966 = vpop.f32.mrf.mxu0
        %v3967 = vadd.f32 %v3887, %v3966
        %v3968 = vpop.f32.mrf.mxu0
        %3969 = vdwg.mxu0
        %v3970 = vadd.f32 %v3962, %v3639
        %v3971 = vadd.f32 %v3967, %v3640
        %s3972 = scalar_lea.vmem %s1, 14
        %v3973 = vld [vmem:[%s3972] sm:$0x3]
        %v3974 = vsel %vm626, %v3970, 0.0
        %3975 = vadd.xlane.f32.xlu0 %v3974
        %v3976 = vpop.xlane.xlu0 %3975
        %v3977 = vsel %vm626, %v3971, 0.0
        %3978 = vadd.xlane.f32.xlu0 %v3977
        %v3979 = vpop.xlane.xlu0 %3978
        %v3980 = vmul.f32 %v3976, %v633
        %v3981 = vmul.f32 %v3979, %v633
        %v3982 = vsub.f32 %v3970, %v3980
        %v3983 = vsub.f32 %v3971, %v3981
        %v3984 = vmul.f32 %v3982, %v3982
        %v3985 = vmul.f32 %v3983, %v3983
        %v3986 = vsel %vm626, %v3984, 0.0
        %3987 = vadd.xlane.f32.xlu0 %v3986
        %v3988 = vpop.xlane.xlu0 %3987
        %v3989 = vsel %vm626, %v3985, 0.0
        %3990 = vadd.xlane.f32.xlu0 %v3989
        %v3991 = vpop.xlane.xlu0 %3990
        %v3992 = vmul.f32 %v3988, %v633
        %v3993 = vmul.f32 %v3991, %v633
        %v3994 = vadd.f32 %v3992, 1e-05
        %v3995 = vadd.f32 %v3993, 1e-05
        %v3996 = vrsqrt.pop %v3994
        %v3997 = vrsqrt.pop %v3995
        %v3998 = vmul.f32 %v3982, %v3996
        %v3999 = vmul.f32 %v3983, %v3997
        %v4000 = vlaneseq
        %v4001 = vshrl.u32 %v4000, 7
        %v4002 = vsub.s32 0, %v4001
        %v4003 = vrot.slane %v3973, %v4002
        %v4004 = vmul.f32 %v3998, %v4003
        %v4005 = vmul.f32 %v3999, %v4003
        %v4006 = vlaneseq
        %v4007 = vshrl.u32 %v4006, 7
        %v4008 = vsub.s32 1, %v4007
        %v4009 = vrot.slane %v3973, %v4008
        %v4010 = vadd.f32 %v4004, %v4009
        %v4011 = vadd.f32 %v4005, %v4009
        %s4012 = scalar_lea.vmem %s1, 10
        %v4013 = vld [vmem:[%s4012] sm:$0x3]
        %v4014 = vsel %vm626, %v3835, 0.0
        %4015 = vadd.xlane.f32.xlu0 %v4014
        %v4016 = vpop.xlane.xlu0 %4015
        %v4017 = vsel %vm626, %v3836, 0.0
        %4018 = vadd.xlane.f32.xlu0 %v4017
        %v4019 = vpop.xlane.xlu0 %4018
        %v4020 = vmul.f32 %v4016, %v633
        %v4021 = vmul.f32 %v4019, %v633
        %v4022 = vsub.f32 %v3835, %v4020
        %v4023 = vsub.f32 %v3836, %v4021
        %v4024 = vmul.f32 %v4022, %v4022
        %v4025 = vmul.f32 %v4023, %v4023
        %v4026 = vsel %vm626, %v4024, 0.0
        %4027 = vadd.xlane.f32.xlu0 %v4026
        %v4028 = vpop.xlane.xlu0 %4027
        %v4029 = vsel %vm626, %v4025, 0.0
        %4030 = vadd.xlane.f32.xlu0 %v4029
        %v4031 = vpop.xlane.xlu0 %4030
        %v4032 = vmul.f32 %v4028, %v633
        %v4033 = vmul.f32 %v4031, %v633
        %v4034 = vadd.f32 %v4032, 1e-05
        %v4035 = vadd.f32 %v4033, 1e-05
        %v4036 = vrsqrt.pop %v4034
        %v4037 = vrsqrt.pop %v4035
        %v4038 = vmul.f32 %v4022, %v4036
        %v4039 = vmul.f32 %v4023, %v4037
        %v4040 = vlaneseq
        %v4041 = vshrl.u32 %v4040, 7
        %v4042 = vsub.s32 0, %v4041
        %v4043 = vrot.slane %v4013, %v4042
        %v4044 = vmul.f32 %v4038, %v4043
        %v4045 = vmul.f32 %v4039, %v4043
        %v4046 = vlaneseq
        %v4047 = vshrl.u32 %v4046, 7
        %v4048 = vsub.s32 1, %v4047
        %v4049 = vrot.slane %v4013, %v4048
        %v4050 = vadd.f32 %v4044, %v4049
        %v4051 = vadd.f32 %v4045, %v4049
        %v4052 = vld [vmem:[%s613] sm:$0xff]
        %v4053 = vld [vmem:[%s613 + $0x8] sm:$0xff]
        %v4054 = vld [vmem:[%s613 + $0x10] sm:$0xff]
        %v4055 = vld [vmem:[%s613 + $0x18] sm:$0xff]
        %s4056 = scalar_lea.vmem %s2, 32
        %v4057 = vld [vmem:[%s4056] sm:$0xff]
        %v4058 = vld [vmem:[%s4056 + $0x8] sm:$0xff]
        %v4059 = vld [vmem:[%s4056 + $0x10] sm:$0xff]
        %v4060 = vld [vmem:[%s4056 + $0x18] sm:$0xff]
        %s4061 = scalar_lea.vmem %s3, 1
        %v4062 = vld [vmem:[%s4061] sm:$0x1]
        %v4064 = vlaneseq
        %v4065 = vshrl.u32 %v4064, 7
        %v4066 = vsub.s32 0, %v4065
        %v4067 = vrot.slane %v4062, %v4066
        %v4070 = vsel %vm626, %v4050, 0
        %v4073 = vsel %vm626, %v4051, 0
        %4075 = vmatprep.subr.mxu0 0.0
        %4076 = vmatpush1.msra.mxu0 0.0
        %4077 = vmatprep.subr.mxu0 0.0
        %4078 = vmatpush1.msra.mxu0 0.0
        %4079 = vmatprep.subr.mxu0 0.0
        %4080 = vmatpush1.msra.mxu0 0.0
        %4081 = vmatprep.subr.mxu0 0.0
        %4082 = vmatpush1.msra.mxu0 0.0
        %4083 = vmatprep.subr.mxu0 0.0
        %4084 = vmatpush1.msra.mxu0 0.0
        %4085 = vmatprep.subr.mxu0 0.0
        %4086 = vmatpush1.msra.mxu0 0.0
        %4087 = vmatprep.subr.mxu0 0.0
        %4088 = vmatpush1.msra.mxu0 0.0
        %4089 = vmatprep.subr.mxu0 0.0
        %4090 = vmatpush1.msra.mxu0 0.0
        %4091 = vmatprep.subr.mxu0 0.0
        %4092 = vmatpush1.msra.mxu0 0.0
        %4093 = vmatprep.subr.mxu0 0.0
        %4094 = vmatpush1.msra.mxu0 0.0
        %4095 = vmatprep.subr.mxu0 0.0
        %4096 = vmatpush1.msra.mxu0 0.0
        %4097 = vmatprep.subr.mxu0 0.0
        %4098 = vmatpush1.msra.mxu0 0.0
        %4099 = vmatprep.subr.mxu0 0.0
        %4100 = vmatpush1.msra.mxu0 %v4060
        %4101 = vmatprep.subr.mxu0 0.0
        %4102 = vmatpush1.msra.mxu0 %v4059
        %4103 = vmatprep.subr.mxu0 0.0
        %4104 = vmatpush1.msra.mxu0 %v4058
        %4105 = vmatprep.subr.mxu0 0.0
        %4106 = vmatpush1.msra.mxu0 %v4057
        %4107 = vmatprep.subr.mxu0 0.0
        %4108 = vmatpush2.msra.mxu0 0.0
        %4109 = vmatprep.subr.mxu0 0.0
        %4110 = vmatpush2.msra.mxu0 0.0
        %4111 = vmatprep.subr.mxu0 0.0
        %4112 = vmatpush2.msra.mxu0 0.0
        %4113 = vmatprep.subr.mxu0 0.0
        %4114 = vmatpush2.msra.mxu0 0.0
        %4115 = vmatprep.subr.mxu0 0.0
        %4116 = vmatpush2.msra.mxu0 0.0
        %4117 = vmatprep.subr.mxu0 0.0
        %4118 = vmatpush2.msra.mxu0 0.0
        %4119 = vmatprep.subr.mxu0 0.0
        %4120 = vmatpush2.msra.mxu0 0.0
        %4121 = vmatprep.subr.mxu0 0.0
        %4122 = vmatpush2.msra.mxu0 0.0
        %4123 = vmatprep.subr.mxu0 0.0
        %4124 = vmatpush2.msra.mxu0 0.0
        %4125 = vmatprep.subr.mxu0 0.0
        %4126 = vmatpush2.msra.mxu0 0.0
        %4127 = vmatprep.subr.mxu0 0.0
        %4128 = vmatpush2.msra.mxu0 0.0
        %4129 = vmatprep.subr.mxu0 0.0
        %4130 = vmatpush2.msra.mxu0 0.0
        %4131 = vmatprep.subr.mxu0 0.0
        %4132 = vmatpush2.msra.mxu0 0.0
        %4133 = vmatprep.subr.mxu0 0.0
        %4134 = vmatpush2.msra.mxu0 0.0
        %4135 = vmatprep.subr.mxu0 0.0
        %4136 = vmatpush2.msra.mxu0 0.0
        %4137 = vmatprep.subr.mxu0 0.0
        %4138 = vmatpush2.msra.mxu0 0.0
        %4139 = vmatprep.mubr.f32.mxu0 0.0
        %4140 = vmatmul.mubr.f32.gmra.mxu0 %v4070
        %v4141 = vpop.f32.mrf.mxu0
        %v4142 = vadd.f32 %v4067, %v4141
        %v4143 = vpop.f32.mrf.mxu0
        %4144 = vmatprep.mubr.f32.mxu0 0.0
        %4145 = vmatmul.mubr.f32.gmra.mxu0 %v4073
        %v4146 = vpop.f32.mrf.mxu0
        %v4147 = vadd.f32 %v4067, %v4146
        %v4148 = vpop.f32.mrf.mxu0
        %4149 = vdwg.mxu0
        %v4150 = vmul.f32 %v4142, 0.35355338
        %v4151 = vmul.f32 %v4147, 0.35355338
        %4156 = vrot.lane.b32.xlu0 %v4057, 96
        %v4157 = vpop.permute.xlu0 %4156
        %4158 = vrot.lane.b32.xlu0 %v4058, 96
        %v4159 = vpop.permute.xlu0 %4158
        %4160 = vrot.lane.b32.xlu0 %v4059, 96
        %v4161 = vpop.permute.xlu0 %4160
        %4162 = vrot.lane.b32.xlu0 %v4060, 96
        %v4163 = vpop.permute.xlu0 %4162
        %4168 = vrot.lane.b32.xlu0 %v4067, 96
        %v4169 = vpop.permute.xlu0 %4168
        %v4172 = vsel %vm626, %v4052, 0
        %v4175 = vsel %vm626, %v4053, 0
        %v4178 = vsel %vm626, %v4054, 0
        %v4181 = vsel %vm626, %v4055, 0
        %4183 = vmatprep.subr.mxu0 0.0
        %4184 = vmatpush1.msra.mxu0 0.0
        %4185 = vmatprep.subr.mxu0 0.0
        %4186 = vmatpush1.msra.mxu0 0.0
        %4187 = vmatprep.subr.mxu0 0.0
        %4188 = vmatpush1.msra.mxu0 0.0
        %4189 = vmatprep.subr.mxu0 0.0
        %4190 = vmatpush1.msra.mxu0 0.0
        %4191 = vmatprep.subr.mxu0 0.0
        %4192 = vmatpush1.msra.mxu0 0.0
        %4193 = vmatprep.subr.mxu0 0.0
        %4194 = vmatpush1.msra.mxu0 0.0
        %4195 = vmatprep.subr.mxu0 0.0
        %4196 = vmatpush1.msra.mxu0 0.0
        %4197 = vmatprep.subr.mxu0 0.0
        %4198 = vmatpush1.msra.mxu0 0.0
        %4199 = vmatprep.subr.mxu0 0.0
        %4200 = vmatpush1.msra.mxu0 0.0
        %4201 = vmatprep.subr.mxu0 0.0
        %4202 = vmatpush1.msra.mxu0 0.0
        %4203 = vmatprep.subr.mxu0 0.0
        %4204 = vmatpush1.msra.mxu0 0.0
        %4205 = vmatprep.subr.mxu0 0.0
        %4206 = vmatpush1.msra.mxu0 0.0
        %4207 = vmatprep.subr.mxu0 0.0
        %4208 = vmatpush1.msra.mxu0 %v4163
        %4209 = vmatprep.subr.mxu0 0.0
        %4210 = vmatpush1.msra.mxu0 %v4161
        %4211 = vmatprep.subr.mxu0 0.0
        %4212 = vmatpush1.msra.mxu0 %v4159
        %4213 = vmatprep.subr.mxu0 0.0
        %4214 = vmatpush1.msra.mxu0 %v4157
        %4215 = vmatprep.subr.mxu0 0.0
        %4216 = vmatpush2.msra.mxu0 0.0
        %4217 = vmatprep.subr.mxu0 0.0
        %4218 = vmatpush2.msra.mxu0 0.0
        %4219 = vmatprep.subr.mxu0 0.0
        %4220 = vmatpush2.msra.mxu0 0.0
        %4221 = vmatprep.subr.mxu0 0.0
        %4222 = vmatpush2.msra.mxu0 0.0
        %4223 = vmatprep.subr.mxu0 0.0
        %4224 = vmatpush2.msra.mxu0 0.0
        %4225 = vmatprep.subr.mxu0 0.0
        %4226 = vmatpush2.msra.mxu0 0.0
        %4227 = vmatprep.subr.mxu0 0.0
        %4228 = vmatpush2.msra.mxu0 0.0
        %4229 = vmatprep.subr.mxu0 0.0
        %4230 = vmatpush2.msra.mxu0 0.0
        %4231 = vmatprep.subr.mxu0 0.0
        %4232 = vmatpush2.msra.mxu0 0.0
        %4233 = vmatprep.subr.mxu0 0.0
        %4234 = vmatpush2.msra.mxu0 0.0
        %4235 = vmatprep.subr.mxu0 0.0
        %4236 = vmatpush2.msra.mxu0 0.0
        %4237 = vmatprep.subr.mxu0 0.0
        %4238 = vmatpush2.msra.mxu0 0.0
        %4239 = vmatprep.subr.mxu0 0.0
        %4240 = vmatpush2.msra.mxu0 0.0
        %4241 = vmatprep.subr.mxu0 0.0
        %4242 = vmatpush2.msra.mxu0 0.0
        %4243 = vmatprep.subr.mxu0 0.0
        %4244 = vmatpush2.msra.mxu0 0.0
        %4245 = vmatprep.subr.mxu0 0.0
        %4246 = vmatpush2.msra.mxu0 0.0
        %4247 = vmatprep.mubr.f32.mxu0 0.0
        %4248 = vmatmul.mubr.f32.gmra.mxu0 %v4172
        %v4249 = vpop.f32.mrf.mxu0
        %v4250 = vadd.f32 %v4169, %v4249
        %v4251 = vpop.f32.mrf.mxu0
        %4252 = vmatprep.mubr.f32.mxu0 0.0
        %4253 = vmatmul.mubr.f32.gmra.mxu0 %v4175
        %v4254 = vpop.f32.mrf.mxu0
        %v4255 = vadd.f32 %v4169, %v4254
        %v4256 = vpop.f32.mrf.mxu0
        %4257 = vmatprep.mubr.f32.mxu0 0.0
        %4258 = vmatmul.mubr.f32.gmra.mxu0 %v4178
        %v4259 = vpop.f32.mrf.mxu0
        %v4260 = vadd.f32 %v4169, %v4259
        %v4261 = vpop.f32.mrf.mxu0
        %4262 = vmatprep.mubr.f32.mxu0 0.0
        %4263 = vmatmul.mubr.f32.gmra.mxu0 %v4181
        %v4264 = vpop.f32.mrf.mxu0
        %v4265 = vadd.f32 %v4169, %v4264
        %v4266 = vpop.f32.mrf.mxu0
        %4267 = vdwg.mxu0
        %v4269 = vsel %vm766, %v4150, 0
        %v4272 = vsel %vm766, %v4151, 0
        %v4275 = vsel %vm766, %v4250, 0
        %v4278 = vsel %vm766, %v4255, 0
        %v4281 = vsel %vm766, %v4260, 0
        %v4284 = vsel %vm766, %v4265, 0
        %4286 = vmatprep.subr.mxu0 0.0
        %4287 = vmatpush1.xpose.msra.mxu0 0.0
        %4288 = vmatprep.subr.mxu0 0.0
        %4289 = vmatpush1.xpose.msra.mxu0 0.0
        %4290 = vmatprep.subr.mxu0 0.0
        %4291 = vmatpush1.xpose.msra.mxu0 0.0
        %4292 = vmatprep.subr.mxu0 0.0
        %4293 = vmatpush1.xpose.msra.mxu0 0.0
        %4294 = vmatprep.subr.mxu0 0.0
        %4295 = vmatpush1.xpose.msra.mxu0 0.0
        %4296 = vmatprep.subr.mxu0 0.0
        %4297 = vmatpush1.xpose.msra.mxu0 0.0
        %4298 = vmatprep.subr.mxu0 0.0
        %4299 = vmatpush1.xpose.msra.mxu0 0.0
        %4300 = vmatprep.subr.mxu0 0.0
        %4301 = vmatpush1.xpose.msra.mxu0 0.0
        %4302 = vmatprep.subr.mxu0 0.0
        %4303 = vmatpush1.xpose.msra.mxu0 0.0
        %4304 = vmatprep.subr.mxu0 0.0
        %4305 = vmatpush1.xpose.msra.mxu0 0.0
        %4306 = vmatprep.subr.mxu0 0.0
        %4307 = vmatpush1.xpose.msra.mxu0 0.0
        %4308 = vmatprep.subr.mxu0 0.0
        %4309 = vmatpush1.xpose.msra.mxu0 0.0
        %4310 = vmatprep.subr.mxu0 0.0
        %4311 = vmatpush1.xpose.msra.mxu0 %v4284
        %4312 = vmatprep.subr.mxu0 0.0
        %4313 = vmatpush1.xpose.msra.mxu0 %v4281
        %4314 = vmatprep.subr.mxu0 0.0
        %4315 = vmatpush1.xpose.msra.mxu0 %v4278
        %4316 = vmatprep.subr.mxu0 0.0
        %4317 = vmatpush1.xpose.msra.mxu0 %v4275
        %4318 = vmatprep.subr.mxu0 0.0
        %4319 = vmatpush2.xpose.msra.mxu0 0.0
        %4320 = vmatprep.subr.mxu0 0.0
        %4321 = vmatpush2.xpose.msra.mxu0 0.0
        %4322 = vmatprep.subr.mxu0 0.0
        %4323 = vmatpush2.xpose.msra.mxu0 0.0
        %4324 = vmatprep.subr.mxu0 0.0
        %4325 = vmatpush2.xpose.msra.mxu0 0.0
        %4326 = vmatprep.subr.mxu0 0.0
        %4327 = vmatpush2.xpose.msra.mxu0 0.0
        %4328 = vmatprep.subr.mxu0 0.0
        %4329 = vmatpush2.xpose.msra.mxu0 0.0
        %4330 = vmatprep.subr.mxu0 0.0
        %4331 = vmatpush2.xpose.msra.mxu0 0.0
        %4332 = vmatprep.subr.mxu0 0.0
        %4333 = vmatpush2.xpose.msra.mxu0 0.0
        %4334 = vmatprep.subr.mxu0 0.0
        %4335 = vmatpush2.xpose.msra.mxu0 0.0
        %4336 = vmatprep.subr.mxu0 0.0
        %4337 = vmatpush2.xpose.msra.mxu0 0.0
        %4338 = vmatprep.subr.mxu0 0.0
        %4339 = vmatpush2.xpose.msra.mxu0 0.0
        %4340 = vmatprep.subr.mxu0 0.0
        %4341 = vmatpush2.xpose.msra.mxu0 0.0
        %4342 = vmatprep.subr.mxu0 0.0
        %4343 = vmatpush2.xpose.msra.mxu0 0.0
        %4344 = vmatprep.subr.mxu0 0.0
        %4345 = vmatpush2.xpose.msra.mxu0 0.0
        %4346 = vmatprep.subr.mxu0 0.0
        %4347 = vmatpush2.xpose.msra.mxu0 0.0
        %4348 = vmatprep.subr.mxu0 0.0
        %4349 = vmatpush2.xpose.msra.mxu0 0.0
        %4350 = vmatprep.mubr.f32.mxu0 0.0
        %4351 = vmatmul.mubr.f32.gmra.mxu0 %v4269
        %v4352 = vpop.f32.mrf.mxu0
        %v4353 = vadd.f32 0.0, %v4352
        %v4354 = vpop.f32.mrf.mxu0
        %4355 = vmatprep.mubr.f32.mxu0 0.0
        %4356 = vmatmul.mubr.f32.gmra.mxu0 %v4272
        %v4357 = vpop.f32.mrf.mxu0
        %v4358 = vadd.f32 0.0, %v4357
        %v4359 = vpop.f32.mrf.mxu0
        %4360 = vdwg.mxu0
        %v4361 = vsel %vm626, %v4353, -inf
        %4362 = vmax.xlane.f32.xlu0 %v4361
        %v4363 = vpop.xlane.xlu0 %4362
        %v4364 = vsel %vm626, %v4358, -inf
        %4365 = vmax.xlane.f32.xlu0 %v4364
        %v4366 = vpop.xlane.xlu0 %4365
        %v4367 = vsub.f32 %v4353, %v4363
        %v4368 = vsub.f32 %v4358, %v4366
        %v4369 = vmul.f32 %v4367, 1.442695
        %v4370 = vpow.pop %v4369
        %v4371 = vmul.f32 %v4368, 1.442695
        %v4372 = vpow.pop %v4371
        %v4373 = vsel %vm626, %v4370, 0.0
        %4374 = vadd.xlane.f32.xlu0 %v4373
        %v4375 = vpop.xlane.xlu0 %4374
        %v4376 = vsel %vm626, %v4372, 0.0
        %4377 = vadd.xlane.f32.xlu0 %v4376
        %v4378 = vpop.xlane.xlu0 %4377
        %4379 = vrot.lane.b32.xlu0 %v4250, 96
        %v4380 = vpop.permute.xlu0 %4379
        %4381 = vrot.lane.b32.xlu0 %v4255, 96
        %v4382 = vpop.permute.xlu0 %4381
        %4383 = vrot.lane.b32.xlu0 %v4260, 96
        %v4384 = vpop.permute.xlu0 %4383
        %4385 = vrot.lane.b32.xlu0 %v4265, 96
        %v4386 = vpop.permute.xlu0 %4385
        %v4392 = vsel %vm626, %v4370, 0
        %v4395 = vsel %vm626, %v4372, 0
        %4397 = vmatprep.subr.mxu0 0.0
        %4398 = vmatpush1.msra.mxu0 0.0
        %4399 = vmatprep.subr.mxu0 0.0
        %4400 = vmatpush1.msra.mxu0 0.0
        %4401 = vmatprep.subr.mxu0 0.0
        %4402 = vmatpush1.msra.mxu0 0.0
        %4403 = vmatprep.subr.mxu0 0.0
        %4404 = vmatpush1.msra.mxu0 0.0
        %4405 = vmatprep.subr.mxu0 0.0
        %4406 = vmatpush1.msra.mxu0 0.0
        %4407 = vmatprep.subr.mxu0 0.0
        %4408 = vmatpush1.msra.mxu0 0.0
        %4409 = vmatprep.subr.mxu0 0.0
        %4410 = vmatpush1.msra.mxu0 0.0
        %4411 = vmatprep.subr.mxu0 0.0
        %4412 = vmatpush1.msra.mxu0 0.0
        %4413 = vmatprep.subr.mxu0 0.0
        %4414 = vmatpush1.msra.mxu0 0.0
        %4415 = vmatprep.subr.mxu0 0.0
        %4416 = vmatpush1.msra.mxu0 0.0
        %4417 = vmatprep.subr.mxu0 0.0
        %4418 = vmatpush1.msra.mxu0 0.0
        %4419 = vmatprep.subr.mxu0 0.0
        %4420 = vmatpush1.msra.mxu0 0.0
        %4421 = vmatprep.subr.mxu0 0.0
        %4422 = vmatpush1.msra.mxu0 %v4386
        %4423 = vmatprep.subr.mxu0 0.0
        %4424 = vmatpush1.msra.mxu0 %v4384
        %4425 = vmatprep.subr.mxu0 0.0
        %4426 = vmatpush1.msra.mxu0 %v4382
        %4427 = vmatprep.subr.mxu0 0.0
        %4428 = vmatpush1.msra.mxu0 %v4380
        %4429 = vmatprep.subr.mxu0 0.0
        %4430 = vmatpush2.msra.mxu0 0.0
        %4431 = vmatprep.subr.mxu0 0.0
        %4432 = vmatpush2.msra.mxu0 0.0
        %4433 = vmatprep.subr.mxu0 0.0
        %4434 = vmatpush2.msra.mxu0 0.0
        %4435 = vmatprep.subr.mxu0 0.0
        %4436 = vmatpush2.msra.mxu0 0.0
        %4437 = vmatprep.subr.mxu0 0.0
        %4438 = vmatpush2.msra.mxu0 0.0
        %4439 = vmatprep.subr.mxu0 0.0
        %4440 = vmatpush2.msra.mxu0 0.0
        %4441 = vmatprep.subr.mxu0 0.0
        %4442 = vmatpush2.msra.mxu0 0.0
        %4443 = vmatprep.subr.mxu0 0.0
        %4444 = vmatpush2.msra.mxu0 0.0
        %4445 = vmatprep.subr.mxu0 0.0
        %4446 = vmatpush2.msra.mxu0 0.0
        %4447 = vmatprep.subr.mxu0 0.0
        %4448 = vmatpush2.msra.mxu0 0.0
        %4449 = vmatprep.subr.mxu0 0.0
        %4450 = vmatpush2.msra.mxu0 0.0
        %4451 = vmatprep.subr.mxu0 0.0
        %4452 = vmatpush2.msra.mxu0 0.0
        %4453 = vmatprep.subr.mxu0 0.0
        %4454 = vmatpush2.msra.mxu0 0.0
        %4455 = vmatprep.subr.mxu0 0.0
        %4456 = vmatpush2.msra.mxu0 0.0
        %4457 = vmatprep.subr.mxu0 0.0
        %4458 = vmatpush2.msra.mxu0 0.0
        %4459 = vmatprep.subr.mxu0 0.0
        %4460 = vmatpush2.msra.mxu0 0.0
        %4461 = vmatprep.mubr.f32.mxu0 0.0
        %4462 = vmatmul.mubr.f32.gmra.mxu0 %v4392
        %v4463 = vpop.f32.mrf.mxu0
        %v4464 = vadd.f32 0.0, %v4463
        %v4465 = vpop.f32.mrf.mxu0
        %4466 = vmatprep.mubr.f32.mxu0 0.0
        %4467 = vmatmul.mubr.f32.gmra.mxu0 %v4395
        %v4468 = vpop.f32.mrf.mxu0
        %v4469 = vadd.f32 0.0, %v4468
        %v4470 = vpop.f32.mrf.mxu0
        %4471 = vdwg.mxu0
        %v4472 = vrcp.pop %v4375
        %v4473 = vrcp.pop %v4378
        %v4474 = vmul.f32 %v4464, %v4472
        %v4475 = vmul.f32 %v4469, %v4473
        %4476 = vrot.lane.b32.xlu0 %v4150, 120
        %v4477 = vpop.permute.xlu0 %4476
        %4478 = vrot.lane.b32.xlu0 %v4151, 120
        %v4479 = vpop.permute.xlu0 %4478
        %4480 = vrot.lane.b32.xlu0 %v4250, 120
        %v4481 = vpop.permute.xlu0 %4480
        %4482 = vrot.lane.b32.xlu0 %v4255, 120
        %v4483 = vpop.permute.xlu0 %4482
        %4484 = vrot.lane.b32.xlu0 %v4260, 120
        %v4485 = vpop.permute.xlu0 %4484
        %4486 = vrot.lane.b32.xlu0 %v4265, 120
        %v4487 = vpop.permute.xlu0 %4486
        %v4488 = vsel %vm766, %v4477, 0
        %v4490 = vsel %vm766, %v4479, 0
        %v4492 = vsel %vm766, %v4481, 0
        %v4494 = vsel %vm766, %v4483, 0
        %v4496 = vsel %vm766, %v4485, 0
        %v4498 = vsel %vm766, %v4487, 0
        %4500 = vmatprep.subr.mxu0 0.0
        %4501 = vmatpush1.xpose.msra.mxu0 0.0
        %4502 = vmatprep.subr.mxu0 0.0
        %4503 = vmatpush1.xpose.msra.mxu0 0.0
        %4504 = vmatprep.subr.mxu0 0.0
        %4505 = vmatpush1.xpose.msra.mxu0 0.0
        %4506 = vmatprep.subr.mxu0 0.0
        %4507 = vmatpush1.xpose.msra.mxu0 0.0
        %4508 = vmatprep.subr.mxu0 0.0
        %4509 = vmatpush1.xpose.msra.mxu0 0.0
        %4510 = vmatprep.subr.mxu0 0.0
        %4511 = vmatpush1.xpose.msra.mxu0 0.0
        %4512 = vmatprep.subr.mxu0 0.0
        %4513 = vmatpush1.xpose.msra.mxu0 0.0
        %4514 = vmatprep.subr.mxu0 0.0
        %4515 = vmatpush1.xpose.msra.mxu0 0.0
        %4516 = vmatprep.subr.mxu0 0.0
        %4517 = vmatpush1.xpose.msra.mxu0 0.0
        %4518 = vmatprep.subr.mxu0 0.0
        %4519 = vmatpush1.xpose.msra.mxu0 0.0
        %4520 = vmatprep.subr.mxu0 0.0
        %4521 = vmatpush1.xpose.msra.mxu0 0.0
        %4522 = vmatprep.subr.mxu0 0.0
        %4523 = vmatpush1.xpose.msra.mxu0 0.0
        %4524 = vmatprep.subr.mxu0 0.0
        %4525 = vmatpush1.xpose.msra.mxu0 %v4498
        %4526 = vmatprep.subr.mxu0 0.0
        %4527 = vmatpush1.xpose.msra.mxu0 %v4496
        %4528 = vmatprep.subr.mxu0 0.0
        %4529 = vmatpush1.xpose.msra.mxu0 %v4494
        %4530 = vmatprep.subr.mxu0 0.0
        %4531 = vmatpush1.xpose.msra.mxu0 %v4492
        %4532 = vmatprep.subr.mxu0 0.0
        %4533 = vmatpush2.xpose.msra.mxu0 0.0
        %4534 = vmatprep.subr.mxu0 0.0
        %4535 = vmatpush2.xpose.msra.mxu0 0.0
        %4536 = vmatprep.subr.mxu0 0.0
        %4537 = vmatpush2.xpose.msra.mxu0 0.0
        %4538 = vmatprep.subr.mxu0 0.0
        %4539 = vmatpush2.xpose.msra.mxu0 0.0
        %4540 = vmatprep.subr.mxu0 0.0
        %4541 = vmatpush2.xpose.msra.mxu0 0.0
        %4542 = vmatprep.subr.mxu0 0.0
        %4543 = vmatpush2.xpose.msra.mxu0 0.0
        %4544 = vmatprep.subr.mxu0 0.0
        %4545 = vmatpush2.xpose.msra.mxu0 0.0
        %4546 = vmatprep.subr.mxu0 0.0
        %4547 = vmatpush2.xpose.msra.mxu0 0.0
        %4548 = vmatprep.subr.mxu0 0.0
        %4549 = vmatpush2.xpose.msra.mxu0 0.0
        %4550 = vmatprep.subr.mxu0 0.0
        %4551 = vmatpush2.xpose.msra.mxu0 0.0
        %4552 = vmatprep.subr.mxu0 0.0
        %4553 = vmatpush2.xpose.msra.mxu0 0.0
        %4554 = vmatprep.subr.mxu0 0.0
        %4555 = vmatpush2.xpose.msra.mxu0 0.0
        %4556 = vmatprep.subr.mxu0 0.0
        %4557 = vmatpush2.xpose.msra.mxu0 0.0
        %4558 = vmatprep.subr.mxu0 0.0
        %4559 = vmatpush2.xpose.msra.mxu0 0.0
        %4560 = vmatprep.subr.mxu0 0.0
        %4561 = vmatpush2.xpose.msra.mxu0 0.0
        %4562 = vmatprep.subr.mxu0 0.0
        %4563 = vmatpush2.xpose.msra.mxu0 0.0
        %4564 = vmatprep.mubr.f32.mxu0 0.0
        %4565 = vmatmul.mubr.f32.gmra.mxu0 %v4488
        %v4566 = vpop.f32.mrf.mxu0
        %v4567 = vadd.f32 0.0, %v4566
        %v4568 = vpop.f32.mrf.mxu0
        %4569 = vmatprep.mubr.f32.mxu0 0.0
        %4570 = vmatmul.mubr.f32.gmra.mxu0 %v4490
        %v4571 = vpop.f32.mrf.mxu0
        %v4572 = vadd.f32 0.0, %v4571
        %v4573 = vpop.f32.mrf.mxu0
        %4574 = vdwg.mxu0
        %v4575 = vsel %vm626, %v4567, -inf
        %4576 = vmax.xlane.f32.xlu0 %v4575
        %v4577 = vpop.xlane.xlu0 %4576
        %v4578 = vsel %vm626, %v4572, -inf
        %4579 = vmax.xlane.f32.xlu0 %v4578
        %v4580 = vpop.xlane.xlu0 %4579
        %v4581 = vsub.f32 %v4567, %v4577
        %v4582 = vsub.f32 %v4572, %v4580
        %v4583 = vmul.f32 %v4581, 1.442695
        %v4584 = vpow.pop %v4583
        %v4585 = vmul.f32 %v4582, 1.442695
        %v4586 = vpow.pop %v4585
        %v4587 = vsel %vm626, %v4584, 0.0
        %4588 = vadd.xlane.f32.xlu0 %v4587
        %v4589 = vpop.xlane.xlu0 %4588
        %v4590 = vsel %vm626, %v4586, 0.0
        %4591 = vadd.xlane.f32.xlu0 %v4590
        %v4592 = vpop.xlane.xlu0 %4591
        %4593 = vrot.lane.b32.xlu0 %v4250, 88
        %v4594 = vpop.permute.xlu0 %4593
        %4595 = vrot.lane.b32.xlu0 %v4255, 88
        %v4596 = vpop.permute.xlu0 %4595
        %4597 = vrot.lane.b32.xlu0 %v4260, 88
        %v4598 = vpop.permute.xlu0 %4597
        %4599 = vrot.lane.b32.xlu0 %v4265, 88
        %v4600 = vpop.permute.xlu0 %4599
        %v4606 = vsel %vm626, %v4584, 0
        %v4609 = vsel %vm626, %v4586, 0
        %4611 = vmatprep.subr.mxu0 0.0
        %4612 = vmatpush1.msra.mxu0 0.0
        %4613 = vmatprep.subr.mxu0 0.0
        %4614 = vmatpush1.msra.mxu0 0.0
        %4615 = vmatprep.subr.mxu0 0.0
        %4616 = vmatpush1.msra.mxu0 0.0
        %4617 = vmatprep.subr.mxu0 0.0
        %4618 = vmatpush1.msra.mxu0 0.0
        %4619 = vmatprep.subr.mxu0 0.0
        %4620 = vmatpush1.msra.mxu0 0.0
        %4621 = vmatprep.subr.mxu0 0.0
        %4622 = vmatpush1.msra.mxu0 0.0
        %4623 = vmatprep.subr.mxu0 0.0
        %4624 = vmatpush1.msra.mxu0 0.0
        %4625 = vmatprep.subr.mxu0 0.0
        %4626 = vmatpush1.msra.mxu0 0.0
        %4627 = vmatprep.subr.mxu0 0.0
        %4628 = vmatpush1.msra.mxu0 0.0
        %4629 = vmatprep.subr.mxu0 0.0
        %4630 = vmatpush1.msra.mxu0 0.0
        %4631 = vmatprep.subr.mxu0 0.0
        %4632 = vmatpush1.msra.mxu0 0.0
        %4633 = vmatprep.subr.mxu0 0.0
        %4634 = vmatpush1.msra.mxu0 0.0
        %4635 = vmatprep.subr.mxu0 0.0
        %4636 = vmatpush1.msra.mxu0 %v4600
        %4637 = vmatprep.subr.mxu0 0.0
        %4638 = vmatpush1.msra.mxu0 %v4598
        %4639 = vmatprep.subr.mxu0 0.0
        %4640 = vmatpush1.msra.mxu0 %v4596
        %4641 = vmatprep.subr.mxu0 0.0
        %4642 = vmatpush1.msra.mxu0 %v4594
        %4643 = vmatprep.subr.mxu0 0.0
        %4644 = vmatpush2.msra.mxu0 0.0
        %4645 = vmatprep.subr.mxu0 0.0
        %4646 = vmatpush2.msra.mxu0 0.0
        %4647 = vmatprep.subr.mxu0 0.0
        %4648 = vmatpush2.msra.mxu0 0.0
        %4649 = vmatprep.subr.mxu0 0.0
        %4650 = vmatpush2.msra.mxu0 0.0
        %4651 = vmatprep.subr.mxu0 0.0
        %4652 = vmatpush2.msra.mxu0 0.0
        %4653 = vmatprep.subr.mxu0 0.0
        %4654 = vmatpush2.msra.mxu0 0.0
        %4655 = vmatprep.subr.mxu0 0.0
        %4656 = vmatpush2.msra.mxu0 0.0
        %4657 = vmatprep.subr.mxu0 0.0
        %4658 = vmatpush2.msra.mxu0 0.0
        %4659 = vmatprep.subr.mxu0 0.0
        %4660 = vmatpush2.msra.mxu0 0.0
        %4661 = vmatprep.subr.mxu0 0.0
        %4662 = vmatpush2.msra.mxu0 0.0
        %4663 = vmatprep.subr.mxu0 0.0
        %4664 = vmatpush2.msra.mxu0 0.0
        %4665 = vmatprep.subr.mxu0 0.0
        %4666 = vmatpush2.msra.mxu0 0.0
        %4667 = vmatprep.subr.mxu0 0.0
        %4668 = vmatpush2.msra.mxu0 0.0
        %4669 = vmatprep.subr.mxu0 0.0
        %4670 = vmatpush2.msra.mxu0 0.0
        %4671 = vmatprep.subr.mxu0 0.0
        %4672 = vmatpush2.msra.mxu0 0.0
        %4673 = vmatprep.subr.mxu0 0.0
        %4674 = vmatpush2.msra.mxu0 0.0
        %4675 = vmatprep.mubr.f32.mxu0 0.0
        %4676 = vmatmul.mubr.f32.gmra.mxu0 %v4606
        %v4677 = vpop.f32.mrf.mxu0
        %v4678 = vadd.f32 0.0, %v4677
        %v4679 = vpop.f32.mrf.mxu0
        %4680 = vmatprep.mubr.f32.mxu0 0.0
        %4681 = vmatmul.mubr.f32.gmra.mxu0 %v4609
        %v4682 = vpop.f32.mrf.mxu0
        %v4683 = vadd.f32 0.0, %v4682
        %v4684 = vpop.f32.mrf.mxu0
        %4685 = vdwg.mxu0
        %v4686 = vrcp.pop %v4589
        %v4687 = vrcp.pop %v4592
        %v4688 = vmul.f32 %v4678, %v4686
        %v4689 = vmul.f32 %v4683, %v4687
        %4690 = vrot.lane.b32.xlu0 %v4150, 112
        %v4691 = vpop.permute.xlu0 %4690
        %4692 = vrot.lane.b32.xlu0 %v4151, 112
        %v4693 = vpop.permute.xlu0 %4692
        %4694 = vrot.lane.b32.xlu0 %v4250, 112
        %v4695 = vpop.permute.xlu0 %4694
        %4696 = vrot.lane.b32.xlu0 %v4255, 112
        %v4697 = vpop.permute.xlu0 %4696
        %4698 = vrot.lane.b32.xlu0 %v4260, 112
        %v4699 = vpop.permute.xlu0 %4698
        %4700 = vrot.lane.b32.xlu0 %v4265, 112
        %v4701 = vpop.permute.xlu0 %4700
        %v4702 = vsel %vm766, %v4691, 0
        %v4704 = vsel %vm766, %v4693, 0
        %v4706 = vsel %vm766, %v4695, 0
        %v4708 = vsel %vm766, %v4697, 0
        %v4710 = vsel %vm766, %v4699, 0
        %v4712 = vsel %vm766, %v4701, 0
        %4714 = vmatprep.subr.mxu0 0.0
        %4715 = vmatpush1.xpose.msra.mxu0 0.0
        %4716 = vmatprep.subr.mxu0 0.0
        %4717 = vmatpush1.xpose.msra.mxu0 0.0
        %4718 = vmatprep.subr.mxu0 0.0
        %4719 = vmatpush1.xpose.msra.mxu0 0.0
        %4720 = vmatprep.subr.mxu0 0.0
        %4721 = vmatpush1.xpose.msra.mxu0 0.0
        %4722 = vmatprep.subr.mxu0 0.0
        %4723 = vmatpush1.xpose.msra.mxu0 0.0
        %4724 = vmatprep.subr.mxu0 0.0
        %4725 = vmatpush1.xpose.msra.mxu0 0.0
        %4726 = vmatprep.subr.mxu0 0.0
        %4727 = vmatpush1.xpose.msra.mxu0 0.0
        %4728 = vmatprep.subr.mxu0 0.0
        %4729 = vmatpush1.xpose.msra.mxu0 0.0
        %4730 = vmatprep.subr.mxu0 0.0
        %4731 = vmatpush1.xpose.msra.mxu0 0.0
        %4732 = vmatprep.subr.mxu0 0.0
        %4733 = vmatpush1.xpose.msra.mxu0 0.0
        %4734 = vmatprep.subr.mxu0 0.0
        %4735 = vmatpush1.xpose.msra.mxu0 0.0
        %4736 = vmatprep.subr.mxu0 0.0
        %4737 = vmatpush1.xpose.msra.mxu0 0.0
        %4738 = vmatprep.subr.mxu0 0.0
        %4739 = vmatpush1.xpose.msra.mxu0 %v4712
        %4740 = vmatprep.subr.mxu0 0.0
        %4741 = vmatpush1.xpose.msra.mxu0 %v4710
        %4742 = vmatprep.subr.mxu0 0.0
        %4743 = vmatpush1.xpose.msra.mxu0 %v4708
        %4744 = vmatprep.subr.mxu0 0.0
        %4745 = vmatpush1.xpose.msra.mxu0 %v4706
        %4746 = vmatprep.subr.mxu0 0.0
        %4747 = vmatpush2.xpose.msra.mxu0 0.0
        %4748 = vmatprep.subr.mxu0 0.0
        %4749 = vmatpush2.xpose.msra.mxu0 0.0
        %4750 = vmatprep.subr.mxu0 0.0
        %4751 = vmatpush2.xpose.msra.mxu0 0.0
        %4752 = vmatprep.subr.mxu0 0.0
        %4753 = vmatpush2.xpose.msra.mxu0 0.0
        %4754 = vmatprep.subr.mxu0 0.0
        %4755 = vmatpush2.xpose.msra.mxu0 0.0
        %4756 = vmatprep.subr.mxu0 0.0
        %4757 = vmatpush2.xpose.msra.mxu0 0.0
        %4758 = vmatprep.subr.mxu0 0.0
        %4759 = vmatpush2.xpose.msra.mxu0 0.0
        %4760 = vmatprep.subr.mxu0 0.0
        %4761 = vmatpush2.xpose.msra.mxu0 0.0
        %4762 = vmatprep.subr.mxu0 0.0
        %4763 = vmatpush2.xpose.msra.mxu0 0.0
        %4764 = vmatprep.subr.mxu0 0.0
        %4765 = vmatpush2.xpose.msra.mxu0 0.0
        %4766 = vmatprep.subr.mxu0 0.0
        %4767 = vmatpush2.xpose.msra.mxu0 0.0
        %4768 = vmatprep.subr.mxu0 0.0
        %4769 = vmatpush2.xpose.msra.mxu0 0.0
        %4770 = vmatprep.subr.mxu0 0.0
        %4771 = vmatpush2.xpose.msra.mxu0 0.0
        %4772 = vmatprep.subr.mxu0 0.0
        %4773 = vmatpush2.xpose.msra.mxu0 0.0
        %4774 = vmatprep.subr.mxu0 0.0
        %4775 = vmatpush2.xpose.msra.mxu0 0.0
        %4776 = vmatprep.subr.mxu0 0.0
        %4777 = vmatpush2.xpose.msra.mxu0 0.0
        %4778 = vmatprep.mubr.f32.mxu0 0.0
        %4779 = vmatmul.mubr.f32.gmra.mxu0 %v4702
        %v4780 = vpop.f32.mrf.mxu0
        %v4781 = vadd.f32 0.0, %v4780
        %v4782 = vpop.f32.mrf.mxu0
        %4783 = vmatprep.mubr.f32.mxu0 0.0
        %4784 = vmatmul.mubr.f32.gmra.mxu0 %v4704
        %v4785 = vpop.f32.mrf.mxu0
        %v4786 = vadd.f32 0.0, %v4785
        %v4787 = vpop.f32.mrf.mxu0
        %4788 = vdwg.mxu0
        %v4789 = vsel %vm626, %v4781, -inf
        %4790 = vmax.xlane.f32.xlu0 %v4789
        %v4791 = vpop.xlane.xlu0 %4790
        %v4792 = vsel %vm626, %v4786, -inf
        %4793 = vmax.xlane.f32.xlu0 %v4792
        %v4794 = vpop.xlane.xlu0 %4793
        %v4795 = vsub.f32 %v4781, %v4791
        %v4796 = vsub.f32 %v4786, %v4794
        %v4797 = vmul.f32 %v4795, 1.442695
        %v4798 = vpow.pop %v4797
        %v4799 = vmul.f32 %v4796, 1.442695
        %v4800 = vpow.pop %v4799
        %v4801 = vsel %vm626, %v4798, 0.0
        %4802 = vadd.xlane.f32.xlu0 %v4801
        %v4803 = vpop.xlane.xlu0 %4802
        %v4804 = vsel %vm626, %v4800, 0.0
        %4805 = vadd.xlane.f32.xlu0 %v4804
        %v4806 = vpop.xlane.xlu0 %4805
        %4807 = vrot.lane.b32.xlu0 %v4250, 80
        %v4808 = vpop.permute.xlu0 %4807
        %4809 = vrot.lane.b32.xlu0 %v4255, 80
        %v4810 = vpop.permute.xlu0 %4809
        %4811 = vrot.lane.b32.xlu0 %v4260, 80
        %v4812 = vpop.permute.xlu0 %4811
        %4813 = vrot.lane.b32.xlu0 %v4265, 80
        %v4814 = vpop.permute.xlu0 %4813
        %v4820 = vsel %vm626, %v4798, 0
        %v4823 = vsel %vm626, %v4800, 0
        %4825 = vmatprep.subr.mxu0 0.0
        %4826 = vmatpush1.msra.mxu0 0.0
        %4827 = vmatprep.subr.mxu0 0.0
        %4828 = vmatpush1.msra.mxu0 0.0
        %4829 = vmatprep.subr.mxu0 0.0
        %4830 = vmatpush1.msra.mxu0 0.0
        %4831 = vmatprep.subr.mxu0 0.0
        %4832 = vmatpush1.msra.mxu0 0.0
        %4833 = vmatprep.subr.mxu0 0.0
        %4834 = vmatpush1.msra.mxu0 0.0
        %4835 = vmatprep.subr.mxu0 0.0
        %4836 = vmatpush1.msra.mxu0 0.0
        %4837 = vmatprep.subr.mxu0 0.0
        %4838 = vmatpush1.msra.mxu0 0.0
        %4839 = vmatprep.subr.mxu0 0.0
        %4840 = vmatpush1.msra.mxu0 0.0
        %4841 = vmatprep.subr.mxu0 0.0
        %4842 = vmatpush1.msra.mxu0 0.0
        %4843 = vmatprep.subr.mxu0 0.0
        %4844 = vmatpush1.msra.mxu0 0.0
        %4845 = vmatprep.subr.mxu0 0.0
        %4846 = vmatpush1.msra.mxu0 0.0
        %4847 = vmatprep.subr.mxu0 0.0
        %4848 = vmatpush1.msra.mxu0 0.0
        %4849 = vmatprep.subr.mxu0 0.0
        %4850 = vmatpush1.msra.mxu0 %v4814
        %4851 = vmatprep.subr.mxu0 0.0
        %4852 = vmatpush1.msra.mxu0 %v4812
        %4853 = vmatprep.subr.mxu0 0.0
        %4854 = vmatpush1.msra.mxu0 %v4810
        %4855 = vmatprep.subr.mxu0 0.0
        %4856 = vmatpush1.msra.mxu0 %v4808
        %4857 = vmatprep.subr.mxu0 0.0
        %4858 = vmatpush2.msra.mxu0 0.0
        %4859 = vmatprep.subr.mxu0 0.0
        %4860 = vmatpush2.msra.mxu0 0.0
        %4861 = vmatprep.subr.mxu0 0.0
        %4862 = vmatpush2.msra.mxu0 0.0
        %4863 = vmatprep.subr.mxu0 0.0
        %4864 = vmatpush2.msra.mxu0 0.0
        %4865 = vmatprep.subr.mxu0 0.0
        %4866 = vmatpush2.msra.mxu0 0.0
        %4867 = vmatprep.subr.mxu0 0.0
        %4868 = vmatpush2.msra.mxu0 0.0
        %4869 = vmatprep.subr.mxu0 0.0
        %4870 = vmatpush2.msra.mxu0 0.0
        %4871 = vmatprep.subr.mxu0 0.0
        %4872 = vmatpush2.msra.mxu0 0.0
        %4873 = vmatprep.subr.mxu0 0.0
        %4874 = vmatpush2.msra.mxu0 0.0
        %4875 = vmatprep.subr.mxu0 0.0
        %4876 = vmatpush2.msra.mxu0 0.0
        %4877 = vmatprep.subr.mxu0 0.0
        %4878 = vmatpush2.msra.mxu0 0.0
        %4879 = vmatprep.subr.mxu0 0.0
        %4880 = vmatpush2.msra.mxu0 0.0
        %4881 = vmatprep.subr.mxu0 0.0
        %4882 = vmatpush2.msra.mxu0 0.0
        %4883 = vmatprep.subr.mxu0 0.0
        %4884 = vmatpush2.msra.mxu0 0.0
        %4885 = vmatprep.subr.mxu0 0.0
        %4886 = vmatpush2.msra.mxu0 0.0
        %4887 = vmatprep.subr.mxu0 0.0
        %4888 = vmatpush2.msra.mxu0 0.0
        %4889 = vmatprep.mubr.f32.mxu0 0.0
        %4890 = vmatmul.mubr.f32.gmra.mxu0 %v4820
        %v4891 = vpop.f32.mrf.mxu0
        %v4892 = vadd.f32 0.0, %v4891
        %v4893 = vpop.f32.mrf.mxu0
        %4894 = vmatprep.mubr.f32.mxu0 0.0
        %4895 = vmatmul.mubr.f32.gmra.mxu0 %v4823
        %v4896 = vpop.f32.mrf.mxu0
        %v4897 = vadd.f32 0.0, %v4896
        %v4898 = vpop.f32.mrf.mxu0
        %4899 = vdwg.mxu0
        %v4900 = vrcp.pop %v4803
        %v4901 = vrcp.pop %v4806
        %v4902 = vmul.f32 %v4892, %v4900
        %v4903 = vmul.f32 %v4897, %v4901
        %4904 = vrot.lane.b32.xlu0 %v4150, 104
        %v4905 = vpop.permute.xlu0 %4904
        %4906 = vrot.lane.b32.xlu0 %v4151, 104
        %v4907 = vpop.permute.xlu0 %4906
        %4908 = vrot.lane.b32.xlu0 %v4250, 104
        %v4909 = vpop.permute.xlu0 %4908
        %4910 = vrot.lane.b32.xlu0 %v4255, 104
        %v4911 = vpop.permute.xlu0 %4910
        %4912 = vrot.lane.b32.xlu0 %v4260, 104
        %v4913 = vpop.permute.xlu0 %4912
        %4914 = vrot.lane.b32.xlu0 %v4265, 104
        %v4915 = vpop.permute.xlu0 %4914
        %v4916 = vsel %vm766, %v4905, 0
        %v4918 = vsel %vm766, %v4907, 0
        %v4920 = vsel %vm766, %v4909, 0
        %v4922 = vsel %vm766, %v4911, 0
        %v4924 = vsel %vm766, %v4913, 0
        %v4926 = vsel %vm766, %v4915, 0
        %4928 = vmatprep.subr.mxu0 0.0
        %4929 = vmatpush1.xpose.msra.mxu0 0.0
        %4930 = vmatprep.subr.mxu0 0.0
        %4931 = vmatpush1.xpose.msra.mxu0 0.0
        %4932 = vmatprep.subr.mxu0 0.0
        %4933 = vmatpush1.xpose.msra.mxu0 0.0
        %4934 = vmatprep.subr.mxu0 0.0
        %4935 = vmatpush1.xpose.msra.mxu0 0.0
        %4936 = vmatprep.subr.mxu0 0.0
        %4937 = vmatpush1.xpose.msra.mxu0 0.0
        %4938 = vmatprep.subr.mxu0 0.0
        %4939 = vmatpush1.xpose.msra.mxu0 0.0
        %4940 = vmatprep.subr.mxu0 0.0
        %4941 = vmatpush1.xpose.msra.mxu0 0.0
        %4942 = vmatprep.subr.mxu0 0.0
        %4943 = vmatpush1.xpose.msra.mxu0 0.0
        %4944 = vmatprep.subr.mxu0 0.0
        %4945 = vmatpush1.xpose.msra.mxu0 0.0
        %4946 = vmatprep.subr.mxu0 0.0
        %4947 = vmatpush1.xpose.msra.mxu0 0.0
        %4948 = vmatprep.subr.mxu0 0.0
        %4949 = vmatpush1.xpose.msra.mxu0 0.0
        %4950 = vmatprep.subr.mxu0 0.0
        %4951 = vmatpush1.xpose.msra.mxu0 0.0
        %4952 = vmatprep.subr.mxu0 0.0
        %4953 = vmatpush1.xpose.msra.mxu0 %v4926
        %4954 = vmatprep.subr.mxu0 0.0
        %4955 = vmatpush1.xpose.msra.mxu0 %v4924
        %4956 = vmatprep.subr.mxu0 0.0
        %4957 = vmatpush1.xpose.msra.mxu0 %v4922
        %4958 = vmatprep.subr.mxu0 0.0
        %4959 = vmatpush1.xpose.msra.mxu0 %v4920
        %4960 = vmatprep.subr.mxu0 0.0
        %4961 = vmatpush2.xpose.msra.mxu0 0.0
        %4962 = vmatprep.subr.mxu0 0.0
        %4963 = vmatpush2.xpose.msra.mxu0 0.0
        %4964 = vmatprep.subr.mxu0 0.0
        %4965 = vmatpush2.xpose.msra.mxu0 0.0
        %4966 = vmatprep.subr.mxu0 0.0
        %4967 = vmatpush2.xpose.msra.mxu0 0.0
        %4968 = vmatprep.subr.mxu0 0.0
        %4969 = vmatpush2.xpose.msra.mxu0 0.0
        %4970 = vmatprep.subr.mxu0 0.0
        %4971 = vmatpush2.xpose.msra.mxu0 0.0
        %4972 = vmatprep.subr.mxu0 0.0
        %4973 = vmatpush2.xpose.msra.mxu0 0.0
        %4974 = vmatprep.subr.mxu0 0.0
        %4975 = vmatpush2.xpose.msra.mxu0 0.0
        %4976 = vmatprep.subr.mxu0 0.0
        %4977 = vmatpush2.xpose.msra.mxu0 0.0
        %4978 = vmatprep.subr.mxu0 0.0
        %4979 = vmatpush2.xpose.msra.mxu0 0.0
        %4980 = vmatprep.subr.mxu0 0.0
        %4981 = vmatpush2.xpose.msra.mxu0 0.0
        %4982 = vmatprep.subr.mxu0 0.0
        %4983 = vmatpush2.xpose.msra.mxu0 0.0
        %4984 = vmatprep.subr.mxu0 0.0
        %4985 = vmatpush2.xpose.msra.mxu0 0.0
        %4986 = vmatprep.subr.mxu0 0.0
        %4987 = vmatpush2.xpose.msra.mxu0 0.0
        %4988 = vmatprep.subr.mxu0 0.0
        %4989 = vmatpush2.xpose.msra.mxu0 0.0
        %4990 = vmatprep.subr.mxu0 0.0
        %4991 = vmatpush2.xpose.msra.mxu0 0.0
        %4992 = vmatprep.mubr.f32.mxu0 0.0
        %4993 = vmatmul.mubr.f32.gmra.mxu0 %v4916
        %v4994 = vpop.f32.mrf.mxu0
        %v4995 = vadd.f32 0.0, %v4994
        %v4996 = vpop.f32.mrf.mxu0
        %4997 = vmatprep.mubr.f32.mxu0 0.0
        %4998 = vmatmul.mubr.f32.gmra.mxu0 %v4918
        %v4999 = vpop.f32.mrf.mxu0
        %v5000 = vadd.f32 0.0, %v4999
        %v5001 = vpop.f32.mrf.mxu0
        %5002 = vdwg.mxu0
        %v5003 = vsel %vm626, %v4995, -inf
        %5004 = vmax.xlane.f32.xlu0 %v5003
        %v5005 = vpop.xlane.xlu0 %5004
        %v5006 = vsel %vm626, %v5000, -inf
        %5007 = vmax.xlane.f32.xlu0 %v5006
        %v5008 = vpop.xlane.xlu0 %5007
        %v5009 = vsub.f32 %v4995, %v5005
        %v5010 = vsub.f32 %v5000, %v5008
        %v5011 = vmul.f32 %v5009, 1.442695
        %v5012 = vpow.pop %v5011
        %v5013 = vmul.f32 %v5010, 1.442695
        %v5014 = vpow.pop %v5013
        %v5015 = vsel %vm626, %v5012, 0.0
        %5016 = vadd.xlane.f32.xlu0 %v5015
        %v5017 = vpop.xlane.xlu0 %5016
        %v5018 = vsel %vm626, %v5014, 0.0
        %5019 = vadd.xlane.f32.xlu0 %v5018
        %v5020 = vpop.xlane.xlu0 %5019
        %5021 = vrot.lane.b32.xlu0 %v4250, 72
        %v5022 = vpop.permute.xlu0 %5021
        %5023 = vrot.lane.b32.xlu0 %v4255, 72
        %v5024 = vpop.permute.xlu0 %5023
        %5025 = vrot.lane.b32.xlu0 %v4260, 72
        %v5026 = vpop.permute.xlu0 %5025
        %5027 = vrot.lane.b32.xlu0 %v4265, 72
        %v5028 = vpop.permute.xlu0 %5027
        %v5034 = vsel %vm626, %v5012, 0
        %v5037 = vsel %vm626, %v5014, 0
        %5039 = vmatprep.subr.mxu0 0.0
        %5040 = vmatpush1.msra.mxu0 0.0
        %5041 = vmatprep.subr.mxu0 0.0
        %5042 = vmatpush1.msra.mxu0 0.0
        %5043 = vmatprep.subr.mxu0 0.0
        %5044 = vmatpush1.msra.mxu0 0.0
        %5045 = vmatprep.subr.mxu0 0.0
        %5046 = vmatpush1.msra.mxu0 0.0
        %5047 = vmatprep.subr.mxu0 0.0
        %5048 = vmatpush1.msra.mxu0 0.0
        %5049 = vmatprep.subr.mxu0 0.0
        %5050 = vmatpush1.msra.mxu0 0.0
        %5051 = vmatprep.subr.mxu0 0.0
        %5052 = vmatpush1.msra.mxu0 0.0
        %5053 = vmatprep.subr.mxu0 0.0
        %5054 = vmatpush1.msra.mxu0 0.0
        %5055 = vmatprep.subr.mxu0 0.0
        %5056 = vmatpush1.msra.mxu0 0.0
        %5057 = vmatprep.subr.mxu0 0.0
        %5058 = vmatpush1.msra.mxu0 0.0
        %5059 = vmatprep.subr.mxu0 0.0
        %5060 = vmatpush1.msra.mxu0 0.0
        %5061 = vmatprep.subr.mxu0 0.0
        %5062 = vmatpush1.msra.mxu0 0.0
        %5063 = vmatprep.subr.mxu0 0.0
        %5064 = vmatpush1.msra.mxu0 %v5028
        %5065 = vmatprep.subr.mxu0 0.0
        %5066 = vmatpush1.msra.mxu0 %v5026
        %5067 = vmatprep.subr.mxu0 0.0
        %5068 = vmatpush1.msra.mxu0 %v5024
        %5069 = vmatprep.subr.mxu0 0.0
        %5070 = vmatpush1.msra.mxu0 %v5022
        %5071 = vmatprep.subr.mxu0 0.0
        %5072 = vmatpush2.msra.mxu0 0.0
        %5073 = vmatprep.subr.mxu0 0.0
        %5074 = vmatpush2.msra.mxu0 0.0
        %5075 = vmatprep.subr.mxu0 0.0
        %5076 = vmatpush2.msra.mxu0 0.0
        %5077 = vmatprep.subr.mxu0 0.0
        %5078 = vmatpush2.msra.mxu0 0.0
        %5079 = vmatprep.subr.mxu0 0.0
        %5080 = vmatpush2.msra.mxu0 0.0
        %5081 = vmatprep.subr.mxu0 0.0
        %5082 = vmatpush2.msra.mxu0 0.0
        %5083 = vmatprep.subr.mxu0 0.0
        %5084 = vmatpush2.msra.mxu0 0.0
        %5085 = vmatprep.subr.mxu0 0.0
        %5086 = vmatpush2.msra.mxu0 0.0
        %5087 = vmatprep.subr.mxu0 0.0
        %5088 = vmatpush2.msra.mxu0 0.0
        %5089 = vmatprep.subr.mxu0 0.0
        %5090 = vmatpush2.msra.mxu0 0.0
        %5091 = vmatprep.subr.mxu0 0.0
        %5092 = vmatpush2.msra.mxu0 0.0
        %5093 = vmatprep.subr.mxu0 0.0
        %5094 = vmatpush2.msra.mxu0 0.0
        %5095 = vmatprep.subr.mxu0 0.0
        %5096 = vmatpush2.msra.mxu0 0.0
        %5097 = vmatprep.subr.mxu0 0.0
        %5098 = vmatpush2.msra.mxu0 0.0
        %5099 = vmatprep.subr.mxu0 0.0
        %5100 = vmatpush2.msra.mxu0 0.0
        %5101 = vmatprep.subr.mxu0 0.0
        %5102 = vmatpush2.msra.mxu0 0.0
        %5103 = vmatprep.mubr.f32.mxu0 0.0
        %5104 = vmatmul.mubr.f32.gmra.mxu0 %v5034
        %v5105 = vpop.f32.mrf.mxu0
        %v5106 = vadd.f32 0.0, %v5105
        %v5107 = vpop.f32.mrf.mxu0
        %5108 = vmatprep.mubr.f32.mxu0 0.0
        %5109 = vmatmul.mubr.f32.gmra.mxu0 %v5037
        %v5110 = vpop.f32.mrf.mxu0
        %v5111 = vadd.f32 0.0, %v5110
        %v5112 = vpop.f32.mrf.mxu0
        %5113 = vdwg.mxu0
        %v5114 = vrcp.pop %v5017
        %v5115 = vrcp.pop %v5020
        %v5116 = vmul.f32 %v5106, %v5114
        %v5117 = vmul.f32 %v5111, %v5115
        %5120 = vrot.lane.b32.xlu0 %v4688, 8
        %v5121 = vpop.permute.xlu0 %5120
        %5122 = vrot.lane.b32.xlu0 %v4689, 8
        %v5123 = vpop.permute.xlu0 %5122
        %5128 = vrot.lane.b32.xlu0 %v4902, 16
        %v5129 = vpop.permute.xlu0 %5128
        %5130 = vrot.lane.b32.xlu0 %v4903, 16
        %v5131 = vpop.permute.xlu0 %5130
        %5136 = vrot.lane.b32.xlu0 %v5116, 24
        %v5137 = vpop.permute.xlu0 %5136
        %5138 = vrot.lane.b32.xlu0 %v5117, 24
        %v5139 = vpop.permute.xlu0 %5138
        %v5142 = vsel %vm766, %v4474, %v5121
        %v5143 = vsel %vm766, %v4475, %v5123
        %v5144 = vsel %vm852, %v5142, %v5129
        %v5145 = vsel %vm852, %v5143, %v5131
        %v5146 = vsel %vm1590, %v5144, %v5137
        %v5147 = vsel %vm1590, %v5145, %v5139
        %5148 = vrot.lane.b32.xlu0 %v4057, 32
        %v5149 = vpop.permute.xlu0 %5148
        %5150 = vrot.lane.b32.xlu0 %v4058, 32
        %v5151 = vpop.permute.xlu0 %5150
        %5152 = vrot.lane.b32.xlu0 %v4059, 32
        %v5153 = vpop.permute.xlu0 %5152
        %5154 = vrot.lane.b32.xlu0 %v4060, 32
        %v5155 = vpop.permute.xlu0 %5154
        %5160 = vrot.lane.b32.xlu0 %v4067, 32
        %v5161 = vpop.permute.xlu0 %5160
        %v5164 = vsel %vm626, %v5146, 0
        %v5167 = vsel %vm626, %v5147, 0
        %5169 = vmatprep.subr.mxu0 0.0
        %5170 = vmatpush1.msra.mxu0 0.0
        %5171 = vmatprep.subr.mxu0 0.0
        %5172 = vmatpush1.msra.mxu0 0.0
        %5173 = vmatprep.subr.mxu0 0.0
        %5174 = vmatpush1.msra.mxu0 0.0
        %5175 = vmatprep.subr.mxu0 0.0
        %5176 = vmatpush1.msra.mxu0 0.0
        %5177 = vmatprep.subr.mxu0 0.0
        %5178 = vmatpush1.msra.mxu0 0.0
        %5179 = vmatprep.subr.mxu0 0.0
        %5180 = vmatpush1.msra.mxu0 0.0
        %5181 = vmatprep.subr.mxu0 0.0
        %5182 = vmatpush1.msra.mxu0 0.0
        %5183 = vmatprep.subr.mxu0 0.0
        %5184 = vmatpush1.msra.mxu0 0.0
        %5185 = vmatprep.subr.mxu0 0.0
        %5186 = vmatpush1.msra.mxu0 0.0
        %5187 = vmatprep.subr.mxu0 0.0
        %5188 = vmatpush1.msra.mxu0 0.0
        %5189 = vmatprep.subr.mxu0 0.0
        %5190 = vmatpush1.msra.mxu0 0.0
        %5191 = vmatprep.subr.mxu0 0.0
        %5192 = vmatpush1.msra.mxu0 0.0
        %5193 = vmatprep.subr.mxu0 0.0
        %5194 = vmatpush1.msra.mxu0 %v5155
        %5195 = vmatprep.subr.mxu0 0.0
        %5196 = vmatpush1.msra.mxu0 %v5153
        %5197 = vmatprep.subr.mxu0 0.0
        %5198 = vmatpush1.msra.mxu0 %v5151
        %5199 = vmatprep.subr.mxu0 0.0
        %5200 = vmatpush1.msra.mxu0 %v5149
        %5201 = vmatprep.subr.mxu0 0.0
        %5202 = vmatpush2.msra.mxu0 0.0
        %5203 = vmatprep.subr.mxu0 0.0
        %5204 = vmatpush2.msra.mxu0 0.0
        %5205 = vmatprep.subr.mxu0 0.0
        %5206 = vmatpush2.msra.mxu0 0.0
        %5207 = vmatprep.subr.mxu0 0.0
        %5208 = vmatpush2.msra.mxu0 0.0
        %5209 = vmatprep.subr.mxu0 0.0
        %5210 = vmatpush2.msra.mxu0 0.0
        %5211 = vmatprep.subr.mxu0 0.0
        %5212 = vmatpush2.msra.mxu0 0.0
        %5213 = vmatprep.subr.mxu0 0.0
        %5214 = vmatpush2.msra.mxu0 0.0
        %5215 = vmatprep.subr.mxu0 0.0
        %5216 = vmatpush2.msra.mxu0 0.0
        %5217 = vmatprep.subr.mxu0 0.0
        %5218 = vmatpush2.msra.mxu0 0.0
        %5219 = vmatprep.subr.mxu0 0.0
        %5220 = vmatpush2.msra.mxu0 0.0
        %5221 = vmatprep.subr.mxu0 0.0
        %5222 = vmatpush2.msra.mxu0 0.0
        %5223 = vmatprep.subr.mxu0 0.0
        %5224 = vmatpush2.msra.mxu0 0.0
        %5225 = vmatprep.subr.mxu0 0.0
        %5226 = vmatpush2.msra.mxu0 0.0
        %5227 = vmatprep.subr.mxu0 0.0
        %5228 = vmatpush2.msra.mxu0 0.0
        %5229 = vmatprep.subr.mxu0 0.0
        %5230 = vmatpush2.msra.mxu0 0.0
        %5231 = vmatprep.subr.mxu0 0.0
        %5232 = vmatpush2.msra.mxu0 0.0
        %5233 = vmatprep.mubr.f32.mxu0 0.0
        %5234 = vmatmul.mubr.f32.gmra.mxu0 %v5164
        %v5235 = vpop.f32.mrf.mxu0
        %v5236 = vadd.f32 %v5161, %v5235
        %v5237 = vpop.f32.mrf.mxu0
        %5238 = vmatprep.mubr.f32.mxu0 0.0
        %5239 = vmatmul.mubr.f32.gmra.mxu0 %v5167
        %v5240 = vpop.f32.mrf.mxu0
        %v5241 = vadd.f32 %v5161, %v5240
        %v5242 = vpop.f32.mrf.mxu0
        %5243 = vdwg.mxu0
        %v5244 = vadd.f32 %v5236, %v4050
        %v5245 = vadd.f32 %v5241, %v4051
        %s5246 = scalar_lea.vmem %s1, 12
        %v5247 = vld [vmem:[%s5246] sm:$0x3]
        %v5248 = vsel %vm626, %v5244, 0.0
        %5249 = vadd.xlane.f32.xlu0 %v5248
        %v5250 = vpop.xlane.xlu0 %5249
        %v5251 = vsel %vm626, %v5245, 0.0
        %5252 = vadd.xlane.f32.xlu0 %v5251
        %v5253 = vpop.xlane.xlu0 %5252
        %v5254 = vmul.f32 %v5250, %v633
        %v5255 = vmul.f32 %v5253, %v633
        %v5256 = vsub.f32 %v5244, %v5254
        %v5257 = vsub.f32 %v5245, %v5255
        %v5258 = vmul.f32 %v5256, %v5256
        %v5259 = vmul.f32 %v5257, %v5257
        %v5260 = vsel %vm626, %v5258, 0.0
        %5261 = vadd.xlane.f32.xlu0 %v5260
        %v5262 = vpop.xlane.xlu0 %5261
        %v5263 = vsel %vm626, %v5259, 0.0
        %5264 = vadd.xlane.f32.xlu0 %v5263
        %v5265 = vpop.xlane.xlu0 %5264
        %v5266 = vmul.f32 %v5262, %v633
        %v5267 = vmul.f32 %v5265, %v633
        %v5268 = vadd.f32 %v5266, 1e-05
        %v5269 = vadd.f32 %v5267, 1e-05
        %v5270 = vrsqrt.pop %v5268
        %v5271 = vrsqrt.pop %v5269
        %v5272 = vmul.f32 %v5256, %v5270
        %v5273 = vmul.f32 %v5257, %v5271
        %v5274 = vlaneseq
        %v5275 = vshrl.u32 %v5274, 7
        %v5276 = vsub.s32 0, %v5275
        %v5277 = vrot.slane %v5247, %v5276
        %v5278 = vmul.f32 %v5272, %v5277
        %v5279 = vmul.f32 %v5273, %v5277
        %v5280 = vlaneseq
        %v5281 = vshrl.u32 %v5280, 7
        %v5282 = vsub.s32 1, %v5281
        %v5283 = vrot.slane %v5247, %v5282
        %v5284 = vadd.f32 %v5278, %v5283
        %v5285 = vadd.f32 %v5279, %v5283
        %v5286 = vadd.f32 %v5284, %v4010
        %v5287 = vadd.f32 %v5285, %v4011
        %v5288 = vld [vmem:[%s14] sm:$0xff]
        %v5289 = vld [vmem:[%s14 + $0x8] sm:$0xff]
        %v5290 = vld [vmem:[%s14 + $0x10] sm:$0xff]
        %v5291 = vld [vmem:[%s14 + $0x18] sm:$0xff]
        %v5292 = vld [vmem:[%s15] sm:$0x1]
        %v5294 = vlaneseq
        %v5295 = vshrl.u32 %v5294, 7
        %v5296 = vsub.s32 0, %v5295
        %v5297 = vrot.slane %v5292, %v5296
        %v5300 = vsel %vm626, %v5286, 0
        %v5303 = vsel %vm626, %v5287, 0
        %5305 = vmatprep.subr.mxu0 0.0
        %5306 = vmatpush1.msra.mxu0 0.0
        %5307 = vmatprep.subr.mxu0 0.0
        %5308 = vmatpush1.msra.mxu0 0.0
        %5309 = vmatprep.subr.mxu0 0.0
        %5310 = vmatpush1.msra.mxu0 0.0
        %5311 = vmatprep.subr.mxu0 0.0
        %5312 = vmatpush1.msra.mxu0 0.0
        %5313 = vmatprep.subr.mxu0 0.0
        %5314 = vmatpush1.msra.mxu0 0.0
        %5315 = vmatprep.subr.mxu0 0.0
        %5316 = vmatpush1.msra.mxu0 0.0
        %5317 = vmatprep.subr.mxu0 0.0
        %5318 = vmatpush1.msra.mxu0 0.0
        %5319 = vmatprep.subr.mxu0 0.0
        %5320 = vmatpush1.msra.mxu0 0.0
        %5321 = vmatprep.subr.mxu0 0.0
        %5322 = vmatpush1.msra.mxu0 0.0
        %5323 = vmatprep.subr.mxu0 0.0
        %5324 = vmatpush1.msra.mxu0 0.0
        %5325 = vmatprep.subr.mxu0 0.0
        %5326 = vmatpush1.msra.mxu0 0.0
        %5327 = vmatprep.subr.mxu0 0.0
        %5328 = vmatpush1.msra.mxu0 0.0
        %5329 = vmatprep.subr.mxu0 0.0
        %5330 = vmatpush1.msra.mxu0 %v5291
        %5331 = vmatprep.subr.mxu0 0.0
        %5332 = vmatpush1.msra.mxu0 %v5290
        %5333 = vmatprep.subr.mxu0 0.0
        %5334 = vmatpush1.msra.mxu0 %v5289
        %5335 = vmatprep.subr.mxu0 0.0
        %5336 = vmatpush1.msra.mxu0 %v5288
        %5337 = vmatprep.subr.mxu0 0.0
        %5338 = vmatpush2.msra.mxu0 0.0
        %5339 = vmatprep.subr.mxu0 0.0
        %5340 = vmatpush2.msra.mxu0 0.0
        %5341 = vmatprep.subr.mxu0 0.0
        %5342 = vmatpush2.msra.mxu0 0.0
        %5343 = vmatprep.subr.mxu0 0.0
        %5344 = vmatpush2.msra.mxu0 0.0
        %5345 = vmatprep.subr.mxu0 0.0
        %5346 = vmatpush2.msra.mxu0 0.0
        %5347 = vmatprep.subr.mxu0 0.0
        %5348 = vmatpush2.msra.mxu0 0.0
        %5349 = vmatprep.subr.mxu0 0.0
        %5350 = vmatpush2.msra.mxu0 0.0
        %5351 = vmatprep.subr.mxu0 0.0
        %5352 = vmatpush2.msra.mxu0 0.0
        %5353 = vmatprep.subr.mxu0 0.0
        %5354 = vmatpush2.msra.mxu0 0.0
        %5355 = vmatprep.subr.mxu0 0.0
        %5356 = vmatpush2.msra.mxu0 0.0
        %5357 = vmatprep.subr.mxu0 0.0
        %5358 = vmatpush2.msra.mxu0 0.0
        %5359 = vmatprep.subr.mxu0 0.0
        %5360 = vmatpush2.msra.mxu0 0.0
        %5361 = vmatprep.subr.mxu0 0.0
        %5362 = vmatpush2.msra.mxu0 0.0
        %5363 = vmatprep.subr.mxu0 0.0
        %5364 = vmatpush2.msra.mxu0 0.0
        %5365 = vmatprep.subr.mxu0 0.0
        %5366 = vmatpush2.msra.mxu0 0.0
        %5367 = vmatprep.subr.mxu0 0.0
        %5368 = vmatpush2.msra.mxu0 0.0
        %5369 = vmatprep.mubr.f32.mxu0 0.0
        %5370 = vmatmul.mubr.f32.gmra.mxu0 %v5300
        %v5371 = vpop.f32.mrf.mxu0
        %v5372 = vadd.f32 %v5297, %v5371
        %v5373 = vpop.f32.mrf.mxu0
        %5374 = vmatprep.mubr.f32.mxu0 0.0
        %5375 = vmatmul.mubr.f32.gmra.mxu0 %v5303
        %v5376 = vpop.f32.mrf.mxu0
        %v5377 = vadd.f32 %v5297, %v5376
        %v5378 = vpop.f32.mrf.mxu0
        %5379 = vdwg.mxu0
        %v5380 = vmul.f32 %v5372, 0.35355338
        %v5381 = vmul.f32 %v5377, 0.35355338
        %5384 = vrot.lane.b32.xlu0 %v5372, 96
        %v5385 = vpop.permute.xlu0 %5384
        %5386 = vrot.lane.b32.xlu0 %v5377, 96
        %v5387 = vpop.permute.xlu0 %5386
        %v5389 = vsel %vm766, %v5380, 0
        %v5392 = vsel %vm766, %v5381, 0
        %v5394 = vsel %vm766, %v5385, 0
        %v5396 = vsel %vm766, %v5387, 0
        %5398 = vmatprep.subr.mxu0 0.0
        %5399 = vmatpush1.xpose.msra.mxu0 0.0
        %5400 = vmatprep.subr.mxu0 0.0
        %5401 = vmatpush1.xpose.msra.mxu0 0.0
        %5402 = vmatprep.subr.mxu0 0.0
        %5403 = vmatpush1.xpose.msra.mxu0 0.0
        %5404 = vmatprep.subr.mxu0 0.0
        %5405 = vmatpush1.xpose.msra.mxu0 0.0
        %5406 = vmatprep.subr.mxu0 0.0
        %5407 = vmatpush1.xpose.msra.mxu0 0.0
        %5408 = vmatprep.subr.mxu0 0.0
        %5409 = vmatpush1.xpose.msra.mxu0 0.0
        %5410 = vmatprep.subr.mxu0 0.0
        %5411 = vmatpush1.xpose.msra.mxu0 0.0
        %5412 = vmatprep.subr.mxu0 0.0
        %5413 = vmatpush1.xpose.msra.mxu0 0.0
        %5414 = vmatprep.subr.mxu0 0.0
        %5415 = vmatpush1.xpose.msra.mxu0 0.0
        %5416 = vmatprep.subr.mxu0 0.0
        %5417 = vmatpush1.xpose.msra.mxu0 0.0
        %5418 = vmatprep.subr.mxu0 0.0
        %5419 = vmatpush1.xpose.msra.mxu0 0.0
        %5420 = vmatprep.subr.mxu0 0.0
        %5421 = vmatpush1.xpose.msra.mxu0 0.0
        %5422 = vmatprep.subr.mxu0 0.0
        %5423 = vmatpush1.xpose.msra.mxu0 0.0
        %5424 = vmatprep.subr.mxu0 0.0
        %5425 = vmatpush1.xpose.msra.mxu0 0.0
        %5426 = vmatprep.subr.mxu0 0.0
        %5427 = vmatpush1.xpose.msra.mxu0 %v5396
        %5428 = vmatprep.subr.mxu0 0.0
        %5429 = vmatpush1.xpose.msra.mxu0 %v5394
        %5430 = vmatprep.subr.mxu0 0.0
        %5431 = vmatpush2.xpose.msra.mxu0 0.0
        %5432 = vmatprep.subr.mxu0 0.0
        %5433 = vmatpush2.xpose.msra.mxu0 0.0
        %5434 = vmatprep.subr.mxu0 0.0
        %5435 = vmatpush2.xpose.msra.mxu0 0.0
        %5436 = vmatprep.subr.mxu0 0.0
        %5437 = vmatpush2.xpose.msra.mxu0 0.0
        %5438 = vmatprep.subr.mxu0 0.0
        %5439 = vmatpush2.xpose.msra.mxu0 0.0
        %5440 = vmatprep.subr.mxu0 0.0
        %5441 = vmatpush2.xpose.msra.mxu0 0.0
        %5442 = vmatprep.subr.mxu0 0.0
        %5443 = vmatpush2.xpose.msra.mxu0 0.0
        %5444 = vmatprep.subr.mxu0 0.0
        %5445 = vmatpush2.xpose.msra.mxu0 0.0
        %5446 = vmatprep.subr.mxu0 0.0
        %5447 = vmatpush2.xpose.msra.mxu0 0.0
        %5448 = vmatprep.subr.mxu0 0.0
        %5449 = vmatpush2.xpose.msra.mxu0 0.0
        %5450 = vmatprep.subr.mxu0 0.0
        %5451 = vmatpush2.xpose.msra.mxu0 0.0
        %5452 = vmatprep.subr.mxu0 0.0
        %5453 = vmatpush2.xpose.msra.mxu0 0.0
        %5454 = vmatprep.subr.mxu0 0.0
        %5455 = vmatpush2.xpose.msra.mxu0 0.0
        %5456 = vmatprep.subr.mxu0 0.0
        %5457 = vmatpush2.xpose.msra.mxu0 0.0
        %5458 = vmatprep.subr.mxu0 0.0
        %5459 = vmatpush2.xpose.msra.mxu0 0.0
        %5460 = vmatprep.subr.mxu0 0.0
        %5461 = vmatpush2.xpose.msra.mxu0 0.0
        %5462 = vmatprep.mubr.f32.mxu0 0.0
        %5463 = vmatmul.mubr.f32.gmra.mxu0 %v5389
        %v5464 = vpop.f32.mrf.mxu0
        %v5465 = vadd.f32 %v621, %v5464
        %v5466 = vpop.f32.mrf.mxu0
        %5467 = vmatprep.mubr.f32.mxu0 0.0
        %5468 = vmatmul.mubr.f32.gmra.mxu0 %v5392
        %v5469 = vpop.f32.mrf.mxu0
        %v5470 = vadd.f32 %v622, %v5469
        %v5471 = vpop.f32.mrf.mxu0
        %5472 = vdwg.mxu0
        %v5473 = vsel %vm852, %v5465, -inf
        %5474 = vmax.xlane.f32.xlu0 %v5473
        %v5475 = vpop.xlane.xlu0 %5474
        %v5476 = vsel %vm852, %v5470, -inf
        %5477 = vmax.xlane.f32.xlu0 %v5476
        %v5478 = vpop.xlane.xlu0 %5477
        %v5479 = vsub.f32 %v5465, %v5475
        %v5480 = vsub.f32 %v5470, %v5478
        %v5481 = vmul.f32 %v5479, 1.442695
        %v5482 = vpow.pop %v5481
        %v5483 = vmul.f32 %v5480, 1.442695
        %v5484 = vpow.pop %v5483
        %v5485 = vsel %vm852, %v5482, 0.0
        %5486 = vadd.xlane.f32.xlu0 %v5485
        %v5487 = vpop.xlane.xlu0 %5486
        %v5488 = vsel %vm852, %v5484, 0.0
        %5489 = vadd.xlane.f32.xlu0 %v5488
        %v5490 = vpop.xlane.xlu0 %5489
        %5491 = vrot.lane.b32.xlu0 %v5372, 64
        %v5492 = vpop.permute.xlu0 %5491
        %5493 = vrot.lane.b32.xlu0 %v5377, 64
        %v5494 = vpop.permute.xlu0 %5493
        %v5498 = vsel %vm852, %v5482, 0
        %v5501 = vsel %vm852, %v5484, 0
        %5503 = vmatprep.subr.mxu0 0.0
        %5504 = vmatpush1.msra.mxu0 0.0
        %5505 = vmatprep.subr.mxu0 0.0
        %5506 = vmatpush1.msra.mxu0 0.0
        %5507 = vmatprep.subr.mxu0 0.0
        %5508 = vmatpush1.msra.mxu0 0.0
        %5509 = vmatprep.subr.mxu0 0.0
        %5510 = vmatpush1.msra.mxu0 0.0
        %5511 = vmatprep.subr.mxu0 0.0
        %5512 = vmatpush1.msra.mxu0 0.0
        %5513 = vmatprep.subr.mxu0 0.0
        %5514 = vmatpush1.msra.mxu0 0.0
        %5515 = vmatprep.subr.mxu0 0.0
        %5516 = vmatpush1.msra.mxu0 0.0
        %5517 = vmatprep.subr.mxu0 0.0
        %5518 = vmatpush1.msra.mxu0 0.0
        %5519 = vmatprep.subr.mxu0 0.0
        %5520 = vmatpush1.msra.mxu0 0.0
        %5521 = vmatprep.subr.mxu0 0.0
        %5522 = vmatpush1.msra.mxu0 0.0
        %5523 = vmatprep.subr.mxu0 0.0
        %5524 = vmatpush1.msra.mxu0 0.0
        %5525 = vmatprep.subr.mxu0 0.0
        %5526 = vmatpush1.msra.mxu0 0.0
        %5527 = vmatprep.subr.mxu0 0.0
        %5528 = vmatpush1.msra.mxu0 0.0
        %5529 = vmatprep.subr.mxu0 0.0
        %5530 = vmatpush1.msra.mxu0 0.0
        %5531 = vmatprep.subr.mxu0 0.0
        %5532 = vmatpush1.msra.mxu0 %v5494
        %5533 = vmatprep.subr.mxu0 0.0
        %5534 = vmatpush1.msra.mxu0 %v5492
        %5535 = vmatprep.subr.mxu0 0.0
        %5536 = vmatpush2.msra.mxu0 0.0
        %5537 = vmatprep.subr.mxu0 0.0
        %5538 = vmatpush2.msra.mxu0 0.0
        %5539 = vmatprep.subr.mxu0 0.0
        %5540 = vmatpush2.msra.mxu0 0.0
        %5541 = vmatprep.subr.mxu0 0.0
        %5542 = vmatpush2.msra.mxu0 0.0
        %5543 = vmatprep.subr.mxu0 0.0
        %5544 = vmatpush2.msra.mxu0 0.0
        %5545 = vmatprep.subr.mxu0 0.0
        %5546 = vmatpush2.msra.mxu0 0.0
        %5547 = vmatprep.subr.mxu0 0.0
        %5548 = vmatpush2.msra.mxu0 0.0
        %5549 = vmatprep.subr.mxu0 0.0
        %5550 = vmatpush2.msra.mxu0 0.0
        %5551 = vmatprep.subr.mxu0 0.0
        %5552 = vmatpush2.msra.mxu0 0.0
        %5553 = vmatprep.subr.mxu0 0.0
        %5554 = vmatpush2.msra.mxu0 0.0
        %5555 = vmatprep.subr.mxu0 0.0
        %5556 = vmatpush2.msra.mxu0 0.0
        %5557 = vmatprep.subr.mxu0 0.0
        %5558 = vmatpush2.msra.mxu0 0.0
        %5559 = vmatprep.subr.mxu0 0.0
        %5560 = vmatpush2.msra.mxu0 0.0
        %5561 = vmatprep.subr.mxu0 0.0
        %5562 = vmatpush2.msra.mxu0 0.0
        %5563 = vmatprep.subr.mxu0 0.0
        %5564 = vmatpush2.msra.mxu0 0.0
        %5565 = vmatprep.subr.mxu0 0.0
        %5566 = vmatpush2.msra.mxu0 0.0
        %5567 = vmatprep.mubr.f32.mxu0 0.0
        %5568 = vmatmul.mubr.f32.gmra.mxu0 %v5498
        %v5569 = vpop.f32.mrf.mxu0
        %v5570 = vadd.f32 0.0, %v5569
        %v5571 = vpop.f32.mrf.mxu0
        %5572 = vmatprep.mubr.f32.mxu0 0.0
        %5573 = vmatmul.mubr.f32.gmra.mxu0 %v5501
        %v5574 = vpop.f32.mrf.mxu0
        %v5575 = vadd.f32 0.0, %v5574
        %v5576 = vpop.f32.mrf.mxu0
        %5577 = vdwg.mxu0
        %v5578 = vrcp.pop %v5487
        %v5579 = vrcp.pop %v5490
        %v5580 = vmul.f32 %v5570, %v5578
        %v5581 = vmul.f32 %v5575, %v5579
        %5582 = vrot.lane.b32.xlu0 %v5380, 120
        %v5583 = vpop.permute.xlu0 %5582
        %5584 = vrot.lane.b32.xlu0 %v5381, 120
        %v5585 = vpop.permute.xlu0 %5584
        %5586 = vrot.lane.b32.xlu0 %v5372, 88
        %v5587 = vpop.permute.xlu0 %5586
        %5588 = vrot.lane.b32.xlu0 %v5377, 88
        %v5589 = vpop.permute.xlu0 %5588
        %v5590 = vsel %vm766, %v5583, 0
        %v5592 = vsel %vm766, %v5585, 0
        %v5594 = vsel %vm766, %v5587, 0
        %v5596 = vsel %vm766, %v5589, 0
        %5598 = vmatprep.subr.mxu0 0.0
        %5599 = vmatpush1.xpose.msra.mxu0 0.0
        %5600 = vmatprep.subr.mxu0 0.0
        %5601 = vmatpush1.xpose.msra.mxu0 0.0
        %5602 = vmatprep.subr.mxu0 0.0
        %5603 = vmatpush1.xpose.msra.mxu0 0.0
        %5604 = vmatprep.subr.mxu0 0.0
        %5605 = vmatpush1.xpose.msra.mxu0 0.0
        %5606 = vmatprep.subr.mxu0 0.0
        %5607 = vmatpush1.xpose.msra.mxu0 0.0
        %5608 = vmatprep.subr.mxu0 0.0
        %5609 = vmatpush1.xpose.msra.mxu0 0.0
        %5610 = vmatprep.subr.mxu0 0.0
        %5611 = vmatpush1.xpose.msra.mxu0 0.0
        %5612 = vmatprep.subr.mxu0 0.0
        %5613 = vmatpush1.xpose.msra.mxu0 0.0
        %5614 = vmatprep.subr.mxu0 0.0
        %5615 = vmatpush1.xpose.msra.mxu0 0.0
        %5616 = vmatprep.subr.mxu0 0.0
        %5617 = vmatpush1.xpose.msra.mxu0 0.0
        %5618 = vmatprep.subr.mxu0 0.0
        %5619 = vmatpush1.xpose.msra.mxu0 0.0
        %5620 = vmatprep.subr.mxu0 0.0
        %5621 = vmatpush1.xpose.msra.mxu0 0.0
        %5622 = vmatprep.subr.mxu0 0.0
        %5623 = vmatpush1.xpose.msra.mxu0 0.0
        %5624 = vmatprep.subr.mxu0 0.0
        %5625 = vmatpush1.xpose.msra.mxu0 0.0
        %5626 = vmatprep.subr.mxu0 0.0
        %5627 = vmatpush1.xpose.msra.mxu0 %v5596
        %5628 = vmatprep.subr.mxu0 0.0
        %5629 = vmatpush1.xpose.msra.mxu0 %v5594
        %5630 = vmatprep.subr.mxu0 0.0
        %5631 = vmatpush2.xpose.msra.mxu0 0.0
        %5632 = vmatprep.subr.mxu0 0.0
        %5633 = vmatpush2.xpose.msra.mxu0 0.0
        %5634 = vmatprep.subr.mxu0 0.0
        %5635 = vmatpush2.xpose.msra.mxu0 0.0
        %5636 = vmatprep.subr.mxu0 0.0
        %5637 = vmatpush2.xpose.msra.mxu0 0.0
        %5638 = vmatprep.subr.mxu0 0.0
        %5639 = vmatpush2.xpose.msra.mxu0 0.0
        %5640 = vmatprep.subr.mxu0 0.0
        %5641 = vmatpush2.xpose.msra.mxu0 0.0
        %5642 = vmatprep.subr.mxu0 0.0
        %5643 = vmatpush2.xpose.msra.mxu0 0.0
        %5644 = vmatprep.subr.mxu0 0.0
        %5645 = vmatpush2.xpose.msra.mxu0 0.0
        %5646 = vmatprep.subr.mxu0 0.0
        %5647 = vmatpush2.xpose.msra.mxu0 0.0
        %5648 = vmatprep.subr.mxu0 0.0
        %5649 = vmatpush2.xpose.msra.mxu0 0.0
        %5650 = vmatprep.subr.mxu0 0.0
        %5651 = vmatpush2.xpose.msra.mxu0 0.0
        %5652 = vmatprep.subr.mxu0 0.0
        %5653 = vmatpush2.xpose.msra.mxu0 0.0
        %5654 = vmatprep.subr.mxu0 0.0
        %5655 = vmatpush2.xpose.msra.mxu0 0.0
        %5656 = vmatprep.subr.mxu0 0.0
        %5657 = vmatpush2.xpose.msra.mxu0 0.0
        %5658 = vmatprep.subr.mxu0 0.0
        %5659 = vmatpush2.xpose.msra.mxu0 0.0
        %5660 = vmatprep.subr.mxu0 0.0
        %5661 = vmatpush2.xpose.msra.mxu0 0.0
        %5662 = vmatprep.mubr.f32.mxu0 0.0
        %5663 = vmatmul.mubr.f32.gmra.mxu0 %v5590
        %v5664 = vpop.f32.mrf.mxu0
        %v5665 = vadd.f32 %v621, %v5664
        %v5666 = vpop.f32.mrf.mxu0
        %5667 = vmatprep.mubr.f32.mxu0 0.0
        %5668 = vmatmul.mubr.f32.gmra.mxu0 %v5592
        %v5669 = vpop.f32.mrf.mxu0
        %v5670 = vadd.f32 %v622, %v5669
        %v5671 = vpop.f32.mrf.mxu0
        %5672 = vdwg.mxu0
        %v5673 = vsel %vm852, %v5665, -inf
        %5674 = vmax.xlane.f32.xlu0 %v5673
        %v5675 = vpop.xlane.xlu0 %5674
        %v5676 = vsel %vm852, %v5670, -inf
        %5677 = vmax.xlane.f32.xlu0 %v5676
        %v5678 = vpop.xlane.xlu0 %5677
        %v5679 = vsub.f32 %v5665, %v5675
        %v5680 = vsub.f32 %v5670, %v5678
        %v5681 = vmul.f32 %v5679, 1.442695
        %v5682 = vpow.pop %v5681
        %v5683 = vmul.f32 %v5680, 1.442695
        %v5684 = vpow.pop %v5683
        %v5685 = vsel %vm852, %v5682, 0.0
        %5686 = vadd.xlane.f32.xlu0 %v5685
        %v5687 = vpop.xlane.xlu0 %5686
        %v5688 = vsel %vm852, %v5684, 0.0
        %5689 = vadd.xlane.f32.xlu0 %v5688
        %v5690 = vpop.xlane.xlu0 %5689
        %5691 = vrot.lane.b32.xlu0 %v5372, 56
        %v5692 = vpop.permute.xlu0 %5691
        %5693 = vrot.lane.b32.xlu0 %v5377, 56
        %v5694 = vpop.permute.xlu0 %5693
        %v5698 = vsel %vm852, %v5682, 0
        %v5701 = vsel %vm852, %v5684, 0
        %5703 = vmatprep.subr.mxu0 0.0
        %5704 = vmatpush1.msra.mxu0 0.0
        %5705 = vmatprep.subr.mxu0 0.0
        %5706 = vmatpush1.msra.mxu0 0.0
        %5707 = vmatprep.subr.mxu0 0.0
        %5708 = vmatpush1.msra.mxu0 0.0
        %5709 = vmatprep.subr.mxu0 0.0
        %5710 = vmatpush1.msra.mxu0 0.0
        %5711 = vmatprep.subr.mxu0 0.0
        %5712 = vmatpush1.msra.mxu0 0.0
        %5713 = vmatprep.subr.mxu0 0.0
        %5714 = vmatpush1.msra.mxu0 0.0
        %5715 = vmatprep.subr.mxu0 0.0
        %5716 = vmatpush1.msra.mxu0 0.0
        %5717 = vmatprep.subr.mxu0 0.0
        %5718 = vmatpush1.msra.mxu0 0.0
        %5719 = vmatprep.subr.mxu0 0.0
        %5720 = vmatpush1.msra.mxu0 0.0
        %5721 = vmatprep.subr.mxu0 0.0
        %5722 = vmatpush1.msra.mxu0 0.0
        %5723 = vmatprep.subr.mxu0 0.0
        %5724 = vmatpush1.msra.mxu0 0.0
        %5725 = vmatprep.subr.mxu0 0.0
        %5726 = vmatpush1.msra.mxu0 0.0
        %5727 = vmatprep.subr.mxu0 0.0
        %5728 = vmatpush1.msra.mxu0 0.0
        %5729 = vmatprep.subr.mxu0 0.0
        %5730 = vmatpush1.msra.mxu0 0.0
        %5731 = vmatprep.subr.mxu0 0.0
        %5732 = vmatpush1.msra.mxu0 %v5694
        %5733 = vmatprep.subr.mxu0 0.0
        %5734 = vmatpush1.msra.mxu0 %v5692
        %5735 = vmatprep.subr.mxu0 0.0
        %5736 = vmatpush2.msra.mxu0 0.0
        %5737 = vmatprep.subr.mxu0 0.0
        %5738 = vmatpush2.msra.mxu0 0.0
        %5739 = vmatprep.subr.mxu0 0.0
        %5740 = vmatpush2.msra.mxu0 0.0
        %5741 = vmatprep.subr.mxu0 0.0
        %5742 = vmatpush2.msra.mxu0 0.0
        %5743 = vmatprep.subr.mxu0 0.0
        %5744 = vmatpush2.msra.mxu0 0.0
        %5745 = vmatprep.subr.mxu0 0.0
        %5746 = vmatpush2.msra.mxu0 0.0
        %5747 = vmatprep.subr.mxu0 0.0
        %5748 = vmatpush2.msra.mxu0 0.0
        %5749 = vmatprep.subr.mxu0 0.0
        %5750 = vmatpush2.msra.mxu0 0.0
        %5751 = vmatprep.subr.mxu0 0.0
        %5752 = vmatpush2.msra.mxu0 0.0
        %5753 = vmatprep.subr.mxu0 0.0
        %5754 = vmatpush2.msra.mxu0 0.0
        %5755 = vmatprep.subr.mxu0 0.0
        %5756 = vmatpush2.msra.mxu0 0.0
        %5757 = vmatprep.subr.mxu0 0.0
        %5758 = vmatpush2.msra.mxu0 0.0
        %5759 = vmatprep.subr.mxu0 0.0
        %5760 = vmatpush2.msra.mxu0 0.0
        %5761 = vmatprep.subr.mxu0 0.0
        %5762 = vmatpush2.msra.mxu0 0.0
        %5763 = vmatprep.subr.mxu0 0.0
        %5764 = vmatpush2.msra.mxu0 0.0
        %5765 = vmatprep.subr.mxu0 0.0
        %5766 = vmatpush2.msra.mxu0 0.0
        %5767 = vmatprep.mubr.f32.mxu0 0.0
        %5768 = vmatmul.mubr.f32.gmra.mxu0 %v5698
        %v5769 = vpop.f32.mrf.mxu0
        %v5770 = vadd.f32 0.0, %v5769
        %v5771 = vpop.f32.mrf.mxu0
        %5772 = vmatprep.mubr.f32.mxu0 0.0
        %5773 = vmatmul.mubr.f32.gmra.mxu0 %v5701
        %v5774 = vpop.f32.mrf.mxu0
        %v5775 = vadd.f32 0.0, %v5774
        %v5776 = vpop.f32.mrf.mxu0
        %5777 = vdwg.mxu0
        %v5778 = vrcp.pop %v5687
        %v5779 = vrcp.pop %v5690
        %v5780 = vmul.f32 %v5770, %v5778
        %v5781 = vmul.f32 %v5775, %v5779
        %5782 = vrot.lane.b32.xlu0 %v5380, 112
        %v5783 = vpop.permute.xlu0 %5782
        %5784 = vrot.lane.b32.xlu0 %v5381, 112
        %v5785 = vpop.permute.xlu0 %5784
        %5786 = vrot.lane.b32.xlu0 %v5372, 80
        %v5787 = vpop.permute.xlu0 %5786
        %5788 = vrot.lane.b32.xlu0 %v5377, 80
        %v5789 = vpop.permute.xlu0 %5788
        %v5790 = vsel %vm766, %v5783, 0
        %v5792 = vsel %vm766, %v5785, 0
        %v5794 = vsel %vm766, %v5787, 0
        %v5796 = vsel %vm766, %v5789, 0
        %5798 = vmatprep.subr.mxu0 0.0
        %5799 = vmatpush1.xpose.msra.mxu0 0.0
        %5800 = vmatprep.subr.mxu0 0.0
        %5801 = vmatpush1.xpose.msra.mxu0 0.0
        %5802 = vmatprep.subr.mxu0 0.0
        %5803 = vmatpush1.xpose.msra.mxu0 0.0
        %5804 = vmatprep.subr.mxu0 0.0
        %5805 = vmatpush1.xpose.msra.mxu0 0.0
        %5806 = vmatprep.subr.mxu0 0.0
        %5807 = vmatpush1.xpose.msra.mxu0 0.0
        %5808 = vmatprep.subr.mxu0 0.0
        %5809 = vmatpush1.xpose.msra.mxu0 0.0
        %5810 = vmatprep.subr.mxu0 0.0
        %5811 = vmatpush1.xpose.msra.mxu0 0.0
        %5812 = vmatprep.subr.mxu0 0.0
        %5813 = vmatpush1.xpose.msra.mxu0 0.0
        %5814 = vmatprep.subr.mxu0 0.0
        %5815 = vmatpush1.xpose.msra.mxu0 0.0
        %5816 = vmatprep.subr.mxu0 0.0
        %5817 = vmatpush1.xpose.msra.mxu0 0.0
        %5818 = vmatprep.subr.mxu0 0.0
        %5819 = vmatpush1.xpose.msra.mxu0 0.0
        %5820 = vmatprep.subr.mxu0 0.0
        %5821 = vmatpush1.xpose.msra.mxu0 0.0
        %5822 = vmatprep.subr.mxu0 0.0
        %5823 = vmatpush1.xpose.msra.mxu0 0.0
        %5824 = vmatprep.subr.mxu0 0.0
        %5825 = vmatpush1.xpose.msra.mxu0 0.0
        %5826 = vmatprep.subr.mxu0 0.0
        %5827 = vmatpush1.xpose.msra.mxu0 %v5796
        %5828 = vmatprep.subr.mxu0 0.0
        %5829 = vmatpush1.xpose.msra.mxu0 %v5794
        %5830 = vmatprep.subr.mxu0 0.0
        %5831 = vmatpush2.xpose.msra.mxu0 0.0
        %5832 = vmatprep.subr.mxu0 0.0
        %5833 = vmatpush2.xpose.msra.mxu0 0.0
        %5834 = vmatprep.subr.mxu0 0.0
        %5835 = vmatpush2.xpose.msra.mxu0 0.0
        %5836 = vmatprep.subr.mxu0 0.0
        %5837 = vmatpush2.xpose.msra.mxu0 0.0
        %5838 = vmatprep.subr.mxu0 0.0
        %5839 = vmatpush2.xpose.msra.mxu0 0.0
        %5840 = vmatprep.subr.mxu0 0.0
        %5841 = vmatpush2.xpose.msra.mxu0 0.0
        %5842 = vmatprep.subr.mxu0 0.0
        %5843 = vmatpush2.xpose.msra.mxu0 0.0
        %5844 = vmatprep.subr.mxu0 0.0
        %5845 = vmatpush2.xpose.msra.mxu0 0.0
        %5846 = vmatprep.subr.mxu0 0.0
        %5847 = vmatpush2.xpose.msra.mxu0 0.0
        %5848 = vmatprep.subr.mxu0 0.0
        %5849 = vmatpush2.xpose.msra.mxu0 0.0
        %5850 = vmatprep.subr.mxu0 0.0
        %5851 = vmatpush2.xpose.msra.mxu0 0.0
        %5852 = vmatprep.subr.mxu0 0.0
        %5853 = vmatpush2.xpose.msra.mxu0 0.0
        %5854 = vmatprep.subr.mxu0 0.0
        %5855 = vmatpush2.xpose.msra.mxu0 0.0
        %5856 = vmatprep.subr.mxu0 0.0
        %5857 = vmatpush2.xpose.msra.mxu0 0.0
        %5858 = vmatprep.subr.mxu0 0.0
        %5859 = vmatpush2.xpose.msra.mxu0 0.0
        %5860 = vmatprep.subr.mxu0 0.0
        %5861 = vmatpush2.xpose.msra.mxu0 0.0
        %5862 = vmatprep.mubr.f32.mxu0 0.0
        %5863 = vmatmul.mubr.f32.gmra.mxu0 %v5790
        %v5864 = vpop.f32.mrf.mxu0
        %v5865 = vadd.f32 %v621, %v5864
        %v5866 = vpop.f32.mrf.mxu0
        %5867 = vmatprep.mubr.f32.mxu0 0.0
        %5868 = vmatmul.mubr.f32.gmra.mxu0 %v5792
        %v5869 = vpop.f32.mrf.mxu0
        %v5870 = vadd.f32 %v622, %v5869
        %v5871 = vpop.f32.mrf.mxu0
        %5872 = vdwg.mxu0
        %v5873 = vsel %vm852, %v5865, -inf
        %5874 = vmax.xlane.f32.xlu0 %v5873
        %v5875 = vpop.xlane.xlu0 %5874
        %v5876 = vsel %vm852, %v5870, -inf
        %5877 = vmax.xlane.f32.xlu0 %v5876
        %v5878 = vpop.xlane.xlu0 %5877
        %v5879 = vsub.f32 %v5865, %v5875
        %v5880 = vsub.f32 %v5870, %v5878
        %v5881 = vmul.f32 %v5879, 1.442695
        %v5882 = vpow.pop %v5881
        %v5883 = vmul.f32 %v5880, 1.442695
        %v5884 = vpow.pop %v5883
        %v5885 = vsel %vm852, %v5882, 0.0
        %5886 = vadd.xlane.f32.xlu0 %v5885
        %v5887 = vpop.xlane.xlu0 %5886
        %v5888 = vsel %vm852, %v5884, 0.0
        %5889 = vadd.xlane.f32.xlu0 %v5888
        %v5890 = vpop.xlane.xlu0 %5889
        %5891 = vrot.lane.b32.xlu0 %v5372, 48
        %v5892 = vpop.permute.xlu0 %5891
        %5893 = vrot.lane.b32.xlu0 %v5377, 48
        %v5894 = vpop.permute.xlu0 %5893
        %v5898 = vsel %vm852, %v5882, 0
        %v5901 = vsel %vm852, %v5884, 0
        %5903 = vmatprep.subr.mxu0 0.0
        %5904 = vmatpush1.msra.mxu0 0.0
        %5905 = vmatprep.subr.mxu0 0.0
        %5906 = vmatpush1.msra.mxu0 0.0
        %5907 = vmatprep.subr.mxu0 0.0
        %5908 = vmatpush1.msra.mxu0 0.0
        %5909 = vmatprep.subr.mxu0 0.0
        %5910 = vmatpush1.msra.mxu0 0.0
        %5911 = vmatprep.subr.mxu0 0.0
        %5912 = vmatpush1.msra.mxu0 0.0
        %5913 = vmatprep.subr.mxu0 0.0
        %5914 = vmatpush1.msra.mxu0 0.0
        %5915 = vmatprep.subr.mxu0 0.0
        %5916 = vmatpush1.msra.mxu0 0.0
        %5917 = vmatprep.subr.mxu0 0.0
        %5918 = vmatpush1.msra.mxu0 0.0
        %5919 = vmatprep.subr.mxu0 0.0
        %5920 = vmatpush1.msra.mxu0 0.0
        %5921 = vmatprep.subr.mxu0 0.0
        %5922 = vmatpush1.msra.mxu0 0.0
        %5923 = vmatprep.subr.mxu0 0.0
        %5924 = vmatpush1.msra.mxu0 0.0
        %5925 = vmatprep.subr.mxu0 0.0
        %5926 = vmatpush1.msra.mxu0 0.0
        %5927 = vmatprep.subr.mxu0 0.0
        %5928 = vmatpush1.msra.mxu0 0.0
        %5929 = vmatprep.subr.mxu0 0.0
        %5930 = vmatpush1.msra.mxu0 0.0
        %5931 = vmatprep.subr.mxu0 0.0
        %5932 = vmatpush1.msra.mxu0 %v5894
        %5933 = vmatprep.subr.mxu0 0.0
        %5934 = vmatpush1.msra.mxu0 %v5892
        %5935 = vmatprep.subr.mxu0 0.0
        %5936 = vmatpush2.msra.mxu0 0.0
        %5937 = vmatprep.subr.mxu0 0.0
        %5938 = vmatpush2.msra.mxu0 0.0
        %5939 = vmatprep.subr.mxu0 0.0
        %5940 = vmatpush2.msra.mxu0 0.0
        %5941 = vmatprep.subr.mxu0 0.0
        %5942 = vmatpush2.msra.mxu0 0.0
        %5943 = vmatprep.subr.mxu0 0.0
        %5944 = vmatpush2.msra.mxu0 0.0
        %5945 = vmatprep.subr.mxu0 0.0
        %5946 = vmatpush2.msra.mxu0 0.0
        %5947 = vmatprep.subr.mxu0 0.0
        %5948 = vmatpush2.msra.mxu0 0.0
        %5949 = vmatprep.subr.mxu0 0.0
        %5950 = vmatpush2.msra.mxu0 0.0
        %5951 = vmatprep.subr.mxu0 0.0
        %5952 = vmatpush2.msra.mxu0 0.0
        %5953 = vmatprep.subr.mxu0 0.0
        %5954 = vmatpush2.msra.mxu0 0.0
        %5955 = vmatprep.subr.mxu0 0.0
        %5956 = vmatpush2.msra.mxu0 0.0
        %5957 = vmatprep.subr.mxu0 0.0
        %5958 = vmatpush2.msra.mxu0 0.0
        %5959 = vmatprep.subr.mxu0 0.0
        %5960 = vmatpush2.msra.mxu0 0.0
        %5961 = vmatprep.subr.mxu0 0.0
        %5962 = vmatpush2.msra.mxu0 0.0
        %5963 = vmatprep.subr.mxu0 0.0
        %5964 = vmatpush2.msra.mxu0 0.0
        %5965 = vmatprep.subr.mxu0 0.0
        %5966 = vmatpush2.msra.mxu0 0.0
        %5967 = vmatprep.mubr.f32.mxu0 0.0
        %5968 = vmatmul.mubr.f32.gmra.mxu0 %v5898
        %v5969 = vpop.f32.mrf.mxu0
        %v5970 = vadd.f32 0.0, %v5969
        %v5971 = vpop.f32.mrf.mxu0
        %5972 = vmatprep.mubr.f32.mxu0 0.0
        %5973 = vmatmul.mubr.f32.gmra.mxu0 %v5901
        %v5974 = vpop.f32.mrf.mxu0
        %v5975 = vadd.f32 0.0, %v5974
        %v5976 = vpop.f32.mrf.mxu0
        %5977 = vdwg.mxu0
        %v5978 = vrcp.pop %v5887
        %v5979 = vrcp.pop %v5890
        %v5980 = vmul.f32 %v5970, %v5978
        %v5981 = vmul.f32 %v5975, %v5979
        %5982 = vrot.lane.b32.xlu0 %v5380, 104
        %v5983 = vpop.permute.xlu0 %5982
        %5984 = vrot.lane.b32.xlu0 %v5381, 104
        %v5985 = vpop.permute.xlu0 %5984
        %5986 = vrot.lane.b32.xlu0 %v5372, 72
        %v5987 = vpop.permute.xlu0 %5986
        %5988 = vrot.lane.b32.xlu0 %v5377, 72
        %v5989 = vpop.permute.xlu0 %5988
        %v5990 = vsel %vm766, %v5983, 0
        %v5992 = vsel %vm766, %v5985, 0
        %v5994 = vsel %vm766, %v5987, 0
        %v5996 = vsel %vm766, %v5989, 0
        %5998 = vmatprep.subr.mxu0 0.0
        %5999 = vmatpush1.xpose.msra.mxu0 0.0
        %6000 = vmatprep.subr.mxu0 0.0
        %6001 = vmatpush1.xpose.msra.mxu0 0.0
        %6002 = vmatprep.subr.mxu0 0.0
        %6003 = vmatpush1.xpose.msra.mxu0 0.0
        %6004 = vmatprep.subr.mxu0 0.0
        %6005 = vmatpush1.xpose.msra.mxu0 0.0
        %6006 = vmatprep.subr.mxu0 0.0
        %6007 = vmatpush1.xpose.msra.mxu0 0.0
        %6008 = vmatprep.subr.mxu0 0.0
        %6009 = vmatpush1.xpose.msra.mxu0 0.0
        %6010 = vmatprep.subr.mxu0 0.0
        %6011 = vmatpush1.xpose.msra.mxu0 0.0
        %6012 = vmatprep.subr.mxu0 0.0
        %6013 = vmatpush1.xpose.msra.mxu0 0.0
        %6014 = vmatprep.subr.mxu0 0.0
        %6015 = vmatpush1.xpose.msra.mxu0 0.0
        %6016 = vmatprep.subr.mxu0 0.0
        %6017 = vmatpush1.xpose.msra.mxu0 0.0
        %6018 = vmatprep.subr.mxu0 0.0
        %6019 = vmatpush1.xpose.msra.mxu0 0.0
        %6020 = vmatprep.subr.mxu0 0.0
        %6021 = vmatpush1.xpose.msra.mxu0 0.0
        %6022 = vmatprep.subr.mxu0 0.0
        %6023 = vmatpush1.xpose.msra.mxu0 0.0
        %6024 = vmatprep.subr.mxu0 0.0
        %6025 = vmatpush1.xpose.msra.mxu0 0.0
        %6026 = vmatprep.subr.mxu0 0.0
        %6027 = vmatpush1.xpose.msra.mxu0 %v5996
        %6028 = vmatprep.subr.mxu0 0.0
        %6029 = vmatpush1.xpose.msra.mxu0 %v5994
        %6030 = vmatprep.subr.mxu0 0.0
        %6031 = vmatpush2.xpose.msra.mxu0 0.0
        %6032 = vmatprep.subr.mxu0 0.0
        %6033 = vmatpush2.xpose.msra.mxu0 0.0
        %6034 = vmatprep.subr.mxu0 0.0
        %6035 = vmatpush2.xpose.msra.mxu0 0.0
        %6036 = vmatprep.subr.mxu0 0.0
        %6037 = vmatpush2.xpose.msra.mxu0 0.0
        %6038 = vmatprep.subr.mxu0 0.0
        %6039 = vmatpush2.xpose.msra.mxu0 0.0
        %6040 = vmatprep.subr.mxu0 0.0
        %6041 = vmatpush2.xpose.msra.mxu0 0.0
        %6042 = vmatprep.subr.mxu0 0.0
        %6043 = vmatpush2.xpose.msra.mxu0 0.0
        %6044 = vmatprep.subr.mxu0 0.0
        %6045 = vmatpush2.xpose.msra.mxu0 0.0
        %6046 = vmatprep.subr.mxu0 0.0
        %6047 = vmatpush2.xpose.msra.mxu0 0.0
        %6048 = vmatprep.subr.mxu0 0.0
        %6049 = vmatpush2.xpose.msra.mxu0 0.0
        %6050 = vmatprep.subr.mxu0 0.0
        %6051 = vmatpush2.xpose.msra.mxu0 0.0
        %6052 = vmatprep.subr.mxu0 0.0
        %6053 = vmatpush2.xpose.msra.mxu0 0.0
        %6054 = vmatprep.subr.mxu0 0.0
        %6055 = vmatpush2.xpose.msra.mxu0 0.0
        %6056 = vmatprep.subr.mxu0 0.0
        %6057 = vmatpush2.xpose.msra.mxu0 0.0
        %6058 = vmatprep.subr.mxu0 0.0
        %6059 = vmatpush2.xpose.msra.mxu0 0.0
        %6060 = vmatprep.subr.mxu0 0.0
        %6061 = vmatpush2.xpose.msra.mxu0 0.0
        %6062 = vmatprep.mubr.f32.mxu0 0.0
        %6063 = vmatmul.mubr.f32.gmra.mxu0 %v5990
        %v6064 = vpop.f32.mrf.mxu0
        %v6065 = vadd.f32 %v621, %v6064
        %v6066 = vpop.f32.mrf.mxu0
        %6067 = vmatprep.mubr.f32.mxu0 0.0
        %6068 = vmatmul.mubr.f32.gmra.mxu0 %v5992
        %v6069 = vpop.f32.mrf.mxu0
        %v6070 = vadd.f32 %v622, %v6069
        %v6071 = vpop.f32.mrf.mxu0
        %6072 = vdwg.mxu0
        %v6073 = vsel %vm852, %v6065, -inf
        %6074 = vmax.xlane.f32.xlu0 %v6073
        %v6075 = vpop.xlane.xlu0 %6074
        %v6076 = vsel %vm852, %v6070, -inf
        %6077 = vmax.xlane.f32.xlu0 %v6076
        %v6078 = vpop.xlane.xlu0 %6077
        %v6079 = vsub.f32 %v6065, %v6075
        %v6080 = vsub.f32 %v6070, %v6078
        %v6081 = vmul.f32 %v6079, 1.442695
        %v6082 = vpow.pop %v6081
        %v6083 = vmul.f32 %v6080, 1.442695
        %v6084 = vpow.pop %v6083
        %v6085 = vsel %vm852, %v6082, 0.0
        %6086 = vadd.xlane.f32.xlu0 %v6085
        %v6087 = vpop.xlane.xlu0 %6086
        %v6088 = vsel %vm852, %v6084, 0.0
        %6089 = vadd.xlane.f32.xlu0 %v6088
        %v6090 = vpop.xlane.xlu0 %6089
        %6091 = vrot.lane.b32.xlu0 %v5372, 40
        %v6092 = vpop.permute.xlu0 %6091
        %6093 = vrot.lane.b32.xlu0 %v5377, 40
        %v6094 = vpop.permute.xlu0 %6093
        %v6098 = vsel %vm852, %v6082, 0
        %v6101 = vsel %vm852, %v6084, 0
        %6103 = vmatprep.subr.mxu0 0.0
        %6104 = vmatpush1.msra.mxu0 0.0
        %6105 = vmatprep.subr.mxu0 0.0
        %6106 = vmatpush1.msra.mxu0 0.0
        %6107 = vmatprep.subr.mxu0 0.0
        %6108 = vmatpush1.msra.mxu0 0.0
        %6109 = vmatprep.subr.mxu0 0.0
        %6110 = vmatpush1.msra.mxu0 0.0
        %6111 = vmatprep.subr.mxu0 0.0
        %6112 = vmatpush1.msra.mxu0 0.0
        %6113 = vmatprep.subr.mxu0 0.0
        %6114 = vmatpush1.msra.mxu0 0.0
        %6115 = vmatprep.subr.mxu0 0.0
        %6116 = vmatpush1.msra.mxu0 0.0
        %6117 = vmatprep.subr.mxu0 0.0
        %6118 = vmatpush1.msra.mxu0 0.0
        %6119 = vmatprep.subr.mxu0 0.0
        %6120 = vmatpush1.msra.mxu0 0.0
        %6121 = vmatprep.subr.mxu0 0.0
        %6122 = vmatpush1.msra.mxu0 0.0
        %6123 = vmatprep.subr.mxu0 0.0
        %6124 = vmatpush1.msra.mxu0 0.0
        %6125 = vmatprep.subr.mxu0 0.0
        %6126 = vmatpush1.msra.mxu0 0.0
        %6127 = vmatprep.subr.mxu0 0.0
        %6128 = vmatpush1.msra.mxu0 0.0
        %6129 = vmatprep.subr.mxu0 0.0
        %6130 = vmatpush1.msra.mxu0 0.0
        %6131 = vmatprep.subr.mxu0 0.0
        %6132 = vmatpush1.msra.mxu0 %v6094
        %6133 = vmatprep.subr.mxu0 0.0
        %6134 = vmatpush1.msra.mxu0 %v6092
        %6135 = vmatprep.subr.mxu0 0.0
        %6136 = vmatpush2.msra.mxu0 0.0
        %6137 = vmatprep.subr.mxu0 0.0
        %6138 = vmatpush2.msra.mxu0 0.0
        %6139 = vmatprep.subr.mxu0 0.0
        %6140 = vmatpush2.msra.mxu0 0.0
        %6141 = vmatprep.subr.mxu0 0.0
        %6142 = vmatpush2.msra.mxu0 0.0
        %6143 = vmatprep.subr.mxu0 0.0
        %6144 = vmatpush2.msra.mxu0 0.0
        %6145 = vmatprep.subr.mxu0 0.0
        %6146 = vmatpush2.msra.mxu0 0.0
        %6147 = vmatprep.subr.mxu0 0.0
        %6148 = vmatpush2.msra.mxu0 0.0
        %6149 = vmatprep.subr.mxu0 0.0
        %6150 = vmatpush2.msra.mxu0 0.0
        %6151 = vmatprep.subr.mxu0 0.0
        %6152 = vmatpush2.msra.mxu0 0.0
        %6153 = vmatprep.subr.mxu0 0.0
        %6154 = vmatpush2.msra.mxu0 0.0
        %6155 = vmatprep.subr.mxu0 0.0
        %6156 = vmatpush2.msra.mxu0 0.0
        %6157 = vmatprep.subr.mxu0 0.0
        %6158 = vmatpush2.msra.mxu0 0.0
        %6159 = vmatprep.subr.mxu0 0.0
        %6160 = vmatpush2.msra.mxu0 0.0
        %6161 = vmatprep.subr.mxu0 0.0
        %6162 = vmatpush2.msra.mxu0 0.0
        %6163 = vmatprep.subr.mxu0 0.0
        %6164 = vmatpush2.msra.mxu0 0.0
        %6165 = vmatprep.subr.mxu0 0.0
        %6166 = vmatpush2.msra.mxu0 0.0
        %6167 = vmatprep.mubr.f32.mxu0 0.0
        %6168 = vmatmul.mubr.f32.gmra.mxu0 %v6098
        %v6169 = vpop.f32.mrf.mxu0
        %v6170 = vadd.f32 0.0, %v6169
        %v6171 = vpop.f32.mrf.mxu0
        %6172 = vmatprep.mubr.f32.mxu0 0.0
        %6173 = vmatmul.mubr.f32.gmra.mxu0 %v6101
        %v6174 = vpop.f32.mrf.mxu0
        %v6175 = vadd.f32 0.0, %v6174
        %v6176 = vpop.f32.mrf.mxu0
        %6177 = vdwg.mxu0
        %v6178 = vrcp.pop %v6087
        %v6179 = vrcp.pop %v6090
        %v6180 = vmul.f32 %v6170, %v6178
        %v6181 = vmul.f32 %v6175, %v6179
        %6184 = vrot.lane.b32.xlu0 %v5780, 8
        %v6185 = vpop.permute.xlu0 %6184
        %6186 = vrot.lane.b32.xlu0 %v5781, 8
        %v6187 = vpop.permute.xlu0 %6186
        %6192 = vrot.lane.b32.xlu0 %v5980, 16
        %v6193 = vpop.permute.xlu0 %6192
        %6194 = vrot.lane.b32.xlu0 %v5981, 16
        %v6195 = vpop.permute.xlu0 %6194
        %6200 = vrot.lane.b32.xlu0 %v6180, 24
        %v6201 = vpop.permute.xlu0 %6200
        %6202 = vrot.lane.b32.xlu0 %v6181, 24
        %v6203 = vpop.permute.xlu0 %6202
        %v6206 = vsel %vm766, %v5580, %v6185
        %v6207 = vsel %vm766, %v5581, %v6187
        %v6208 = vsel %vm852, %v6206, %v6193
        %v6209 = vsel %vm852, %v6207, %v6195
        %v6210 = vsel %vm1590, %v6208, %v6201
        %v6211 = vsel %vm1590, %v6209, %v6203
        %6216 = vrot.lane.b32.xlu0 %v5288, 32
        %v6217 = vpop.permute.xlu0 %6216
        %6218 = vrot.lane.b32.xlu0 %v5289, 32
        %v6219 = vpop.permute.xlu0 %6218
        %6220 = vrot.lane.b32.xlu0 %v5290, 32
        %v6221 = vpop.permute.xlu0 %6220
        %6222 = vrot.lane.b32.xlu0 %v5291, 32
        %v6223 = vpop.permute.xlu0 %6222
        %6228 = vrot.lane.b32.xlu0 %v5297, 32
        %v6229 = vpop.permute.xlu0 %6228
        %v6232 = vsel %vm626, %v6210, 0
        %v6235 = vsel %vm626, %v6211, 0
        %6237 = vmatprep.subr.mxu0 0.0
        %6238 = vmatpush1.msra.mxu0 0.0
        %6239 = vmatprep.subr.mxu0 0.0
        %6240 = vmatpush1.msra.mxu0 0.0
        %6241 = vmatprep.subr.mxu0 0.0
        %6242 = vmatpush1.msra.mxu0 0.0
        %6243 = vmatprep.subr.mxu0 0.0
        %6244 = vmatpush1.msra.mxu0 0.0
        %6245 = vmatprep.subr.mxu0 0.0
        %6246 = vmatpush1.msra.mxu0 0.0
        %6247 = vmatprep.subr.mxu0 0.0
        %6248 = vmatpush1.msra.mxu0 0.0
        %6249 = vmatprep.subr.mxu0 0.0
        %6250 = vmatpush1.msra.mxu0 0.0
        %6251 = vmatprep.subr.mxu0 0.0
        %6252 = vmatpush1.msra.mxu0 0.0
        %6253 = vmatprep.subr.mxu0 0.0
        %6254 = vmatpush1.msra.mxu0 0.0
        %6255 = vmatprep.subr.mxu0 0.0
        %6256 = vmatpush1.msra.mxu0 0.0
        %6257 = vmatprep.subr.mxu0 0.0
        %6258 = vmatpush1.msra.mxu0 0.0
        %6259 = vmatprep.subr.mxu0 0.0
        %6260 = vmatpush1.msra.mxu0 0.0
        %6261 = vmatprep.subr.mxu0 0.0
        %6262 = vmatpush1.msra.mxu0 %v6223
        %6263 = vmatprep.subr.mxu0 0.0
        %6264 = vmatpush1.msra.mxu0 %v6221
        %6265 = vmatprep.subr.mxu0 0.0
        %6266 = vmatpush1.msra.mxu0 %v6219
        %6267 = vmatprep.subr.mxu0 0.0
        %6268 = vmatpush1.msra.mxu0 %v6217
        %6269 = vmatprep.subr.mxu0 0.0
        %6270 = vmatpush2.msra.mxu0 0.0
        %6271 = vmatprep.subr.mxu0 0.0
        %6272 = vmatpush2.msra.mxu0 0.0
        %6273 = vmatprep.subr.mxu0 0.0
        %6274 = vmatpush2.msra.mxu0 0.0
        %6275 = vmatprep.subr.mxu0 0.0
        %6276 = vmatpush2.msra.mxu0 0.0
        %6277 = vmatprep.subr.mxu0 0.0
        %6278 = vmatpush2.msra.mxu0 0.0
        %6279 = vmatprep.subr.mxu0 0.0
        %6280 = vmatpush2.msra.mxu0 0.0
        %6281 = vmatprep.subr.mxu0 0.0
        %6282 = vmatpush2.msra.mxu0 0.0
        %6283 = vmatprep.subr.mxu0 0.0
        %6284 = vmatpush2.msra.mxu0 0.0
        %6285 = vmatprep.subr.mxu0 0.0
        %6286 = vmatpush2.msra.mxu0 0.0
        %6287 = vmatprep.subr.mxu0 0.0
        %6288 = vmatpush2.msra.mxu0 0.0
        %6289 = vmatprep.subr.mxu0 0.0
        %6290 = vmatpush2.msra.mxu0 0.0
        %6291 = vmatprep.subr.mxu0 0.0
        %6292 = vmatpush2.msra.mxu0 0.0
        %6293 = vmatprep.subr.mxu0 0.0
        %6294 = vmatpush2.msra.mxu0 0.0
        %6295 = vmatprep.subr.mxu0 0.0
        %6296 = vmatpush2.msra.mxu0 0.0
        %6297 = vmatprep.subr.mxu0 0.0
        %6298 = vmatpush2.msra.mxu0 0.0
        %6299 = vmatprep.subr.mxu0 0.0
        %6300 = vmatpush2.msra.mxu0 0.0
        %6301 = vmatprep.mubr.f32.mxu0 0.0
        %6302 = vmatmul.mubr.f32.gmra.mxu0 %v6232
        %v6303 = vpop.f32.mrf.mxu0
        %v6304 = vadd.f32 %v6229, %v6303
        %v6305 = vpop.f32.mrf.mxu0
        %6306 = vmatprep.mubr.f32.mxu0 0.0
        %6307 = vmatmul.mubr.f32.gmra.mxu0 %v6235
        %v6308 = vpop.f32.mrf.mxu0
        %v6309 = vadd.f32 %v6229, %v6308
        %v6310 = vpop.f32.mrf.mxu0
        %6311 = vdwg.mxu0
        %v6312 = vadd.f32 %v6304, %v5284
        %v6313 = vadd.f32 %v6309, %v5285
        %s6314 = scalar_lea.vmem %s1, 16
        %v6315 = vld [vmem:[%s6314] sm:$0x3]
        %v6316 = vsel %vm626, %v6312, 0.0
        %6317 = vadd.xlane.f32.xlu0 %v6316
        %v6318 = vpop.xlane.xlu0 %6317
        %v6319 = vsel %vm626, %v6313, 0.0
        %6320 = vadd.xlane.f32.xlu0 %v6319
        %v6321 = vpop.xlane.xlu0 %6320
        %v6322 = vmul.f32 %v6318, %v633
        %v6323 = vmul.f32 %v6321, %v633
        %v6324 = vsub.f32 %v6312, %v6322
        %v6325 = vsub.f32 %v6313, %v6323
        %v6326 = vmul.f32 %v6324, %v6324
        %v6327 = vmul.f32 %v6325, %v6325
        %v6328 = vsel %vm626, %v6326, 0.0
        %6329 = vadd.xlane.f32.xlu0 %v6328
        %v6330 = vpop.xlane.xlu0 %6329
        %v6331 = vsel %vm626, %v6327, 0.0
        %6332 = vadd.xlane.f32.xlu0 %v6331
        %v6333 = vpop.xlane.xlu0 %6332
        %v6334 = vmul.f32 %v6330, %v633
        %v6335 = vmul.f32 %v6333, %v633
        %v6336 = vadd.f32 %v6334, 1e-05
        %v6337 = vadd.f32 %v6335, 1e-05
        %v6338 = vrsqrt.pop %v6336
        %v6339 = vrsqrt.pop %v6337
        %v6340 = vmul.f32 %v6324, %v6338
        %v6341 = vmul.f32 %v6325, %v6339
        %v6342 = vlaneseq
        %v6343 = vshrl.u32 %v6342, 7
        %v6344 = vsub.s32 0, %v6343
        %v6345 = vrot.slane %v6315, %v6344
        %v6346 = vmul.f32 %v6340, %v6345
        %v6347 = vmul.f32 %v6341, %v6345
        %v6348 = vlaneseq
        %v6349 = vshrl.u32 %v6348, 7
        %v6350 = vsub.s32 1, %v6349
        %v6351 = vrot.slane %v6315, %v6350
        %v6352 = vadd.f32 %v6346, %v6351
        %v6353 = vadd.f32 %v6347, %v6351
        %6354 = vst.msk [vmem:[%s598] sm:$0xff] %vm626, %v6352
        %6355 = vst.msk [vmem:[%s598 + $0x8] sm:$0xff] %vm626, %v6353
        %s6356 = sand.u32 %s433, 1
        %s6357 = scalar_lea.sflag [#allocation3], %s6356
        %s6358 = sand.u32 %s433, 1
        %s6359 = smul.addr %s6358, 16
        %s6360 = scalar_lea.vmem [#allocation2], %s6359
        // Predicated region
        $region93: #{tpu_custom_call.1} parent=91 // pred_check
          %p6361 = pneg %p443
        $region94: #{tpu_custom_call.1} parent=91 // pred_check_branch
          %6363 = sbr.rel (%p6361) target = $region96
        $region95: #{tpu_custom_call.1} parent=91 // pred_region
          %s6365 = ssub.s32 256, 256
          %6366 = vsyncadd %s6357, %s6365
          %s6367 = smul.addr %s32, 2
          %s6368 = smul.addr %s6367, 128
          %s6369 = scalar_lea.hbm %s18, %s6368
          %s6370 = sshll.u32 %s6360, 4
          %s6371 = int_to_ptr.vmem [resolvable:$true] %s6370
          %6376 = dma.vmem_to_hbm [thread:$0]  %s6371, 256, %s6369, %s6357, 128, 128, 8
        $region96: #{tpu_custom_call.1} parent=91 // pred_fallthru
          _
      $region92: #{tpu_custom_call.1} parent=5 // pred_fallthru
        _
      %p6377 = scmp.le.s32.totalorder 2, %s27
      // Predicated region
      $region97: #{tpu_custom_call.1} parent=5 // pred_check
        %p6378 = pneg %p6377
      $region98: #{tpu_custom_call.1} parent=5 // pred_check_branch
        %6380 = sbr.rel (%p6378) target = $region100
      $region99: #{tpu_custom_call.1} parent=5 // pred_region
        %s6381 = ssub.s32 %s27, 2
        // Predicated region
        $region101: #{tpu_custom_call.1} parent=99 // pred_check
          %p6382 = pneg %p449
        $region102: #{tpu_custom_call.1} parent=99 // pred_check_branch
          %6384 = sbr.rel (%p6382) target = $region104
        $region103: #{tpu_custom_call.1} parent=99 // pred_region
          %s6385 = sand.u32 %s434, 1
          %s6386 = scalar_lea.sflag [#allocation3], %s6385
          %s6387 = sand.u32 %s434, 1
          %s6388 = smul.addr %s6387, 16
          %s6389 = scalar_lea.vmem [#allocation2], %s6388
          %6390 = dma.done %s6386, 256
        $region104: #{tpu_custom_call.1} parent=99 // pred_fallthru
          _
      $region100: #{tpu_custom_call.1} parent=5 // pred_fallthru
        _
    $region6: #{tpu_custom_call.1} parent=1 // loop_footer
      %s31 = sadd.s32 1, %s27
    $region7: #{tpu_custom_call.1} parent=1 // loop_footer_branch
      %26 = sbr.rel target = $region3
    $region8: #{tpu_custom_call.1} parent=1 // loop_exit
      _
    %6391 = vsyncpa [#allocation3], 1
    %s6392 = scalar_lea.sflag [#allocation3], 1
    %6393 = vsyncpa %s6392, 1

</llo_original>
